<compile_context>
chip_gen: v7x
topology: tpu7x:2x2x1
jax: 0.10.0
libtpu: 0.0.40
codegen_flags: <defaults>
</compile_context>

<pallas_src>
import functools

import jax
import jax.numpy as jnp
from jax.experimental import pallas as pl
from jax.experimental.pallas import tpu as pltpu


# ---------------------------------------------------------------------------
# Fused Pallas kernel:
#   acc = W @ Xcols -> [InstanceNorm over S] -> act -> [proj_act(Pw @ acc)]
# ---------------------------------------------------------------------------
def _fused_matmul_call(x_cols, w, *, use_in, eps, act, proj_w=None, proj_act="none",
                       out_dtype=jnp.float32):
    """x_cols : (N, Kd, S)  taps/channels-first, spatial S on the lane axis (bf16)
       w      : (Cout, Kd)
       proj_w : optional (Cp, Cout) fused 1x1x1-conv epilogue (bias-free)
       returns (N, Cout, S) out_dtype, or (N, Cp, S) when proj_w is given."""
    N, Kd, S = x_cols.shape
    Cout = w.shape[0]
    has_proj = proj_w is not None
    Cfin = proj_w.shape[0] if has_proj else Cout
    w = w.astype(x_cols.dtype)

    def kernel(x_ref, w_ref, *rest):
        if has_proj:
            pw_ref, o_ref = rest
        else:
            (o_ref,) = rest
        # Single MXU contraction over taps*channels; S stays lane-dense.
        acc = jnp.dot(w_ref[...], x_ref[0], preferred_element_type=jnp.float32)
        if use_in:
            # InstanceNorm3d: per-sample, per-channel stats over all spatial
            # positions (biased variance, no affine params).
            mean = jnp.mean(acc, axis=1, keepdims=True)
            var = jnp.mean(jnp.square(acc - mean), axis=1, keepdims=True)
            acc = (acc - mean) * jax.lax.rsqrt(var + eps)
        if act == "relu":
            acc = jnp.maximum(acc, 0.0)
        elif act == "sigmoid":
            acc = jax.nn.sigmoid(acc)
        if has_proj:
            out = jnp.dot(pw_ref[...], acc, preferred_element_type=jnp.float32)
            if proj_act == "sigmoid":
                out = jax.nn.sigmoid(out)
            o_ref[0] = out.astype(o_ref.dtype)
        else:
            o_ref[0] = acc.astype(o_ref.dtype)

    in_specs = [
        pl.BlockSpec((1, Kd, S), lambda n: (n, 0, 0)),
        pl.BlockSpec((Cout, Kd), lambda n: (0, 0)),
    ]
    inputs = [x_cols, w]
    if has_proj:
        in_specs.append(pl.BlockSpec((Cfin, Cout), lambda n: (0, 0)))
        inputs.append(proj_w.astype(jnp.float32))

    return pl.pallas_call(
        kernel,
        out_shape=jax.ShapeDtypeStruct((N, Cfin, S), out_dtype),
        grid=(N,),
        in_specs=in_specs,
        out_specs=pl.BlockSpec((1, Cfin, S), lambda n: (n, 0, 0)),
        compiler_params=pltpu.CompilerParams(
            dimension_semantics=("parallel",),
        ),
    )(*inputs)


# ---------------------------------------------------------------------------
# JAX glue: tap gather (im2col, taps-major / channels-minor), transposed conv,
# skip concat.
# ---------------------------------------------------------------------------
def _im2col(x, K, padding):
    """x: (N, C, D, H, W) -> (N, K^3*C, Do*Ho*Wo)."""
    N, C, D, H, W = x.shape
    p = padding
    if p > 0:
        x = jnp.pad(x, [(0, 0), (0, 0), (p, p), (p, p), (p, p)])
    Dp, Hp, Wp = D + 2 * p, H + 2 * p, W + 2 * p
    Do, Ho, Wo = Dp - K + 1, Hp - K + 1, Wp - K + 1
    S = Do * Ho * Wo
    cols = []
    for kd in range(K):
        for kh in range(K):
            for kw in range(K):
                cols.append(x[:, :, kd:kd + Do, kh:kh + Ho, kw:kw + Wo].reshape(N, C, S))
    # TODO(synk): this K^3 slab is still written once to HBM (bf16); a manual-DMA
    # in-kernel gather from the padded activation would remove even that duplication.
    return jnp.concatenate(cols, axis=1), (Do, Ho, Wo)


def conv3d(x, w, *, padding, use_in, eps, act, proj_w=None, proj_act="none",
           out_dtype=jnp.float32):
    """x: (N, Cin, D, H, W); w: (Cout, Cin, K, K, K) (PyTorch Conv3d layout, bias=False)."""
    Cout, Cin, K = w.shape[0], w.shape[1], w.shape[2]
    x_cols, (Do, Ho, Wo) = _im2col(x.astype(jnp.bfloat16), K, padding)
    w_flat = jnp.transpose(w, (0, 2, 3, 4, 1)).reshape(Cout, K * K * K * Cin)
    out = _fused_matmul_call(
        x_cols, w_flat.astype(jnp.bfloat16),
        use_in=use_in, eps=eps, act=act, proj_w=proj_w, proj_act=proj_act,
        out_dtype=out_dtype,
    )
    N = x.shape[0]
    Cfin = proj_w.shape[0] if proj_w is not None else Cout
    return out.reshape(N, Cfin, Do, Ho, Wo)


def _ct_axis(y, tap_ax, sp_ax):
    """Consume a length-3 tap axis against a length-D spatial axis of per-tap
    transposed-conv partials (stride 2) -> spatial length 2*D+1, scatter-free.
       out[2j]   = y0[j] + y2[j-1]   (zero-padded at the ends)
       out[2j+1] = y1[j]
    built with pad + add + interleave (stack/reshape) + concat only."""
    y0 = jax.lax.index_in_dim(y, 0, tap_ax, keepdims=False)
    y1 = jax.lax.index_in_dim(y, 1, tap_ax, keepdims=False)
    y2 = jax.lax.index_in_dim(y, 2, tap_ax, keepdims=False)
    sp = sp_ax - 1 if sp_ax > tap_ax else sp_ax
    D = y1.shape[sp]
    pad_a = [(0, 0)] * y1.ndim
    pad_b = [(0, 0)] * y1.ndim
    pad_a[sp] = (0, 1)
    pad_b[sp] = (1, 0)
    even = jnp.pad(y0, pad_a) + jnp.pad(y2, pad_b)               # length D+1
    even_head = jax.lax.slice_in_dim(even, 0, D, axis=sp)
    even_tail = jax.lax.slice_in_dim(even, D, D + 1, axis=sp)
    inter = jnp.stack([even_head, y1], axis=sp + 1)              # (..., D, 2, ...)
    shape = list(y1.shape)
    shape[sp] = 2 * D
    inter = inter.reshape(shape)                                 # interleaved, length 2D
    return jnp.concatenate([inter, even_tail], axis=sp)          # length 2D+1


def conv_transpose3d(x, w_t, b, *, stride=2):
    """nn.ConvTranspose3d(kernel=K, stride=s, padding=0) with bias.
       x: (N, Cin, D, H, W); w_t in PyTorch layout (Cin, Cout, K, K, K).
       Dense formulation: one Pallas matmul on the undilated input
           y[(kd,kh,kw,co), s] = sum_ci w[ci,co,kd,kh,kw] * x[ci, s]
       then per-axis parity interleave (no strided scatter-adds)."""
    N, Cin, D, H, W = x.shape
    Cout, K = w_t.shape[1], w_t.shape[2]
    w_big = jnp.transpose(w_t, (2, 3, 4, 1, 0)).reshape(K * K * K * Cout, Cin)
    x_flat = x.reshape(N, Cin, D * H * W).astype(jnp.bfloat16)
    y = _fused_matmul_call(x_flat, w_big.astype(jnp.bfloat16),
                           use_in=False, eps=0.0, act="none")
    y = y.reshape(N, K, K, K, Cout, D, H, W)
    if K == 3 and stride == 2:
        z = _ct_axis(y, tap_ax=1, sp_ax=5)   # -> (N, K, K, Cout, 2D+1, H, W)
        z = _ct_axis(z, tap_ax=1, sp_ax=5)   # -> (N, K, Cout, 2D+1, 2H+1, W)
        z = _ct_axis(z, tap_ax=1, sp_ax=5)   # -> (N, Cout, 2D+1, 2H+1, 2W+1)
        out = z
    else:
        # TODO(synk): generic fallback (K != 3 or stride != 2) keeps the strided
        # scatter-add recombination.
        Do, Ho, Wo = (D - 1) * stride + K, (H - 1) * stride + K, (W - 1) * stride + K
        out = jnp.zeros((N, Cout, Do, Ho, Wo), jnp.float32)
        for kd in range(K):
            for kh in range(K):
                for kw in range(K):
                    out = out.at[:, :,
                                 kd:kd + stride * D:stride,
                                 kh:kh + stride * H:stride,
                                 kw:kw + stride * W:stride].add(y[:, kd, kh, kw])
    return out + b.reshape(1, Cout, 1, 1, 1)


def concat_with_skip(x, skip):
    """Replicates _concat_with_skip: pad/crop x to skip's spatial size, cat([skip, x], C)."""
    sl = [slice(None), slice(None)]
    pads = [(0, 0), (0, 0)]
    for ax in (2, 3, 4):
        diff = skip.shape[ax] - x.shape[ax]
        before, after = diff - diff // 2, diff // 2   # negatives crop (F.pad semantics)
        start = -before if before < 0 else 0
        stop = x.shape[ax] + after if after < 0 else x.shape[ax]
        sl.append(slice(start, stop))
        pads.append((max(before, 0), max(after, 0)))
    x = x[tuple(sl)]
    if any(p != (0, 0) for p in pads):
        x = jnp.pad(x, pads)
    return jnp.concatenate([skip, x.astype(skip.dtype)], axis=1)


# ---------------------------------------------------------------------------
# Decoder parameters and forward pass
# ---------------------------------------------------------------------------
def _calc_n_kernels(n_init, level, bound):
    return min(bound, n_init * 2 ** level)


def init_decoder_params(key, cfg):
    K = cfg["kernel_size"]
    calc = functools.partial(
        _calc_n_kernels, cfg["n_kernels_init"], bound=cfg["n_kernels_max"]
    )
    levels = []
    for level in range(cfg["n_levels"] - 2, -1, -1):
        cin_up, cout = calc(level + 1), calc(level)
        key, k1, k2, k3, k4 = jax.random.split(key, 5)
        conv_ws = [  # n_convolutions_per_block = 2, Conv3d layout (Cout, Cin, K, K, K)
            0.1 * jax.random.normal(k3, (cout, cout * 2, K, K, K), jnp.float32),
            0.1 * jax.random.normal(k4, (cout, cout, K, K, K), jnp.float32),
        ]
        levels.append(
            dict(
                up_w=0.1 * jax.random.normal(k1, (cin_up, cout, K, K, K), jnp.float32),
                up_b=0.1 * jax.random.normal(k2, (cout,), jnp.float32),
                conv_ws=conv_ws,
            )
        )
    key, kl = jax.random.split(key)
    last_w = 0.1 * jax.random.normal(
        kl, (cfg["n_kernels_last"], calc(0), 1, 1, 1), jnp.float32
    )
    return dict(levels=levels, last_w=last_w)


def decoder_forward(params, x, skips, *, cfg, logits=False):
    """Eval-mode forward of Decoder (NCDHW, like PyTorch).
    x: bottleneck features, skips: encoder skips ordered shallow -> deep."""
    # TODO(synk): Dropout and the training-time deep-supervision branch are eval-mode
    # identities / never taken here, so they are not modeled.
    eps = cfg["instance_norm_epsilon"]
    n_lvls = len(params["levels"])
    for li, (lvl, skip) in enumerate(zip(params["levels"], list(reversed(skips)))):
        x = conv_transpose3d(x, lvl["up_w"], lvl["up_b"], stride=2)
        x = concat_with_skip(x, skip)
        n_convs = len(lvl["conv_ws"])
        for ci, w in enumerate(lvl["conv_ws"]):
            fuse_last = (li == n_lvls - 1) and (ci == n_convs - 1)
            if fuse_last:
                # Fuse the final 1x1x1 conv (bias=False) + final Sigmoid into the
                # epilogue of the last 3x3x3 conv kernel (saves an HBM round trip).
                pk = params["last_w"]
                proj_w = pk.reshape(pk.shape[0], pk.shape[1])
                x = conv3d(
                    x, w, padding=1, use_in=cfg["use_instance_norm"],
                    eps=eps, act="relu",
                    proj_w=proj_w, proj_act="none" if logits else "sigmoid",
                    out_dtype=jnp.float32,
                )
            else:
                # Intermediate activations go back to HBM as bf16 (half the traffic);
                # they are consumed as bf16 matmul inputs anyway.
                x = conv3d(
                    x, w, padding=1, use_in=cfg["use_instance_norm"],
                    eps=eps, act="relu", out_dtype=jnp.bfloat16,
                )
    return x


# ---------------------------------------------------------------------------
if __name__ == "__main__":
    cfg = dict(
        n_levels=3,
        n_kernels_init=4,
        n_kernels_max=8,
        n_kernels_last=2,
        kernel_size=3,
        n_convolutions_per_block=2,
        use_instance_norm=True,
        dropout_rate=0.0,
        instance_norm_epsilon=1e-5,
    )

    key = jax.random.PRNGKey(0)
    key, kx, ks0, ks1, kp = jax.random.split(key, 5)
    N = 2
    # Bottleneck (level 2): 8 channels, spatial 4^3 (NCDHW).
    x = jax.random.normal(kx, (N, 8, 4, 4, 4), jnp.float32)
    # Encoder skips, shallow -> deep: level 0 (4 ch, 16^3), level 1 (8 ch, 8^3).
    skips = [
        jax.random.normal(ks0, (N, 4, 16, 16, 16), jnp.float32),
        jax.random.normal(ks1, (N, 8, 8, 8, 8), jnp.float32),
    ]
    params = init_decoder_params(kp, cfg)

    fwd = jax.jit(functools.partial(decoder_forward, cfg=cfg, logits=False))
    out = jax.block_until_ready(fwd(params, x, skips))

    assert out.shape == (N, cfg["n_kernels_last"], 16, 16, 16), out.shape
    assert bool(jnp.all(jnp.isfinite(out)))
    assert bool(jnp.all((out >= 0.0) & (out <= 1.0)))  # sigmoid output
    print("KERNEL_OK")
</pallas_src>

<mosaic_0001>
module attributes {stable_mosaic.version = 11 : i64} {
  func.func @kernel(%arg0: i32, %arg1: memref<1x8x64xbf16, #tpu.memory_space<vmem>>, %arg2: memref<216x8xbf16, #tpu.memory_space<vmem>>, %arg3: memref<1x216x64xf32, #tpu.memory_space<vmem>>) attributes {dimension_semantics = [#tpu.dimension_semantics<parallel>], iteration_bounds = array<i64: 2>, scalar_prefetch = 0 : i64, scratch_operands = 0 : i64, tpu.core_type = #tpu.core_type<tc>, window_params = [{transform_indices = @transform_0, window_bounds = array<i64: 1, 8, 64>}, {pipeline_mode = #tpu.pipeline_mode<synchronous>, transform_indices = @transform_1, window_bounds = array<i64: 216, 8>}, {transform_indices = @transform_2, window_bounds = array<i64: 1, 216, 64>}]} {
    %c0 = arith.constant 0 : index
    %c0_0 = arith.constant 0 : index
    %0 = vector.load %arg2[%c0, %c0_0] : memref<216x8xbf16, #tpu.memory_space<vmem>>, vector<216x8xbf16>
    %c0_1 = arith.constant 0 : index
    %c0_2 = arith.constant 0 : index
    %c0_3 = arith.constant 0 : index
    %1 = vector.load %arg1[%c0_1, %c0_2, %c0_3] : memref<1x8x64xbf16, #tpu.memory_space<vmem>>, vector<1x8x64xbf16>
    %2 = vector.shape_cast %1 : vector<1x8x64xbf16> to vector<8x64xbf16>
    %cst = arith.constant dense<0.000000e+00> : vector<216x64xf32>
    %3 = tpu.matmul %0, %2, %cst {dimension_numbers = #tpu.dot_dimension_numbers<[1], [0], [0], [1], [0, 0, 1, 1], [], []>} : vector<216x8xbf16>, vector<8x64xbf16>, vector<216x64xf32> -> vector<216x64xf32>
    %c0_4 = arith.constant 0 : index
    %c0_5 = arith.constant 0 : index
    %c0_6 = arith.constant 0 : index
    %4 = vector.load %arg3[%c0_4, %c0_5, %c0_6] : memref<1x216x64xf32, #tpu.memory_space<vmem>>, vector<1x216x64xf32>
    %5 = vector.shape_cast %4 : vector<1x216x64xf32> to vector<216x64xf32>
    %6 = vector.shape_cast %3 : vector<216x64xf32> to vector<1x216x64xf32>
    tpu.vector_store %arg3[%c0_4, %c0_5, %c0_6], %6 {strides = array<i32>} : memref<1x216x64xf32, #tpu.memory_space<vmem>>, vector<1x216x64xf32>,
    return
  }
  func.func @transform_0(%arg0: i32) -> (i32, i32, i32) {
    %c0_i32 = arith.constant 0 : i32
    %c0_i32_0 = arith.constant 0 : i32
    %c0_i32_1 = arith.constant 0 : i32
    return %arg0, %c0_i32, %c0_i32_0 : i32, i32, i32
  }
  func.func @transform_1(%arg0: i32) -> (i32, i32) {
    %c0_i32 = arith.constant 0 : i32
    %c0_i32_0 = arith.constant 0 : i32
    %c0_i32_1 = arith.constant 0 : i32
    return %c0_i32, %c0_i32_0 : i32, i32
  }
  func.func @transform_2(%arg0: i32) -> (i32, i32, i32) {
    %c0_i32 = arith.constant 0 : i32
    %c0_i32_0 = arith.constant 0 : i32
    %c0_i32_1 = arith.constant 0 : i32
    return %arg0, %c0_i32, %c0_i32_0 : i32, i32, i32
  }
}

module attributes {stable_mosaic.version = 11 : i64} {
  func.func @kernel(%arg0: i32, %arg1: memref<1x432x512xbf16, #tpu.memory_space<vmem>>, %arg2: memref<8x432xbf16, #tpu.memory_space<vmem>>, %arg3: memref<1x8x512xbf16, #tpu.memory_space<vmem>>) attributes {dimension_semantics = [#tpu.dimension_semantics<parallel>], iteration_bounds = array<i64: 2>, scalar_prefetch = 0 : i64, scratch_operands = 0 : i64, tpu.core_type = #tpu.core_type<tc>, window_params = [{transform_indices = @transform_0, window_bounds = array<i64: 1, 432, 512>}, {pipeline_mode = #tpu.pipeline_mode<synchronous>, transform_indices = @transform_1, window_bounds = array<i64: 8, 432>}, {transform_indices = @transform_2, window_bounds = array<i64: 1, 8, 512>}]} {
    %c0 = arith.constant 0 : index
    %c0_0 = arith.constant 0 : index
    %0 = vector.load %arg2[%c0, %c0_0] : memref<8x432xbf16, #tpu.memory_space<vmem>>, vector<8x432xbf16>
    %c0_1 = arith.constant 0 : index
    %c0_2 = arith.constant 0 : index
    %c0_3 = arith.constant 0 : index
    %1 = vector.load %arg1[%c0_1, %c0_2, %c0_3] : memref<1x432x512xbf16, #tpu.memory_space<vmem>>, vector<1x432x512xbf16>
    %2 = vector.shape_cast %1 : vector<1x432x512xbf16> to vector<432x512xbf16>
    %cst = arith.constant dense<0.000000e+00> : vector<8x512xf32>
    %3 = tpu.matmul %0, %2, %cst {dimension_numbers = #tpu.dot_dimension_numbers<[1], [0], [0], [1], [0, 0, 1, 1], [], []>} : vector<8x432xbf16>, vector<432x512xbf16>, vector<8x512xf32> -> vector<8x512xf32>
    %cst_4 = arith.constant dense<0.000000e+00> : vector<8xf32>
    %4 = vector.multi_reduction <add>, %3, %cst_4 [1] : vector<8x512xf32> to vector<8xf32>
    %5 = vector.shape_cast %4 : vector<8xf32> to vector<8x1xf32>
    %cst_5 = arith.constant 5.120000e+02 : f32
    %6 = vector.broadcast %cst_5 : f32 to vector<8x1xf32>
    %7 = arith.divf %5, %6 : vector<8x1xf32>
    %8 = vector.broadcast %7 : vector<8x1xf32> to vector<8x512xf32>
    %9 = arith.subf %3, %8 : vector<8x512xf32>
    %10 = arith.mulf %9, %9 : vector<8x512xf32>
    %cst_6 = arith.constant dense<0.000000e+00> : vector<8xf32>
    %11 = vector.multi_reduction <add>, %10, %cst_6 [1] : vector<8x512xf32> to vector<8xf32>
    %12 = vector.shape_cast %11 : vector<8xf32> to vector<8x1xf32>
    %cst_7 = arith.constant 5.120000e+02 : f32
    %13 = vector.broadcast %cst_7 : f32 to vector<8x1xf32>
    %14 = arith.divf %12, %13 : vector<8x1xf32>
    %15 = vector.broadcast %7 : vector<8x1xf32> to vector<8x512xf32>
    %16 = arith.subf %3, %15 : vector<8x512xf32>
    %cst_8 = arith.constant 9.99999974E-6 : f32
    %17 = vector.broadcast %cst_8 : f32 to vector<8x1xf32>
    %18 = arith.addf %14, %17 : vector<8x1xf32>
    %19 = math.rsqrt %18 : vector<8x1xf32>
    %20 = vector.broadcast %19 : vector<8x1xf32> to vector<8x512xf32>
    %21 = arith.mulf %16, %20 : vector<8x512xf32>
    %cst_9 = arith.constant 0.000000e+00 : f32
    %22 = vector.broadcast %cst_9 : f32 to vector<8x512xf32>
    %23 = arith.maximumf %21, %22 : vector<8x512xf32>
    %24 = arith.truncf %23 : vector<8x512xf32> to vector<8x512xbf16>
    %c0_10 = arith.constant 0 : index
    %c0_11 = arith.constant 0 : index
    %c0_12 = arith.constant 0 : index
    %25 = vector.load %arg3[%c0_10, %c0_11, %c0_12] : memref<1x8x512xbf16, #tpu.memory_space<vmem>>, vector<1x8x512xbf16>
    %26 = vector.shape_cast %25 : vector<1x8x512xbf16> to vector<8x512xbf16>
    %27 = vector.shape_cast %24 : vector<8x512xbf16> to vector<1x8x512xbf16>
    tpu.vector_store %arg3[%c0_10, %c0_11, %c0_12], %27 {strides = array<i32>} : memref<1x8x512xbf16, #tpu.memory_space<vmem>>, vector<1x8x512xbf16>,
    return
  }
  func.func @transform_0(%arg0: i32) -> (i32, i32, i32) {
    %c0_i32 = arith.constant 0 : i32
    %c0_i32_0 = arith.constant 0 : i32
    %c0_i32_1 = arith.constant 0 : i32
    return %arg0, %c0_i32, %c0_i32_0 : i32, i32, i32
  }
  func.func @transform_1(%arg0: i32) -> (i32, i32) {
    %c0_i32 = arith.constant 0 : i32
    %c0_i32_0 = arith.constant 0 : i32
    %c0_i32_1 = arith.constant 0 : i32
    return %c0_i32, %c0_i32_0 : i32, i32
  }
  func.func @transform_2(%arg0: i32) -> (i32, i32, i32) {
    %c0_i32 = arith.constant 0 : i32
    %c0_i32_0 = arith.constant 0 : i32
    %c0_i32_1 = arith.constant 0 : i32
    return %arg0, %c0_i32, %c0_i32_0 : i32, i32, i32
  }
}

module attributes {stable_mosaic.version = 11 : i64} {
  func.func @kernel(%arg0: i32, %arg1: memref<1x216x512xbf16, #tpu.memory_space<vmem>>, %arg2: memref<8x216xbf16, #tpu.memory_space<vmem>>, %arg3: memref<1x8x512xbf16, #tpu.memory_space<vmem>>) attributes {dimension_semantics = [#tpu.dimension_semantics<parallel>], iteration_bounds = array<i64: 2>, scalar_prefetch = 0 : i64, scratch_operands = 0 : i64, tpu.core_type = #tpu.core_type<tc>, window_params = [{transform_indices = @transform_0, window_bounds = array<i64: 1, 216, 512>}, {pipeline_mode = #tpu.pipeline_mode<synchronous>, transform_indices = @transform_1, window_bounds = array<i64: 8, 216>}, {transform_indices = @transform_2, window_bounds = array<i64: 1, 8, 512>}]} {
    %c0 = arith.constant 0 : index
    %c0_0 = arith.constant 0 : index
    %0 = vector.load %arg2[%c0, %c0_0] : memref<8x216xbf16, #tpu.memory_space<vmem>>, vector<8x216xbf16>
    %c0_1 = arith.constant 0 : index
    %c0_2 = arith.constant 0 : index
    %c0_3 = arith.constant 0 : index
    %1 = vector.load %arg1[%c0_1, %c0_2, %c0_3] : memref<1x216x512xbf16, #tpu.memory_space<vmem>>, vector<1x216x512xbf16>
    %2 = vector.shape_cast %1 : vector<1x216x512xbf16> to vector<216x512xbf16>
    %cst = arith.constant dense<0.000000e+00> : vector<8x512xf32>
    %3 = tpu.matmul %0, %2, %cst {dimension_numbers = #tpu.dot_dimension_numbers<[1], [0], [0], [1], [0, 0, 1, 1], [], []>} : vector<8x216xbf16>, vector<216x512xbf16>, vector<8x512xf32> -> vector<8x512xf32>
    %cst_4 = arith.constant dense<0.000000e+00> : vector<8xf32>
    %4 = vector.multi_reduction <add>, %3, %cst_4 [1] : vector<8x512xf32> to vector<8xf32>
    %5 = vector.shape_cast %4 : vector<8xf32> to vector<8x1xf32>
    %cst_5 = arith.constant 5.120000e+02 : f32
    %6 = vector.broadcast %cst_5 : f32 to vector<8x1xf32>
    %7 = arith.divf %5, %6 : vector<8x1xf32>
    %8 = vector.broadcast %7 : vector<8x1xf32> to vector<8x512xf32>
    %9 = arith.subf %3, %8 : vector<8x512xf32>
    %10 = arith.mulf %9, %9 : vector<8x512xf32>
    %cst_6 = arith.constant dense<0.000000e+00> : vector<8xf32>
    %11 = vector.multi_reduction <add>, %10, %cst_6 [1] : vector<8x512xf32> to vector<8xf32>
    %12 = vector.shape_cast %11 : vector<8xf32> to vector<8x1xf32>
    %cst_7 = arith.constant 5.120000e+02 : f32
    %13 = vector.broadcast %cst_7 : f32 to vector<8x1xf32>
    %14 = arith.divf %12, %13 : vector<8x1xf32>
    %15 = vector.broadcast %7 : vector<8x1xf32> to vector<8x512xf32>
    %16 = arith.subf %3, %15 : vector<8x512xf32>
    %cst_8 = arith.constant 9.99999974E-6 : f32
    %17 = vector.broadcast %cst_8 : f32 to vector<8x1xf32>
    %18 = arith.addf %14, %17 : vector<8x1xf32>
    %19 = math.rsqrt %18 : vector<8x1xf32>
    %20 = vector.broadcast %19 : vector<8x1xf32> to vector<8x512xf32>
    %21 = arith.mulf %16, %20 : vector<8x512xf32>
    %cst_9 = arith.constant 0.000000e+00 : f32
    %22 = vector.broadcast %cst_9 : f32 to vector<8x512xf32>
    %23 = arith.maximumf %21, %22 : vector<8x512xf32>
    %24 = arith.truncf %23 : vector<8x512xf32> to vector<8x512xbf16>
    %c0_10 = arith.constant 0 : index
    %c0_11 = arith.constant 0 : index
    %c0_12 = arith.constant 0 : index
    %25 = vector.load %arg3[%c0_10, %c0_11, %c0_12] : memref<1x8x512xbf16, #tpu.memory_space<vmem>>, vector<1x8x512xbf16>
    %26 = vector.shape_cast %25 : vector<1x8x512xbf16> to vector<8x512xbf16>
    %27 = vector.shape_cast %24 : vector<8x512xbf16> to vector<1x8x512xbf16>
    tpu.vector_store %arg3[%c0_10, %c0_11, %c0_12], %27 {strides = array<i32>} : memref<1x8x512xbf16, #tpu.memory_space<vmem>>, vector<1x8x512xbf16>,
    return
  }
  func.func @transform_0(%arg0: i32) -> (i32, i32, i32) {
    %c0_i32 = arith.constant 0 : i32
    %c0_i32_0 = arith.constant 0 : i32
    %c0_i32_1 = arith.constant 0 : i32
    return %arg0, %c0_i32, %c0_i32_0 : i32, i32, i32
  }
  func.func @transform_1(%arg0: i32) -> (i32, i32) {
    %c0_i32 = arith.constant 0 : i32
    %c0_i32_0 = arith.constant 0 : i32
    %c0_i32_1 = arith.constant 0 : i32
    return %c0_i32, %c0_i32_0 : i32, i32
  }
  func.func @transform_2(%arg0: i32) -> (i32, i32, i32) {
    %c0_i32 = arith.constant 0 : i32
    %c0_i32_0 = arith.constant 0 : i32
    %c0_i32_1 = arith.constant 0 : i32
    return %arg0, %c0_i32, %c0_i32_0 : i32, i32, i32
  }
}

module attributes {stable_mosaic.version = 11 : i64} {
  func.func @kernel(%arg0: i32, %arg1: memref<1x8x512xbf16, #tpu.memory_space<vmem>>, %arg2: memref<108x8xbf16, #tpu.memory_space<vmem>>, %arg3: memref<1x108x512xf32, #tpu.memory_space<vmem>>) attributes {dimension_semantics = [#tpu.dimension_semantics<parallel>], iteration_bounds = array<i64: 2>, scalar_prefetch = 0 : i64, scratch_operands = 0 : i64, tpu.core_type = #tpu.core_type<tc>, window_params = [{transform_indices = @transform_0, window_bounds = array<i64: 1, 8, 512>}, {pipeline_mode = #tpu.pipeline_mode<synchronous>, transform_indices = @transform_1, window_bounds = array<i64: 108, 8>}, {transform_indices = @transform_2, window_bounds = array<i64: 1, 108, 512>}]} {
    %c0 = arith.constant 0 : index
    %c0_0 = arith.constant 0 : index
    %0 = vector.load %arg2[%c0, %c0_0] : memref<108x8xbf16, #tpu.memory_space<vmem>>, vector<108x8xbf16>
    %c0_1 = arith.constant 0 : index
    %c0_2 = arith.constant 0 : index
    %c0_3 = arith.constant 0 : index
    %1 = vector.load %arg1[%c0_1, %c0_2, %c0_3] : memref<1x8x512xbf16, #tpu.memory_space<vmem>>, vector<1x8x512xbf16>
    %2 = vector.shape_cast %1 : vector<1x8x512xbf16> to vector<8x512xbf16>
    %cst = arith.constant dense<0.000000e+00> : vector<108x512xf32>
    %3 = tpu.matmul %0, %2, %cst {dimension_numbers = #tpu.dot_dimension_numbers<[1], [0], [0], [1], [0, 0, 1, 1], [], []>} : vector<108x8xbf16>, vector<8x512xbf16>, vector<108x512xf32> -> vector<108x512xf32>
    %c0_4 = arith.constant 0 : index
    %c0_5 = arith.constant 0 : index
    %c0_6 = arith.constant 0 : index
    %4 = vector.load %arg3[%c0_4, %c0_5, %c0_6] : memref<1x108x512xf32, #tpu.memory_space<vmem>>, vector<1x108x512xf32>
    %5 = vector.shape_cast %4 : vector<1x108x512xf32> to vector<108x512xf32>
    %6 = vector.shape_cast %3 : vector<108x512xf32> to vector<1x108x512xf32>
    tpu.vector_store %arg3[%c0_4, %c0_5, %c0_6], %6 {strides = array<i32>} : memref<1x108x512xf32, #tpu.memory_space<vmem>>, vector<1x108x512xf32>,
    return
  }
  func.func @transform_0(%arg0: i32) -> (i32, i32, i32) {
    %c0_i32 = arith.constant 0 : i32
    %c0_i32_0 = arith.constant 0 : i32
    %c0_i32_1 = arith.constant 0 : i32
    return %arg0, %c0_i32, %c0_i32_0 : i32, i32, i32
  }
  func.func @transform_1(%arg0: i32) -> (i32, i32) {
    %c0_i32 = arith.constant 0 : i32
    %c0_i32_0 = arith.constant 0 : i32
    %c0_i32_1 = arith.constant 0 : i32
    return %c0_i32, %c0_i32_0 : i32, i32
  }
  func.func @transform_2(%arg0: i32) -> (i32, i32, i32) {
    %c0_i32 = arith.constant 0 : i32
    %c0_i32_0 = arith.constant 0 : i32
    %c0_i32_1 = arith.constant 0 : i32
    return %arg0, %c0_i32, %c0_i32_0 : i32, i32, i32
  }
}

module attributes {stable_mosaic.version = 11 : i64} {
  func.func @kernel(%arg0: i32, %arg1: memref<1x216x4096xbf16, #tpu.memory_space<vmem>>, %arg2: memref<4x216xbf16, #tpu.memory_space<vmem>>, %arg3: memref<1x4x4096xbf16, #tpu.memory_space<vmem>>) attributes {dimension_semantics = [#tpu.dimension_semantics<parallel>], iteration_bounds = array<i64: 2>, scalar_prefetch = 0 : i64, scratch_operands = 0 : i64, tpu.core_type = #tpu.core_type<tc>, window_params = [{transform_indices = @transform_0, window_bounds = array<i64: 1, 216, 4096>}, {pipeline_mode = #tpu.pipeline_mode<synchronous>, transform_indices = @transform_1, window_bounds = array<i64: 4, 216>}, {transform_indices = @transform_2, window_bounds = array<i64: 1, 4, 4096>}]} {
    %c0 = arith.constant 0 : index
    %c0_0 = arith.constant 0 : index
    %0 = vector.load %arg2[%c0, %c0_0] : memref<4x216xbf16, #tpu.memory_space<vmem>>, vector<4x216xbf16>
    %c0_1 = arith.constant 0 : index
    %c0_2 = arith.constant 0 : index
    %c0_3 = arith.constant 0 : index
    %1 = vector.load %arg1[%c0_1, %c0_2, %c0_3] : memref<1x216x4096xbf16, #tpu.memory_space<vmem>>, vector<1x216x4096xbf16>
    %2 = vector.shape_cast %1 : vector<1x216x4096xbf16> to vector<216x4096xbf16>
    %cst = arith.constant dense<0.000000e+00> : vector<4x4096xf32>
    %3 = tpu.matmul %0, %2, %cst {dimension_numbers = #tpu.dot_dimension_numbers<[1], [0], [0], [1], [0, 0, 1, 1], [], []>} : vector<4x216xbf16>, vector<216x4096xbf16>, vector<4x4096xf32> -> vector<4x4096xf32>
    %cst_4 = arith.constant dense<0.000000e+00> : vector<4xf32>
    %4 = vector.multi_reduction <add>, %3, %cst_4 [1] : vector<4x4096xf32> to vector<4xf32>
    %5 = vector.shape_cast %4 : vector<4xf32> to vector<4x1xf32>
    %cst_5 = arith.constant 4.096000e+03 : f32
    %6 = vector.broadcast %cst_5 : f32 to vector<4x1xf32>
    %7 = arith.divf %5, %6 : vector<4x1xf32>
    %8 = vector.broadcast %7 : vector<4x1xf32> to vector<4x4096xf32>
    %9 = arith.subf %3, %8 : vector<4x4096xf32>
    %10 = arith.mulf %9, %9 : vector<4x4096xf32>
    %cst_6 = arith.constant dense<0.000000e+00> : vector<4xf32>
    %11 = vector.multi_reduction <add>, %10, %cst_6 [1] : vector<4x4096xf32> to vector<4xf32>
    %12 = vector.shape_cast %11 : vector<4xf32> to vector<4x1xf32>
    %cst_7 = arith.constant 4.096000e+03 : f32
    %13 = vector.broadcast %cst_7 : f32 to vector<4x1xf32>
    %14 = arith.divf %12, %13 : vector<4x1xf32>
    %15 = vector.broadcast %7 : vector<4x1xf32> to vector<4x4096xf32>
    %16 = arith.subf %3, %15 : vector<4x4096xf32>
    %cst_8 = arith.constant 9.99999974E-6 : f32
    %17 = vector.broadcast %cst_8 : f32 to vector<4x1xf32>
    %18 = arith.addf %14, %17 : vector<4x1xf32>
    %19 = math.rsqrt %18 : vector<4x1xf32>
    %20 = vector.broadcast %19 : vector<4x1xf32> to vector<4x4096xf32>
    %21 = arith.mulf %16, %20 : vector<4x4096xf32>
    %cst_9 = arith.constant 0.000000e+00 : f32
    %22 = vector.broadcast %cst_9 : f32 to vector<4x4096xf32>
    %23 = arith.maximumf %21, %22 : vector<4x4096xf32>
    %24 = arith.truncf %23 : vector<4x4096xf32> to vector<4x4096xbf16>
    %c0_10 = arith.constant 0 : index
    %c0_11 = arith.constant 0 : index
    %c0_12 = arith.constant 0 : index
    %25 = vector.load %arg3[%c0_10, %c0_11, %c0_12] : memref<1x4x4096xbf16, #tpu.memory_space<vmem>>, vector<1x4x4096xbf16>
    %26 = vector.shape_cast %25 : vector<1x4x4096xbf16> to vector<4x4096xbf16>
    %27 = vector.shape_cast %24 : vector<4x4096xbf16> to vector<1x4x4096xbf16>
    tpu.vector_store %arg3[%c0_10, %c0_11, %c0_12], %27 {strides = array<i32>} : memref<1x4x4096xbf16, #tpu.memory_space<vmem>>, vector<1x4x4096xbf16>,
    return
  }
  func.func @transform_0(%arg0: i32) -> (i32, i32, i32) {
    %c0_i32 = arith.constant 0 : i32
    %c0_i32_0 = arith.constant 0 : i32
    %c0_i32_1 = arith.constant 0 : i32
    return %arg0, %c0_i32, %c0_i32_0 : i32, i32, i32
  }
  func.func @transform_1(%arg0: i32) -> (i32, i32) {
    %c0_i32 = arith.constant 0 : i32
    %c0_i32_0 = arith.constant 0 : i32
    %c0_i32_1 = arith.constant 0 : i32
    return %c0_i32, %c0_i32_0 : i32, i32
  }
  func.func @transform_2(%arg0: i32) -> (i32, i32, i32) {
    %c0_i32 = arith.constant 0 : i32
    %c0_i32_0 = arith.constant 0 : i32
    %c0_i32_1 = arith.constant 0 : i32
    return %arg0, %c0_i32, %c0_i32_0 : i32, i32, i32
  }
}

module attributes {stable_mosaic.version = 11 : i64} {
  func.func @kernel(%arg0: i32, %arg1: memref<1x108x4096xbf16, #tpu.memory_space<vmem>>, %arg2: memref<4x108xbf16, #tpu.memory_space<vmem>>, %arg3: memref<2x4xf32, #tpu.memory_space<vmem>>, %arg4: memref<1x2x4096xf32, #tpu.memory_space<vmem>>) attributes {dimension_semantics = [#tpu.dimension_semantics<parallel>], iteration_bounds = array<i64: 2>, scalar_prefetch = 0 : i64, scratch_operands = 0 : i64, tpu.core_type = #tpu.core_type<tc>, window_params = [{transform_indices = @transform_0, window_bounds = array<i64: 1, 108, 4096>}, {pipeline_mode = #tpu.pipeline_mode<synchronous>, transform_indices = @transform_1, window_bounds = array<i64: 4, 108>}, {pipeline_mode = #tpu.pipeline_mode<synchronous>, transform_indices = @transform_2, window_bounds = array<i64: 2, 4>}, {transform_indices = @transform_3, window_bounds = array<i64: 1, 2, 4096>}]} {
    %c0 = arith.constant 0 : index
    %c0_0 = arith.constant 0 : index
    %0 = vector.load %arg2[%c0, %c0_0] : memref<4x108xbf16, #tpu.memory_space<vmem>>, vector<4x108xbf16>
    %c0_1 = arith.constant 0 : index
    %c0_2 = arith.constant 0 : index
    %c0_3 = arith.constant 0 : index
    %1 = vector.load %arg1[%c0_1, %c0_2, %c0_3] : memref<1x108x4096xbf16, #tpu.memory_space<vmem>>, vector<1x108x4096xbf16>
    %2 = vector.shape_cast %1 : vector<1x108x4096xbf16> to vector<108x4096xbf16>
    %cst = arith.constant dense<0.000000e+00> : vector<4x4096xf32>
    %3 = tpu.matmul %0, %2, %cst {dimension_numbers = #tpu.dot_dimension_numbers<[1], [0], [0], [1], [0, 0, 1, 1], [], []>} : vector<4x108xbf16>, vector<108x4096xbf16>, vector<4x4096xf32> -> vector<4x4096xf32>
    %cst_4 = arith.constant dense<0.000000e+00> : vector<4xf32>
    %4 = vector.multi_reduction <add>, %3, %cst_4 [1] : vector<4x4096xf32> to vector<4xf32>
    %5 = vector.shape_cast %4 : vector<4xf32> to vector<4x1xf32>
    %cst_5 = arith.constant 4.096000e+03 : f32
    %6 = vector.broadcast %cst_5 : f32 to vector<4x1xf32>
    %7 = arith.divf %5, %6 : vector<4x1xf32>
    %8 = vector.broadcast %7 : vector<4x1xf32> to vector<4x4096xf32>
    %9 = arith.subf %3, %8 : vector<4x4096xf32>
    %10 = arith.mulf %9, %9 : vector<4x4096xf32>
    %cst_6 = arith.constant dense<0.000000e+00> : vector<4xf32>
    %11 = vector.multi_reduction <add>, %10, %cst_6 [1] : vector<4x4096xf32> to vector<4xf32>
    %12 = vector.shape_cast %11 : vector<4xf32> to vector<4x1xf32>
    %cst_7 = arith.constant 4.096000e+03 : f32
    %13 = vector.broadcast %cst_7 : f32 to vector<4x1xf32>
    %14 = arith.divf %12, %13 : vector<4x1xf32>
    %15 = vector.broadcast %7 : vector<4x1xf32> to vector<4x4096xf32>
    %16 = arith.subf %3, %15 : vector<4x4096xf32>
    %cst_8 = arith.constant 9.99999974E-6 : f32
    %17 = vector.broadcast %cst_8 : f32 to vector<4x1xf32>
    %18 = arith.addf %14, %17 : vector<4x1xf32>
    %19 = math.rsqrt %18 : vector<4x1xf32>
    %20 = vector.broadcast %19 : vector<4x1xf32> to vector<4x4096xf32>
    %21 = arith.mulf %16, %20 : vector<4x4096xf32>
    %cst_9 = arith.constant 0.000000e+00 : f32
    %22 = vector.broadcast %cst_9 : f32 to vector<4x4096xf32>
    %23 = arith.maximumf %21, %22 : vector<4x4096xf32>
    %c0_10 = arith.constant 0 : index
    %c0_11 = arith.constant 0 : index
    %24 = vector.load %arg3[%c0_10, %c0_11] : memref<2x4xf32, #tpu.memory_space<vmem>>, vector<2x4xf32>
    %cst_12 = arith.constant dense<0.000000e+00> : vector<2x4096xf32>
    %25 = tpu.matmul %24, %23, %cst_12 {dimension_numbers = #tpu.dot_dimension_numbers<[1], [0], [0], [1], [0, 0, 1, 1], [], []>} : vector<2x4xf32>, vector<4x4096xf32>, vector<2x4096xf32> -> vector<2x4096xf32>
    %26 = arith.negf %25 : vector<2x4096xf32>
    %27 = math.exp %26 : vector<2x4096xf32>
    %cst_13 = arith.constant 1.000000e+00 : f32
    %28 = vector.broadcast %cst_13 : f32 to vector<2x4096xf32>
    %29 = arith.addf %28, %27 : vector<2x4096xf32>
    %30 = arith.divf %28, %29 : vector<2x4096xf32>
    %c0_14 = arith.constant 0 : index
    %c0_15 = arith.constant 0 : index
    %c0_16 = arith.constant 0 : index
    %31 = vector.load %arg4[%c0_14, %c0_15, %c0_16] : memref<1x2x4096xf32, #tpu.memory_space<vmem>>, vector<1x2x4096xf32>
    %32 = vector.shape_cast %31 : vector<1x2x4096xf32> to vector<2x4096xf32>
    %33 = vector.shape_cast %30 : vector<2x4096xf32> to vector<1x2x4096xf32>
    tpu.vector_store %arg4[%c0_14, %c0_15, %c0_16], %33 {strides = array<i32>} : memref<1x2x4096xf32, #tpu.memory_space<vmem>>, vector<1x2x4096xf32>,
    return
  }
  func.func @transform_0(%arg0: i32) -> (i32, i32, i32) {
    %c0_i32 = arith.constant 0 : i32
    %c0_i32_0 = arith.constant 0 : i32
    %c0_i32_1 = arith.constant 0 : i32
    return %arg0, %c0_i32, %c0_i32_0 : i32, i32, i32
  }
  func.func @transform_1(%arg0: i32) -> (i32, i32) {
    %c0_i32 = arith.constant 0 : i32
    %c0_i32_0 = arith.constant 0 : i32
    %c0_i32_1 = arith.constant 0 : i32
    return %c0_i32, %c0_i32_0 : i32, i32
  }
  func.func @transform_2(%arg0: i32) -> (i32, i32) {
    %c0_i32 = arith.constant 0 : i32
    %c0_i32_0 = arith.constant 0 : i32
    %c0_i32_1 = arith.constant 0 : i32
    return %c0_i32, %c0_i32_0 : i32, i32
  }
  func.func @transform_3(%arg0: i32) -> (i32, i32, i32) {
    %c0_i32 = arith.constant 0 : i32
    %c0_i32_0 = arith.constant 0 : i32
    %c0_i32_1 = arith.constant 0 : i32
    return %arg0, %c0_i32, %c0_i32_0 : i32, i32, i32
  }
}

</mosaic_0001>

<llo_original>
// kernel: decoder_forward.6
$region0: #{decoder_forward.6}
  #allocation0 [shape = 'u32[]', space=smem, size = 0x4, offset = 0x4, fixed_abs, tag = 'smem constant byte address 0x4 - core index']
  #allocation1 [shape = 'u32[144,128]{1,0:T(1,128)}', space=vmem, size = 0x12000, scoped, tag = 'internal scratch']
  %s0 = inlined_call_operand.vmem [shape: bf16[2,8,64], index: 0, kind: input, shape index: {}]
  %s1 = inlined_call_operand.vmem [shape: bf16[216,8], index: 1, kind: input, shape index: {}]
  %s2 = inlined_call_operand.vmem [shape: f32[2,216,64], index: 2, kind: output, shape index: {}]
  %s3 = sld [smem:[#allocation0]]
  $region41: #{decoder_forward.6} parent=0
    _
  %s5 = ssub.s32 1, %s3
  %s6 = scalar_select 0, %s5, %s3
  loop: start=0, step=1, limit=4
  $region2: #{decoder_forward.6} parent=0 // loop_pre_header
    _
  $region3: #{decoder_forward.6} parent=0 // loop_header
    %s8 = sphi 0, %s12
    %p9 = scmp.ge.s32.totalorder %s8, 4
    %s18 = sphi 0, %s20
    %s21 = sphi 0, %s18
    %s22 = sphi 0, %s21
    %s38 = sphi 0, %s22
    %s42 = sphi 0, %s42
    %s44 = sphi 0, %s42
    %s45 = sphi 0, %s44
    %s59 = sphi 0, %s45
    %s65 = sphi 0, %s67
    %s68 = sphi 0, %s65
    %s69 = sphi 0, %s68
    %s85 = sphi 0, %s69
  $region4: #{decoder_forward.6} parent=0 // loop_header_branch
    %11 = sbr.rel (%p9) target = $region8
  $region5: #{decoder_forward.6} parent=0 // loop_body
    %s13 = ssub.s32 %s8, 1
    %s14 = ssub.s32 %s8, 2
    %s15 = sadd.s32 %s8, 1
    %s16 = ssub.s32 %s8, %s15
    %p17 = scmp.eq.s32.totalorder %s16, 0
    %s19 = sadd.s32 %s18, 1
    %s20 = scalar_select %p17, %s18, %s19
    %p23 = pneg %p17
    %p24 = scmp.eq.s32.totalorder %s8, 1
    %p25 = por %p23, %p24
    %p26 = scmp.ne.s32.totalorder %s18, %s21
    %p27 = scmp.eq.s32.totalorder %s8, 0
    %p28 = por %p26, %p27
    %p29 = scmp.ne.s32.totalorder %s18, %s21
    %p30 = scmp.eq.s32.totalorder %s13, 1
    %p31 = por %p29, %p30
    %p32 = scmp.ne.s32.totalorder %s21, %s22
    %p33 = scmp.eq.s32.totalorder %s13, 0
    %p34 = por %p32, %p33
    %p35 = scmp.ne.s32.totalorder %s21, %s22
    %p36 = scmp.eq.s32.totalorder %s14, 1
    %p37 = por %p35, %p36
    %p39 = scmp.ne.s32.totalorder %s22, %s38
    %p40 = scmp.eq.s32.totalorder %s14, 0
    %p41 = por %p39, %p40
    %s43 = sadd.s32 %s42, 1
    %p46 = scmp.eq.s32.totalorder %s8, 1
    %p47 = scmp.ne.s32.totalorder %s42, %s44
    %p48 = scmp.eq.s32.totalorder %s8, 0
    %p49 = por %p47, %p48
    %p50 = scmp.ne.s32.totalorder %s42, %s44
    %p51 = scmp.eq.s32.totalorder %s13, 1
    %p52 = por %p50, %p51
    %p53 = scmp.ne.s32.totalorder %s44, %s45
    %p54 = scmp.eq.s32.totalorder %s13, 0
    %p55 = por %p53, %p54
    %p56 = scmp.ne.s32.totalorder %s44, %s45
    %p57 = scmp.eq.s32.totalorder %s14, 1
    %p58 = por %p56, %p57
    %p60 = scmp.ne.s32.totalorder %s45, %s59
    %p61 = scmp.eq.s32.totalorder %s14, 0
    %p62 = por %p60, %p61
    %s63 = ssub.s32 %s8, %s15
    %p64 = scmp.eq.s32.totalorder %s63, 0
    %s66 = sadd.s32 %s65, 1
    %s67 = scalar_select %p64, %s65, %s66
    %p70 = pneg %p64
    %p71 = scmp.eq.s32.totalorder %s8, 1
    %p72 = por %p70, %p71
    %p73 = scmp.ne.s32.totalorder %s65, %s68
    %p74 = scmp.eq.s32.totalorder %s8, 0
    %p75 = por %p73, %p74
    %p76 = scmp.ne.s32.totalorder %s65, %s68
    %p77 = scmp.eq.s32.totalorder %s13, 1
    %p78 = por %p76, %p77
    %p79 = scmp.ne.s32.totalorder %s68, %s69
    %p80 = scmp.eq.s32.totalorder %s13, 0
    %p81 = por %p79, %p80
    %p82 = scmp.ne.s32.totalorder %s68, %s69
    %p83 = scmp.eq.s32.totalorder %s14, 1
    %p84 = por %p82, %p83
    %p86 = scmp.ne.s32.totalorder %s69, %s85
    %p87 = scmp.eq.s32.totalorder %s14, 0
    %p88 = por %p86, %p87
    %p89 = scmp.le.s32.totalorder 1, %s8
    %p90 = scmp.lt.s32.totalorder %s8, 3
    %p91 = pnand %p89, %p90
    %p92 = pneg %p91
    // Predicated region
    $region9: #{decoder_forward.6} parent=5 // pred_check
      _
    $region10: #{decoder_forward.6} parent=5 // pred_check_branch
      %94 = sbr.rel (%p91) target = $region12
    $region11: #{decoder_forward.6} parent=5 // pred_region
      %s95 = ssub.s32 %s8, 1
      // Predicated region
      $region13: #{decoder_forward.6} parent=11 // pred_check
        %p96 = pneg %p55
      $region14: #{decoder_forward.6} parent=11 // pred_check_branch
        %98 = sbr.rel (%p96) target = $region16
      $region15: #{decoder_forward.6} parent=11 // pred_region
        _
      $region16: #{decoder_forward.6} parent=11 // pred_fallthru
        _
    $region12: #{decoder_forward.6} parent=5 // pred_fallthru
      _
    %p99 = scmp.lt.s32.totalorder %s8, 2
    // Predicated region
    $region17: #{decoder_forward.6} parent=5 // pred_check
      %p100 = pneg %p99
    $region18: #{decoder_forward.6} parent=5 // pred_check_branch
      %102 = sbr.rel (%p100) target = $region20
    $region19: #{decoder_forward.6} parent=5 // pred_region
      // Predicated region
      $region21: #{decoder_forward.6} parent=19 // pred_check
        %p103 = pneg %p28
      $region22: #{decoder_forward.6} parent=19 // pred_check_branch
        %105 = sbr.rel (%p103) target = $region24
      $region23: #{decoder_forward.6} parent=19 // pred_region
        %p106 = scmp.lt.s32.totalorder %s8, 1
        %s107 = scalar_select %p106, %s8, 1
        %s108 = smul.addr %s107, 4
        %s109 = scalar_lea.vmem %s0, %s108
      $region24: #{decoder_forward.6} parent=19 // pred_fallthru
        _
    $region20: #{decoder_forward.6} parent=5 // pred_fallthru
      _
    %p110 = scmp.le.s32.totalorder 1, %s8
    %p111 = scmp.lt.s32.totalorder %s8, 3
    %p112 = pnand %p110, %p111
    %p113 = pneg %p112
    // Predicated region
    $region25: #{decoder_forward.6} parent=5 // pred_check
      _
    $region26: #{decoder_forward.6} parent=5 // pred_check_branch
      %115 = sbr.rel (%p112) target = $region28
    $region27: #{decoder_forward.6} parent=5 // pred_region
      %s116 = ssub.s32 %s8, 1
      %p117 = scmp.lt.s32.totalorder %s13, 1
      %s118 = scalar_select %p117, %s13, 1
      %s119 = smul.addr %s118, 4
      %s120 = scalar_lea.vmem %s0, %s119
      %p121 = pneg %p34
      %p122 = pneg %p31
      %p123 = pneg %p55
      %p124 = pneg %p52
      %p125 = pneg %p81
      %p126 = pneg %p78
      %p127 = scmp.lt.s32.totalorder %s13, 1
      %s128 = scalar_select %p127, %s13, 1
      %s129 = smul.addr %s128, 27
      %s130 = smul.addr %s129, 8
      %s131 = scalar_lea.vmem %s2, %s130
      %p132 = scmp.lt.s32.totalorder %s13, 1
      %s133 = scalar_select %p132, %s13, 1
      %s134 = smul.addr %s133, 4
      %s135 = scalar_lea.vmem %s0, %s134
      %p136 = scmp.lt.s32.totalorder %s13, 1
      %s137 = scalar_select %p136, %s13, 1
      %s138 = smul.addr %s137, 27
      %s139 = smul.addr %s138, 8
      %s140 = scalar_lea.vmem %s2, %s139
      %v142 = vld [vmem:[%s1] sm:$0xf]
      %v143 = vld [vmem:[%s1 + $0x4] sm:$0xf]
      %v144 = vld [vmem:[%s1 + $0x8] sm:$0xf]
      %v145 = vld [vmem:[%s1 + $0xc] sm:$0xf]
      %v146 = vld [vmem:[%s1 + $0x10] sm:$0xf]
      %v147 = vld [vmem:[%s1 + $0x14] sm:$0xf]
      %v148 = vld [vmem:[%s1 + $0x18] sm:$0xf]
      %v149 = vld [vmem:[%s1 + $0x1c] sm:$0xf]
      %v150 = vld [vmem:[%s1 + $0x20] sm:$0xf]
      %v151 = vld [vmem:[%s1 + $0x24] sm:$0xf]
      %v152 = vld [vmem:[%s1 + $0x28] sm:$0xf]
      %v153 = vld [vmem:[%s1 + $0x2c] sm:$0xf]
      %v154 = vld [vmem:[%s1 + $0x30] sm:$0xf]
      %v155 = vld [vmem:[%s1 + $0x34] sm:$0xf]
      %v156 = vld [vmem:[%s1 + $0x38] sm:$0xf]
      %v157 = vld [vmem:[%s1 + $0x3c] sm:$0xf]
      %v158 = vld [vmem:[%s1 + $0x40] sm:$0xf]
      %v159 = vld [vmem:[%s1 + $0x44] sm:$0xf]
      %v160 = vld [vmem:[%s1 + $0x48] sm:$0xf]
      %v161 = vld [vmem:[%s1 + $0x4c] sm:$0xf]
      %v162 = vld [vmem:[%s1 + $0x50] sm:$0xf]
      %v163 = vld [vmem:[%s1 + $0x54] sm:$0xf]
      %v164 = vld [vmem:[%s1 + $0x58] sm:$0xf]
      %v165 = vld [vmem:[%s1 + $0x5c] sm:$0xf]
      %v166 = vld [vmem:[%s1 + $0x60] sm:$0xf]
      %v167 = vld [vmem:[%s1 + $0x64] sm:$0xf]
      %v168 = vld [vmem:[%s1 + $0x68] sm:$0xf]
      %v169 = vld [vmem:[%s135] sm:$0xf]
      %v197 = vunpack.c.l.b16 %v142
      %v198 = vunpack.c.l.b16 %v143
      %v199 = vunpack.c.l.b16 %v144
      %v200 = vunpack.c.l.b16 %v145
      %v201 = vunpack.c.l.b16 %v146
      %v202 = vunpack.c.l.b16 %v147
      %v203 = vunpack.c.l.b16 %v148
      %v204 = vunpack.c.l.b16 %v149
      %v205 = vunpack.c.l.b16 %v150
      %v206 = vunpack.c.l.b16 %v151
      %v207 = vunpack.c.l.b16 %v152
      %v208 = vunpack.c.l.b16 %v153
      %v209 = vunpack.c.l.b16 %v154
      %v210 = vunpack.c.l.b16 %v155
      %v211 = vunpack.c.l.b16 %v156
      %v212 = vunpack.c.l.b16 %v157
      %v213 = vunpack.c.l.b16 %v158
      %v214 = vunpack.c.l.b16 %v159
      %v215 = vunpack.c.l.b16 %v160
      %v216 = vunpack.c.l.b16 %v161
      %v217 = vunpack.c.l.b16 %v162
      %v218 = vunpack.c.l.b16 %v163
      %v219 = vunpack.c.l.b16 %v164
      %v220 = vunpack.c.l.b16 %v165
      %v221 = vunpack.c.l.b16 %v166
      %v222 = vunpack.c.l.b16 %v167
      %v223 = vunpack.c.l.b16 %v168
      %v224 = vpack.c.b16 %v198, %v197
      %v225 = vpack.c.b16 %v200, %v199
      %v226 = vpack.c.b16 %v202, %v201
      %v227 = vpack.c.b16 %v204, %v203
      %v228 = vpack.c.b16 %v206, %v205
      %v229 = vpack.c.b16 %v208, %v207
      %v230 = vpack.c.b16 %v210, %v209
      %v231 = vpack.c.b16 %v212, %v211
      %v232 = vpack.c.b16 %v214, %v213
      %v233 = vpack.c.b16 %v216, %v215
      %v234 = vpack.c.b16 %v218, %v217
      %v235 = vpack.c.b16 %v220, %v219
      %v236 = vpack.c.b16 %v222, %v221
      %v237 = vpack.c.b16 %v223, %v223
      %vm238 = vcmask 64512
      %v240 = vsel %vm238, %v224, 0
      %v243 = vsel %vm238, %v225, 0
      %v246 = vsel %vm238, %v226, 0
      %v249 = vsel %vm238, %v227, 0
      %v252 = vsel %vm238, %v228, 0
      %v255 = vsel %vm238, %v229, 0
      %v258 = vsel %vm238, %v230, 0
      %v261 = vsel %vm238, %v231, 0
      %v264 = vsel %vm238, %v232, 0
      %v267 = vsel %vm238, %v233, 0
      %v270 = vsel %vm238, %v234, 0
      %v273 = vsel %vm238, %v235, 0
      %v276 = vsel %vm238, %v236, 0
      %v279 = vsel %vm238, %v237, 0
      %vm281 = vcmask 1043456
      %v283 = vsel %vm281, %v169, 0
      %285 = vmatprep.subr.bf16.mxu0 0
      %286 = vmatpush1.bf16.msra.mxu0 %v283
      %287 = vmatprep.subr.bf16.mxu0 0
      %288 = vmatpush1.bf16.msra.mxu0 0
      %289 = vmatprep.subr.bf16.mxu0 0
      %290 = vmatpush1.bf16.msra.mxu0 0
      %291 = vmatprep.subr.bf16.mxu0 0
      %292 = vmatpush1.bf16.msra.mxu0 0
      %293 = vmatprep.subr.bf16.mxu0 0
      %294 = vmatpush1.bf16.msra.mxu0 0
      %295 = vmatprep.subr.bf16.mxu0 0
      %296 = vmatpush1.bf16.msra.mxu0 0
      %297 = vmatprep.subr.bf16.mxu0 0
      %298 = vmatpush1.bf16.msra.mxu0 0
      %299 = vmatprep.subr.bf16.mxu0 0
      %300 = vmatpush1.bf16.msra.mxu0 0
      %301 = vmatprep.subr.bf16.mxu0 0
      %302 = vmatpush1.bf16.msra.mxu0 0
      %303 = vmatprep.subr.bf16.mxu0 0
      %304 = vmatpush1.bf16.msra.mxu0 0
      %305 = vmatprep.subr.bf16.mxu0 0
      %306 = vmatpush1.bf16.msra.mxu0 0
      %307 = vmatprep.subr.bf16.mxu0 0
      %308 = vmatpush1.bf16.msra.mxu0 0
      %309 = vmatprep.subr.bf16.mxu0 0
      %310 = vmatpush1.bf16.msra.mxu0 0
      %311 = vmatprep.subr.bf16.mxu0 0
      %312 = vmatpush1.bf16.msra.mxu0 0
      %313 = vmatprep.subr.bf16.mxu0 0
      %314 = vmatpush1.bf16.msra.mxu0 0
      %315 = vmatprep.subr.bf16.mxu0 0
      %316 = vmatpush1.bf16.msra.mxu0 0
      %317 = vmatprep.mubr.bf16.mxu0 0
      %318 = vmatmul.mubr.bf16.gmra.mrb[0].mxu0 %v240
      %v319 = vpop.f32.mrb[0].mxu0
      %v320 = vadd.f32 0.0, %v319
      %v321 = vpop.f32.mrb[0].mxu0
      %v322 = vpop.f32.mrb[0].mxu0
      %v323 = vadd.f32 0.0, %v322
      %v324 = vpop.f32.mrb[0].mxu0
      %325 = vmatprep.mubr.bf16.mxu0 0
      %326 = vmatmul.mubr.bf16.gmra.mrb[0].mxu0 %v243
      %v327 = vpop.f32.mrb[0].mxu0
      %v328 = vadd.f32 0.0, %v327
      %v329 = vpop.f32.mrb[0].mxu0
      %v330 = vpop.f32.mrb[0].mxu0
      %v331 = vadd.f32 0.0, %v330
      %v332 = vpop.f32.mrb[0].mxu0
      %333 = vmatprep.mubr.bf16.mxu0 0
      %334 = vmatmul.mubr.bf16.gmra.mrb[0].mxu0 %v246
      %v335 = vpop.f32.mrb[0].mxu0
      %v336 = vadd.f32 0.0, %v335
      %v337 = vpop.f32.mrb[0].mxu0
      %v338 = vpop.f32.mrb[0].mxu0
      %v339 = vadd.f32 0.0, %v338
      %v340 = vpop.f32.mrb[0].mxu0
      %341 = vmatprep.mubr.bf16.mxu0 0
      %342 = vmatmul.mubr.bf16.gmra.mrb[0].mxu0 %v249
      %v343 = vpop.f32.mrb[0].mxu0
      %v344 = vadd.f32 0.0, %v343
      %v345 = vpop.f32.mrb[0].mxu0
      %v346 = vpop.f32.mrb[0].mxu0
      %v347 = vadd.f32 0.0, %v346
      %v348 = vpop.f32.mrb[0].mxu0
      %349 = vmatprep.mubr.bf16.mxu0 0
      %350 = vmatmul.mubr.bf16.gmra.mrb[0].mxu0 %v252
      %v351 = vpop.f32.mrb[0].mxu0
      %v352 = vadd.f32 0.0, %v351
      %v353 = vpop.f32.mrb[0].mxu0
      %v354 = vpop.f32.mrb[0].mxu0
      %v355 = vadd.f32 0.0, %v354
      %v356 = vpop.f32.mrb[0].mxu0
      %357 = vmatprep.mubr.bf16.mxu0 0
      %358 = vmatmul.mubr.bf16.gmra.mrb[0].mxu0 %v255
      %v359 = vpop.f32.mrb[0].mxu0
      %v360 = vadd.f32 0.0, %v359
      %v361 = vpop.f32.mrb[0].mxu0
      %v362 = vpop.f32.mrb[0].mxu0
      %v363 = vadd.f32 0.0, %v362
      %v364 = vpop.f32.mrb[0].mxu0
      %365 = vmatprep.mubr.bf16.mxu0 0
      %366 = vmatmul.mubr.bf16.gmra.mrb[0].mxu0 %v258
      %v367 = vpop.f32.mrb[0].mxu0
      %v368 = vadd.f32 0.0, %v367
      %v369 = vpop.f32.mrb[0].mxu0
      %v370 = vpop.f32.mrb[0].mxu0
      %v371 = vadd.f32 0.0, %v370
      %v372 = vpop.f32.mrb[0].mxu0
      %373 = vmatprep.mubr.bf16.mxu0 0
      %374 = vmatmul.mubr.bf16.gmra.mrb[0].mxu0 %v261
      %v375 = vpop.f32.mrb[0].mxu0
      %v376 = vadd.f32 0.0, %v375
      %v377 = vpop.f32.mrb[0].mxu0
      %v378 = vpop.f32.mrb[0].mxu0
      %v379 = vadd.f32 0.0, %v378
      %v380 = vpop.f32.mrb[0].mxu0
      %381 = vmatprep.mubr.bf16.mxu0 0
      %382 = vmatmul.mubr.bf16.gmra.mrb[0].mxu0 %v264
      %v383 = vpop.f32.mrb[0].mxu0
      %v384 = vadd.f32 0.0, %v383
      %v385 = vpop.f32.mrb[0].mxu0
      %v386 = vpop.f32.mrb[0].mxu0
      %v387 = vadd.f32 0.0, %v386
      %v388 = vpop.f32.mrb[0].mxu0
      %389 = vmatprep.mubr.bf16.mxu0 0
      %390 = vmatmul.mubr.bf16.gmra.mrb[0].mxu0 %v267
      %v391 = vpop.f32.mrb[0].mxu0
      %v392 = vadd.f32 0.0, %v391
      %v393 = vpop.f32.mrb[0].mxu0
      %v394 = vpop.f32.mrb[0].mxu0
      %v395 = vadd.f32 0.0, %v394
      %v396 = vpop.f32.mrb[0].mxu0
      %397 = vmatprep.mubr.bf16.mxu0 0
      %398 = vmatmul.mubr.bf16.gmra.mrb[0].mxu0 %v270
      %v399 = vpop.f32.mrb[0].mxu0
      %v400 = vadd.f32 0.0, %v399
      %v401 = vpop.f32.mrb[0].mxu0
      %v402 = vpop.f32.mrb[0].mxu0
      %v403 = vadd.f32 0.0, %v402
      %v404 = vpop.f32.mrb[0].mxu0
      %405 = vmatprep.mubr.bf16.mxu0 0
      %406 = vmatmul.mubr.bf16.gmra.mrb[0].mxu0 %v273
      %v407 = vpop.f32.mrb[0].mxu0
      %v408 = vadd.f32 0.0, %v407
      %v409 = vpop.f32.mrb[0].mxu0
      %v410 = vpop.f32.mrb[0].mxu0
      %v411 = vadd.f32 0.0, %v410
      %v412 = vpop.f32.mrb[0].mxu0
      %413 = vmatprep.mubr.bf16.mxu0 0
      %414 = vmatmul.mubr.bf16.gmra.mrb[0].mxu0 %v276
      %v415 = vpop.f32.mrb[0].mxu0
      %v416 = vadd.f32 0.0, %v415
      %v417 = vpop.f32.mrb[0].mxu0
      %v418 = vpop.f32.mrb[0].mxu0
      %v419 = vadd.f32 0.0, %v418
      %v420 = vpop.f32.mrb[0].mxu0
      %421 = vmatprep.mubr.bf16.mxu0 0
      %422 = vmatmul.mubr.bf16.gmra.mrb[0].mxu0 %v279
      %v423 = vpop.f32.mrb[0].mxu0
      %v424 = vadd.f32 0.0, %v423
      %v425 = vpop.f32.mrb[0].mxu0
      %v426 = vpop.f32.mrb[0].mxu0
      %v427 = vpop.f32.mrb[0].mxu0
      %428 = vdwg.mxu0
      %vm429 = vcmask 523264
      %430 = vst.msk [vmem:[%s140] sm:$0xff] %vm429, %v320
      %431 = vst.msk [vmem:[%s140 + $0x8] sm:$0xff] %vm429, %v323
      %432 = vst.msk [vmem:[%s140 + $0x10] sm:$0xff] %vm429, %v328
      %433 = vst.msk [vmem:[%s140 + $0x18] sm:$0xff] %vm429, %v331
      %434 = vst.msk [vmem:[%s140 + $0x20] sm:$0xff] %vm429, %v336
      %435 = vst.msk [vmem:[%s140 + $0x28] sm:$0xff] %vm429, %v339
      %436 = vst.msk [vmem:[%s140 + $0x30] sm:$0xff] %vm429, %v344
      %437 = vst.msk [vmem:[%s140 + $0x38] sm:$0xff] %vm429, %v347
      %438 = vst.msk [vmem:[%s140 + $0x40] sm:$0xff] %vm429, %v352
      %439 = vst.msk [vmem:[%s140 + $0x48] sm:$0xff] %vm429, %v355
      %440 = vst.msk [vmem:[%s140 + $0x50] sm:$0xff] %vm429, %v360
      %441 = vst.msk [vmem:[%s140 + $0x58] sm:$0xff] %vm429, %v363
      %442 = vst.msk [vmem:[%s140 + $0x60] sm:$0xff] %vm429, %v368
      %443 = vst.msk [vmem:[%s140 + $0x68] sm:$0xff] %vm429, %v371
      %444 = vst.msk [vmem:[%s140 + $0x70] sm:$0xff] %vm429, %v376
      %445 = vst.msk [vmem:[%s140 + $0x78] sm:$0xff] %vm429, %v379
      %446 = vst.msk [vmem:[%s140 + $0x80] sm:$0xff] %vm429, %v384
      %447 = vst.msk [vmem:[%s140 + $0x88] sm:$0xff] %vm429, %v387
      %448 = vst.msk [vmem:[%s140 + $0x90] sm:$0xff] %vm429, %v392
      %449 = vst.msk [vmem:[%s140 + $0x98] sm:$0xff] %vm429, %v395
      %450 = vst.msk [vmem:[%s140 + $0xa0] sm:$0xff] %vm429, %v400
      %451 = vst.msk [vmem:[%s140 + $0xa8] sm:$0xff] %vm429, %v403
      %452 = vst.msk [vmem:[%s140 + $0xb0] sm:$0xff] %vm429, %v408
      %453 = vst.msk [vmem:[%s140 + $0xb8] sm:$0xff] %vm429, %v411
      %454 = vst.msk [vmem:[%s140 + $0xc0] sm:$0xff] %vm429, %v416
      %455 = vst.msk [vmem:[%s140 + $0xc8] sm:$0xff] %vm429, %v419
      %456 = vst.msk [vmem:[%s140 + $0xd0] sm:$0xff] %vm429, %v424
      %p457 = scmp.lt.s32.totalorder %s13, 1
      %s458 = scalar_select %p457, %s13, 1
      %s459 = smul.addr %s458, 27
      %s460 = smul.addr %s459, 8
      %s461 = scalar_lea.vmem %s2, %s460
      // Predicated region
      $region29: #{decoder_forward.6} parent=27 // pred_check
        %p462 = pneg %p78
      $region30: #{decoder_forward.6} parent=27 // pred_check_branch
        %464 = sbr.rel (%p462) target = $region32
      $region31: #{decoder_forward.6} parent=27 // pred_region
        _
      $region32: #{decoder_forward.6} parent=27 // pred_fallthru
        _
    $region28: #{decoder_forward.6} parent=5 // pred_fallthru
      _
    %p465 = scmp.le.s32.totalorder 2, %s8
    // Predicated region
    $region33: #{decoder_forward.6} parent=5 // pred_check
      %p466 = pneg %p465
    $region34: #{decoder_forward.6} parent=5 // pred_check_branch
      %468 = sbr.rel (%p466) target = $region36
    $region35: #{decoder_forward.6} parent=5 // pred_region
      %s469 = ssub.s32 %s8, 2
      // Predicated region
      $region37: #{decoder_forward.6} parent=35 // pred_check
        %p470 = pneg %p84
      $region38: #{decoder_forward.6} parent=35 // pred_check_branch
        %472 = sbr.rel (%p470) target = $region40
      $region39: #{decoder_forward.6} parent=35 // pred_region
        %p473 = scmp.lt.s32.totalorder %s14, 1
        %s474 = scalar_select %p473, %s14, 1
        %s475 = smul.addr %s474, 27
        %s476 = smul.addr %s475, 8
        %s477 = scalar_lea.vmem %s2, %s476
      $region40: #{decoder_forward.6} parent=35 // pred_fallthru
        _
    $region36: #{decoder_forward.6} parent=5 // pred_fallthru
      _
  $region6: #{decoder_forward.6} parent=0 // loop_footer
    %s12 = sadd.s32 1, %s8
  $region7: #{decoder_forward.6} parent=0 // loop_footer_branch
    %7 = sbr.rel target = $region3
  $region8: #{decoder_forward.6} parent=0 // loop_exit
    _

// kernel: decoder_forward.7
$region0: #{decoder_forward.7}
  #allocation0 [shape = 'u32[]', space=smem, size = 0x4, offset = 0x4, fixed_abs, tag = 'smem constant byte address 0x4 - core index']
  #allocation1 [shape = 'u32[144,128]{1,0:T(1,128)}', space=vmem, size = 0x12000, scoped, tag = 'internal scratch']
  %s0 = inlined_call_operand.vmem [shape: bf16[2,432,512], index: 0, kind: input, shape index: {}]
  %s1 = inlined_call_operand.vmem [shape: bf16[8,432], index: 1, kind: input, shape index: {}]
  %s2 = inlined_call_operand.vmem [shape: bf16[2,8,512], index: 2, kind: output, shape index: {}]
  %s3 = sld [smem:[#allocation0]]
  $region41: #{decoder_forward.7} parent=0
    _
  %s5 = ssub.s32 1, %s3
  %s6 = scalar_select 0, %s5, %s3
  loop: start=0, step=1, limit=4
  $region2: #{decoder_forward.7} parent=0 // loop_pre_header
    _
  $region3: #{decoder_forward.7} parent=0 // loop_header
    %s8 = sphi 0, %s12
    %p9 = scmp.ge.s32.totalorder %s8, 4
    %s18 = sphi 0, %s20
    %s21 = sphi 0, %s18
    %s22 = sphi 0, %s21
    %s38 = sphi 0, %s22
    %s42 = sphi 0, %s42
    %s44 = sphi 0, %s42
    %s45 = sphi 0, %s44
    %s59 = sphi 0, %s45
    %s65 = sphi 0, %s67
    %s68 = sphi 0, %s65
    %s69 = sphi 0, %s68
    %s85 = sphi 0, %s69
  $region4: #{decoder_forward.7} parent=0 // loop_header_branch
    %11 = sbr.rel (%p9) target = $region8
  $region5: #{decoder_forward.7} parent=0 // loop_body
    %s13 = ssub.s32 %s8, 1
    %s14 = ssub.s32 %s8, 2
    %s15 = sadd.s32 %s8, 1
    %s16 = ssub.s32 %s8, %s15
    %p17 = scmp.eq.s32.totalorder %s16, 0
    %s19 = sadd.s32 %s18, 1
    %s20 = scalar_select %p17, %s18, %s19
    %p23 = pneg %p17
    %p24 = scmp.eq.s32.totalorder %s8, 1
    %p25 = por %p23, %p24
    %p26 = scmp.ne.s32.totalorder %s18, %s21
    %p27 = scmp.eq.s32.totalorder %s8, 0
    %p28 = por %p26, %p27
    %p29 = scmp.ne.s32.totalorder %s18, %s21
    %p30 = scmp.eq.s32.totalorder %s13, 1
    %p31 = por %p29, %p30
    %p32 = scmp.ne.s32.totalorder %s21, %s22
    %p33 = scmp.eq.s32.totalorder %s13, 0
    %p34 = por %p32, %p33
    %p35 = scmp.ne.s32.totalorder %s21, %s22
    %p36 = scmp.eq.s32.totalorder %s14, 1
    %p37 = por %p35, %p36
    %p39 = scmp.ne.s32.totalorder %s22, %s38
    %p40 = scmp.eq.s32.totalorder %s14, 0
    %p41 = por %p39, %p40
    %s43 = sadd.s32 %s42, 1
    %p46 = scmp.eq.s32.totalorder %s8, 1
    %p47 = scmp.ne.s32.totalorder %s42, %s44
    %p48 = scmp.eq.s32.totalorder %s8, 0
    %p49 = por %p47, %p48
    %p50 = scmp.ne.s32.totalorder %s42, %s44
    %p51 = scmp.eq.s32.totalorder %s13, 1
    %p52 = por %p50, %p51
    %p53 = scmp.ne.s32.totalorder %s44, %s45
    %p54 = scmp.eq.s32.totalorder %s13, 0
    %p55 = por %p53, %p54
    %p56 = scmp.ne.s32.totalorder %s44, %s45
    %p57 = scmp.eq.s32.totalorder %s14, 1
    %p58 = por %p56, %p57
    %p60 = scmp.ne.s32.totalorder %s45, %s59
    %p61 = scmp.eq.s32.totalorder %s14, 0
    %p62 = por %p60, %p61
    %s63 = ssub.s32 %s8, %s15
    %p64 = scmp.eq.s32.totalorder %s63, 0
    %s66 = sadd.s32 %s65, 1
    %s67 = scalar_select %p64, %s65, %s66
    %p70 = pneg %p64
    %p71 = scmp.eq.s32.totalorder %s8, 1
    %p72 = por %p70, %p71
    %p73 = scmp.ne.s32.totalorder %s65, %s68
    %p74 = scmp.eq.s32.totalorder %s8, 0
    %p75 = por %p73, %p74
    %p76 = scmp.ne.s32.totalorder %s65, %s68
    %p77 = scmp.eq.s32.totalorder %s13, 1
    %p78 = por %p76, %p77
    %p79 = scmp.ne.s32.totalorder %s68, %s69
    %p80 = scmp.eq.s32.totalorder %s13, 0
    %p81 = por %p79, %p80
    %p82 = scmp.ne.s32.totalorder %s68, %s69
    %p83 = scmp.eq.s32.totalorder %s14, 1
    %p84 = por %p82, %p83
    %p86 = scmp.ne.s32.totalorder %s69, %s85
    %p87 = scmp.eq.s32.totalorder %s14, 0
    %p88 = por %p86, %p87
    %p89 = scmp.le.s32.totalorder 1, %s8
    %p90 = scmp.lt.s32.totalorder %s8, 3
    %p91 = pnand %p89, %p90
    %p92 = pneg %p91
    // Predicated region
    $region9: #{decoder_forward.7} parent=5 // pred_check
      _
    $region10: #{decoder_forward.7} parent=5 // pred_check_branch
      %94 = sbr.rel (%p91) target = $region12
    $region11: #{decoder_forward.7} parent=5 // pred_region
      %s95 = ssub.s32 %s8, 1
      // Predicated region
      $region13: #{decoder_forward.7} parent=11 // pred_check
        %p96 = pneg %p55
      $region14: #{decoder_forward.7} parent=11 // pred_check_branch
        %98 = sbr.rel (%p96) target = $region16
      $region15: #{decoder_forward.7} parent=11 // pred_region
        _
      $region16: #{decoder_forward.7} parent=11 // pred_fallthru
        _
    $region12: #{decoder_forward.7} parent=5 // pred_fallthru
      _
    %p99 = scmp.lt.s32.totalorder %s8, 2
    // Predicated region
    $region17: #{decoder_forward.7} parent=5 // pred_check
      %p100 = pneg %p99
    $region18: #{decoder_forward.7} parent=5 // pred_check_branch
      %102 = sbr.rel (%p100) target = $region20
    $region19: #{decoder_forward.7} parent=5 // pred_region
      // Predicated region
      $region21: #{decoder_forward.7} parent=19 // pred_check
        %p103 = pneg %p28
      $region22: #{decoder_forward.7} parent=19 // pred_check_branch
        %105 = sbr.rel (%p103) target = $region24
      $region23: #{decoder_forward.7} parent=19 // pred_region
        %p106 = scmp.lt.s32.totalorder %s8, 1
        %s107 = scalar_select %p106, %s8, 1
        %s108 = smul.addr %s107, 216
        %s109 = smul.addr %s108, 4
        %s110 = scalar_lea.vmem %s0, %s109
      $region24: #{decoder_forward.7} parent=19 // pred_fallthru
        _
    $region20: #{decoder_forward.7} parent=5 // pred_fallthru
      _
    %p111 = scmp.le.s32.totalorder 1, %s8
    %p112 = scmp.lt.s32.totalorder %s8, 3
    %p113 = pnand %p111, %p112
    %p114 = pneg %p113
    // Predicated region
    $region25: #{decoder_forward.7} parent=5 // pred_check
      _
    $region26: #{decoder_forward.7} parent=5 // pred_check_branch
      %116 = sbr.rel (%p113) target = $region28
    $region27: #{decoder_forward.7} parent=5 // pred_region
      %s117 = ssub.s32 %s8, 1
      %p118 = scmp.lt.s32.totalorder %s13, 1
      %s119 = scalar_select %p118, %s13, 1
      %s120 = smul.addr %s119, 216
      %s121 = smul.addr %s120, 4
      %s122 = scalar_lea.vmem %s0, %s121
      %p123 = pneg %p34
      %p124 = pneg %p31
      %p125 = pneg %p55
      %p126 = pneg %p52
      %p127 = pneg %p81
      %p128 = pneg %p78
      %p129 = scmp.lt.s32.totalorder %s13, 1
      %s130 = scalar_select %p129, %s13, 1
      %s131 = smul.addr %s130, 4
      %s132 = smul.addr %s131, 4
      %s133 = scalar_lea.vmem %s2, %s132
      %p134 = scmp.lt.s32.totalorder %s13, 1
      %s135 = scalar_select %p134, %s13, 1
      %s136 = smul.addr %s135, 216
      %s137 = smul.addr %s136, 4
      %s138 = scalar_lea.vmem %s0, %s137
      %p139 = scmp.lt.s32.totalorder %s13, 1
      %s140 = scalar_select %p139, %s13, 1
      %s141 = smul.addr %s140, 4
      %s142 = smul.addr %s141, 4
      %s143 = scalar_lea.vmem %s2, %s142
      %v145 = vld [vmem:[%s1] sm:$0xff]
      %v146 = vld [vmem:[%s1 + $0x8] sm:$0xff]
      %v147 = vld [vmem:[%s138] sm:$0xff]
      %v148 = vld [vmem:[%s138 + $0x8] sm:$0xff]
      %v149 = vld [vmem:[%s138 + $0x10] sm:$0xff]
      %v150 = vld [vmem:[%s138 + $0x18] sm:$0xff]
      %v151 = vld [vmem:[%s138 + $0x20] sm:$0xff]
      %v152 = vld [vmem:[%s138 + $0x28] sm:$0xff]
      %v153 = vld [vmem:[%s138 + $0x30] sm:$0xff]
      %v154 = vld [vmem:[%s138 + $0x38] sm:$0xff]
      %v155 = vld [vmem:[%s138 + $0x40] sm:$0xff]
      %v156 = vld [vmem:[%s138 + $0x48] sm:$0xff]
      %v157 = vld [vmem:[%s138 + $0x50] sm:$0xff]
      %v158 = vld [vmem:[%s138 + $0x58] sm:$0xff]
      %v159 = vld [vmem:[%s138 + $0x60] sm:$0xff]
      %v160 = vld [vmem:[%s138 + $0x68] sm:$0xff]
      %v161 = vld [vmem:[%s138 + $0x70] sm:$0xff]
      %v162 = vld [vmem:[%s138 + $0x78] sm:$0xff]
      %v163 = vld [vmem:[%s138 + $0x80] sm:$0xff]
      %v164 = vld [vmem:[%s138 + $0x88] sm:$0xff]
      %v165 = vld [vmem:[%s138 + $0x90] sm:$0xff]
      %v166 = vld [vmem:[%s138 + $0x98] sm:$0xff]
      %v167 = vld [vmem:[%s138 + $0xa0] sm:$0xff]
      %v168 = vld [vmem:[%s138 + $0xa8] sm:$0xff]
      %v169 = vld [vmem:[%s138 + $0xb0] sm:$0xff]
      %v170 = vld [vmem:[%s138 + $0xb8] sm:$0xff]
      %v171 = vld [vmem:[%s138 + $0xc0] sm:$0xff]
      %v172 = vld [vmem:[%s138 + $0xc8] sm:$0xff]
      %v173 = vld [vmem:[%s138 + $0xd0] sm:$0xff]
      %v174 = vld [vmem:[%s138 + $0xd8] sm:$0xff]
      %v175 = vld [vmem:[%s138 + $0xe0] sm:$0xff]
      %v176 = vld [vmem:[%s138 + $0xe8] sm:$0xff]
      %v177 = vld [vmem:[%s138 + $0xf0] sm:$0xff]
      %v178 = vld [vmem:[%s138 + $0xf8] sm:$0xff]
      %v179 = vld [vmem:[%s138 + $0x100] sm:$0xff]
      %v180 = vld [vmem:[%s138 + $0x108] sm:$0xff]
      %v181 = vld [vmem:[%s138 + $0x110] sm:$0xff]
      %v182 = vld [vmem:[%s138 + $0x118] sm:$0xff]
      %v183 = vld [vmem:[%s138 + $0x120] sm:$0xff]
      %v184 = vld [vmem:[%s138 + $0x128] sm:$0xff]
      %v185 = vld [vmem:[%s138 + $0x130] sm:$0xff]
      %v186 = vld [vmem:[%s138 + $0x138] sm:$0xff]
      %v187 = vld [vmem:[%s138 + $0x140] sm:$0xff]
      %v188 = vld [vmem:[%s138 + $0x148] sm:$0xff]
      %v189 = vld [vmem:[%s138 + $0x150] sm:$0xff]
      %v190 = vld [vmem:[%s138 + $0x158] sm:$0xff]
      %v191 = vld [vmem:[%s138 + $0x160] sm:$0xff]
      %v192 = vld [vmem:[%s138 + $0x168] sm:$0xff]
      %v193 = vld [vmem:[%s138 + $0x170] sm:$0xff]
      %v194 = vld [vmem:[%s138 + $0x178] sm:$0xff]
      %v195 = vld [vmem:[%s138 + $0x180] sm:$0xff]
      %v196 = vld [vmem:[%s138 + $0x188] sm:$0xff]
      %v197 = vld [vmem:[%s138 + $0x190] sm:$0xff]
      %v198 = vld [vmem:[%s138 + $0x198] sm:$0xff]
      %v199 = vld [vmem:[%s138 + $0x1a0] sm:$0xff]
      %v200 = vld [vmem:[%s138 + $0x1a8] sm:$0xff]
      %v201 = vld [vmem:[%s138 + $0x1b0] sm:$0xff]
      %v202 = vld [vmem:[%s138 + $0x1b8] sm:$0xff]
      %v203 = vld [vmem:[%s138 + $0x1c0] sm:$0xff]
      %v204 = vld [vmem:[%s138 + $0x1c8] sm:$0xff]
      %v205 = vld [vmem:[%s138 + $0x1d0] sm:$0xff]
      %v206 = vld [vmem:[%s138 + $0x1d8] sm:$0xff]
      %v207 = vld [vmem:[%s138 + $0x1e0] sm:$0xff]
      %v208 = vld [vmem:[%s138 + $0x1e8] sm:$0xff]
      %v209 = vld [vmem:[%s138 + $0x1f0] sm:$0xff]
      %v210 = vld [vmem:[%s138 + $0x1f8] sm:$0xff]
      %v211 = vld [vmem:[%s138 + $0x200] sm:$0xff]
      %v212 = vld [vmem:[%s138 + $0x208] sm:$0xff]
      %v213 = vld [vmem:[%s138 + $0x210] sm:$0xff]
      %v214 = vld [vmem:[%s138 + $0x218] sm:$0xff]
      %v215 = vld [vmem:[%s138 + $0x220] sm:$0xff]
      %v216 = vld [vmem:[%s138 + $0x228] sm:$0xff]
      %v217 = vld [vmem:[%s138 + $0x230] sm:$0xff]
      %v218 = vld [vmem:[%s138 + $0x238] sm:$0xff]
      %v219 = vld [vmem:[%s138 + $0x240] sm:$0xff]
      %v220 = vld [vmem:[%s138 + $0x248] sm:$0xff]
      %v221 = vld [vmem:[%s138 + $0x250] sm:$0xff]
      %v222 = vld [vmem:[%s138 + $0x258] sm:$0xff]
      %v223 = vld [vmem:[%s138 + $0x260] sm:$0xff]
      %v224 = vld [vmem:[%s138 + $0x268] sm:$0xff]
      %v225 = vld [vmem:[%s138 + $0x270] sm:$0xff]
      %v226 = vld [vmem:[%s138 + $0x278] sm:$0xff]
      %v227 = vld [vmem:[%s138 + $0x280] sm:$0xff]
      %v228 = vld [vmem:[%s138 + $0x288] sm:$0xff]
      %v229 = vld [vmem:[%s138 + $0x290] sm:$0xff]
      %v230 = vld [vmem:[%s138 + $0x298] sm:$0xff]
      %v231 = vld [vmem:[%s138 + $0x2a0] sm:$0xff]
      %v232 = vld [vmem:[%s138 + $0x2a8] sm:$0xff]
      %v233 = vld [vmem:[%s138 + $0x2b0] sm:$0xff]
      %v234 = vld [vmem:[%s138 + $0x2b8] sm:$0xff]
      %v235 = vld [vmem:[%s138 + $0x2c0] sm:$0xff]
      %v236 = vld [vmem:[%s138 + $0x2c8] sm:$0xff]
      %v237 = vld [vmem:[%s138 + $0x2d0] sm:$0xff]
      %v238 = vld [vmem:[%s138 + $0x2d8] sm:$0xff]
      %v239 = vld [vmem:[%s138 + $0x2e0] sm:$0xff]
      %v240 = vld [vmem:[%s138 + $0x2e8] sm:$0xff]
      %v241 = vld [vmem:[%s138 + $0x2f0] sm:$0xff]
      %v242 = vld [vmem:[%s138 + $0x2f8] sm:$0xff]
      %v243 = vld [vmem:[%s138 + $0x300] sm:$0xff]
      %v244 = vld [vmem:[%s138 + $0x308] sm:$0xff]
      %v245 = vld [vmem:[%s138 + $0x310] sm:$0xff]
      %v246 = vld [vmem:[%s138 + $0x318] sm:$0xff]
      %v247 = vld [vmem:[%s138 + $0x320] sm:$0xff]
      %v248 = vld [vmem:[%s138 + $0x328] sm:$0xff]
      %v249 = vld [vmem:[%s138 + $0x330] sm:$0xff]
      %v250 = vld [vmem:[%s138 + $0x338] sm:$0xff]
      %v251 = vld [vmem:[%s138 + $0x340] sm:$0xff]
      %v252 = vld [vmem:[%s138 + $0x348] sm:$0xff]
      %v253 = vld [vmem:[%s138 + $0x350] sm:$0xff]
      %v254 = vld [vmem:[%s138 + $0x358] sm:$0xff]
      %v257 = vunpack.c.l.b16 %v145
      %v258 = vunpack.c.h.b16 %v145
      %v259 = vunpack.c.l.b16 %v146
      %v260 = vunpack.c.h.b16 %v146
      %v261 = vpack.c.b16 %v257, %v257
      %v262 = vpack.c.b16 %v258, %v258
      %v263 = vpack.c.b16 %v259, %v259
      %v264 = vpack.c.b16 %v260, %v260
      %v376 = vunpack.c.l.b16 %v147
      %v377 = vunpack.c.h.b16 %v147
      %v378 = vunpack.c.l.b16 %v148
      %v379 = vunpack.c.h.b16 %v148
      %v380 = vunpack.c.l.b16 %v149
      %v381 = vunpack.c.h.b16 %v149
      %v382 = vunpack.c.l.b16 %v150
      %v383 = vunpack.c.h.b16 %v150
      %v384 = vunpack.c.l.b16 %v151
      %v385 = vunpack.c.h.b16 %v151
      %v386 = vunpack.c.l.b16 %v152
      %v387 = vunpack.c.h.b16 %v152
      %v388 = vunpack.c.l.b16 %v153
      %v389 = vunpack.c.h.b16 %v153
      %v390 = vunpack.c.l.b16 %v154
      %v391 = vunpack.c.h.b16 %v154
      %v392 = vunpack.c.l.b16 %v155
      %v393 = vunpack.c.h.b16 %v155
      %v394 = vunpack.c.l.b16 %v156
      %v395 = vunpack.c.h.b16 %v156
      %v396 = vunpack.c.l.b16 %v157
      %v397 = vunpack.c.h.b16 %v157
      %v398 = vunpack.c.l.b16 %v158
      %v399 = vunpack.c.h.b16 %v158
      %v400 = vunpack.c.l.b16 %v159
      %v401 = vunpack.c.h.b16 %v159
      %v402 = vunpack.c.l.b16 %v160
      %v403 = vunpack.c.h.b16 %v160
      %v404 = vunpack.c.l.b16 %v161
      %v405 = vunpack.c.h.b16 %v161
      %v406 = vunpack.c.l.b16 %v162
      %v407 = vunpack.c.h.b16 %v162
      %v408 = vunpack.c.l.b16 %v163
      %v409 = vunpack.c.h.b16 %v163
      %v410 = vunpack.c.l.b16 %v164
      %v411 = vunpack.c.h.b16 %v164
      %v412 = vunpack.c.l.b16 %v165
      %v413 = vunpack.c.h.b16 %v165
      %v414 = vunpack.c.l.b16 %v166
      %v415 = vunpack.c.h.b16 %v166
      %v416 = vunpack.c.l.b16 %v167
      %v417 = vunpack.c.h.b16 %v167
      %v418 = vunpack.c.l.b16 %v168
      %v419 = vunpack.c.h.b16 %v168
      %v420 = vunpack.c.l.b16 %v169
      %v421 = vunpack.c.h.b16 %v169
      %v422 = vunpack.c.l.b16 %v170
      %v423 = vunpack.c.h.b16 %v170
      %v424 = vunpack.c.l.b16 %v171
      %v425 = vunpack.c.h.b16 %v171
      %v426 = vunpack.c.l.b16 %v172
      %v427 = vunpack.c.h.b16 %v172
      %v428 = vunpack.c.l.b16 %v173
      %v429 = vunpack.c.h.b16 %v173
      %v430 = vunpack.c.l.b16 %v174
      %v431 = vunpack.c.h.b16 %v174
      %v432 = vunpack.c.l.b16 %v175
      %v433 = vunpack.c.h.b16 %v175
      %v434 = vunpack.c.l.b16 %v176
      %v435 = vunpack.c.h.b16 %v176
      %v436 = vunpack.c.l.b16 %v177
      %v437 = vunpack.c.h.b16 %v177
      %v438 = vunpack.c.l.b16 %v178
      %v439 = vunpack.c.h.b16 %v178
      %v440 = vunpack.c.l.b16 %v179
      %v441 = vunpack.c.h.b16 %v179
      %v442 = vunpack.c.l.b16 %v180
      %v443 = vunpack.c.h.b16 %v180
      %v444 = vunpack.c.l.b16 %v181
      %v445 = vunpack.c.h.b16 %v181
      %v446 = vunpack.c.l.b16 %v182
      %v447 = vunpack.c.h.b16 %v182
      %v448 = vunpack.c.l.b16 %v183
      %v449 = vunpack.c.h.b16 %v183
      %v450 = vunpack.c.l.b16 %v184
      %v451 = vunpack.c.h.b16 %v184
      %v452 = vunpack.c.l.b16 %v185
      %v453 = vunpack.c.h.b16 %v185
      %v454 = vunpack.c.l.b16 %v186
      %v455 = vunpack.c.h.b16 %v186
      %v456 = vunpack.c.l.b16 %v187
      %v457 = vunpack.c.h.b16 %v187
      %v458 = vunpack.c.l.b16 %v188
      %v459 = vunpack.c.h.b16 %v188
      %v460 = vunpack.c.l.b16 %v189
      %v461 = vunpack.c.h.b16 %v189
      %v462 = vunpack.c.l.b16 %v190
      %v463 = vunpack.c.h.b16 %v190
      %v464 = vunpack.c.l.b16 %v191
      %v465 = vunpack.c.h.b16 %v191
      %v466 = vunpack.c.l.b16 %v192
      %v467 = vunpack.c.h.b16 %v192
      %v468 = vunpack.c.l.b16 %v193
      %v469 = vunpack.c.h.b16 %v193
      %v470 = vunpack.c.l.b16 %v194
      %v471 = vunpack.c.h.b16 %v194
      %v472 = vunpack.c.l.b16 %v195
      %v473 = vunpack.c.h.b16 %v195
      %v474 = vunpack.c.l.b16 %v196
      %v475 = vunpack.c.h.b16 %v196
      %v476 = vunpack.c.l.b16 %v197
      %v477 = vunpack.c.h.b16 %v197
      %v478 = vunpack.c.l.b16 %v198
      %v479 = vunpack.c.h.b16 %v198
      %v480 = vunpack.c.l.b16 %v199
      %v481 = vunpack.c.h.b16 %v199
      %v482 = vunpack.c.l.b16 %v200
      %v483 = vunpack.c.h.b16 %v200
      %v484 = vunpack.c.l.b16 %v201
      %v485 = vunpack.c.h.b16 %v201
      %v486 = vunpack.c.l.b16 %v202
      %v487 = vunpack.c.h.b16 %v202
      %v488 = vunpack.c.l.b16 %v203
      %v489 = vunpack.c.h.b16 %v203
      %v490 = vunpack.c.l.b16 %v204
      %v491 = vunpack.c.h.b16 %v204
      %v492 = vunpack.c.l.b16 %v205
      %v493 = vunpack.c.h.b16 %v205
      %v494 = vunpack.c.l.b16 %v206
      %v495 = vunpack.c.h.b16 %v206
      %v496 = vunpack.c.l.b16 %v207
      %v497 = vunpack.c.h.b16 %v207
      %v498 = vunpack.c.l.b16 %v208
      %v499 = vunpack.c.h.b16 %v208
      %v500 = vunpack.c.l.b16 %v209
      %v501 = vunpack.c.h.b16 %v209
      %v502 = vunpack.c.l.b16 %v210
      %v503 = vunpack.c.h.b16 %v210
      %v504 = vunpack.c.l.b16 %v211
      %v505 = vunpack.c.h.b16 %v211
      %v506 = vunpack.c.l.b16 %v212
      %v507 = vunpack.c.h.b16 %v212
      %v508 = vunpack.c.l.b16 %v213
      %v509 = vunpack.c.h.b16 %v213
      %v510 = vunpack.c.l.b16 %v214
      %v511 = vunpack.c.h.b16 %v214
      %v512 = vunpack.c.l.b16 %v215
      %v513 = vunpack.c.h.b16 %v215
      %v514 = vunpack.c.l.b16 %v216
      %v515 = vunpack.c.h.b16 %v216
      %v516 = vunpack.c.l.b16 %v217
      %v517 = vunpack.c.h.b16 %v217
      %v518 = vunpack.c.l.b16 %v218
      %v519 = vunpack.c.h.b16 %v218
      %v520 = vunpack.c.l.b16 %v219
      %v521 = vunpack.c.h.b16 %v219
      %v522 = vunpack.c.l.b16 %v220
      %v523 = vunpack.c.h.b16 %v220
      %v524 = vunpack.c.l.b16 %v221
      %v525 = vunpack.c.h.b16 %v221
      %v526 = vunpack.c.l.b16 %v222
      %v527 = vunpack.c.h.b16 %v222
      %v528 = vunpack.c.l.b16 %v223
      %v529 = vunpack.c.h.b16 %v223
      %v530 = vunpack.c.l.b16 %v224
      %v531 = vunpack.c.h.b16 %v224
      %v532 = vunpack.c.l.b16 %v225
      %v533 = vunpack.c.h.b16 %v225
      %v534 = vunpack.c.l.b16 %v226
      %v535 = vunpack.c.h.b16 %v226
      %v536 = vunpack.c.l.b16 %v227
      %v537 = vunpack.c.h.b16 %v227
      %v538 = vunpack.c.l.b16 %v228
      %v539 = vunpack.c.h.b16 %v228
      %v540 = vunpack.c.l.b16 %v229
      %v541 = vunpack.c.h.b16 %v229
      %v542 = vunpack.c.l.b16 %v230
      %v543 = vunpack.c.h.b16 %v230
      %v544 = vunpack.c.l.b16 %v231
      %v545 = vunpack.c.h.b16 %v231
      %v546 = vunpack.c.l.b16 %v232
      %v547 = vunpack.c.h.b16 %v232
      %v548 = vunpack.c.l.b16 %v233
      %v549 = vunpack.c.h.b16 %v233
      %v550 = vunpack.c.l.b16 %v234
      %v551 = vunpack.c.h.b16 %v234
      %v552 = vunpack.c.l.b16 %v235
      %v553 = vunpack.c.h.b16 %v235
      %v554 = vunpack.c.l.b16 %v236
      %v555 = vunpack.c.h.b16 %v236
      %v556 = vunpack.c.l.b16 %v237
      %v557 = vunpack.c.h.b16 %v237
      %v558 = vunpack.c.l.b16 %v238
      %v559 = vunpack.c.h.b16 %v238
      %v560 = vunpack.c.l.b16 %v239
      %v561 = vunpack.c.h.b16 %v239
      %v562 = vunpack.c.l.b16 %v240
      %v563 = vunpack.c.h.b16 %v240
      %v564 = vunpack.c.l.b16 %v241
      %v565 = vunpack.c.h.b16 %v241
      %v566 = vunpack.c.l.b16 %v242
      %v567 = vunpack.c.h.b16 %v242
      %v568 = vunpack.c.l.b16 %v243
      %v569 = vunpack.c.h.b16 %v243
      %v570 = vunpack.c.l.b16 %v244
      %v571 = vunpack.c.h.b16 %v244
      %v572 = vunpack.c.l.b16 %v245
      %v573 = vunpack.c.h.b16 %v245
      %v574 = vunpack.c.l.b16 %v246
      %v575 = vunpack.c.h.b16 %v246
      %v576 = vunpack.c.l.b16 %v247
      %v577 = vunpack.c.h.b16 %v247
      %v578 = vunpack.c.l.b16 %v248
      %v579 = vunpack.c.h.b16 %v248
      %v580 = vunpack.c.l.b16 %v249
      %v581 = vunpack.c.h.b16 %v249
      %v582 = vunpack.c.l.b16 %v250
      %v583 = vunpack.c.h.b16 %v250
      %v584 = vunpack.c.l.b16 %v251
      %v585 = vunpack.c.h.b16 %v251
      %v586 = vunpack.c.l.b16 %v252
      %v587 = vunpack.c.h.b16 %v252
      %v588 = vunpack.c.l.b16 %v253
      %v589 = vunpack.c.h.b16 %v253
      %v590 = vunpack.c.l.b16 %v254
      %v591 = vunpack.c.h.b16 %v254
      %v592 = vpack.c.b16 %v380, %v376
      %v593 = vpack.c.b16 %v381, %v377
      %v594 = vpack.c.b16 %v382, %v378
      %v595 = vpack.c.b16 %v383, %v379
      %v596 = vpack.c.b16 %v388, %v384
      %v597 = vpack.c.b16 %v389, %v385
      %v598 = vpack.c.b16 %v390, %v386
      %v599 = vpack.c.b16 %v391, %v387
      %v600 = vpack.c.b16 %v396, %v392
      %v601 = vpack.c.b16 %v397, %v393
      %v602 = vpack.c.b16 %v398, %v394
      %v603 = vpack.c.b16 %v399, %v395
      %v604 = vpack.c.b16 %v404, %v400
      %v605 = vpack.c.b16 %v405, %v401
      %v606 = vpack.c.b16 %v406, %v402
      %v607 = vpack.c.b16 %v407, %v403
      %v608 = vpack.c.b16 %v412, %v408
      %v609 = vpack.c.b16 %v413, %v409
      %v610 = vpack.c.b16 %v414, %v410
      %v611 = vpack.c.b16 %v415, %v411
      %v612 = vpack.c.b16 %v420, %v416
      %v613 = vpack.c.b16 %v421, %v417
      %v614 = vpack.c.b16 %v422, %v418
      %v615 = vpack.c.b16 %v423, %v419
      %v616 = vpack.c.b16 %v428, %v424
      %v617 = vpack.c.b16 %v429, %v425
      %v618 = vpack.c.b16 %v430, %v426
      %v619 = vpack.c.b16 %v431, %v427
      %v620 = vpack.c.b16 %v436, %v432
      %v621 = vpack.c.b16 %v437, %v433
      %v622 = vpack.c.b16 %v438, %v434
      %v623 = vpack.c.b16 %v439, %v435
      %v624 = vpack.c.b16 %v444, %v440
      %v625 = vpack.c.b16 %v445, %v441
      %v626 = vpack.c.b16 %v446, %v442
      %v627 = vpack.c.b16 %v447, %v443
      %v628 = vpack.c.b16 %v452, %v448
      %v629 = vpack.c.b16 %v453, %v449
      %v630 = vpack.c.b16 %v454, %v450
      %v631 = vpack.c.b16 %v455, %v451
      %v632 = vpack.c.b16 %v460, %v456
      %v633 = vpack.c.b16 %v461, %v457
      %v634 = vpack.c.b16 %v462, %v458
      %v635 = vpack.c.b16 %v463, %v459
      %v636 = vpack.c.b16 %v468, %v464
      %v637 = vpack.c.b16 %v469, %v465
      %v638 = vpack.c.b16 %v470, %v466
      %v639 = vpack.c.b16 %v471, %v467
      %v640 = vpack.c.b16 %v476, %v472
      %v641 = vpack.c.b16 %v477, %v473
      %v642 = vpack.c.b16 %v478, %v474
      %v643 = vpack.c.b16 %v479, %v475
      %v644 = vpack.c.b16 %v484, %v480
      %v645 = vpack.c.b16 %v485, %v481
      %v646 = vpack.c.b16 %v486, %v482
      %v647 = vpack.c.b16 %v487, %v483
      %v648 = vpack.c.b16 %v492, %v488
      %v649 = vpack.c.b16 %v493, %v489
      %v650 = vpack.c.b16 %v494, %v490
      %v651 = vpack.c.b16 %v495, %v491
      %v652 = vpack.c.b16 %v500, %v496
      %v653 = vpack.c.b16 %v501, %v497
      %v654 = vpack.c.b16 %v502, %v498
      %v655 = vpack.c.b16 %v503, %v499
      %v656 = vpack.c.b16 %v508, %v504
      %v657 = vpack.c.b16 %v509, %v505
      %v658 = vpack.c.b16 %v510, %v506
      %v659 = vpack.c.b16 %v511, %v507
      %v660 = vpack.c.b16 %v516, %v512
      %v661 = vpack.c.b16 %v517, %v513
      %v662 = vpack.c.b16 %v518, %v514
      %v663 = vpack.c.b16 %v519, %v515
      %v664 = vpack.c.b16 %v524, %v520
      %v665 = vpack.c.b16 %v525, %v521
      %v666 = vpack.c.b16 %v526, %v522
      %v667 = vpack.c.b16 %v527, %v523
      %v668 = vpack.c.b16 %v532, %v528
      %v669 = vpack.c.b16 %v533, %v529
      %v670 = vpack.c.b16 %v534, %v530
      %v671 = vpack.c.b16 %v535, %v531
      %v672 = vpack.c.b16 %v540, %v536
      %v673 = vpack.c.b16 %v541, %v537
      %v674 = vpack.c.b16 %v542, %v538
      %v675 = vpack.c.b16 %v543, %v539
      %v676 = vpack.c.b16 %v548, %v544
      %v677 = vpack.c.b16 %v549, %v545
      %v678 = vpack.c.b16 %v550, %v546
      %v679 = vpack.c.b16 %v551, %v547
      %v680 = vpack.c.b16 %v556, %v552
      %v681 = vpack.c.b16 %v557, %v553
      %v682 = vpack.c.b16 %v558, %v554
      %v683 = vpack.c.b16 %v559, %v555
      %v684 = vpack.c.b16 %v564, %v560
      %v685 = vpack.c.b16 %v565, %v561
      %v686 = vpack.c.b16 %v566, %v562
      %v687 = vpack.c.b16 %v567, %v563
      %v688 = vpack.c.b16 %v572, %v568
      %v689 = vpack.c.b16 %v573, %v569
      %v690 = vpack.c.b16 %v574, %v570
      %v691 = vpack.c.b16 %v575, %v571
      %v692 = vpack.c.b16 %v580, %v576
      %v693 = vpack.c.b16 %v581, %v577
      %v694 = vpack.c.b16 %v582, %v578
      %v695 = vpack.c.b16 %v583, %v579
      %v696 = vpack.c.b16 %v588, %v584
      %v697 = vpack.c.b16 %v589, %v585
      %v698 = vpack.c.b16 %v590, %v586
      %v699 = vpack.c.b16 %v591, %v587
      %vm808 = vcmask 392192
      %v810 = vsel %vm808, %v264, 0
      %812 = vmatprep.subr.bf16.mxu0 %v593
      %813 = vmatpush1.bf16.msra.mxu0 %v592
      %814 = vmatprep.subr.bf16.mxu0 %v597
      %815 = vmatpush1.bf16.msra.mxu0 %v596
      %816 = vmatprep.subr.bf16.mxu0 %v601
      %817 = vmatpush1.bf16.msra.mxu0 %v600
      %818 = vmatprep.subr.bf16.mxu0 %v605
      %819 = vmatpush1.bf16.msra.mxu0 %v604
      %820 = vmatprep.subr.bf16.mxu0 %v609
      %821 = vmatpush1.bf16.msra.mxu0 %v608
      %822 = vmatprep.subr.bf16.mxu0 %v613
      %823 = vmatpush1.bf16.msra.mxu0 %v612
      %824 = vmatprep.subr.bf16.mxu0 %v617
      %825 = vmatpush1.bf16.msra.mxu0 %v616
      %826 = vmatprep.subr.bf16.mxu0 %v621
      %827 = vmatpush1.bf16.msra.mxu0 %v620
      %828 = vmatprep.subr.bf16.mxu0 %v625
      %829 = vmatpush1.bf16.msra.mxu0 %v624
      %830 = vmatprep.subr.bf16.mxu0 %v629
      %831 = vmatpush1.bf16.msra.mxu0 %v628
      %832 = vmatprep.subr.bf16.mxu0 %v633
      %833 = vmatpush1.bf16.msra.mxu0 %v632
      %834 = vmatprep.subr.bf16.mxu0 %v637
      %835 = vmatpush1.bf16.msra.mxu0 %v636
      %836 = vmatprep.subr.bf16.mxu0 %v641
      %837 = vmatpush1.bf16.msra.mxu0 %v640
      %838 = vmatprep.subr.bf16.mxu0 %v645
      %839 = vmatpush1.bf16.msra.mxu0 %v644
      %840 = vmatprep.subr.bf16.mxu0 %v649
      %841 = vmatpush1.bf16.msra.mxu0 %v648
      %842 = vmatprep.subr.bf16.mxu0 %v653
      %843 = vmatpush1.bf16.msra.mxu0 %v652
      %844 = vmatprep.mubr.bf16.mxu0 %v262
      %845 = vmatmul.mubr.bf16.gmra.mrb[0].mxu0 %v261
      %v846 = vpop.f32.mrb[0].mxu0
      %v847 = vadd.f32 0.0, %v846
      %v848 = vpop.f32.mrb[0].mxu0
      %v849 = vadd.f32 0.0, %v848
      %v850 = vpop.f32.mrb[0].mxu0
      %v851 = vpop.f32.mrb[0].mxu0
      %852 = vdwg.mxu0
      %853 = vmatprep.subr.bf16.mxu0 %v657
      %854 = vmatpush1.bf16.msra.mxu0 %v656
      %855 = vmatprep.subr.bf16.mxu0 %v661
      %856 = vmatpush1.bf16.msra.mxu0 %v660
      %857 = vmatprep.subr.bf16.mxu0 %v665
      %858 = vmatpush1.bf16.msra.mxu0 %v664
      %859 = vmatprep.subr.bf16.mxu0 %v669
      %860 = vmatpush1.bf16.msra.mxu0 %v668
      %861 = vmatprep.subr.bf16.mxu0 %v673
      %862 = vmatpush1.bf16.msra.mxu0 %v672
      %863 = vmatprep.subr.bf16.mxu0 %v677
      %864 = vmatpush1.bf16.msra.mxu0 %v676
      %865 = vmatprep.subr.bf16.mxu0 %v681
      %866 = vmatpush1.bf16.msra.mxu0 %v680
      %867 = vmatprep.subr.bf16.mxu0 %v685
      %868 = vmatpush1.bf16.msra.mxu0 %v684
      %869 = vmatprep.subr.bf16.mxu0 %v689
      %870 = vmatpush1.bf16.msra.mxu0 %v688
      %871 = vmatprep.subr.bf16.mxu0 %v693
      %872 = vmatpush1.bf16.msra.mxu0 %v692
      %873 = vmatprep.subr.bf16.mxu0 %v697
      %874 = vmatpush1.bf16.msra.mxu0 %v696
      %875 = vmatprep.subr.bf16.mxu0 0
      %876 = vmatpush1.bf16.msra.mxu0 0
      %877 = vmatprep.subr.bf16.mxu0 0
      %878 = vmatpush1.bf16.msra.mxu0 0
      %879 = vmatprep.subr.bf16.mxu0 0
      %880 = vmatpush1.bf16.msra.mxu0 0
      %881 = vmatprep.subr.bf16.mxu0 0
      %882 = vmatpush1.bf16.msra.mxu0 0
      %883 = vmatprep.subr.bf16.mxu0 0
      %884 = vmatpush1.bf16.msra.mxu0 0
      %885 = vmatprep.mubr.bf16.mxu0 %v810
      %886 = vmatmul.mubr.bf16.gmra.mrb[0].mxu0 %v263
      %v887 = vpop.f32.mrb[0].mxu0
      %v888 = vadd.f32 %v847, %v887
      %v889 = vpop.f32.mrb[0].mxu0
      %v890 = vadd.f32 %v849, %v889
      %v891 = vpop.f32.mrb[0].mxu0
      %v892 = vpop.f32.mrb[0].mxu0
      %893 = vdwg.mxu0
      %894 = vmatprep.subr.bf16.mxu0 %v595
      %895 = vmatpush1.bf16.msra.mxu0 %v594
      %896 = vmatprep.subr.bf16.mxu0 %v599
      %897 = vmatpush1.bf16.msra.mxu0 %v598
      %898 = vmatprep.subr.bf16.mxu0 %v603
      %899 = vmatpush1.bf16.msra.mxu0 %v602
      %900 = vmatprep.subr.bf16.mxu0 %v607
      %901 = vmatpush1.bf16.msra.mxu0 %v606
      %902 = vmatprep.subr.bf16.mxu0 %v611
      %903 = vmatpush1.bf16.msra.mxu0 %v610
      %904 = vmatprep.subr.bf16.mxu0 %v615
      %905 = vmatpush1.bf16.msra.mxu0 %v614
      %906 = vmatprep.subr.bf16.mxu0 %v619
      %907 = vmatpush1.bf16.msra.mxu0 %v618
      %908 = vmatprep.subr.bf16.mxu0 %v623
      %909 = vmatpush1.bf16.msra.mxu0 %v622
      %910 = vmatprep.subr.bf16.mxu0 %v627
      %911 = vmatpush1.bf16.msra.mxu0 %v626
      %912 = vmatprep.subr.bf16.mxu0 %v631
      %913 = vmatpush1.bf16.msra.mxu0 %v630
      %914 = vmatprep.subr.bf16.mxu0 %v635
      %915 = vmatpush1.bf16.msra.mxu0 %v634
      %916 = vmatprep.subr.bf16.mxu0 %v639
      %917 = vmatpush1.bf16.msra.mxu0 %v638
      %918 = vmatprep.subr.bf16.mxu0 %v643
      %919 = vmatpush1.bf16.msra.mxu0 %v642
      %920 = vmatprep.subr.bf16.mxu0 %v647
      %921 = vmatpush1.bf16.msra.mxu0 %v646
      %922 = vmatprep.subr.bf16.mxu0 %v651
      %923 = vmatpush1.bf16.msra.mxu0 %v650
      %924 = vmatprep.subr.bf16.mxu0 %v655
      %925 = vmatpush1.bf16.msra.mxu0 %v654
      %926 = vmatprep.mubr.bf16.mxu0 %v262
      %927 = vmatmul.mubr.bf16.gmra.mrb[0].mxu0 %v261
      %v928 = vpop.f32.mrb[0].mxu0
      %v929 = vadd.f32 0.0, %v928
      %v930 = vpop.f32.mrb[0].mxu0
      %v931 = vadd.f32 0.0, %v930
      %v932 = vpop.f32.mrb[0].mxu0
      %v933 = vpop.f32.mrb[0].mxu0
      %934 = vdwg.mxu0
      %935 = vmatprep.subr.bf16.mxu0 %v659
      %936 = vmatpush1.bf16.msra.mxu0 %v658
      %937 = vmatprep.subr.bf16.mxu0 %v663
      %938 = vmatpush1.bf16.msra.mxu0 %v662
      %939 = vmatprep.subr.bf16.mxu0 %v667
      %940 = vmatpush1.bf16.msra.mxu0 %v666
      %941 = vmatprep.subr.bf16.mxu0 %v671
      %942 = vmatpush1.bf16.msra.mxu0 %v670
      %943 = vmatprep.subr.bf16.mxu0 %v675
      %944 = vmatpush1.bf16.msra.mxu0 %v674
      %945 = vmatprep.subr.bf16.mxu0 %v679
      %946 = vmatpush1.bf16.msra.mxu0 %v678
      %947 = vmatprep.subr.bf16.mxu0 %v683
      %948 = vmatpush1.bf16.msra.mxu0 %v682
      %949 = vmatprep.subr.bf16.mxu0 %v687
      %950 = vmatpush1.bf16.msra.mxu0 %v686
      %951 = vmatprep.subr.bf16.mxu0 %v691
      %952 = vmatpush1.bf16.msra.mxu0 %v690
      %953 = vmatprep.subr.bf16.mxu0 %v695
      %954 = vmatpush1.bf16.msra.mxu0 %v694
      %955 = vmatprep.subr.bf16.mxu0 %v699
      %956 = vmatpush1.bf16.msra.mxu0 %v698
      %957 = vmatprep.subr.bf16.mxu0 0
      %958 = vmatpush1.bf16.msra.mxu0 0
      %959 = vmatprep.subr.bf16.mxu0 0
      %960 = vmatpush1.bf16.msra.mxu0 0
      %961 = vmatprep.subr.bf16.mxu0 0
      %962 = vmatpush1.bf16.msra.mxu0 0
      %963 = vmatprep.subr.bf16.mxu0 0
      %964 = vmatpush1.bf16.msra.mxu0 0
      %965 = vmatprep.subr.bf16.mxu0 0
      %966 = vmatpush1.bf16.msra.mxu0 0
      %967 = vmatprep.mubr.bf16.mxu0 %v810
      %968 = vmatmul.mubr.bf16.gmra.mrb[0].mxu0 %v263
      %v969 = vpop.f32.mrb[0].mxu0
      %v970 = vadd.f32 %v929, %v969
      %v971 = vpop.f32.mrb[0].mxu0
      %v972 = vadd.f32 %v931, %v971
      %v973 = vpop.f32.mrb[0].mxu0
      %v974 = vpop.f32.mrb[0].mxu0
      %975 = vdwg.mxu0
      %v976 = vadd.f32 %v888, %v890
      %v977 = vadd.f32 %v976, %v970
      %v978 = vadd.f32 %v977, %v972
      %979 = vadd.xlane.f32.xlu0 %v978
      %v980 = vpop.xlane.xlu0 %979
      %v981 = vrcp.pop 512.0
      %v982 = vmul.f32 %v980, %v981
      %v983 = vsub.f32 %v888, %v982
      %v984 = vsub.f32 %v890, %v982
      %v985 = vsub.f32 %v970, %v982
      %v986 = vsub.f32 %v972, %v982
      %v987 = vmul.f32 %v983, %v983
      %v988 = vmul.f32 %v984, %v984
      %v989 = vmul.f32 %v985, %v985
      %v990 = vmul.f32 %v986, %v986
      %v991 = vadd.f32 %v987, %v988
      %v992 = vadd.f32 %v991, %v989
      %v993 = vadd.f32 %v992, %v990
      %994 = vadd.xlane.f32.xlu0 %v993
      %v995 = vpop.xlane.xlu0 %994
      %v996 = vmul.f32 %v995, %v981
      %v997 = vadd.f32 %v996, 1e-05
      %v998 = vrsqrt.pop %v997
      %v999 = vmul.f32 %v983, %v998
      %v1000 = vmul.f32 %v984, %v998
      %v1001 = vmul.f32 %v985, %v998
      %v1002 = vmul.f32 %v986, %v998
      %v1003 = vmax.f32 %v999, 0.0
      %v1004 = vmax.f32 %v1000, 0.0
      %v1005 = vmax.f32 %v1001, 0.0
      %v1006 = vmax.f32 %v1002, 0.0
      %v1007 = vpack.c.bf16 %v1003, %v1003
      %v1008 = vpack.c.bf16 %v1004, %v1004
      %v1009 = vpack.c.bf16 %v1005, %v1005
      %v1010 = vpack.c.bf16 %v1006, %v1006
      %v1015 = vunpack.c.l.b16 %v1007
      %v1016 = vunpack.c.l.b16 %v1008
      %v1017 = vunpack.c.l.b16 %v1009
      %v1018 = vunpack.c.l.b16 %v1010
      %v1019 = vpack.c.b16 %v1016, %v1015
      %v1020 = vpack.c.b16 %v1018, %v1017
      %1023 = vst [vmem:[%s143] sm:$0xff] %v1019
      %1024 = vst [vmem:[%s143 + $0x8] sm:$0xff] %v1020
      %p1025 = scmp.lt.s32.totalorder %s13, 1
      %s1026 = scalar_select %p1025, %s13, 1
      %s1027 = smul.addr %s1026, 4
      %s1028 = smul.addr %s1027, 4
      %s1029 = scalar_lea.vmem %s2, %s1028
      // Predicated region
      $region29: #{decoder_forward.7} parent=27 // pred_check
        %p1030 = pneg %p78
      $region30: #{decoder_forward.7} parent=27 // pred_check_branch
        %1032 = sbr.rel (%p1030) target = $region32
      $region31: #{decoder_forward.7} parent=27 // pred_region
        _
      $region32: #{decoder_forward.7} parent=27 // pred_fallthru
        _
    $region28: #{decoder_forward.7} parent=5 // pred_fallthru
      _
    %p1033 = scmp.le.s32.totalorder 2, %s8
    // Predicated region
    $region33: #{decoder_forward.7} parent=5 // pred_check
      %p1034 = pneg %p1033
    $region34: #{decoder_forward.7} parent=5 // pred_check_branch
      %1036 = sbr.rel (%p1034) target = $region36
    $region35: #{decoder_forward.7} parent=5 // pred_region
      %s1037 = ssub.s32 %s8, 2
      // Predicated region
      $region37: #{decoder_forward.7} parent=35 // pred_check
        %p1038 = pneg %p84
      $region38: #{decoder_forward.7} parent=35 // pred_check_branch
        %1040 = sbr.rel (%p1038) target = $region40
      $region39: #{decoder_forward.7} parent=35 // pred_region
        %p1041 = scmp.lt.s32.totalorder %s14, 1
        %s1042 = scalar_select %p1041, %s14, 1
        %s1043 = smul.addr %s1042, 4
        %s1044 = smul.addr %s1043, 4
        %s1045 = scalar_lea.vmem %s2, %s1044
      $region40: #{decoder_forward.7} parent=35 // pred_fallthru
        _
    $region36: #{decoder_forward.7} parent=5 // pred_fallthru
      _
  $region6: #{decoder_forward.7} parent=0 // loop_footer
    %s12 = sadd.s32 1, %s8
  $region7: #{decoder_forward.7} parent=0 // loop_footer_branch
    %7 = sbr.rel target = $region3
  $region8: #{decoder_forward.7} parent=0 // loop_exit
    _

// kernel: decoder_forward.9
$region0: #{decoder_forward.9}
  #allocation0 [shape = 'u32[]', space=smem, size = 0x4, offset = 0x4, fixed_abs, tag = 'smem constant byte address 0x4 - core index']
  #allocation1 [shape = 'u32[144,128]{1,0:T(1,128)}', space=vmem, size = 0x12000, scoped, tag = 'internal scratch']
  %s0 = inlined_call_operand.vmem [shape: bf16[2,8,512], index: 0, kind: input, shape index: {}]
  %s1 = inlined_call_operand.vmem [shape: bf16[108,8], index: 1, kind: input, shape index: {}]
  %s2 = inlined_call_operand.vmem [shape: f32[2,108,512], index: 2, kind: output, shape index: {}]
  %s3 = sld [smem:[#allocation0]]
  $region41: #{decoder_forward.9} parent=0
    _
  %s5 = ssub.s32 1, %s3
  %s6 = scalar_select 0, %s5, %s3
  loop: start=0, step=1, limit=4
  $region2: #{decoder_forward.9} parent=0 // loop_pre_header
    _
  $region3: #{decoder_forward.9} parent=0 // loop_header
    %s8 = sphi 0, %s12
    %p9 = scmp.ge.s32.totalorder %s8, 4
    %s18 = sphi 0, %s20
    %s21 = sphi 0, %s18
    %s22 = sphi 0, %s21
    %s38 = sphi 0, %s22
    %s42 = sphi 0, %s42
    %s44 = sphi 0, %s42
    %s45 = sphi 0, %s44
    %s59 = sphi 0, %s45
    %s65 = sphi 0, %s67
    %s68 = sphi 0, %s65
    %s69 = sphi 0, %s68
    %s85 = sphi 0, %s69
  $region4: #{decoder_forward.9} parent=0 // loop_header_branch
    %11 = sbr.rel (%p9) target = $region8
  $region5: #{decoder_forward.9} parent=0 // loop_body
    %s13 = ssub.s32 %s8, 1
    %s14 = ssub.s32 %s8, 2
    %s15 = sadd.s32 %s8, 1
    %s16 = ssub.s32 %s8, %s15
    %p17 = scmp.eq.s32.totalorder %s16, 0
    %s19 = sadd.s32 %s18, 1
    %s20 = scalar_select %p17, %s18, %s19
    %p23 = pneg %p17
    %p24 = scmp.eq.s32.totalorder %s8, 1
    %p25 = por %p23, %p24
    %p26 = scmp.ne.s32.totalorder %s18, %s21
    %p27 = scmp.eq.s32.totalorder %s8, 0
    %p28 = por %p26, %p27
    %p29 = scmp.ne.s32.totalorder %s18, %s21
    %p30 = scmp.eq.s32.totalorder %s13, 1
    %p31 = por %p29, %p30
    %p32 = scmp.ne.s32.totalorder %s21, %s22
    %p33 = scmp.eq.s32.totalorder %s13, 0
    %p34 = por %p32, %p33
    %p35 = scmp.ne.s32.totalorder %s21, %s22
    %p36 = scmp.eq.s32.totalorder %s14, 1
    %p37 = por %p35, %p36
    %p39 = scmp.ne.s32.totalorder %s22, %s38
    %p40 = scmp.eq.s32.totalorder %s14, 0
    %p41 = por %p39, %p40
    %s43 = sadd.s32 %s42, 1
    %p46 = scmp.eq.s32.totalorder %s8, 1
    %p47 = scmp.ne.s32.totalorder %s42, %s44
    %p48 = scmp.eq.s32.totalorder %s8, 0
    %p49 = por %p47, %p48
    %p50 = scmp.ne.s32.totalorder %s42, %s44
    %p51 = scmp.eq.s32.totalorder %s13, 1
    %p52 = por %p50, %p51
    %p53 = scmp.ne.s32.totalorder %s44, %s45
    %p54 = scmp.eq.s32.totalorder %s13, 0
    %p55 = por %p53, %p54
    %p56 = scmp.ne.s32.totalorder %s44, %s45
    %p57 = scmp.eq.s32.totalorder %s14, 1
    %p58 = por %p56, %p57
    %p60 = scmp.ne.s32.totalorder %s45, %s59
    %p61 = scmp.eq.s32.totalorder %s14, 0
    %p62 = por %p60, %p61
    %s63 = ssub.s32 %s8, %s15
    %p64 = scmp.eq.s32.totalorder %s63, 0
    %s66 = sadd.s32 %s65, 1
    %s67 = scalar_select %p64, %s65, %s66
    %p70 = pneg %p64
    %p71 = scmp.eq.s32.totalorder %s8, 1
    %p72 = por %p70, %p71
    %p73 = scmp.ne.s32.totalorder %s65, %s68
    %p74 = scmp.eq.s32.totalorder %s8, 0
    %p75 = por %p73, %p74
    %p76 = scmp.ne.s32.totalorder %s65, %s68
    %p77 = scmp.eq.s32.totalorder %s13, 1
    %p78 = por %p76, %p77
    %p79 = scmp.ne.s32.totalorder %s68, %s69
    %p80 = scmp.eq.s32.totalorder %s13, 0
    %p81 = por %p79, %p80
    %p82 = scmp.ne.s32.totalorder %s68, %s69
    %p83 = scmp.eq.s32.totalorder %s14, 1
    %p84 = por %p82, %p83
    %p86 = scmp.ne.s32.totalorder %s69, %s85
    %p87 = scmp.eq.s32.totalorder %s14, 0
    %p88 = por %p86, %p87
    %p89 = scmp.le.s32.totalorder 1, %s8
    %p90 = scmp.lt.s32.totalorder %s8, 3
    %p91 = pnand %p89, %p90
    %p92 = pneg %p91
    // Predicated region
    $region9: #{decoder_forward.9} parent=5 // pred_check
      _
    $region10: #{decoder_forward.9} parent=5 // pred_check_branch
      %94 = sbr.rel (%p91) target = $region12
    $region11: #{decoder_forward.9} parent=5 // pred_region
      %s95 = ssub.s32 %s8, 1
      // Predicated region
      $region13: #{decoder_forward.9} parent=11 // pred_check
        %p96 = pneg %p55
      $region14: #{decoder_forward.9} parent=11 // pred_check_branch
        %98 = sbr.rel (%p96) target = $region16
      $region15: #{decoder_forward.9} parent=11 // pred_region
        _
      $region16: #{decoder_forward.9} parent=11 // pred_fallthru
        _
    $region12: #{decoder_forward.9} parent=5 // pred_fallthru
      _
    %p99 = scmp.lt.s32.totalorder %s8, 2
    // Predicated region
    $region17: #{decoder_forward.9} parent=5 // pred_check
      %p100 = pneg %p99
    $region18: #{decoder_forward.9} parent=5 // pred_check_branch
      %102 = sbr.rel (%p100) target = $region20
    $region19: #{decoder_forward.9} parent=5 // pred_region
      // Predicated region
      $region21: #{decoder_forward.9} parent=19 // pred_check
        %p103 = pneg %p28
      $region22: #{decoder_forward.9} parent=19 // pred_check_branch
        %105 = sbr.rel (%p103) target = $region24
      $region23: #{decoder_forward.9} parent=19 // pred_region
        %p106 = scmp.lt.s32.totalorder %s8, 1
        %s107 = scalar_select %p106, %s8, 1
        %s108 = smul.addr %s107, 4
        %s109 = smul.addr %s108, 4
        %s110 = scalar_lea.vmem %s0, %s109
      $region24: #{decoder_forward.9} parent=19 // pred_fallthru
        _
    $region20: #{decoder_forward.9} parent=5 // pred_fallthru
      _
    %p111 = scmp.le.s32.totalorder 1, %s8
    %p112 = scmp.lt.s32.totalorder %s8, 3
    %p113 = pnand %p111, %p112
    %p114 = pneg %p113
    // Predicated region
    $region25: #{decoder_forward.9} parent=5 // pred_check
      _
    $region26: #{decoder_forward.9} parent=5 // pred_check_branch
      %116 = sbr.rel (%p113) target = $region28
    $region27: #{decoder_forward.9} parent=5 // pred_region
      %s117 = ssub.s32 %s8, 1
      %p118 = scmp.lt.s32.totalorder %s13, 1
      %s119 = scalar_select %p118, %s13, 1
      %s120 = smul.addr %s119, 4
      %s121 = smul.addr %s120, 4
      %s122 = scalar_lea.vmem %s0, %s121
      %p123 = pneg %p34
      %p124 = pneg %p31
      %p125 = pneg %p55
      %p126 = pneg %p52
      %p127 = pneg %p81
      %p128 = pneg %p78
      %p129 = scmp.lt.s32.totalorder %s13, 1
      %s130 = scalar_select %p129, %s13, 1
      %s131 = smul.addr %s130, 56
      %s132 = smul.addr %s131, 8
      %s133 = scalar_lea.vmem %s2, %s132
      %p134 = scmp.lt.s32.totalorder %s13, 1
      %s135 = scalar_select %p134, %s13, 1
      %s136 = smul.addr %s135, 4
      %s137 = smul.addr %s136, 4
      %s138 = scalar_lea.vmem %s0, %s137
      %p139 = scmp.lt.s32.totalorder %s13, 1
      %s140 = scalar_select %p139, %s13, 1
      %s141 = smul.addr %s140, 56
      %s142 = smul.addr %s141, 8
      %s143 = scalar_lea.vmem %s2, %s142
      %v145 = vld [vmem:[%s1] sm:$0xf]
      %v146 = vld [vmem:[%s1 + $0x4] sm:$0xf]
      %v147 = vld [vmem:[%s1 + $0x8] sm:$0xf]
      %v148 = vld [vmem:[%s1 + $0xc] sm:$0xf]
      %v149 = vld [vmem:[%s1 + $0x10] sm:$0xf]
      %v150 = vld [vmem:[%s1 + $0x14] sm:$0xf]
      %v151 = vld [vmem:[%s1 + $0x18] sm:$0xf]
      %v152 = vld [vmem:[%s1 + $0x1c] sm:$0xf]
      %v153 = vld [vmem:[%s1 + $0x20] sm:$0xf]
      %v154 = vld [vmem:[%s1 + $0x24] sm:$0xf]
      %v155 = vld [vmem:[%s1 + $0x28] sm:$0xf]
      %v156 = vld [vmem:[%s1 + $0x2c] sm:$0xf]
      %v157 = vld [vmem:[%s1 + $0x30] sm:$0xf]
      %v158 = vld [vmem:[%s1 + $0x34] sm:$0x3]
      %v159 = vld [vmem:[%s138] sm:$0xff]
      %v160 = vld [vmem:[%s138 + $0x8] sm:$0xff]
      %v175 = vunpack.c.l.b16 %v145
      %v176 = vunpack.c.l.b16 %v146
      %v177 = vunpack.c.l.b16 %v147
      %v178 = vunpack.c.l.b16 %v148
      %v179 = vunpack.c.l.b16 %v149
      %v180 = vunpack.c.l.b16 %v150
      %v181 = vunpack.c.l.b16 %v151
      %v182 = vunpack.c.l.b16 %v152
      %v183 = vunpack.c.l.b16 %v153
      %v184 = vunpack.c.l.b16 %v154
      %v185 = vunpack.c.l.b16 %v155
      %v186 = vunpack.c.l.b16 %v156
      %v187 = vunpack.c.l.b16 %v157
      %v188 = vunpack.c.l.b16 %v158
      %v189 = vpack.c.b16 %v176, %v175
      %v190 = vpack.c.b16 %v178, %v177
      %v191 = vpack.c.b16 %v180, %v179
      %v192 = vpack.c.b16 %v182, %v181
      %v193 = vpack.c.b16 %v184, %v183
      %v194 = vpack.c.b16 %v186, %v185
      %v195 = vpack.c.b16 %v188, %v187
      %v198 = vunpack.c.l.b16 %v159
      %v199 = vunpack.c.h.b16 %v159
      %v200 = vunpack.c.l.b16 %v160
      %v201 = vunpack.c.h.b16 %v160
      %v202 = vpack.c.b16 %v198, %v198
      %v203 = vpack.c.b16 %v199, %v199
      %v204 = vpack.c.b16 %v200, %v200
      %v205 = vpack.c.b16 %v201, %v201
      %vm206 = vcmask 64512
      %v208 = vsel %vm206, %v189, 0
      %v211 = vsel %vm206, %v190, 0
      %v214 = vsel %vm206, %v191, 0
      %v217 = vsel %vm206, %v192, 0
      %v220 = vsel %vm206, %v193, 0
      %v223 = vsel %vm206, %v194, 0
      %v226 = vsel %vm206, %v195, 0
      %vm228 = vcmask 1043456
      %v230 = vsel %vm228, %v202, 0
      %v233 = vsel %vm228, %v203, 0
      %v236 = vsel %vm228, %v204, 0
      %v239 = vsel %vm228, %v205, 0
      %241 = vmatprep.subr.bf16.mxu0 %v233
      %242 = vmatpush1.bf16.msra.mxu0 %v230
      %243 = vmatprep.subr.bf16.mxu0 0
      %244 = vmatpush1.bf16.msra.mxu0 0
      %245 = vmatprep.subr.bf16.mxu0 0
      %246 = vmatpush1.bf16.msra.mxu0 0
      %247 = vmatprep.subr.bf16.mxu0 0
      %248 = vmatpush1.bf16.msra.mxu0 0
      %249 = vmatprep.subr.bf16.mxu0 0
      %250 = vmatpush1.bf16.msra.mxu0 0
      %251 = vmatprep.subr.bf16.mxu0 0
      %252 = vmatpush1.bf16.msra.mxu0 0
      %253 = vmatprep.subr.bf16.mxu0 0
      %254 = vmatpush1.bf16.msra.mxu0 0
      %255 = vmatprep.subr.bf16.mxu0 0
      %256 = vmatpush1.bf16.msra.mxu0 0
      %257 = vmatprep.subr.bf16.mxu0 0
      %258 = vmatpush1.bf16.msra.mxu0 0
      %259 = vmatprep.subr.bf16.mxu0 0
      %260 = vmatpush1.bf16.msra.mxu0 0
      %261 = vmatprep.subr.bf16.mxu0 0
      %262 = vmatpush1.bf16.msra.mxu0 0
      %263 = vmatprep.subr.bf16.mxu0 0
      %264 = vmatpush1.bf16.msra.mxu0 0
      %265 = vmatprep.subr.bf16.mxu0 0
      %266 = vmatpush1.bf16.msra.mxu0 0
      %267 = vmatprep.subr.bf16.mxu0 0
      %268 = vmatpush1.bf16.msra.mxu0 0
      %269 = vmatprep.subr.bf16.mxu0 0
      %270 = vmatpush1.bf16.msra.mxu0 0
      %271 = vmatprep.subr.bf16.mxu0 0
      %272 = vmatpush1.bf16.msra.mxu0 0
      %273 = vmatprep.mubr.bf16.mxu0 0
      %274 = vmatmul.mubr.bf16.gmra.mrb[0].mxu0 %v208
      %v275 = vpop.f32.mrb[0].mxu0
      %v276 = vadd.f32 0.0, %v275
      %v277 = vpop.f32.mrb[0].mxu0
      %v278 = vadd.f32 0.0, %v277
      %v279 = vpop.f32.mrb[0].mxu0
      %v280 = vadd.f32 0.0, %v279
      %v281 = vpop.f32.mrb[0].mxu0
      %v282 = vadd.f32 0.0, %v281
      %283 = vmatprep.mubr.bf16.mxu0 0
      %284 = vmatmul.mubr.bf16.gmra.mrb[0].mxu0 %v211
      %v285 = vpop.f32.mrb[0].mxu0
      %v286 = vadd.f32 0.0, %v285
      %v287 = vpop.f32.mrb[0].mxu0
      %v288 = vadd.f32 0.0, %v287
      %v289 = vpop.f32.mrb[0].mxu0
      %v290 = vadd.f32 0.0, %v289
      %v291 = vpop.f32.mrb[0].mxu0
      %v292 = vadd.f32 0.0, %v291
      %293 = vmatprep.mubr.bf16.mxu0 0
      %294 = vmatmul.mubr.bf16.gmra.mrb[0].mxu0 %v214
      %v295 = vpop.f32.mrb[0].mxu0
      %v296 = vadd.f32 0.0, %v295
      %v297 = vpop.f32.mrb[0].mxu0
      %v298 = vadd.f32 0.0, %v297
      %v299 = vpop.f32.mrb[0].mxu0
      %v300 = vadd.f32 0.0, %v299
      %v301 = vpop.f32.mrb[0].mxu0
      %v302 = vadd.f32 0.0, %v301
      %303 = vmatprep.mubr.bf16.mxu0 0
      %304 = vmatmul.mubr.bf16.gmra.mrb[0].mxu0 %v217
      %v305 = vpop.f32.mrb[0].mxu0
      %v306 = vadd.f32 0.0, %v305
      %v307 = vpop.f32.mrb[0].mxu0
      %v308 = vadd.f32 0.0, %v307
      %v309 = vpop.f32.mrb[0].mxu0
      %v310 = vadd.f32 0.0, %v309
      %v311 = vpop.f32.mrb[0].mxu0
      %v312 = vadd.f32 0.0, %v311
      %313 = vmatprep.mubr.bf16.mxu0 0
      %314 = vmatmul.mubr.bf16.gmra.mrb[0].mxu0 %v220
      %v315 = vpop.f32.mrb[0].mxu0
      %v316 = vadd.f32 0.0, %v315
      %v317 = vpop.f32.mrb[0].mxu0
      %v318 = vadd.f32 0.0, %v317
      %v319 = vpop.f32.mrb[0].mxu0
      %v320 = vadd.f32 0.0, %v319
      %v321 = vpop.f32.mrb[0].mxu0
      %v322 = vadd.f32 0.0, %v321
      %323 = vmatprep.mubr.bf16.mxu0 0
      %324 = vmatmul.mubr.bf16.gmra.mrb[0].mxu0 %v223
      %v325 = vpop.f32.mrb[0].mxu0
      %v326 = vadd.f32 0.0, %v325
      %v327 = vpop.f32.mrb[0].mxu0
      %v328 = vadd.f32 0.0, %v327
      %v329 = vpop.f32.mrb[0].mxu0
      %v330 = vadd.f32 0.0, %v329
      %v331 = vpop.f32.mrb[0].mxu0
      %v332 = vadd.f32 0.0, %v331
      %333 = vmatprep.mubr.bf16.mxu0 0
      %334 = vmatmul.mubr.bf16.gmra.mrb[0].mxu0 %v226
      %v335 = vpop.f32.mrb[0].mxu0
      %v336 = vadd.f32 0.0, %v335
      %v337 = vpop.f32.mrb[0].mxu0
      %v338 = vadd.f32 0.0, %v337
      %v339 = vpop.f32.mrb[0].mxu0
      %v340 = vadd.f32 0.0, %v339
      %v341 = vpop.f32.mrb[0].mxu0
      %v342 = vadd.f32 0.0, %v341
      %343 = vdwg.mxu0
      %344 = vmatprep.subr.bf16.mxu0 %v239
      %345 = vmatpush1.bf16.msra.mxu0 %v236
      %346 = vmatprep.subr.bf16.mxu0 0
      %347 = vmatpush1.bf16.msra.mxu0 0
      %348 = vmatprep.subr.bf16.mxu0 0
      %349 = vmatpush1.bf16.msra.mxu0 0
      %350 = vmatprep.subr.bf16.mxu0 0
      %351 = vmatpush1.bf16.msra.mxu0 0
      %352 = vmatprep.subr.bf16.mxu0 0
      %353 = vmatpush1.bf16.msra.mxu0 0
      %354 = vmatprep.subr.bf16.mxu0 0
      %355 = vmatpush1.bf16.msra.mxu0 0
      %356 = vmatprep.subr.bf16.mxu0 0
      %357 = vmatpush1.bf16.msra.mxu0 0
      %358 = vmatprep.subr.bf16.mxu0 0
      %359 = vmatpush1.bf16.msra.mxu0 0
      %360 = vmatprep.subr.bf16.mxu0 0
      %361 = vmatpush1.bf16.msra.mxu0 0
      %362 = vmatprep.subr.bf16.mxu0 0
      %363 = vmatpush1.bf16.msra.mxu0 0
      %364 = vmatprep.subr.bf16.mxu0 0
      %365 = vmatpush1.bf16.msra.mxu0 0
      %366 = vmatprep.subr.bf16.mxu0 0
      %367 = vmatpush1.bf16.msra.mxu0 0
      %368 = vmatprep.subr.bf16.mxu0 0
      %369 = vmatpush1.bf16.msra.mxu0 0
      %370 = vmatprep.subr.bf16.mxu0 0
      %371 = vmatpush1.bf16.msra.mxu0 0
      %372 = vmatprep.subr.bf16.mxu0 0
      %373 = vmatpush1.bf16.msra.mxu0 0
      %374 = vmatprep.subr.bf16.mxu0 0
      %375 = vmatpush1.bf16.msra.mxu0 0
      %376 = vmatprep.mubr.bf16.mxu0 0
      %377 = vmatmul.mubr.bf16.gmra.mrb[0].mxu0 %v208
      %v378 = vpop.f32.mrb[0].mxu0
      %v379 = vadd.f32 0.0, %v378
      %v380 = vpop.f32.mrb[0].mxu0
      %v381 = vadd.f32 0.0, %v380
      %v382 = vpop.f32.mrb[0].mxu0
      %v383 = vadd.f32 0.0, %v382
      %v384 = vpop.f32.mrb[0].mxu0
      %v385 = vadd.f32 0.0, %v384
      %386 = vmatprep.mubr.bf16.mxu0 0
      %387 = vmatmul.mubr.bf16.gmra.mrb[0].mxu0 %v211
      %v388 = vpop.f32.mrb[0].mxu0
      %v389 = vadd.f32 0.0, %v388
      %v390 = vpop.f32.mrb[0].mxu0
      %v391 = vadd.f32 0.0, %v390
      %v392 = vpop.f32.mrb[0].mxu0
      %v393 = vadd.f32 0.0, %v392
      %v394 = vpop.f32.mrb[0].mxu0
      %v395 = vadd.f32 0.0, %v394
      %396 = vmatprep.mubr.bf16.mxu0 0
      %397 = vmatmul.mubr.bf16.gmra.mrb[0].mxu0 %v214
      %v398 = vpop.f32.mrb[0].mxu0
      %v399 = vadd.f32 0.0, %v398
      %v400 = vpop.f32.mrb[0].mxu0
      %v401 = vadd.f32 0.0, %v400
      %v402 = vpop.f32.mrb[0].mxu0
      %v403 = vadd.f32 0.0, %v402
      %v404 = vpop.f32.mrb[0].mxu0
      %v405 = vadd.f32 0.0, %v404
      %406 = vmatprep.mubr.bf16.mxu0 0
      %407 = vmatmul.mubr.bf16.gmra.mrb[0].mxu0 %v217
      %v408 = vpop.f32.mrb[0].mxu0
      %v409 = vadd.f32 0.0, %v408
      %v410 = vpop.f32.mrb[0].mxu0
      %v411 = vadd.f32 0.0, %v410
      %v412 = vpop.f32.mrb[0].mxu0
      %v413 = vadd.f32 0.0, %v412
      %v414 = vpop.f32.mrb[0].mxu0
      %v415 = vadd.f32 0.0, %v414
      %416 = vmatprep.mubr.bf16.mxu0 0
      %417 = vmatmul.mubr.bf16.gmra.mrb[0].mxu0 %v220
      %v418 = vpop.f32.mrb[0].mxu0
      %v419 = vadd.f32 0.0, %v418
      %v420 = vpop.f32.mrb[0].mxu0
      %v421 = vadd.f32 0.0, %v420
      %v422 = vpop.f32.mrb[0].mxu0
      %v423 = vadd.f32 0.0, %v422
      %v424 = vpop.f32.mrb[0].mxu0
      %v425 = vadd.f32 0.0, %v424
      %426 = vmatprep.mubr.bf16.mxu0 0
      %427 = vmatmul.mubr.bf16.gmra.mrb[0].mxu0 %v223
      %v428 = vpop.f32.mrb[0].mxu0
      %v429 = vadd.f32 0.0, %v428
      %v430 = vpop.f32.mrb[0].mxu0
      %v431 = vadd.f32 0.0, %v430
      %v432 = vpop.f32.mrb[0].mxu0
      %v433 = vadd.f32 0.0, %v432
      %v434 = vpop.f32.mrb[0].mxu0
      %v435 = vadd.f32 0.0, %v434
      %436 = vmatprep.mubr.bf16.mxu0 0
      %437 = vmatmul.mubr.bf16.gmra.mrb[0].mxu0 %v226
      %v438 = vpop.f32.mrb[0].mxu0
      %v439 = vadd.f32 0.0, %v438
      %v440 = vpop.f32.mrb[0].mxu0
      %v441 = vadd.f32 0.0, %v440
      %v442 = vpop.f32.mrb[0].mxu0
      %v443 = vadd.f32 0.0, %v442
      %v444 = vpop.f32.mrb[0].mxu0
      %v445 = vadd.f32 0.0, %v444
      %446 = vdwg.mxu0
      %447 = vst [vmem:[%s143] sm:$0xff] %v276
      %448 = vst [vmem:[%s143 + $0x8] sm:$0xff] %v278
      %449 = vst [vmem:[%s143 + $0x10] sm:$0xff] %v379
      %450 = vst [vmem:[%s143 + $0x18] sm:$0xff] %v381
      %451 = vst [vmem:[%s143 + $0x20] sm:$0xff] %v280
      %452 = vst [vmem:[%s143 + $0x28] sm:$0xff] %v282
      %453 = vst [vmem:[%s143 + $0x30] sm:$0xff] %v383
      %454 = vst [vmem:[%s143 + $0x38] sm:$0xff] %v385
      %455 = vst [vmem:[%s143 + $0x40] sm:$0xff] %v286
      %456 = vst [vmem:[%s143 + $0x48] sm:$0xff] %v288
      %457 = vst [vmem:[%s143 + $0x50] sm:$0xff] %v389
      %458 = vst [vmem:[%s143 + $0x58] sm:$0xff] %v391
      %459 = vst [vmem:[%s143 + $0x60] sm:$0xff] %v290
      %460 = vst [vmem:[%s143 + $0x68] sm:$0xff] %v292
      %461 = vst [vmem:[%s143 + $0x70] sm:$0xff] %v393
      %462 = vst [vmem:[%s143 + $0x78] sm:$0xff] %v395
      %463 = vst [vmem:[%s143 + $0x80] sm:$0xff] %v296
      %464 = vst [vmem:[%s143 + $0x88] sm:$0xff] %v298
      %465 = vst [vmem:[%s143 + $0x90] sm:$0xff] %v399
      %466 = vst [vmem:[%s143 + $0x98] sm:$0xff] %v401
      %467 = vst [vmem:[%s143 + $0xa0] sm:$0xff] %v300
      %468 = vst [vmem:[%s143 + $0xa8] sm:$0xff] %v302
      %469 = vst [vmem:[%s143 + $0xb0] sm:$0xff] %v403
      %470 = vst [vmem:[%s143 + $0xb8] sm:$0xff] %v405
      %471 = vst [vmem:[%s143 + $0xc0] sm:$0xff] %v306
      %472 = vst [vmem:[%s143 + $0xc8] sm:$0xff] %v308
      %473 = vst [vmem:[%s143 + $0xd0] sm:$0xff] %v409
      %474 = vst [vmem:[%s143 + $0xd8] sm:$0xff] %v411
      %475 = vst [vmem:[%s143 + $0xe0] sm:$0xff] %v310
      %476 = vst [vmem:[%s143 + $0xe8] sm:$0xff] %v312
      %477 = vst [vmem:[%s143 + $0xf0] sm:$0xff] %v413
      %478 = vst [vmem:[%s143 + $0xf8] sm:$0xff] %v415
      %479 = vst [vmem:[%s143 + $0x100] sm:$0xff] %v316
      %480 = vst [vmem:[%s143 + $0x108] sm:$0xff] %v318
      %481 = vst [vmem:[%s143 + $0x110] sm:$0xff] %v419
      %482 = vst [vmem:[%s143 + $0x118] sm:$0xff] %v421
      %483 = vst [vmem:[%s143 + $0x120] sm:$0xff] %v320
      %484 = vst [vmem:[%s143 + $0x128] sm:$0xff] %v322
      %485 = vst [vmem:[%s143 + $0x130] sm:$0xff] %v423
      %486 = vst [vmem:[%s143 + $0x138] sm:$0xff] %v425
      %487 = vst [vmem:[%s143 + $0x140] sm:$0xff] %v326
      %488 = vst [vmem:[%s143 + $0x148] sm:$0xff] %v328
      %489 = vst [vmem:[%s143 + $0x150] sm:$0xff] %v429
      %490 = vst [vmem:[%s143 + $0x158] sm:$0xff] %v431
      %491 = vst [vmem:[%s143 + $0x160] sm:$0xff] %v330
      %492 = vst [vmem:[%s143 + $0x168] sm:$0xff] %v332
      %493 = vst [vmem:[%s143 + $0x170] sm:$0xff] %v433
      %494 = vst [vmem:[%s143 + $0x178] sm:$0xff] %v435
      %495 = vst [vmem:[%s143 + $0x180] sm:$0xff] %v336
      %496 = vst [vmem:[%s143 + $0x188] sm:$0xff] %v338
      %497 = vst [vmem:[%s143 + $0x190] sm:$0xff] %v439
      %498 = vst [vmem:[%s143 + $0x198] sm:$0xff] %v441
      %499 = vst [vmem:[%s143 + $0x1a0] sm:$0xf] %v340
      %500 = vst [vmem:[%s143 + $0x1a8] sm:$0xf] %v342
      %501 = vst [vmem:[%s143 + $0x1b0] sm:$0xf] %v443
      %502 = vst [vmem:[%s143 + $0x1b8] sm:$0xf] %v445
      %p503 = scmp.lt.s32.totalorder %s13, 1
      %s504 = scalar_select %p503, %s13, 1
      %s505 = smul.addr %s504, 56
      %s506 = smul.addr %s505, 8
      %s507 = scalar_lea.vmem %s2, %s506
      // Predicated region
      $region29: #{decoder_forward.9} parent=27 // pred_check
        %p508 = pneg %p78
      $region30: #{decoder_forward.9} parent=27 // pred_check_branch
        %510 = sbr.rel (%p508) target = $region32
      $region31: #{decoder_forward.9} parent=27 // pred_region
        _
      $region32: #{decoder_forward.9} parent=27 // pred_fallthru
        _
    $region28: #{decoder_forward.9} parent=5 // pred_fallthru
      _
    %p511 = scmp.le.s32.totalorder 2, %s8
    // Predicated region
    $region33: #{decoder_forward.9} parent=5 // pred_check
      %p512 = pneg %p511
    $region34: #{decoder_forward.9} parent=5 // pred_check_branch
      %514 = sbr.rel (%p512) target = $region36
    $region35: #{decoder_forward.9} parent=5 // pred_region
      %s515 = ssub.s32 %s8, 2
      // Predicated region
      $region37: #{decoder_forward.9} parent=35 // pred_check
        %p516 = pneg %p84
      $region38: #{decoder_forward.9} parent=35 // pred_check_branch
        %518 = sbr.rel (%p516) target = $region40
      $region39: #{decoder_forward.9} parent=35 // pred_region
        %p519 = scmp.lt.s32.totalorder %s14, 1
        %s520 = scalar_select %p519, %s14, 1
        %s521 = smul.addr %s520, 56
        %s522 = smul.addr %s521, 8
        %s523 = scalar_lea.vmem %s2, %s522
      $region40: #{decoder_forward.9} parent=35 // pred_fallthru
        _
    $region36: #{decoder_forward.9} parent=5 // pred_fallthru
      _
  $region6: #{decoder_forward.9} parent=0 // loop_footer
    %s12 = sadd.s32 1, %s8
  $region7: #{decoder_forward.9} parent=0 // loop_footer_branch
    %7 = sbr.rel target = $region3
  $region8: #{decoder_forward.9} parent=0 // loop_exit
    _

// kernel: decoder_forward.8
$region0: #{decoder_forward.8}
  #allocation0 [shape = 'u32[]', space=smem, size = 0x4, offset = 0x4, fixed_abs, tag = 'smem constant byte address 0x4 - core index']
  #allocation1 [shape = 'u32[144,128]{1,0:T(1,128)}', space=vmem, size = 0x12000, scoped, tag = 'internal scratch']
  %s0 = inlined_call_operand.vmem [shape: bf16[2,216,512], index: 0, kind: input, shape index: {}]
  %s1 = inlined_call_operand.vmem [shape: bf16[8,216], index: 1, kind: input, shape index: {}]
  %s2 = inlined_call_operand.vmem [shape: bf16[2,8,512], index: 2, kind: output, shape index: {}]
  %s3 = sld [smem:[#allocation0]]
  $region41: #{decoder_forward.8} parent=0
    _
  %s5 = ssub.s32 1, %s3
  %s6 = scalar_select 0, %s5, %s3
  loop: start=0, step=1, limit=4
  $region2: #{decoder_forward.8} parent=0 // loop_pre_header
    _
  $region3: #{decoder_forward.8} parent=0 // loop_header
    %s8 = sphi 0, %s12
    %p9 = scmp.ge.s32.totalorder %s8, 4
    %s18 = sphi 0, %s20
    %s21 = sphi 0, %s18
    %s22 = sphi 0, %s21
    %s38 = sphi 0, %s22
    %s42 = sphi 0, %s42
    %s44 = sphi 0, %s42
    %s45 = sphi 0, %s44
    %s59 = sphi 0, %s45
    %s65 = sphi 0, %s67
    %s68 = sphi 0, %s65
    %s69 = sphi 0, %s68
    %s85 = sphi 0, %s69
  $region4: #{decoder_forward.8} parent=0 // loop_header_branch
    %11 = sbr.rel (%p9) target = $region8
  $region5: #{decoder_forward.8} parent=0 // loop_body
    %s13 = ssub.s32 %s8, 1
    %s14 = ssub.s32 %s8, 2
    %s15 = sadd.s32 %s8, 1
    %s16 = ssub.s32 %s8, %s15
    %p17 = scmp.eq.s32.totalorder %s16, 0
    %s19 = sadd.s32 %s18, 1
    %s20 = scalar_select %p17, %s18, %s19
    %p23 = pneg %p17
    %p24 = scmp.eq.s32.totalorder %s8, 1
    %p25 = por %p23, %p24
    %p26 = scmp.ne.s32.totalorder %s18, %s21
    %p27 = scmp.eq.s32.totalorder %s8, 0
    %p28 = por %p26, %p27
    %p29 = scmp.ne.s32.totalorder %s18, %s21
    %p30 = scmp.eq.s32.totalorder %s13, 1
    %p31 = por %p29, %p30
    %p32 = scmp.ne.s32.totalorder %s21, %s22
    %p33 = scmp.eq.s32.totalorder %s13, 0
    %p34 = por %p32, %p33
    %p35 = scmp.ne.s32.totalorder %s21, %s22
    %p36 = scmp.eq.s32.totalorder %s14, 1
    %p37 = por %p35, %p36
    %p39 = scmp.ne.s32.totalorder %s22, %s38
    %p40 = scmp.eq.s32.totalorder %s14, 0
    %p41 = por %p39, %p40
    %s43 = sadd.s32 %s42, 1
    %p46 = scmp.eq.s32.totalorder %s8, 1
    %p47 = scmp.ne.s32.totalorder %s42, %s44
    %p48 = scmp.eq.s32.totalorder %s8, 0
    %p49 = por %p47, %p48
    %p50 = scmp.ne.s32.totalorder %s42, %s44
    %p51 = scmp.eq.s32.totalorder %s13, 1
    %p52 = por %p50, %p51
    %p53 = scmp.ne.s32.totalorder %s44, %s45
    %p54 = scmp.eq.s32.totalorder %s13, 0
    %p55 = por %p53, %p54
    %p56 = scmp.ne.s32.totalorder %s44, %s45
    %p57 = scmp.eq.s32.totalorder %s14, 1
    %p58 = por %p56, %p57
    %p60 = scmp.ne.s32.totalorder %s45, %s59
    %p61 = scmp.eq.s32.totalorder %s14, 0
    %p62 = por %p60, %p61
    %s63 = ssub.s32 %s8, %s15
    %p64 = scmp.eq.s32.totalorder %s63, 0
    %s66 = sadd.s32 %s65, 1
    %s67 = scalar_select %p64, %s65, %s66
    %p70 = pneg %p64
    %p71 = scmp.eq.s32.totalorder %s8, 1
    %p72 = por %p70, %p71
    %p73 = scmp.ne.s32.totalorder %s65, %s68
    %p74 = scmp.eq.s32.totalorder %s8, 0
    %p75 = por %p73, %p74
    %p76 = scmp.ne.s32.totalorder %s65, %s68
    %p77 = scmp.eq.s32.totalorder %s13, 1
    %p78 = por %p76, %p77
    %p79 = scmp.ne.s32.totalorder %s68, %s69
    %p80 = scmp.eq.s32.totalorder %s13, 0
    %p81 = por %p79, %p80
    %p82 = scmp.ne.s32.totalorder %s68, %s69
    %p83 = scmp.eq.s32.totalorder %s14, 1
    %p84 = por %p82, %p83
    %p86 = scmp.ne.s32.totalorder %s69, %s85
    %p87 = scmp.eq.s32.totalorder %s14, 0
    %p88 = por %p86, %p87
    %p89 = scmp.le.s32.totalorder 1, %s8
    %p90 = scmp.lt.s32.totalorder %s8, 3
    %p91 = pnand %p89, %p90
    %p92 = pneg %p91
    // Predicated region
    $region9: #{decoder_forward.8} parent=5 // pred_check
      _
    $region10: #{decoder_forward.8} parent=5 // pred_check_branch
      %94 = sbr.rel (%p91) target = $region12
    $region11: #{decoder_forward.8} parent=5 // pred_region
      %s95 = ssub.s32 %s8, 1
      // Predicated region
      $region13: #{decoder_forward.8} parent=11 // pred_check
        %p96 = pneg %p55
      $region14: #{decoder_forward.8} parent=11 // pred_check_branch
        %98 = sbr.rel (%p96) target = $region16
      $region15: #{decoder_forward.8} parent=11 // pred_region
        _
      $region16: #{decoder_forward.8} parent=11 // pred_fallthru
        _
    $region12: #{decoder_forward.8} parent=5 // pred_fallthru
      _
    %p99 = scmp.lt.s32.totalorder %s8, 2
    // Predicated region
    $region17: #{decoder_forward.8} parent=5 // pred_check
      %p100 = pneg %p99
    $region18: #{decoder_forward.8} parent=5 // pred_check_branch
      %102 = sbr.rel (%p100) target = $region20
    $region19: #{decoder_forward.8} parent=5 // pred_region
      // Predicated region
      $region21: #{decoder_forward.8} parent=19 // pred_check
        %p103 = pneg %p28
      $region22: #{decoder_forward.8} parent=19 // pred_check_branch
        %105 = sbr.rel (%p103) target = $region24
      $region23: #{decoder_forward.8} parent=19 // pred_region
        %p106 = scmp.lt.s32.totalorder %s8, 1
        %s107 = scalar_select %p106, %s8, 1
        %s108 = smul.addr %s107, 108
        %s109 = smul.addr %s108, 4
        %s110 = scalar_lea.vmem %s0, %s109
      $region24: #{decoder_forward.8} parent=19 // pred_fallthru
        _
    $region20: #{decoder_forward.8} parent=5 // pred_fallthru
      _
    %p111 = scmp.le.s32.totalorder 1, %s8
    %p112 = scmp.lt.s32.totalorder %s8, 3
    %p113 = pnand %p111, %p112
    %p114 = pneg %p113
    // Predicated region
    $region25: #{decoder_forward.8} parent=5 // pred_check
      _
    $region26: #{decoder_forward.8} parent=5 // pred_check_branch
      %116 = sbr.rel (%p113) target = $region28
    $region27: #{decoder_forward.8} parent=5 // pred_region
      %s117 = ssub.s32 %s8, 1
      %p118 = scmp.lt.s32.totalorder %s13, 1
      %s119 = scalar_select %p118, %s13, 1
      %s120 = smul.addr %s119, 108
      %s121 = smul.addr %s120, 4
      %s122 = scalar_lea.vmem %s0, %s121
      %p123 = pneg %p34
      %p124 = pneg %p31
      %p125 = pneg %p55
      %p126 = pneg %p52
      %p127 = pneg %p81
      %p128 = pneg %p78
      %p129 = scmp.lt.s32.totalorder %s13, 1
      %s130 = scalar_select %p129, %s13, 1
      %s131 = smul.addr %s130, 4
      %s132 = smul.addr %s131, 4
      %s133 = scalar_lea.vmem %s2, %s132
      %p134 = scmp.lt.s32.totalorder %s13, 1
      %s135 = scalar_select %p134, %s13, 1
      %s136 = smul.addr %s135, 108
      %s137 = smul.addr %s136, 4
      %s138 = scalar_lea.vmem %s0, %s137
      %p139 = scmp.lt.s32.totalorder %s13, 1
      %s140 = scalar_select %p139, %s13, 1
      %s141 = smul.addr %s140, 4
      %s142 = smul.addr %s141, 4
      %s143 = scalar_lea.vmem %s2, %s142
      %v145 = vld [vmem:[%s1] sm:$0xff]
      %v146 = vld [vmem:[%s138] sm:$0xff]
      %v147 = vld [vmem:[%s138 + $0x8] sm:$0xff]
      %v148 = vld [vmem:[%s138 + $0x10] sm:$0xff]
      %v149 = vld [vmem:[%s138 + $0x18] sm:$0xff]
      %v150 = vld [vmem:[%s138 + $0x20] sm:$0xff]
      %v151 = vld [vmem:[%s138 + $0x28] sm:$0xff]
      %v152 = vld [vmem:[%s138 + $0x30] sm:$0xff]
      %v153 = vld [vmem:[%s138 + $0x38] sm:$0xff]
      %v154 = vld [vmem:[%s138 + $0x40] sm:$0xff]
      %v155 = vld [vmem:[%s138 + $0x48] sm:$0xff]
      %v156 = vld [vmem:[%s138 + $0x50] sm:$0xff]
      %v157 = vld [vmem:[%s138 + $0x58] sm:$0xff]
      %v158 = vld [vmem:[%s138 + $0x60] sm:$0xff]
      %v159 = vld [vmem:[%s138 + $0x68] sm:$0xff]
      %v160 = vld [vmem:[%s138 + $0x70] sm:$0xff]
      %v161 = vld [vmem:[%s138 + $0x78] sm:$0xff]
      %v162 = vld [vmem:[%s138 + $0x80] sm:$0xff]
      %v163 = vld [vmem:[%s138 + $0x88] sm:$0xff]
      %v164 = vld [vmem:[%s138 + $0x90] sm:$0xff]
      %v165 = vld [vmem:[%s138 + $0x98] sm:$0xff]
      %v166 = vld [vmem:[%s138 + $0xa0] sm:$0xff]
      %v167 = vld [vmem:[%s138 + $0xa8] sm:$0xff]
      %v168 = vld [vmem:[%s138 + $0xb0] sm:$0xff]
      %v169 = vld [vmem:[%s138 + $0xb8] sm:$0xff]
      %v170 = vld [vmem:[%s138 + $0xc0] sm:$0xff]
      %v171 = vld [vmem:[%s138 + $0xc8] sm:$0xff]
      %v172 = vld [vmem:[%s138 + $0xd0] sm:$0xff]
      %v173 = vld [vmem:[%s138 + $0xd8] sm:$0xff]
      %v174 = vld [vmem:[%s138 + $0xe0] sm:$0xff]
      %v175 = vld [vmem:[%s138 + $0xe8] sm:$0xff]
      %v176 = vld [vmem:[%s138 + $0xf0] sm:$0xff]
      %v177 = vld [vmem:[%s138 + $0xf8] sm:$0xff]
      %v178 = vld [vmem:[%s138 + $0x100] sm:$0xff]
      %v179 = vld [vmem:[%s138 + $0x108] sm:$0xff]
      %v180 = vld [vmem:[%s138 + $0x110] sm:$0xff]
      %v181 = vld [vmem:[%s138 + $0x118] sm:$0xff]
      %v182 = vld [vmem:[%s138 + $0x120] sm:$0xff]
      %v183 = vld [vmem:[%s138 + $0x128] sm:$0xff]
      %v184 = vld [vmem:[%s138 + $0x130] sm:$0xff]
      %v185 = vld [vmem:[%s138 + $0x138] sm:$0xff]
      %v186 = vld [vmem:[%s138 + $0x140] sm:$0xff]
      %v187 = vld [vmem:[%s138 + $0x148] sm:$0xff]
      %v188 = vld [vmem:[%s138 + $0x150] sm:$0xff]
      %v189 = vld [vmem:[%s138 + $0x158] sm:$0xff]
      %v190 = vld [vmem:[%s138 + $0x160] sm:$0xff]
      %v191 = vld [vmem:[%s138 + $0x168] sm:$0xff]
      %v192 = vld [vmem:[%s138 + $0x170] sm:$0xff]
      %v193 = vld [vmem:[%s138 + $0x178] sm:$0xff]
      %v194 = vld [vmem:[%s138 + $0x180] sm:$0xff]
      %v195 = vld [vmem:[%s138 + $0x188] sm:$0xff]
      %v196 = vld [vmem:[%s138 + $0x190] sm:$0xff]
      %v197 = vld [vmem:[%s138 + $0x198] sm:$0xff]
      %v198 = vld [vmem:[%s138 + $0x1a0] sm:$0xff]
      %v199 = vld [vmem:[%s138 + $0x1a8] sm:$0xff]
      %v201 = vunpack.c.l.b16 %v145
      %v202 = vunpack.c.h.b16 %v145
      %v203 = vpack.c.b16 %v201, %v201
      %v204 = vpack.c.b16 %v202, %v202
      %v260 = vunpack.c.l.b16 %v146
      %v261 = vunpack.c.h.b16 %v146
      %v262 = vunpack.c.l.b16 %v147
      %v263 = vunpack.c.h.b16 %v147
      %v264 = vunpack.c.l.b16 %v148
      %v265 = vunpack.c.h.b16 %v148
      %v266 = vunpack.c.l.b16 %v149
      %v267 = vunpack.c.h.b16 %v149
      %v268 = vunpack.c.l.b16 %v150
      %v269 = vunpack.c.h.b16 %v150
      %v270 = vunpack.c.l.b16 %v151
      %v271 = vunpack.c.h.b16 %v151
      %v272 = vunpack.c.l.b16 %v152
      %v273 = vunpack.c.h.b16 %v152
      %v274 = vunpack.c.l.b16 %v153
      %v275 = vunpack.c.h.b16 %v153
      %v276 = vunpack.c.l.b16 %v154
      %v277 = vunpack.c.h.b16 %v154
      %v278 = vunpack.c.l.b16 %v155
      %v279 = vunpack.c.h.b16 %v155
      %v280 = vunpack.c.l.b16 %v156
      %v281 = vunpack.c.h.b16 %v156
      %v282 = vunpack.c.l.b16 %v157
      %v283 = vunpack.c.h.b16 %v157
      %v284 = vunpack.c.l.b16 %v158
      %v285 = vunpack.c.h.b16 %v158
      %v286 = vunpack.c.l.b16 %v159
      %v287 = vunpack.c.h.b16 %v159
      %v288 = vunpack.c.l.b16 %v160
      %v289 = vunpack.c.h.b16 %v160
      %v290 = vunpack.c.l.b16 %v161
      %v291 = vunpack.c.h.b16 %v161
      %v292 = vunpack.c.l.b16 %v162
      %v293 = vunpack.c.h.b16 %v162
      %v294 = vunpack.c.l.b16 %v163
      %v295 = vunpack.c.h.b16 %v163
      %v296 = vunpack.c.l.b16 %v164
      %v297 = vunpack.c.h.b16 %v164
      %v298 = vunpack.c.l.b16 %v165
      %v299 = vunpack.c.h.b16 %v165
      %v300 = vunpack.c.l.b16 %v166
      %v301 = vunpack.c.h.b16 %v166
      %v302 = vunpack.c.l.b16 %v167
      %v303 = vunpack.c.h.b16 %v167
      %v304 = vunpack.c.l.b16 %v168
      %v305 = vunpack.c.h.b16 %v168
      %v306 = vunpack.c.l.b16 %v169
      %v307 = vunpack.c.h.b16 %v169
      %v308 = vunpack.c.l.b16 %v170
      %v309 = vunpack.c.h.b16 %v170
      %v310 = vunpack.c.l.b16 %v171
      %v311 = vunpack.c.h.b16 %v171
      %v312 = vunpack.c.l.b16 %v172
      %v313 = vunpack.c.h.b16 %v172
      %v314 = vunpack.c.l.b16 %v173
      %v315 = vunpack.c.h.b16 %v173
      %v316 = vunpack.c.l.b16 %v174
      %v317 = vunpack.c.h.b16 %v174
      %v318 = vunpack.c.l.b16 %v175
      %v319 = vunpack.c.h.b16 %v175
      %v320 = vunpack.c.l.b16 %v176
      %v321 = vunpack.c.h.b16 %v176
      %v322 = vunpack.c.l.b16 %v177
      %v323 = vunpack.c.h.b16 %v177
      %v324 = vunpack.c.l.b16 %v178
      %v325 = vunpack.c.h.b16 %v178
      %v326 = vunpack.c.l.b16 %v179
      %v327 = vunpack.c.h.b16 %v179
      %v328 = vunpack.c.l.b16 %v180
      %v329 = vunpack.c.h.b16 %v180
      %v330 = vunpack.c.l.b16 %v181
      %v331 = vunpack.c.h.b16 %v181
      %v332 = vunpack.c.l.b16 %v182
      %v333 = vunpack.c.h.b16 %v182
      %v334 = vunpack.c.l.b16 %v183
      %v335 = vunpack.c.h.b16 %v183
      %v336 = vunpack.c.l.b16 %v184
      %v337 = vunpack.c.h.b16 %v184
      %v338 = vunpack.c.l.b16 %v185
      %v339 = vunpack.c.h.b16 %v185
      %v340 = vunpack.c.l.b16 %v186
      %v341 = vunpack.c.h.b16 %v186
      %v342 = vunpack.c.l.b16 %v187
      %v343 = vunpack.c.h.b16 %v187
      %v344 = vunpack.c.l.b16 %v188
      %v345 = vunpack.c.h.b16 %v188
      %v346 = vunpack.c.l.b16 %v189
      %v347 = vunpack.c.h.b16 %v189
      %v348 = vunpack.c.l.b16 %v190
      %v349 = vunpack.c.h.b16 %v190
      %v350 = vunpack.c.l.b16 %v191
      %v351 = vunpack.c.h.b16 %v191
      %v352 = vunpack.c.l.b16 %v192
      %v353 = vunpack.c.h.b16 %v192
      %v354 = vunpack.c.l.b16 %v193
      %v355 = vunpack.c.h.b16 %v193
      %v356 = vunpack.c.l.b16 %v194
      %v357 = vunpack.c.h.b16 %v194
      %v358 = vunpack.c.l.b16 %v195
      %v359 = vunpack.c.h.b16 %v195
      %v360 = vunpack.c.l.b16 %v196
      %v361 = vunpack.c.h.b16 %v196
      %v362 = vunpack.c.l.b16 %v197
      %v363 = vunpack.c.h.b16 %v197
      %v364 = vunpack.c.l.b16 %v198
      %v365 = vunpack.c.h.b16 %v198
      %v366 = vunpack.c.l.b16 %v199
      %v367 = vunpack.c.h.b16 %v199
      %v368 = vpack.c.b16 %v264, %v260
      %v369 = vpack.c.b16 %v265, %v261
      %v370 = vpack.c.b16 %v266, %v262
      %v371 = vpack.c.b16 %v267, %v263
      %v372 = vpack.c.b16 %v272, %v268
      %v373 = vpack.c.b16 %v273, %v269
      %v374 = vpack.c.b16 %v274, %v270
      %v375 = vpack.c.b16 %v275, %v271
      %v376 = vpack.c.b16 %v280, %v276
      %v377 = vpack.c.b16 %v281, %v277
      %v378 = vpack.c.b16 %v282, %v278
      %v379 = vpack.c.b16 %v283, %v279
      %v380 = vpack.c.b16 %v288, %v284
      %v381 = vpack.c.b16 %v289, %v285
      %v382 = vpack.c.b16 %v290, %v286
      %v383 = vpack.c.b16 %v291, %v287
      %v384 = vpack.c.b16 %v296, %v292
      %v385 = vpack.c.b16 %v297, %v293
      %v386 = vpack.c.b16 %v298, %v294
      %v387 = vpack.c.b16 %v299, %v295
      %v388 = vpack.c.b16 %v304, %v300
      %v389 = vpack.c.b16 %v305, %v301
      %v390 = vpack.c.b16 %v306, %v302
      %v391 = vpack.c.b16 %v307, %v303
      %v392 = vpack.c.b16 %v312, %v308
      %v393 = vpack.c.b16 %v313, %v309
      %v394 = vpack.c.b16 %v314, %v310
      %v395 = vpack.c.b16 %v315, %v311
      %v396 = vpack.c.b16 %v320, %v316
      %v397 = vpack.c.b16 %v321, %v317
      %v398 = vpack.c.b16 %v322, %v318
      %v399 = vpack.c.b16 %v323, %v319
      %v400 = vpack.c.b16 %v328, %v324
      %v401 = vpack.c.b16 %v329, %v325
      %v402 = vpack.c.b16 %v330, %v326
      %v403 = vpack.c.b16 %v331, %v327
      %v404 = vpack.c.b16 %v336, %v332
      %v405 = vpack.c.b16 %v337, %v333
      %v406 = vpack.c.b16 %v338, %v334
      %v407 = vpack.c.b16 %v339, %v335
      %v408 = vpack.c.b16 %v344, %v340
      %v409 = vpack.c.b16 %v345, %v341
      %v410 = vpack.c.b16 %v346, %v342
      %v411 = vpack.c.b16 %v347, %v343
      %v412 = vpack.c.b16 %v352, %v348
      %v413 = vpack.c.b16 %v353, %v349
      %v414 = vpack.c.b16 %v354, %v350
      %v415 = vpack.c.b16 %v355, %v351
      %v416 = vpack.c.b16 %v360, %v356
      %v417 = vpack.c.b16 %v361, %v357
      %v418 = vpack.c.b16 %v362, %v358
      %v419 = vpack.c.b16 %v363, %v359
      %v420 = vpack.c.b16 %v364, %v364
      %v421 = vpack.c.b16 %v365, %v365
      %v422 = vpack.c.b16 %v366, %v366
      %v423 = vpack.c.b16 %v367, %v367
      %vm476 = vcmask 719872
      %v478 = vsel %vm476, %v204, 0
      %vm480 = vcmask 1043456
      %v482 = vsel %vm480, %v420, 0
      %v485 = vsel %vm480, %v421, 0
      %v488 = vsel %vm480, %v422, 0
      %v491 = vsel %vm480, %v423, 0
      %493 = vmatprep.subr.bf16.mxu0 %v369
      %494 = vmatpush1.bf16.msra.mxu0 %v368
      %495 = vmatprep.subr.bf16.mxu0 %v373
      %496 = vmatpush1.bf16.msra.mxu0 %v372
      %497 = vmatprep.subr.bf16.mxu0 %v377
      %498 = vmatpush1.bf16.msra.mxu0 %v376
      %499 = vmatprep.subr.bf16.mxu0 %v381
      %500 = vmatpush1.bf16.msra.mxu0 %v380
      %501 = vmatprep.subr.bf16.mxu0 %v385
      %502 = vmatpush1.bf16.msra.mxu0 %v384
      %503 = vmatprep.subr.bf16.mxu0 %v389
      %504 = vmatpush1.bf16.msra.mxu0 %v388
      %505 = vmatprep.subr.bf16.mxu0 %v393
      %506 = vmatpush1.bf16.msra.mxu0 %v392
      %507 = vmatprep.subr.bf16.mxu0 %v397
      %508 = vmatpush1.bf16.msra.mxu0 %v396
      %509 = vmatprep.subr.bf16.mxu0 %v401
      %510 = vmatpush1.bf16.msra.mxu0 %v400
      %511 = vmatprep.subr.bf16.mxu0 %v405
      %512 = vmatpush1.bf16.msra.mxu0 %v404
      %513 = vmatprep.subr.bf16.mxu0 %v409
      %514 = vmatpush1.bf16.msra.mxu0 %v408
      %515 = vmatprep.subr.bf16.mxu0 %v413
      %516 = vmatpush1.bf16.msra.mxu0 %v412
      %517 = vmatprep.subr.bf16.mxu0 %v417
      %518 = vmatpush1.bf16.msra.mxu0 %v416
      %519 = vmatprep.subr.bf16.mxu0 %v485
      %520 = vmatpush1.bf16.msra.mxu0 %v482
      %521 = vmatprep.subr.bf16.mxu0 0
      %522 = vmatpush1.bf16.msra.mxu0 0
      %523 = vmatprep.subr.bf16.mxu0 0
      %524 = vmatpush1.bf16.msra.mxu0 0
      %525 = vmatprep.mubr.bf16.mxu0 %v478
      %526 = vmatmul.mubr.bf16.gmra.mrb[0].mxu0 %v203
      %v527 = vpop.f32.mrb[0].mxu0
      %v528 = vadd.f32 0.0, %v527
      %v529 = vpop.f32.mrb[0].mxu0
      %v530 = vadd.f32 0.0, %v529
      %v531 = vpop.f32.mrb[0].mxu0
      %v532 = vpop.f32.mrb[0].mxu0
      %533 = vdwg.mxu0
      %534 = vmatprep.subr.bf16.mxu0 %v371
      %535 = vmatpush1.bf16.msra.mxu0 %v370
      %536 = vmatprep.subr.bf16.mxu0 %v375
      %537 = vmatpush1.bf16.msra.mxu0 %v374
      %538 = vmatprep.subr.bf16.mxu0 %v379
      %539 = vmatpush1.bf16.msra.mxu0 %v378
      %540 = vmatprep.subr.bf16.mxu0 %v383
      %541 = vmatpush1.bf16.msra.mxu0 %v382
      %542 = vmatprep.subr.bf16.mxu0 %v387
      %543 = vmatpush1.bf16.msra.mxu0 %v386
      %544 = vmatprep.subr.bf16.mxu0 %v391
      %545 = vmatpush1.bf16.msra.mxu0 %v390
      %546 = vmatprep.subr.bf16.mxu0 %v395
      %547 = vmatpush1.bf16.msra.mxu0 %v394
      %548 = vmatprep.subr.bf16.mxu0 %v399
      %549 = vmatpush1.bf16.msra.mxu0 %v398
      %550 = vmatprep.subr.bf16.mxu0 %v403
      %551 = vmatpush1.bf16.msra.mxu0 %v402
      %552 = vmatprep.subr.bf16.mxu0 %v407
      %553 = vmatpush1.bf16.msra.mxu0 %v406
      %554 = vmatprep.subr.bf16.mxu0 %v411
      %555 = vmatpush1.bf16.msra.mxu0 %v410
      %556 = vmatprep.subr.bf16.mxu0 %v415
      %557 = vmatpush1.bf16.msra.mxu0 %v414
      %558 = vmatprep.subr.bf16.mxu0 %v419
      %559 = vmatpush1.bf16.msra.mxu0 %v418
      %560 = vmatprep.subr.bf16.mxu0 %v491
      %561 = vmatpush1.bf16.msra.mxu0 %v488
      %562 = vmatprep.subr.bf16.mxu0 0
      %563 = vmatpush1.bf16.msra.mxu0 0
      %564 = vmatprep.subr.bf16.mxu0 0
      %565 = vmatpush1.bf16.msra.mxu0 0
      %566 = vmatprep.mubr.bf16.mxu0 %v478
      %567 = vmatmul.mubr.bf16.gmra.mrb[0].mxu0 %v203
      %v568 = vpop.f32.mrb[0].mxu0
      %v569 = vadd.f32 0.0, %v568
      %v570 = vpop.f32.mrb[0].mxu0
      %v571 = vadd.f32 0.0, %v570
      %v572 = vpop.f32.mrb[0].mxu0
      %v573 = vpop.f32.mrb[0].mxu0
      %574 = vdwg.mxu0
      %v575 = vadd.f32 %v528, %v530
      %v576 = vadd.f32 %v575, %v569
      %v577 = vadd.f32 %v576, %v571
      %578 = vadd.xlane.f32.xlu0 %v577
      %v579 = vpop.xlane.xlu0 %578
      %v580 = vrcp.pop 512.0
      %v581 = vmul.f32 %v579, %v580
      %v582 = vsub.f32 %v528, %v581
      %v583 = vsub.f32 %v530, %v581
      %v584 = vsub.f32 %v569, %v581
      %v585 = vsub.f32 %v571, %v581
      %v586 = vmul.f32 %v582, %v582
      %v587 = vmul.f32 %v583, %v583
      %v588 = vmul.f32 %v584, %v584
      %v589 = vmul.f32 %v585, %v585
      %v590 = vadd.f32 %v586, %v587
      %v591 = vadd.f32 %v590, %v588
      %v592 = vadd.f32 %v591, %v589
      %593 = vadd.xlane.f32.xlu0 %v592
      %v594 = vpop.xlane.xlu0 %593
      %v595 = vmul.f32 %v594, %v580
      %v596 = vadd.f32 %v595, 1e-05
      %v597 = vrsqrt.pop %v596
      %v598 = vmul.f32 %v582, %v597
      %v599 = vmul.f32 %v583, %v597
      %v600 = vmul.f32 %v584, %v597
      %v601 = vmul.f32 %v585, %v597
      %v602 = vmax.f32 %v598, 0.0
      %v603 = vmax.f32 %v599, 0.0
      %v604 = vmax.f32 %v600, 0.0
      %v605 = vmax.f32 %v601, 0.0
      %v606 = vpack.c.bf16 %v602, %v602
      %v607 = vpack.c.bf16 %v603, %v603
      %v608 = vpack.c.bf16 %v604, %v604
      %v609 = vpack.c.bf16 %v605, %v605
      %v614 = vunpack.c.l.b16 %v606
      %v615 = vunpack.c.l.b16 %v607
      %v616 = vunpack.c.l.b16 %v608
      %v617 = vunpack.c.l.b16 %v609
      %v618 = vpack.c.b16 %v615, %v614
      %v619 = vpack.c.b16 %v617, %v616
      %622 = vst [vmem:[%s143] sm:$0xff] %v618
      %623 = vst [vmem:[%s143 + $0x8] sm:$0xff] %v619
      %p624 = scmp.lt.s32.totalorder %s13, 1
      %s625 = scalar_select %p624, %s13, 1
      %s626 = smul.addr %s625, 4
      %s627 = smul.addr %s626, 4
      %s628 = scalar_lea.vmem %s2, %s627
      // Predicated region
      $region29: #{decoder_forward.8} parent=27 // pred_check
        %p629 = pneg %p78
      $region30: #{decoder_forward.8} parent=27 // pred_check_branch
        %631 = sbr.rel (%p629) target = $region32
      $region31: #{decoder_forward.8} parent=27 // pred_region
        _
      $region32: #{decoder_forward.8} parent=27 // pred_fallthru
        _
    $region28: #{decoder_forward.8} parent=5 // pred_fallthru
      _
    %p632 = scmp.le.s32.totalorder 2, %s8
    // Predicated region
    $region33: #{decoder_forward.8} parent=5 // pred_check
      %p633 = pneg %p632
    $region34: #{decoder_forward.8} parent=5 // pred_check_branch
      %635 = sbr.rel (%p633) target = $region36
    $region35: #{decoder_forward.8} parent=5 // pred_region
      %s636 = ssub.s32 %s8, 2
      // Predicated region
      $region37: #{decoder_forward.8} parent=35 // pred_check
        %p637 = pneg %p84
      $region38: #{decoder_forward.8} parent=35 // pred_check_branch
        %639 = sbr.rel (%p637) target = $region40
      $region39: #{decoder_forward.8} parent=35 // pred_region
        %p640 = scmp.lt.s32.totalorder %s14, 1
        %s641 = scalar_select %p640, %s14, 1
        %s642 = smul.addr %s641, 4
        %s643 = smul.addr %s642, 4
        %s644 = scalar_lea.vmem %s2, %s643
      $region40: #{decoder_forward.8} parent=35 // pred_fallthru
        _
    $region36: #{decoder_forward.8} parent=5 // pred_fallthru
      _
  $region6: #{decoder_forward.8} parent=0 // loop_footer
    %s12 = sadd.s32 1, %s8
  $region7: #{decoder_forward.8} parent=0 // loop_footer_branch
    %7 = sbr.rel target = $region3
  $region8: #{decoder_forward.8} parent=0 // loop_exit
    _

// kernel: decoder_forward.10
$region0: #{decoder_forward.10}
  #allocation0 [shape = 'u32[]', space=smem, size = 0x4, offset = 0x4, fixed_abs, tag = 'smem constant byte address 0x4 - core index']
  #allocation1 [shape = 'u32[144,128]{1,0:T(1,128)}', space=vmem, size = 0x12000, scoped, tag = 'internal scratch']
  %s0 = inlined_call_operand.vmem [shape: bf16[2,216,4096], index: 0, kind: input, shape index: {}]
  %s1 = inlined_call_operand.vmem [shape: bf16[4,216], index: 1, kind: input, shape index: {}]
  %s2 = inlined_call_operand.vmem [shape: bf16[2,4,4096], index: 2, kind: output, shape index: {}]
  %s3 = sld [smem:[#allocation0]]
  $region41: #{decoder_forward.10} parent=0
    _
  %s5 = ssub.s32 1, %s3
  %s6 = scalar_select 0, %s5, %s3
  loop: start=0, step=1, limit=4
  $region2: #{decoder_forward.10} parent=0 // loop_pre_header
    _
  $region3: #{decoder_forward.10} parent=0 // loop_header
    %s8 = sphi 0, %s12
    %p9 = scmp.ge.s32.totalorder %s8, 4
    %s18 = sphi 0, %s20
    %s21 = sphi 0, %s18
    %s22 = sphi 0, %s21
    %s38 = sphi 0, %s22
    %s42 = sphi 0, %s42
    %s44 = sphi 0, %s42
    %s45 = sphi 0, %s44
    %s59 = sphi 0, %s45
    %s65 = sphi 0, %s67
    %s68 = sphi 0, %s65
    %s69 = sphi 0, %s68
    %s85 = sphi 0, %s69
  $region4: #{decoder_forward.10} parent=0 // loop_header_branch
    %11 = sbr.rel (%p9) target = $region8
  $region5: #{decoder_forward.10} parent=0 // loop_body
    %s13 = ssub.s32 %s8, 1
    %s14 = ssub.s32 %s8, 2
    %s15 = sadd.s32 %s8, 1
    %s16 = ssub.s32 %s8, %s15
    %p17 = scmp.eq.s32.totalorder %s16, 0
    %s19 = sadd.s32 %s18, 1
    %s20 = scalar_select %p17, %s18, %s19
    %p23 = pneg %p17
    %p24 = scmp.eq.s32.totalorder %s8, 1
    %p25 = por %p23, %p24
    %p26 = scmp.ne.s32.totalorder %s18, %s21
    %p27 = scmp.eq.s32.totalorder %s8, 0
    %p28 = por %p26, %p27
    %p29 = scmp.ne.s32.totalorder %s18, %s21
    %p30 = scmp.eq.s32.totalorder %s13, 1
    %p31 = por %p29, %p30
    %p32 = scmp.ne.s32.totalorder %s21, %s22
    %p33 = scmp.eq.s32.totalorder %s13, 0
    %p34 = por %p32, %p33
    %p35 = scmp.ne.s32.totalorder %s21, %s22
    %p36 = scmp.eq.s32.totalorder %s14, 1
    %p37 = por %p35, %p36
    %p39 = scmp.ne.s32.totalorder %s22, %s38
    %p40 = scmp.eq.s32.totalorder %s14, 0
    %p41 = por %p39, %p40
    %s43 = sadd.s32 %s42, 1
    %p46 = scmp.eq.s32.totalorder %s8, 1
    %p47 = scmp.ne.s32.totalorder %s42, %s44
    %p48 = scmp.eq.s32.totalorder %s8, 0
    %p49 = por %p47, %p48
    %p50 = scmp.ne.s32.totalorder %s42, %s44
    %p51 = scmp.eq.s32.totalorder %s13, 1
    %p52 = por %p50, %p51
    %p53 = scmp.ne.s32.totalorder %s44, %s45
    %p54 = scmp.eq.s32.totalorder %s13, 0
    %p55 = por %p53, %p54
    %p56 = scmp.ne.s32.totalorder %s44, %s45
    %p57 = scmp.eq.s32.totalorder %s14, 1
    %p58 = por %p56, %p57
    %p60 = scmp.ne.s32.totalorder %s45, %s59
    %p61 = scmp.eq.s32.totalorder %s14, 0
    %p62 = por %p60, %p61
    %s63 = ssub.s32 %s8, %s15
    %p64 = scmp.eq.s32.totalorder %s63, 0
    %s66 = sadd.s32 %s65, 1
    %s67 = scalar_select %p64, %s65, %s66
    %p70 = pneg %p64
    %p71 = scmp.eq.s32.totalorder %s8, 1
    %p72 = por %p70, %p71
    %p73 = scmp.ne.s32.totalorder %s65, %s68
    %p74 = scmp.eq.s32.totalorder %s8, 0
    %p75 = por %p73, %p74
    %p76 = scmp.ne.s32.totalorder %s65, %s68
    %p77 = scmp.eq.s32.totalorder %s13, 1
    %p78 = por %p76, %p77
    %p79 = scmp.ne.s32.totalorder %s68, %s69
    %p80 = scmp.eq.s32.totalorder %s13, 0
    %p81 = por %p79, %p80
    %p82 = scmp.ne.s32.totalorder %s68, %s69
    %p83 = scmp.eq.s32.totalorder %s14, 1
    %p84 = por %p82, %p83
    %p86 = scmp.ne.s32.totalorder %s69, %s85
    %p87 = scmp.eq.s32.totalorder %s14, 0
    %p88 = por %p86, %p87
    %p89 = scmp.le.s32.totalorder 1, %s8
    %p90 = scmp.lt.s32.totalorder %s8, 3
    %p91 = pnand %p89, %p90
    %p92 = pneg %p91
    // Predicated region
    $region9: #{decoder_forward.10} parent=5 // pred_check
      _
    $region10: #{decoder_forward.10} parent=5 // pred_check_branch
      %94 = sbr.rel (%p91) target = $region12
    $region11: #{decoder_forward.10} parent=5 // pred_region
      %s95 = ssub.s32 %s8, 1
      // Predicated region
      $region13: #{decoder_forward.10} parent=11 // pred_check
        %p96 = pneg %p55
      $region14: #{decoder_forward.10} parent=11 // pred_check_branch
        %98 = sbr.rel (%p96) target = $region16
      $region15: #{decoder_forward.10} parent=11 // pred_region
        _
      $region16: #{decoder_forward.10} parent=11 // pred_fallthru
        _
    $region12: #{decoder_forward.10} parent=5 // pred_fallthru
      _
    %p99 = scmp.lt.s32.totalorder %s8, 2
    // Predicated region
    $region17: #{decoder_forward.10} parent=5 // pred_check
      %p100 = pneg %p99
    $region18: #{decoder_forward.10} parent=5 // pred_check_branch
      %102 = sbr.rel (%p100) target = $region20
    $region19: #{decoder_forward.10} parent=5 // pred_region
      // Predicated region
      $region21: #{decoder_forward.10} parent=19 // pred_check
        %p103 = pneg %p28
      $region22: #{decoder_forward.10} parent=19 // pred_check_branch
        %105 = sbr.rel (%p103) target = $region24
      $region23: #{decoder_forward.10} parent=19 // pred_region
        %p106 = scmp.lt.s32.totalorder %s8, 1
        %s107 = scalar_select %p106, %s8, 1
        %s108 = smul.addr %s107, 864
        %s109 = smul.addr %s108, 4
        %s110 = scalar_lea.vmem %s0, %s109
      $region24: #{decoder_forward.10} parent=19 // pred_fallthru
        _
    $region20: #{decoder_forward.10} parent=5 // pred_fallthru
      _
    %p111 = scmp.le.s32.totalorder 1, %s8
    %p112 = scmp.lt.s32.totalorder %s8, 3
    %p113 = pnand %p111, %p112
    %p114 = pneg %p113
    // Predicated region
    $region25: #{decoder_forward.10} parent=5 // pred_check
      _
    $region26: #{decoder_forward.10} parent=5 // pred_check_branch
      %116 = sbr.rel (%p113) target = $region28
    $region27: #{decoder_forward.10} parent=5 // pred_region
      %s117 = ssub.s32 %s8, 1
      %p118 = scmp.lt.s32.totalorder %s13, 1
      %s119 = scalar_select %p118, %s13, 1
      %s120 = smul.addr %s119, 864
      %s121 = smul.addr %s120, 4
      %s122 = scalar_lea.vmem %s0, %s121
      %p123 = pneg %p34
      %p124 = pneg %p31
      %p125 = pneg %p55
      %p126 = pneg %p52
      %p127 = pneg %p81
      %p128 = pneg %p78
      %p129 = scmp.lt.s32.totalorder %s13, 1
      %s130 = scalar_select %p129, %s13, 1
      %s131 = smul.addr %s130, 32
      %s132 = smul.addr %s131, 2
      %s133 = scalar_lea.vmem %s2, %s132
      %p134 = scmp.lt.s32.totalorder %s13, 1
      %s135 = scalar_select %p134, %s13, 1
      %s136 = smul.addr %s135, 864
      %s137 = smul.addr %s136, 4
      %s138 = scalar_lea.vmem %s0, %s137
      %p139 = scmp.lt.s32.totalorder %s13, 1
      %s140 = scalar_select %p139, %s13, 1
      %s141 = smul.addr %s140, 32
      %s142 = smul.addr %s141, 2
      %s143 = scalar_lea.vmem %s2, %s142
      %v145 = vld [vmem:[%s1] sm:$0xf]
      %v146 = vld [vmem:[%s138] sm:$0xff]
      %v147 = vld [vmem:[%s138 + $0x8] sm:$0xff]
      %v148 = vld [vmem:[%s138 + $0x10] sm:$0xff]
      %v149 = vld [vmem:[%s138 + $0x18] sm:$0xff]
      %v150 = vld [vmem:[%s138 + $0x20] sm:$0xff]
      %v151 = vld [vmem:[%s138 + $0x28] sm:$0xff]
      %v152 = vld [vmem:[%s138 + $0x30] sm:$0xff]
      %v153 = vld [vmem:[%s138 + $0x38] sm:$0xff]
      %v154 = vld [vmem:[%s138 + $0x40] sm:$0xff]
      %v155 = vld [vmem:[%s138 + $0x48] sm:$0xff]
      %v156 = vld [vmem:[%s138 + $0x50] sm:$0xff]
      %v157 = vld [vmem:[%s138 + $0x58] sm:$0xff]
      %v158 = vld [vmem:[%s138 + $0x60] sm:$0xff]
      %v159 = vld [vmem:[%s138 + $0x68] sm:$0xff]
      %v160 = vld [vmem:[%s138 + $0x70] sm:$0xff]
      %v161 = vld [vmem:[%s138 + $0x78] sm:$0xff]
      %v162 = vld [vmem:[%s138 + $0x80] sm:$0xff]
      %v163 = vld [vmem:[%s138 + $0x88] sm:$0xff]
      %v164 = vld [vmem:[%s138 + $0x90] sm:$0xff]
      %v165 = vld [vmem:[%s138 + $0x98] sm:$0xff]
      %v166 = vld [vmem:[%s138 + $0xa0] sm:$0xff]
      %v167 = vld [vmem:[%s138 + $0xa8] sm:$0xff]
      %v168 = vld [vmem:[%s138 + $0xb0] sm:$0xff]
      %v169 = vld [vmem:[%s138 + $0xb8] sm:$0xff]
      %v170 = vld [vmem:[%s138 + $0xc0] sm:$0xff]
      %v171 = vld [vmem:[%s138 + $0xc8] sm:$0xff]
      %v172 = vld [vmem:[%s138 + $0xd0] sm:$0xff]
      %v173 = vld [vmem:[%s138 + $0xd8] sm:$0xff]
      %v174 = vld [vmem:[%s138 + $0xe0] sm:$0xff]
      %v175 = vld [vmem:[%s138 + $0xe8] sm:$0xff]
      %v176 = vld [vmem:[%s138 + $0xf0] sm:$0xff]
      %v177 = vld [vmem:[%s138 + $0xf8] sm:$0xff]
      %v178 = vld [vmem:[%s138 + $0x100] sm:$0xff]
      %v179 = vld [vmem:[%s138 + $0x108] sm:$0xff]
      %v180 = vld [vmem:[%s138 + $0x110] sm:$0xff]
      %v181 = vld [vmem:[%s138 + $0x118] sm:$0xff]
      %v182 = vld [vmem:[%s138 + $0x120] sm:$0xff]
      %v183 = vld [vmem:[%s138 + $0x128] sm:$0xff]
      %v184 = vld [vmem:[%s138 + $0x130] sm:$0xff]
      %v185 = vld [vmem:[%s138 + $0x138] sm:$0xff]
      %v186 = vld [vmem:[%s138 + $0x140] sm:$0xff]
      %v187 = vld [vmem:[%s138 + $0x148] sm:$0xff]
      %v188 = vld [vmem:[%s138 + $0x150] sm:$0xff]
      %v189 = vld [vmem:[%s138 + $0x158] sm:$0xff]
      %v190 = vld [vmem:[%s138 + $0x160] sm:$0xff]
      %v191 = vld [vmem:[%s138 + $0x168] sm:$0xff]
      %v192 = vld [vmem:[%s138 + $0x170] sm:$0xff]
      %v193 = vld [vmem:[%s138 + $0x178] sm:$0xff]
      %v194 = vld [vmem:[%s138 + $0x180] sm:$0xff]
      %v195 = vld [vmem:[%s138 + $0x188] sm:$0xff]
      %v196 = vld [vmem:[%s138 + $0x190] sm:$0xff]
      %v197 = vld [vmem:[%s138 + $0x198] sm:$0xff]
      %v198 = vld [vmem:[%s138 + $0x1a0] sm:$0xff]
      %v199 = vld [vmem:[%s138 + $0x1a8] sm:$0xff]
      %v200 = vld [vmem:[%s138 + $0x1b0] sm:$0xff]
      %v201 = vld [vmem:[%s138 + $0x1b8] sm:$0xff]
      %v202 = vld [vmem:[%s138 + $0x1c0] sm:$0xff]
      %v203 = vld [vmem:[%s138 + $0x1c8] sm:$0xff]
      %v204 = vld [vmem:[%s138 + $0x1d0] sm:$0xff]
      %v205 = vld [vmem:[%s138 + $0x1d8] sm:$0xff]
      %v206 = vld [vmem:[%s138 + $0x1e0] sm:$0xff]
      %v207 = vld [vmem:[%s138 + $0x1e8] sm:$0xff]
      %v208 = vld [vmem:[%s138 + $0x1f0] sm:$0xff]
      %v209 = vld [vmem:[%s138 + $0x1f8] sm:$0xff]
      %v210 = vld [vmem:[%s138 + $0x200] sm:$0xff]
      %v211 = vld [vmem:[%s138 + $0x208] sm:$0xff]
      %v212 = vld [vmem:[%s138 + $0x210] sm:$0xff]
      %v213 = vld [vmem:[%s138 + $0x218] sm:$0xff]
      %v214 = vld [vmem:[%s138 + $0x220] sm:$0xff]
      %v215 = vld [vmem:[%s138 + $0x228] sm:$0xff]
      %v216 = vld [vmem:[%s138 + $0x230] sm:$0xff]
      %v217 = vld [vmem:[%s138 + $0x238] sm:$0xff]
      %v218 = vld [vmem:[%s138 + $0x240] sm:$0xff]
      %v219 = vld [vmem:[%s138 + $0x248] sm:$0xff]
      %v220 = vld [vmem:[%s138 + $0x250] sm:$0xff]
      %v221 = vld [vmem:[%s138 + $0x258] sm:$0xff]
      %v222 = vld [vmem:[%s138 + $0x260] sm:$0xff]
      %v223 = vld [vmem:[%s138 + $0x268] sm:$0xff]
      %v224 = vld [vmem:[%s138 + $0x270] sm:$0xff]
      %v225 = vld [vmem:[%s138 + $0x278] sm:$0xff]
      %v226 = vld [vmem:[%s138 + $0x280] sm:$0xff]
      %v227 = vld [vmem:[%s138 + $0x288] sm:$0xff]
      %v228 = vld [vmem:[%s138 + $0x290] sm:$0xff]
      %v229 = vld [vmem:[%s138 + $0x298] sm:$0xff]
      %v230 = vld [vmem:[%s138 + $0x2a0] sm:$0xff]
      %v231 = vld [vmem:[%s138 + $0x2a8] sm:$0xff]
      %v232 = vld [vmem:[%s138 + $0x2b0] sm:$0xff]
      %v233 = vld [vmem:[%s138 + $0x2b8] sm:$0xff]
      %v234 = vld [vmem:[%s138 + $0x2c0] sm:$0xff]
      %v235 = vld [vmem:[%s138 + $0x2c8] sm:$0xff]
      %v236 = vld [vmem:[%s138 + $0x2d0] sm:$0xff]
      %v237 = vld [vmem:[%s138 + $0x2d8] sm:$0xff]
      %v238 = vld [vmem:[%s138 + $0x2e0] sm:$0xff]
      %v239 = vld [vmem:[%s138 + $0x2e8] sm:$0xff]
      %v240 = vld [vmem:[%s138 + $0x2f0] sm:$0xff]
      %v241 = vld [vmem:[%s138 + $0x2f8] sm:$0xff]
      %v242 = vld [vmem:[%s138 + $0x300] sm:$0xff]
      %v243 = vld [vmem:[%s138 + $0x308] sm:$0xff]
      %v244 = vld [vmem:[%s138 + $0x310] sm:$0xff]
      %v245 = vld [vmem:[%s138 + $0x318] sm:$0xff]
      %v246 = vld [vmem:[%s138 + $0x320] sm:$0xff]
      %v247 = vld [vmem:[%s138 + $0x328] sm:$0xff]
      %v248 = vld [vmem:[%s138 + $0x330] sm:$0xff]
      %v249 = vld [vmem:[%s138 + $0x338] sm:$0xff]
      %v250 = vld [vmem:[%s138 + $0x340] sm:$0xff]
      %v251 = vld [vmem:[%s138 + $0x348] sm:$0xff]
      %v252 = vld [vmem:[%s138 + $0x350] sm:$0xff]
      %v253 = vld [vmem:[%s138 + $0x358] sm:$0xff]
      %v254 = vld [vmem:[%s138 + $0x360] sm:$0xff]
      %v255 = vld [vmem:[%s138 + $0x368] sm:$0xff]
      %v256 = vld [vmem:[%s138 + $0x370] sm:$0xff]
      %v257 = vld [vmem:[%s138 + $0x378] sm:$0xff]
      %v258 = vld [vmem:[%s138 + $0x380] sm:$0xff]
      %v259 = vld [vmem:[%s138 + $0x388] sm:$0xff]
      %v260 = vld [vmem:[%s138 + $0x390] sm:$0xff]
      %v261 = vld [vmem:[%s138 + $0x398] sm:$0xff]
      %v262 = vld [vmem:[%s138 + $0x3a0] sm:$0xff]
      %v263 = vld [vmem:[%s138 + $0x3a8] sm:$0xff]
      %v264 = vld [vmem:[%s138 + $0x3b0] sm:$0xff]
      %v265 = vld [vmem:[%s138 + $0x3b8] sm:$0xff]
      %v266 = vld [vmem:[%s138 + $0x3c0] sm:$0xff]
      %v267 = vld [vmem:[%s138 + $0x3c8] sm:$0xff]
      %v268 = vld [vmem:[%s138 + $0x3d0] sm:$0xff]
      %v269 = vld [vmem:[%s138 + $0x3d8] sm:$0xff]
      %v270 = vld [vmem:[%s138 + $0x3e0] sm:$0xff]
      %v271 = vld [vmem:[%s138 + $0x3e8] sm:$0xff]
      %v272 = vld [vmem:[%s138 + $0x3f0] sm:$0xff]
      %v273 = vld [vmem:[%s138 + $0x3f8] sm:$0xff]
      %v274 = vld [vmem:[%s138 + $0x400] sm:$0xff]
      %v275 = vld [vmem:[%s138 + $0x408] sm:$0xff]
      %v276 = vld [vmem:[%s138 + $0x410] sm:$0xff]
      %v277 = vld [vmem:[%s138 + $0x418] sm:$0xff]
      %v278 = vld [vmem:[%s138 + $0x420] sm:$0xff]
      %v279 = vld [vmem:[%s138 + $0x428] sm:$0xff]
      %v280 = vld [vmem:[%s138 + $0x430] sm:$0xff]
      %v281 = vld [vmem:[%s138 + $0x438] sm:$0xff]
      %v282 = vld [vmem:[%s138 + $0x440] sm:$0xff]
      %v283 = vld [vmem:[%s138 + $0x448] sm:$0xff]
      %v284 = vld [vmem:[%s138 + $0x450] sm:$0xff]
      %v285 = vld [vmem:[%s138 + $0x458] sm:$0xff]
      %v286 = vld [vmem:[%s138 + $0x460] sm:$0xff]
      %v287 = vld [vmem:[%s138 + $0x468] sm:$0xff]
      %v288 = vld [vmem:[%s138 + $0x470] sm:$0xff]
      %v289 = vld [vmem:[%s138 + $0x478] sm:$0xff]
      %v290 = vld [vmem:[%s138 + $0x480] sm:$0xff]
      %v291 = vld [vmem:[%s138 + $0x488] sm:$0xff]
      %v292 = vld [vmem:[%s138 + $0x490] sm:$0xff]
      %v293 = vld [vmem:[%s138 + $0x498] sm:$0xff]
      %v294 = vld [vmem:[%s138 + $0x4a0] sm:$0xff]
      %v295 = vld [vmem:[%s138 + $0x4a8] sm:$0xff]
      %v296 = vld [vmem:[%s138 + $0x4b0] sm:$0xff]
      %v297 = vld [vmem:[%s138 + $0x4b8] sm:$0xff]
      %v298 = vld [vmem:[%s138 + $0x4c0] sm:$0xff]
      %v299 = vld [vmem:[%s138 + $0x4c8] sm:$0xff]
      %v300 = vld [vmem:[%s138 + $0x4d0] sm:$0xff]
      %v301 = vld [vmem:[%s138 + $0x4d8] sm:$0xff]
      %v302 = vld [vmem:[%s138 + $0x4e0] sm:$0xff]
      %v303 = vld [vmem:[%s138 + $0x4e8] sm:$0xff]
      %v304 = vld [vmem:[%s138 + $0x4f0] sm:$0xff]
      %v305 = vld [vmem:[%s138 + $0x4f8] sm:$0xff]
      %v306 = vld [vmem:[%s138 + $0x500] sm:$0xff]
      %v307 = vld [vmem:[%s138 + $0x508] sm:$0xff]
      %v308 = vld [vmem:[%s138 + $0x510] sm:$0xff]
      %v309 = vld [vmem:[%s138 + $0x518] sm:$0xff]
      %v310 = vld [vmem:[%s138 + $0x520] sm:$0xff]
      %v311 = vld [vmem:[%s138 + $0x528] sm:$0xff]
      %v312 = vld [vmem:[%s138 + $0x530] sm:$0xff]
      %v313 = vld [vmem:[%s138 + $0x538] sm:$0xff]
      %v314 = vld [vmem:[%s138 + $0x540] sm:$0xff]
      %v315 = vld [vmem:[%s138 + $0x548] sm:$0xff]
      %v316 = vld [vmem:[%s138 + $0x550] sm:$0xff]
      %v317 = vld [vmem:[%s138 + $0x558] sm:$0xff]
      %v318 = vld [vmem:[%s138 + $0x560] sm:$0xff]
      %v319 = vld [vmem:[%s138 + $0x568] sm:$0xff]
      %v320 = vld [vmem:[%s138 + $0x570] sm:$0xff]
      %v321 = vld [vmem:[%s138 + $0x578] sm:$0xff]
      %v322 = vld [vmem:[%s138 + $0x580] sm:$0xff]
      %v323 = vld [vmem:[%s138 + $0x588] sm:$0xff]
      %v324 = vld [vmem:[%s138 + $0x590] sm:$0xff]
      %v325 = vld [vmem:[%s138 + $0x598] sm:$0xff]
      %v326 = vld [vmem:[%s138 + $0x5a0] sm:$0xff]
      %v327 = vld [vmem:[%s138 + $0x5a8] sm:$0xff]
      %v328 = vld [vmem:[%s138 + $0x5b0] sm:$0xff]
      %v329 = vld [vmem:[%s138 + $0x5b8] sm:$0xff]
      %v330 = vld [vmem:[%s138 + $0x5c0] sm:$0xff]
      %v331 = vld [vmem:[%s138 + $0x5c8] sm:$0xff]
      %v332 = vld [vmem:[%s138 + $0x5d0] sm:$0xff]
      %v333 = vld [vmem:[%s138 + $0x5d8] sm:$0xff]
      %v334 = vld [vmem:[%s138 + $0x5e0] sm:$0xff]
      %v335 = vld [vmem:[%s138 + $0x5e8] sm:$0xff]
      %v336 = vld [vmem:[%s138 + $0x5f0] sm:$0xff]
      %v337 = vld [vmem:[%s138 + $0x5f8] sm:$0xff]
      %v338 = vld [vmem:[%s138 + $0x600] sm:$0xff]
      %v339 = vld [vmem:[%s138 + $0x608] sm:$0xff]
      %v340 = vld [vmem:[%s138 + $0x610] sm:$0xff]
      %v341 = vld [vmem:[%s138 + $0x618] sm:$0xff]
      %v342 = vld [vmem:[%s138 + $0x620] sm:$0xff]
      %v343 = vld [vmem:[%s138 + $0x628] sm:$0xff]
      %v344 = vld [vmem:[%s138 + $0x630] sm:$0xff]
      %v345 = vld [vmem:[%s138 + $0x638] sm:$0xff]
      %v346 = vld [vmem:[%s138 + $0x640] sm:$0xff]
      %v347 = vld [vmem:[%s138 + $0x648] sm:$0xff]
      %v348 = vld [vmem:[%s138 + $0x650] sm:$0xff]
      %v349 = vld [vmem:[%s138 + $0x658] sm:$0xff]
      %v350 = vld [vmem:[%s138 + $0x660] sm:$0xff]
      %v351 = vld [vmem:[%s138 + $0x668] sm:$0xff]
      %v352 = vld [vmem:[%s138 + $0x670] sm:$0xff]
      %v353 = vld [vmem:[%s138 + $0x678] sm:$0xff]
      %v354 = vld [vmem:[%s138 + $0x680] sm:$0xff]
      %v355 = vld [vmem:[%s138 + $0x688] sm:$0xff]
      %v356 = vld [vmem:[%s138 + $0x690] sm:$0xff]
      %v357 = vld [vmem:[%s138 + $0x698] sm:$0xff]
      %v358 = vld [vmem:[%s138 + $0x6a0] sm:$0xff]
      %v359 = vld [vmem:[%s138 + $0x6a8] sm:$0xff]
      %v360 = vld [vmem:[%s138 + $0x6b0] sm:$0xff]
      %v361 = vld [vmem:[%s138 + $0x6b8] sm:$0xff]
      %v362 = vld [vmem:[%s138 + $0x6c0] sm:$0xff]
      %v363 = vld [vmem:[%s138 + $0x6c8] sm:$0xff]
      %v364 = vld [vmem:[%s138 + $0x6d0] sm:$0xff]
      %v365 = vld [vmem:[%s138 + $0x6d8] sm:$0xff]
      %v366 = vld [vmem:[%s138 + $0x6e0] sm:$0xff]
      %v367 = vld [vmem:[%s138 + $0x6e8] sm:$0xff]
      %v368 = vld [vmem:[%s138 + $0x6f0] sm:$0xff]
      %v369 = vld [vmem:[%s138 + $0x6f8] sm:$0xff]
      %v370 = vld [vmem:[%s138 + $0x700] sm:$0xff]
      %v371 = vld [vmem:[%s138 + $0x708] sm:$0xff]
      %v372 = vld [vmem:[%s138 + $0x710] sm:$0xff]
      %v373 = vld [vmem:[%s138 + $0x718] sm:$0xff]
      %v374 = vld [vmem:[%s138 + $0x720] sm:$0xff]
      %v375 = vld [vmem:[%s138 + $0x728] sm:$0xff]
      %v376 = vld [vmem:[%s138 + $0x730] sm:$0xff]
      %v377 = vld [vmem:[%s138 + $0x738] sm:$0xff]
      %v378 = vld [vmem:[%s138 + $0x740] sm:$0xff]
      %v379 = vld [vmem:[%s138 + $0x748] sm:$0xff]
      %v380 = vld [vmem:[%s138 + $0x750] sm:$0xff]
      %v381 = vld [vmem:[%s138 + $0x758] sm:$0xff]
      %v382 = vld [vmem:[%s138 + $0x760] sm:$0xff]
      %v383 = vld [vmem:[%s138 + $0x768] sm:$0xff]
      %v384 = vld [vmem:[%s138 + $0x770] sm:$0xff]
      %v385 = vld [vmem:[%s138 + $0x778] sm:$0xff]
      %v386 = vld [vmem:[%s138 + $0x780] sm:$0xff]
      %v387 = vld [vmem:[%s138 + $0x788] sm:$0xff]
      %v388 = vld [vmem:[%s138 + $0x790] sm:$0xff]
      %v389 = vld [vmem:[%s138 + $0x798] sm:$0xff]
      %v390 = vld [vmem:[%s138 + $0x7a0] sm:$0xff]
      %v391 = vld [vmem:[%s138 + $0x7a8] sm:$0xff]
      %v392 = vld [vmem:[%s138 + $0x7b0] sm:$0xff]
      %v393 = vld [vmem:[%s138 + $0x7b8] sm:$0xff]
      %v394 = vld [vmem:[%s138 + $0x7c0] sm:$0xff]
      %v395 = vld [vmem:[%s138 + $0x7c8] sm:$0xff]
      %v396 = vld [vmem:[%s138 + $0x7d0] sm:$0xff]
      %v397 = vld [vmem:[%s138 + $0x7d8] sm:$0xff]
      %v398 = vld [vmem:[%s138 + $0x7e0] sm:$0xff]
      %v399 = vld [vmem:[%s138 + $0x7e8] sm:$0xff]
      %v400 = vld [vmem:[%s138 + $0x7f0] sm:$0xff]
      %v401 = vld [vmem:[%s138 + $0x7f8] sm:$0xff]
      %v402 = vld [vmem:[%s138 + $0x800] sm:$0xff]
      %v403 = vld [vmem:[%s138 + $0x808] sm:$0xff]
      %v404 = vld [vmem:[%s138 + $0x810] sm:$0xff]
      %v405 = vld [vmem:[%s138 + $0x818] sm:$0xff]
      %v406 = vld [vmem:[%s138 + $0x820] sm:$0xff]
      %v407 = vld [vmem:[%s138 + $0x828] sm:$0xff]
      %v408 = vld [vmem:[%s138 + $0x830] sm:$0xff]
      %v409 = vld [vmem:[%s138 + $0x838] sm:$0xff]
      %v410 = vld [vmem:[%s138 + $0x840] sm:$0xff]
      %v411 = vld [vmem:[%s138 + $0x848] sm:$0xff]
      %v412 = vld [vmem:[%s138 + $0x850] sm:$0xff]
      %v413 = vld [vmem:[%s138 + $0x858] sm:$0xff]
      %v414 = vld [vmem:[%s138 + $0x860] sm:$0xff]
      %v415 = vld [vmem:[%s138 + $0x868] sm:$0xff]
      %v416 = vld [vmem:[%s138 + $0x870] sm:$0xff]
      %v417 = vld [vmem:[%s138 + $0x878] sm:$0xff]
      %v418 = vld [vmem:[%s138 + $0x880] sm:$0xff]
      %v419 = vld [vmem:[%s138 + $0x888] sm:$0xff]
      %v420 = vld [vmem:[%s138 + $0x890] sm:$0xff]
      %v421 = vld [vmem:[%s138 + $0x898] sm:$0xff]
      %v422 = vld [vmem:[%s138 + $0x8a0] sm:$0xff]
      %v423 = vld [vmem:[%s138 + $0x8a8] sm:$0xff]
      %v424 = vld [vmem:[%s138 + $0x8b0] sm:$0xff]
      %v425 = vld [vmem:[%s138 + $0x8b8] sm:$0xff]
      %v426 = vld [vmem:[%s138 + $0x8c0] sm:$0xff]
      %v427 = vld [vmem:[%s138 + $0x8c8] sm:$0xff]
      %v428 = vld [vmem:[%s138 + $0x8d0] sm:$0xff]
      %v429 = vld [vmem:[%s138 + $0x8d8] sm:$0xff]
      %v430 = vld [vmem:[%s138 + $0x8e0] sm:$0xff]
      %v431 = vld [vmem:[%s138 + $0x8e8] sm:$0xff]
      %v432 = vld [vmem:[%s138 + $0x8f0] sm:$0xff]
      %v433 = vld [vmem:[%s138 + $0x8f8] sm:$0xff]
      %v434 = vld [vmem:[%s138 + $0x900] sm:$0xff]
      %v435 = vld [vmem:[%s138 + $0x908] sm:$0xff]
      %v436 = vld [vmem:[%s138 + $0x910] sm:$0xff]
      %v437 = vld [vmem:[%s138 + $0x918] sm:$0xff]
      %v438 = vld [vmem:[%s138 + $0x920] sm:$0xff]
      %v439 = vld [vmem:[%s138 + $0x928] sm:$0xff]
      %v440 = vld [vmem:[%s138 + $0x930] sm:$0xff]
      %v441 = vld [vmem:[%s138 + $0x938] sm:$0xff]
      %v442 = vld [vmem:[%s138 + $0x940] sm:$0xff]
      %v443 = vld [vmem:[%s138 + $0x948] sm:$0xff]
      %v444 = vld [vmem:[%s138 + $0x950] sm:$0xff]
      %v445 = vld [vmem:[%s138 + $0x958] sm:$0xff]
      %v446 = vld [vmem:[%s138 + $0x960] sm:$0xff]
      %v447 = vld [vmem:[%s138 + $0x968] sm:$0xff]
      %v448 = vld [vmem:[%s138 + $0x970] sm:$0xff]
      %v449 = vld [vmem:[%s138 + $0x978] sm:$0xff]
      %v450 = vld [vmem:[%s138 + $0x980] sm:$0xff]
      %v451 = vld [vmem:[%s138 + $0x988] sm:$0xff]
      %v452 = vld [vmem:[%s138 + $0x990] sm:$0xff]
      %v453 = vld [vmem:[%s138 + $0x998] sm:$0xff]
      %v454 = vld [vmem:[%s138 + $0x9a0] sm:$0xff]
      %v455 = vld [vmem:[%s138 + $0x9a8] sm:$0xff]
      %v456 = vld [vmem:[%s138 + $0x9b0] sm:$0xff]
      %v457 = vld [vmem:[%s138 + $0x9b8] sm:$0xff]
      %v458 = vld [vmem:[%s138 + $0x9c0] sm:$0xff]
      %v459 = vld [vmem:[%s138 + $0x9c8] sm:$0xff]
      %v460 = vld [vmem:[%s138 + $0x9d0] sm:$0xff]
      %v461 = vld [vmem:[%s138 + $0x9d8] sm:$0xff]
      %v462 = vld [vmem:[%s138 + $0x9e0] sm:$0xff]
      %v463 = vld [vmem:[%s138 + $0x9e8] sm:$0xff]
      %v464 = vld [vmem:[%s138 + $0x9f0] sm:$0xff]
      %v465 = vld [vmem:[%s138 + $0x9f8] sm:$0xff]
      %v466 = vld [vmem:[%s138 + $0xa00] sm:$0xff]
      %v467 = vld [vmem:[%s138 + $0xa08] sm:$0xff]
      %v468 = vld [vmem:[%s138 + $0xa10] sm:$0xff]
      %v469 = vld [vmem:[%s138 + $0xa18] sm:$0xff]
      %v470 = vld [vmem:[%s138 + $0xa20] sm:$0xff]
      %v471 = vld [vmem:[%s138 + $0xa28] sm:$0xff]
      %v472 = vld [vmem:[%s138 + $0xa30] sm:$0xff]
      %v473 = vld [vmem:[%s138 + $0xa38] sm:$0xff]
      %v474 = vld [vmem:[%s138 + $0xa40] sm:$0xff]
      %v475 = vld [vmem:[%s138 + $0xa48] sm:$0xff]
      %v476 = vld [vmem:[%s138 + $0xa50] sm:$0xff]
      %v477 = vld [vmem:[%s138 + $0xa58] sm:$0xff]
      %v478 = vld [vmem:[%s138 + $0xa60] sm:$0xff]
      %v479 = vld [vmem:[%s138 + $0xa68] sm:$0xff]
      %v480 = vld [vmem:[%s138 + $0xa70] sm:$0xff]
      %v481 = vld [vmem:[%s138 + $0xa78] sm:$0xff]
      %v482 = vld [vmem:[%s138 + $0xa80] sm:$0xff]
      %v483 = vld [vmem:[%s138 + $0xa88] sm:$0xff]
      %v484 = vld [vmem:[%s138 + $0xa90] sm:$0xff]
      %v485 = vld [vmem:[%s138 + $0xa98] sm:$0xff]
      %v486 = vld [vmem:[%s138 + $0xaa0] sm:$0xff]
      %v487 = vld [vmem:[%s138 + $0xaa8] sm:$0xff]
      %v488 = vld [vmem:[%s138 + $0xab0] sm:$0xff]
      %v489 = vld [vmem:[%s138 + $0xab8] sm:$0xff]
      %v490 = vld [vmem:[%s138 + $0xac0] sm:$0xff]
      %v491 = vld [vmem:[%s138 + $0xac8] sm:$0xff]
      %v492 = vld [vmem:[%s138 + $0xad0] sm:$0xff]
      %v493 = vld [vmem:[%s138 + $0xad8] sm:$0xff]
      %v494 = vld [vmem:[%s138 + $0xae0] sm:$0xff]
      %v495 = vld [vmem:[%s138 + $0xae8] sm:$0xff]
      %v496 = vld [vmem:[%s138 + $0xaf0] sm:$0xff]
      %v497 = vld [vmem:[%s138 + $0xaf8] sm:$0xff]
      %v498 = vld [vmem:[%s138 + $0xb00] sm:$0xff]
      %v499 = vld [vmem:[%s138 + $0xb08] sm:$0xff]
      %v500 = vld [vmem:[%s138 + $0xb10] sm:$0xff]
      %v501 = vld [vmem:[%s138 + $0xb18] sm:$0xff]
      %v502 = vld [vmem:[%s138 + $0xb20] sm:$0xff]
      %v503 = vld [vmem:[%s138 + $0xb28] sm:$0xff]
      %v504 = vld [vmem:[%s138 + $0xb30] sm:$0xff]
      %v505 = vld [vmem:[%s138 + $0xb38] sm:$0xff]
      %v506 = vld [vmem:[%s138 + $0xb40] sm:$0xff]
      %v507 = vld [vmem:[%s138 + $0xb48] sm:$0xff]
      %v508 = vld [vmem:[%s138 + $0xb50] sm:$0xff]
      %v509 = vld [vmem:[%s138 + $0xb58] sm:$0xff]
      %v510 = vld [vmem:[%s138 + $0xb60] sm:$0xff]
      %v511 = vld [vmem:[%s138 + $0xb68] sm:$0xff]
      %v512 = vld [vmem:[%s138 + $0xb70] sm:$0xff]
      %v513 = vld [vmem:[%s138 + $0xb78] sm:$0xff]
      %v514 = vld [vmem:[%s138 + $0xb80] sm:$0xff]
      %v515 = vld [vmem:[%s138 + $0xb88] sm:$0xff]
      %v516 = vld [vmem:[%s138 + $0xb90] sm:$0xff]
      %v517 = vld [vmem:[%s138 + $0xb98] sm:$0xff]
      %v518 = vld [vmem:[%s138 + $0xba0] sm:$0xff]
      %v519 = vld [vmem:[%s138 + $0xba8] sm:$0xff]
      %v520 = vld [vmem:[%s138 + $0xbb0] sm:$0xff]
      %v521 = vld [vmem:[%s138 + $0xbb8] sm:$0xff]
      %v522 = vld [vmem:[%s138 + $0xbc0] sm:$0xff]
      %v523 = vld [vmem:[%s138 + $0xbc8] sm:$0xff]
      %v524 = vld [vmem:[%s138 + $0xbd0] sm:$0xff]
      %v525 = vld [vmem:[%s138 + $0xbd8] sm:$0xff]
      %v526 = vld [vmem:[%s138 + $0xbe0] sm:$0xff]
      %v527 = vld [vmem:[%s138 + $0xbe8] sm:$0xff]
      %v528 = vld [vmem:[%s138 + $0xbf0] sm:$0xff]
      %v529 = vld [vmem:[%s138 + $0xbf8] sm:$0xff]
      %v530 = vld [vmem:[%s138 + $0xc00] sm:$0xff]
      %v531 = vld [vmem:[%s138 + $0xc08] sm:$0xff]
      %v532 = vld [vmem:[%s138 + $0xc10] sm:$0xff]
      %v533 = vld [vmem:[%s138 + $0xc18] sm:$0xff]
      %v534 = vld [vmem:[%s138 + $0xc20] sm:$0xff]
      %v535 = vld [vmem:[%s138 + $0xc28] sm:$0xff]
      %v536 = vld [vmem:[%s138 + $0xc30] sm:$0xff]
      %v537 = vld [vmem:[%s138 + $0xc38] sm:$0xff]
      %v538 = vld [vmem:[%s138 + $0xc40] sm:$0xff]
      %v539 = vld [vmem:[%s138 + $0xc48] sm:$0xff]
      %v540 = vld [vmem:[%s138 + $0xc50] sm:$0xff]
      %v541 = vld [vmem:[%s138 + $0xc58] sm:$0xff]
      %v542 = vld [vmem:[%s138 + $0xc60] sm:$0xff]
      %v543 = vld [vmem:[%s138 + $0xc68] sm:$0xff]
      %v544 = vld [vmem:[%s138 + $0xc70] sm:$0xff]
      %v545 = vld [vmem:[%s138 + $0xc78] sm:$0xff]
      %v546 = vld [vmem:[%s138 + $0xc80] sm:$0xff]
      %v547 = vld [vmem:[%s138 + $0xc88] sm:$0xff]
      %v548 = vld [vmem:[%s138 + $0xc90] sm:$0xff]
      %v549 = vld [vmem:[%s138 + $0xc98] sm:$0xff]
      %v550 = vld [vmem:[%s138 + $0xca0] sm:$0xff]
      %v551 = vld [vmem:[%s138 + $0xca8] sm:$0xff]
      %v552 = vld [vmem:[%s138 + $0xcb0] sm:$0xff]
      %v553 = vld [vmem:[%s138 + $0xcb8] sm:$0xff]
      %v554 = vld [vmem:[%s138 + $0xcc0] sm:$0xff]
      %v555 = vld [vmem:[%s138 + $0xcc8] sm:$0xff]
      %v556 = vld [vmem:[%s138 + $0xcd0] sm:$0xff]
      %v557 = vld [vmem:[%s138 + $0xcd8] sm:$0xff]
      %v558 = vld [vmem:[%s138 + $0xce0] sm:$0xff]
      %v559 = vld [vmem:[%s138 + $0xce8] sm:$0xff]
      %v560 = vld [vmem:[%s138 + $0xcf0] sm:$0xff]
      %v561 = vld [vmem:[%s138 + $0xcf8] sm:$0xff]
      %v562 = vld [vmem:[%s138 + $0xd00] sm:$0xff]
      %v563 = vld [vmem:[%s138 + $0xd08] sm:$0xff]
      %v564 = vld [vmem:[%s138 + $0xd10] sm:$0xff]
      %v565 = vld [vmem:[%s138 + $0xd18] sm:$0xff]
      %v566 = vld [vmem:[%s138 + $0xd20] sm:$0xff]
      %v567 = vld [vmem:[%s138 + $0xd28] sm:$0xff]
      %v568 = vld [vmem:[%s138 + $0xd30] sm:$0xff]
      %v569 = vld [vmem:[%s138 + $0xd38] sm:$0xff]
      %v570 = vld [vmem:[%s138 + $0xd40] sm:$0xff]
      %v571 = vld [vmem:[%s138 + $0xd48] sm:$0xff]
      %v572 = vld [vmem:[%s138 + $0xd50] sm:$0xff]
      %v573 = vld [vmem:[%s138 + $0xd58] sm:$0xff]
      %v574 = vld [vmem:[%s138 + $0xd60] sm:$0xff]
      %v575 = vld [vmem:[%s138 + $0xd68] sm:$0xff]
      %v576 = vld [vmem:[%s138 + $0xd70] sm:$0xff]
      %v577 = vld [vmem:[%s138 + $0xd78] sm:$0xff]
      %v580 = vunpack.c.l.s4 1983009808
      %v581 = vunpack.c.0.s8 %v580
      %v582 = vlaneseq
      %v583 = vshrl.u32 %v582, 7
      %v584 = vsub.s32 %v581, %v583
      %v585 = vrot.slane %v145, %v584
      %v586 = vcombine.high %v585, %v585
      %v1020 = vunpack.c.l.b16 %v146
      %v1021 = vunpack.c.h.b16 %v146
      %v1022 = vunpack.c.l.b16 %v147
      %v1023 = vunpack.c.h.b16 %v147
      %v1024 = vunpack.c.l.b16 %v148
      %v1025 = vunpack.c.h.b16 %v148
      %v1026 = vunpack.c.l.b16 %v149
      %v1027 = vunpack.c.h.b16 %v149
      %v1028 = vunpack.c.l.b16 %v150
      %v1029 = vunpack.c.h.b16 %v150
      %v1030 = vunpack.c.l.b16 %v151
      %v1031 = vunpack.c.h.b16 %v151
      %v1032 = vunpack.c.l.b16 %v152
      %v1033 = vunpack.c.h.b16 %v152
      %v1034 = vunpack.c.l.b16 %v153
      %v1035 = vunpack.c.h.b16 %v153
      %v1036 = vunpack.c.l.b16 %v154
      %v1037 = vunpack.c.h.b16 %v154
      %v1038 = vunpack.c.l.b16 %v155
      %v1039 = vunpack.c.h.b16 %v155
      %v1040 = vunpack.c.l.b16 %v156
      %v1041 = vunpack.c.h.b16 %v156
      %v1042 = vunpack.c.l.b16 %v157
      %v1043 = vunpack.c.h.b16 %v157
      %v1044 = vunpack.c.l.b16 %v158
      %v1045 = vunpack.c.h.b16 %v158
      %v1046 = vunpack.c.l.b16 %v159
      %v1047 = vunpack.c.h.b16 %v159
      %v1048 = vunpack.c.l.b16 %v160
      %v1049 = vunpack.c.h.b16 %v160
      %v1050 = vunpack.c.l.b16 %v161
      %v1051 = vunpack.c.h.b16 %v161
      %v1052 = vunpack.c.l.b16 %v162
      %v1053 = vunpack.c.h.b16 %v162
      %v1054 = vunpack.c.l.b16 %v163
      %v1055 = vunpack.c.h.b16 %v163
      %v1056 = vunpack.c.l.b16 %v164
      %v1057 = vunpack.c.h.b16 %v164
      %v1058 = vunpack.c.l.b16 %v165
      %v1059 = vunpack.c.h.b16 %v165
      %v1060 = vunpack.c.l.b16 %v166
      %v1061 = vunpack.c.h.b16 %v166
      %v1062 = vunpack.c.l.b16 %v167
      %v1063 = vunpack.c.h.b16 %v167
      %v1064 = vunpack.c.l.b16 %v168
      %v1065 = vunpack.c.h.b16 %v168
      %v1066 = vunpack.c.l.b16 %v169
      %v1067 = vunpack.c.h.b16 %v169
      %v1068 = vunpack.c.l.b16 %v170
      %v1069 = vunpack.c.h.b16 %v170
      %v1070 = vunpack.c.l.b16 %v171
      %v1071 = vunpack.c.h.b16 %v171
      %v1072 = vunpack.c.l.b16 %v172
      %v1073 = vunpack.c.h.b16 %v172
      %v1074 = vunpack.c.l.b16 %v173
      %v1075 = vunpack.c.h.b16 %v173
      %v1076 = vunpack.c.l.b16 %v174
      %v1077 = vunpack.c.h.b16 %v174
      %v1078 = vunpack.c.l.b16 %v175
      %v1079 = vunpack.c.h.b16 %v175
      %v1080 = vunpack.c.l.b16 %v176
      %v1081 = vunpack.c.h.b16 %v176
      %v1082 = vunpack.c.l.b16 %v177
      %v1083 = vunpack.c.h.b16 %v177
      %v1084 = vunpack.c.l.b16 %v178
      %v1085 = vunpack.c.h.b16 %v178
      %v1086 = vunpack.c.l.b16 %v179
      %v1087 = vunpack.c.h.b16 %v179
      %v1088 = vunpack.c.l.b16 %v180
      %v1089 = vunpack.c.h.b16 %v180
      %v1090 = vunpack.c.l.b16 %v181
      %v1091 = vunpack.c.h.b16 %v181
      %v1092 = vunpack.c.l.b16 %v182
      %v1093 = vunpack.c.h.b16 %v182
      %v1094 = vunpack.c.l.b16 %v183
      %v1095 = vunpack.c.h.b16 %v183
      %v1096 = vunpack.c.l.b16 %v184
      %v1097 = vunpack.c.h.b16 %v184
      %v1098 = vunpack.c.l.b16 %v185
      %v1099 = vunpack.c.h.b16 %v185
      %v1100 = vunpack.c.l.b16 %v186
      %v1101 = vunpack.c.h.b16 %v186
      %v1102 = vunpack.c.l.b16 %v187
      %v1103 = vunpack.c.h.b16 %v187
      %v1104 = vunpack.c.l.b16 %v188
      %v1105 = vunpack.c.h.b16 %v188
      %v1106 = vunpack.c.l.b16 %v189
      %v1107 = vunpack.c.h.b16 %v189
      %v1108 = vunpack.c.l.b16 %v190
      %v1109 = vunpack.c.h.b16 %v190
      %v1110 = vunpack.c.l.b16 %v191
      %v1111 = vunpack.c.h.b16 %v191
      %v1112 = vunpack.c.l.b16 %v192
      %v1113 = vunpack.c.h.b16 %v192
      %v1114 = vunpack.c.l.b16 %v193
      %v1115 = vunpack.c.h.b16 %v193
      %v1116 = vunpack.c.l.b16 %v194
      %v1117 = vunpack.c.h.b16 %v194
      %v1118 = vunpack.c.l.b16 %v195
      %v1119 = vunpack.c.h.b16 %v195
      %v1120 = vunpack.c.l.b16 %v196
      %v1121 = vunpack.c.h.b16 %v196
      %v1122 = vunpack.c.l.b16 %v197
      %v1123 = vunpack.c.h.b16 %v197
      %v1124 = vunpack.c.l.b16 %v198
      %v1125 = vunpack.c.h.b16 %v198
      %v1126 = vunpack.c.l.b16 %v199
      %v1127 = vunpack.c.h.b16 %v199
      %v1128 = vunpack.c.l.b16 %v200
      %v1129 = vunpack.c.h.b16 %v200
      %v1130 = vunpack.c.l.b16 %v201
      %v1131 = vunpack.c.h.b16 %v201
      %v1132 = vunpack.c.l.b16 %v202
      %v1133 = vunpack.c.h.b16 %v202
      %v1134 = vunpack.c.l.b16 %v203
      %v1135 = vunpack.c.h.b16 %v203
      %v1136 = vunpack.c.l.b16 %v204
      %v1137 = vunpack.c.h.b16 %v204
      %v1138 = vunpack.c.l.b16 %v205
      %v1139 = vunpack.c.h.b16 %v205
      %v1140 = vunpack.c.l.b16 %v206
      %v1141 = vunpack.c.h.b16 %v206
      %v1142 = vunpack.c.l.b16 %v207
      %v1143 = vunpack.c.h.b16 %v207
      %v1144 = vunpack.c.l.b16 %v208
      %v1145 = vunpack.c.h.b16 %v208
      %v1146 = vunpack.c.l.b16 %v209
      %v1147 = vunpack.c.h.b16 %v209
      %v1148 = vunpack.c.l.b16 %v210
      %v1149 = vunpack.c.h.b16 %v210
      %v1150 = vunpack.c.l.b16 %v211
      %v1151 = vunpack.c.h.b16 %v211
      %v1152 = vunpack.c.l.b16 %v212
      %v1153 = vunpack.c.h.b16 %v212
      %v1154 = vunpack.c.l.b16 %v213
      %v1155 = vunpack.c.h.b16 %v213
      %v1156 = vunpack.c.l.b16 %v214
      %v1157 = vunpack.c.h.b16 %v214
      %v1158 = vunpack.c.l.b16 %v215
      %v1159 = vunpack.c.h.b16 %v215
      %v1160 = vunpack.c.l.b16 %v216
      %v1161 = vunpack.c.h.b16 %v216
      %v1162 = vunpack.c.l.b16 %v217
      %v1163 = vunpack.c.h.b16 %v217
      %v1164 = vunpack.c.l.b16 %v218
      %v1165 = vunpack.c.h.b16 %v218
      %v1166 = vunpack.c.l.b16 %v219
      %v1167 = vunpack.c.h.b16 %v219
      %v1168 = vunpack.c.l.b16 %v220
      %v1169 = vunpack.c.h.b16 %v220
      %v1170 = vunpack.c.l.b16 %v221
      %v1171 = vunpack.c.h.b16 %v221
      %v1172 = vunpack.c.l.b16 %v222
      %v1173 = vunpack.c.h.b16 %v222
      %v1174 = vunpack.c.l.b16 %v223
      %v1175 = vunpack.c.h.b16 %v223
      %v1176 = vunpack.c.l.b16 %v224
      %v1177 = vunpack.c.h.b16 %v224
      %v1178 = vunpack.c.l.b16 %v225
      %v1179 = vunpack.c.h.b16 %v225
      %v1180 = vunpack.c.l.b16 %v226
      %v1181 = vunpack.c.h.b16 %v226
      %v1182 = vunpack.c.l.b16 %v227
      %v1183 = vunpack.c.h.b16 %v227
      %v1184 = vunpack.c.l.b16 %v228
      %v1185 = vunpack.c.h.b16 %v228
      %v1186 = vunpack.c.l.b16 %v229
      %v1187 = vunpack.c.h.b16 %v229
      %v1188 = vunpack.c.l.b16 %v230
      %v1189 = vunpack.c.h.b16 %v230
      %v1190 = vunpack.c.l.b16 %v231
      %v1191 = vunpack.c.h.b16 %v231
      %v1192 = vunpack.c.l.b16 %v232
      %v1193 = vunpack.c.h.b16 %v232
      %v1194 = vunpack.c.l.b16 %v233
      %v1195 = vunpack.c.h.b16 %v233
      %v1196 = vunpack.c.l.b16 %v234
      %v1197 = vunpack.c.h.b16 %v234
      %v1198 = vunpack.c.l.b16 %v235
      %v1199 = vunpack.c.h.b16 %v235
      %v1200 = vunpack.c.l.b16 %v236
      %v1201 = vunpack.c.h.b16 %v236
      %v1202 = vunpack.c.l.b16 %v237
      %v1203 = vunpack.c.h.b16 %v237
      %v1204 = vunpack.c.l.b16 %v238
      %v1205 = vunpack.c.h.b16 %v238
      %v1206 = vunpack.c.l.b16 %v239
      %v1207 = vunpack.c.h.b16 %v239
      %v1208 = vunpack.c.l.b16 %v240
      %v1209 = vunpack.c.h.b16 %v240
      %v1210 = vunpack.c.l.b16 %v241
      %v1211 = vunpack.c.h.b16 %v241
      %v1212 = vunpack.c.l.b16 %v242
      %v1213 = vunpack.c.h.b16 %v242
      %v1214 = vunpack.c.l.b16 %v243
      %v1215 = vunpack.c.h.b16 %v243
      %v1216 = vunpack.c.l.b16 %v244
      %v1217 = vunpack.c.h.b16 %v244
      %v1218 = vunpack.c.l.b16 %v245
      %v1219 = vunpack.c.h.b16 %v245
      %v1220 = vunpack.c.l.b16 %v246
      %v1221 = vunpack.c.h.b16 %v246
      %v1222 = vunpack.c.l.b16 %v247
      %v1223 = vunpack.c.h.b16 %v247
      %v1224 = vunpack.c.l.b16 %v248
      %v1225 = vunpack.c.h.b16 %v248
      %v1226 = vunpack.c.l.b16 %v249
      %v1227 = vunpack.c.h.b16 %v249
      %v1228 = vunpack.c.l.b16 %v250
      %v1229 = vunpack.c.h.b16 %v250
      %v1230 = vunpack.c.l.b16 %v251
      %v1231 = vunpack.c.h.b16 %v251
      %v1232 = vunpack.c.l.b16 %v252
      %v1233 = vunpack.c.h.b16 %v252
      %v1234 = vunpack.c.l.b16 %v253
      %v1235 = vunpack.c.h.b16 %v253
      %v1236 = vunpack.c.l.b16 %v254
      %v1237 = vunpack.c.h.b16 %v254
      %v1238 = vunpack.c.l.b16 %v255
      %v1239 = vunpack.c.h.b16 %v255
      %v1240 = vunpack.c.l.b16 %v256
      %v1241 = vunpack.c.h.b16 %v256
      %v1242 = vunpack.c.l.b16 %v257
      %v1243 = vunpack.c.h.b16 %v257
      %v1244 = vunpack.c.l.b16 %v258
      %v1245 = vunpack.c.h.b16 %v258
      %v1246 = vunpack.c.l.b16 %v259
      %v1247 = vunpack.c.h.b16 %v259
      %v1248 = vunpack.c.l.b16 %v260
      %v1249 = vunpack.c.h.b16 %v260
      %v1250 = vunpack.c.l.b16 %v261
      %v1251 = vunpack.c.h.b16 %v261
      %v1252 = vunpack.c.l.b16 %v262
      %v1253 = vunpack.c.h.b16 %v262
      %v1254 = vunpack.c.l.b16 %v263
      %v1255 = vunpack.c.h.b16 %v263
      %v1256 = vunpack.c.l.b16 %v264
      %v1257 = vunpack.c.h.b16 %v264
      %v1258 = vunpack.c.l.b16 %v265
      %v1259 = vunpack.c.h.b16 %v265
      %v1260 = vunpack.c.l.b16 %v266
      %v1261 = vunpack.c.h.b16 %v266
      %v1262 = vunpack.c.l.b16 %v267
      %v1263 = vunpack.c.h.b16 %v267
      %v1264 = vunpack.c.l.b16 %v268
      %v1265 = vunpack.c.h.b16 %v268
      %v1266 = vunpack.c.l.b16 %v269
      %v1267 = vunpack.c.h.b16 %v269
      %v1268 = vunpack.c.l.b16 %v270
      %v1269 = vunpack.c.h.b16 %v270
      %v1270 = vunpack.c.l.b16 %v271
      %v1271 = vunpack.c.h.b16 %v271
      %v1272 = vunpack.c.l.b16 %v272
      %v1273 = vunpack.c.h.b16 %v272
      %v1274 = vunpack.c.l.b16 %v273
      %v1275 = vunpack.c.h.b16 %v273
      %v1276 = vunpack.c.l.b16 %v274
      %v1277 = vunpack.c.h.b16 %v274
      %v1278 = vunpack.c.l.b16 %v275
      %v1279 = vunpack.c.h.b16 %v275
      %v1280 = vunpack.c.l.b16 %v276
      %v1281 = vunpack.c.h.b16 %v276
      %v1282 = vunpack.c.l.b16 %v277
      %v1283 = vunpack.c.h.b16 %v277
      %v1284 = vunpack.c.l.b16 %v278
      %v1285 = vunpack.c.h.b16 %v278
      %v1286 = vunpack.c.l.b16 %v279
      %v1287 = vunpack.c.h.b16 %v279
      %v1288 = vunpack.c.l.b16 %v280
      %v1289 = vunpack.c.h.b16 %v280
      %v1290 = vunpack.c.l.b16 %v281
      %v1291 = vunpack.c.h.b16 %v281
      %v1292 = vunpack.c.l.b16 %v282
      %v1293 = vunpack.c.h.b16 %v282
      %v1294 = vunpack.c.l.b16 %v283
      %v1295 = vunpack.c.h.b16 %v283
      %v1296 = vunpack.c.l.b16 %v284
      %v1297 = vunpack.c.h.b16 %v284
      %v1298 = vunpack.c.l.b16 %v285
      %v1299 = vunpack.c.h.b16 %v285
      %v1300 = vunpack.c.l.b16 %v286
      %v1301 = vunpack.c.h.b16 %v286
      %v1302 = vunpack.c.l.b16 %v287
      %v1303 = vunpack.c.h.b16 %v287
      %v1304 = vunpack.c.l.b16 %v288
      %v1305 = vunpack.c.h.b16 %v288
      %v1306 = vunpack.c.l.b16 %v289
      %v1307 = vunpack.c.h.b16 %v289
      %v1308 = vunpack.c.l.b16 %v290
      %v1309 = vunpack.c.h.b16 %v290
      %v1310 = vunpack.c.l.b16 %v291
      %v1311 = vunpack.c.h.b16 %v291
      %v1312 = vunpack.c.l.b16 %v292
      %v1313 = vunpack.c.h.b16 %v292
      %v1314 = vunpack.c.l.b16 %v293
      %v1315 = vunpack.c.h.b16 %v293
      %v1316 = vunpack.c.l.b16 %v294
      %v1317 = vunpack.c.h.b16 %v294
      %v1318 = vunpack.c.l.b16 %v295
      %v1319 = vunpack.c.h.b16 %v295
      %v1320 = vunpack.c.l.b16 %v296
      %v1321 = vunpack.c.h.b16 %v296
      %v1322 = vunpack.c.l.b16 %v297
      %v1323 = vunpack.c.h.b16 %v297
      %v1324 = vunpack.c.l.b16 %v298
      %v1325 = vunpack.c.h.b16 %v298
      %v1326 = vunpack.c.l.b16 %v299
      %v1327 = vunpack.c.h.b16 %v299
      %v1328 = vunpack.c.l.b16 %v300
      %v1329 = vunpack.c.h.b16 %v300
      %v1330 = vunpack.c.l.b16 %v301
      %v1331 = vunpack.c.h.b16 %v301
      %v1332 = vunpack.c.l.b16 %v302
      %v1333 = vunpack.c.h.b16 %v302
      %v1334 = vunpack.c.l.b16 %v303
      %v1335 = vunpack.c.h.b16 %v303
      %v1336 = vunpack.c.l.b16 %v304
      %v1337 = vunpack.c.h.b16 %v304
      %v1338 = vunpack.c.l.b16 %v305
      %v1339 = vunpack.c.h.b16 %v305
      %v1340 = vunpack.c.l.b16 %v306
      %v1341 = vunpack.c.h.b16 %v306
      %v1342 = vunpack.c.l.b16 %v307
      %v1343 = vunpack.c.h.b16 %v307
      %v1344 = vunpack.c.l.b16 %v308
      %v1345 = vunpack.c.h.b16 %v308
      %v1346 = vunpack.c.l.b16 %v309
      %v1347 = vunpack.c.h.b16 %v309
      %v1348 = vunpack.c.l.b16 %v310
      %v1349 = vunpack.c.h.b16 %v310
      %v1350 = vunpack.c.l.b16 %v311
      %v1351 = vunpack.c.h.b16 %v311
      %v1352 = vunpack.c.l.b16 %v312
      %v1353 = vunpack.c.h.b16 %v312
      %v1354 = vunpack.c.l.b16 %v313
      %v1355 = vunpack.c.h.b16 %v313
      %v1356 = vunpack.c.l.b16 %v314
      %v1357 = vunpack.c.h.b16 %v314
      %v1358 = vunpack.c.l.b16 %v315
      %v1359 = vunpack.c.h.b16 %v315
      %v1360 = vunpack.c.l.b16 %v316
      %v1361 = vunpack.c.h.b16 %v316
      %v1362 = vunpack.c.l.b16 %v317
      %v1363 = vunpack.c.h.b16 %v317
      %v1364 = vunpack.c.l.b16 %v318
      %v1365 = vunpack.c.h.b16 %v318
      %v1366 = vunpack.c.l.b16 %v319
      %v1367 = vunpack.c.h.b16 %v319
      %v1368 = vunpack.c.l.b16 %v320
      %v1369 = vunpack.c.h.b16 %v320
      %v1370 = vunpack.c.l.b16 %v321
      %v1371 = vunpack.c.h.b16 %v321
      %v1372 = vunpack.c.l.b16 %v322
      %v1373 = vunpack.c.h.b16 %v322
      %v1374 = vunpack.c.l.b16 %v323
      %v1375 = vunpack.c.h.b16 %v323
      %v1376 = vunpack.c.l.b16 %v324
      %v1377 = vunpack.c.h.b16 %v324
      %v1378 = vunpack.c.l.b16 %v325
      %v1379 = vunpack.c.h.b16 %v325
      %v1380 = vunpack.c.l.b16 %v326
      %v1381 = vunpack.c.h.b16 %v326
      %v1382 = vunpack.c.l.b16 %v327
      %v1383 = vunpack.c.h.b16 %v327
      %v1384 = vunpack.c.l.b16 %v328
      %v1385 = vunpack.c.h.b16 %v328
      %v1386 = vunpack.c.l.b16 %v329
      %v1387 = vunpack.c.h.b16 %v329
      %v1388 = vunpack.c.l.b16 %v330
      %v1389 = vunpack.c.h.b16 %v330
      %v1390 = vunpack.c.l.b16 %v331
      %v1391 = vunpack.c.h.b16 %v331
      %v1392 = vunpack.c.l.b16 %v332
      %v1393 = vunpack.c.h.b16 %v332
      %v1394 = vunpack.c.l.b16 %v333
      %v1395 = vunpack.c.h.b16 %v333
      %v1396 = vunpack.c.l.b16 %v334
      %v1397 = vunpack.c.h.b16 %v334
      %v1398 = vunpack.c.l.b16 %v335
      %v1399 = vunpack.c.h.b16 %v335
      %v1400 = vunpack.c.l.b16 %v336
      %v1401 = vunpack.c.h.b16 %v336
      %v1402 = vunpack.c.l.b16 %v337
      %v1403 = vunpack.c.h.b16 %v337
      %v1404 = vunpack.c.l.b16 %v338
      %v1405 = vunpack.c.h.b16 %v338
      %v1406 = vunpack.c.l.b16 %v339
      %v1407 = vunpack.c.h.b16 %v339
      %v1408 = vunpack.c.l.b16 %v340
      %v1409 = vunpack.c.h.b16 %v340
      %v1410 = vunpack.c.l.b16 %v341
      %v1411 = vunpack.c.h.b16 %v341
      %v1412 = vunpack.c.l.b16 %v342
      %v1413 = vunpack.c.h.b16 %v342
      %v1414 = vunpack.c.l.b16 %v343
      %v1415 = vunpack.c.h.b16 %v343
      %v1416 = vunpack.c.l.b16 %v344
      %v1417 = vunpack.c.h.b16 %v344
      %v1418 = vunpack.c.l.b16 %v345
      %v1419 = vunpack.c.h.b16 %v345
      %v1420 = vunpack.c.l.b16 %v346
      %v1421 = vunpack.c.h.b16 %v346
      %v1422 = vunpack.c.l.b16 %v347
      %v1423 = vunpack.c.h.b16 %v347
      %v1424 = vunpack.c.l.b16 %v348
      %v1425 = vunpack.c.h.b16 %v348
      %v1426 = vunpack.c.l.b16 %v349
      %v1427 = vunpack.c.h.b16 %v349
      %v1428 = vunpack.c.l.b16 %v350
      %v1429 = vunpack.c.h.b16 %v350
      %v1430 = vunpack.c.l.b16 %v351
      %v1431 = vunpack.c.h.b16 %v351
      %v1432 = vunpack.c.l.b16 %v352
      %v1433 = vunpack.c.h.b16 %v352
      %v1434 = vunpack.c.l.b16 %v353
      %v1435 = vunpack.c.h.b16 %v353
      %v1436 = vunpack.c.l.b16 %v354
      %v1437 = vunpack.c.h.b16 %v354
      %v1438 = vunpack.c.l.b16 %v355
      %v1439 = vunpack.c.h.b16 %v355
      %v1440 = vunpack.c.l.b16 %v356
      %v1441 = vunpack.c.h.b16 %v356
      %v1442 = vunpack.c.l.b16 %v357
      %v1443 = vunpack.c.h.b16 %v357
      %v1444 = vunpack.c.l.b16 %v358
      %v1445 = vunpack.c.h.b16 %v358
      %v1446 = vunpack.c.l.b16 %v359
      %v1447 = vunpack.c.h.b16 %v359
      %v1448 = vunpack.c.l.b16 %v360
      %v1449 = vunpack.c.h.b16 %v360
      %v1450 = vunpack.c.l.b16 %v361
      %v1451 = vunpack.c.h.b16 %v361
      %v1452 = vunpack.c.l.b16 %v362
      %v1453 = vunpack.c.h.b16 %v362
      %v1454 = vunpack.c.l.b16 %v363
      %v1455 = vunpack.c.h.b16 %v363
      %v1456 = vunpack.c.l.b16 %v364
      %v1457 = vunpack.c.h.b16 %v364
      %v1458 = vunpack.c.l.b16 %v365
      %v1459 = vunpack.c.h.b16 %v365
      %v1460 = vunpack.c.l.b16 %v366
      %v1461 = vunpack.c.h.b16 %v366
      %v1462 = vunpack.c.l.b16 %v367
      %v1463 = vunpack.c.h.b16 %v367
      %v1464 = vunpack.c.l.b16 %v368
      %v1465 = vunpack.c.h.b16 %v368
      %v1466 = vunpack.c.l.b16 %v369
      %v1467 = vunpack.c.h.b16 %v369
      %v1468 = vunpack.c.l.b16 %v370
      %v1469 = vunpack.c.h.b16 %v370
      %v1470 = vunpack.c.l.b16 %v371
      %v1471 = vunpack.c.h.b16 %v371
      %v1472 = vunpack.c.l.b16 %v372
      %v1473 = vunpack.c.h.b16 %v372
      %v1474 = vunpack.c.l.b16 %v373
      %v1475 = vunpack.c.h.b16 %v373
      %v1476 = vunpack.c.l.b16 %v374
      %v1477 = vunpack.c.h.b16 %v374
      %v1478 = vunpack.c.l.b16 %v375
      %v1479 = vunpack.c.h.b16 %v375
      %v1480 = vunpack.c.l.b16 %v376
      %v1481 = vunpack.c.h.b16 %v376
      %v1482 = vunpack.c.l.b16 %v377
      %v1483 = vunpack.c.h.b16 %v377
      %v1484 = vunpack.c.l.b16 %v378
      %v1485 = vunpack.c.h.b16 %v378
      %v1486 = vunpack.c.l.b16 %v379
      %v1487 = vunpack.c.h.b16 %v379
      %v1488 = vunpack.c.l.b16 %v380
      %v1489 = vunpack.c.h.b16 %v380
      %v1490 = vunpack.c.l.b16 %v381
      %v1491 = vunpack.c.h.b16 %v381
      %v1492 = vunpack.c.l.b16 %v382
      %v1493 = vunpack.c.h.b16 %v382
      %v1494 = vunpack.c.l.b16 %v383
      %v1495 = vunpack.c.h.b16 %v383
      %v1496 = vunpack.c.l.b16 %v384
      %v1497 = vunpack.c.h.b16 %v384
      %v1498 = vunpack.c.l.b16 %v385
      %v1499 = vunpack.c.h.b16 %v385
      %v1500 = vunpack.c.l.b16 %v386
      %v1501 = vunpack.c.h.b16 %v386
      %v1502 = vunpack.c.l.b16 %v387
      %v1503 = vunpack.c.h.b16 %v387
      %v1504 = vunpack.c.l.b16 %v388
      %v1505 = vunpack.c.h.b16 %v388
      %v1506 = vunpack.c.l.b16 %v389
      %v1507 = vunpack.c.h.b16 %v389
      %v1508 = vunpack.c.l.b16 %v390
      %v1509 = vunpack.c.h.b16 %v390
      %v1510 = vunpack.c.l.b16 %v391
      %v1511 = vunpack.c.h.b16 %v391
      %v1512 = vunpack.c.l.b16 %v392
      %v1513 = vunpack.c.h.b16 %v392
      %v1514 = vunpack.c.l.b16 %v393
      %v1515 = vunpack.c.h.b16 %v393
      %v1516 = vunpack.c.l.b16 %v394
      %v1517 = vunpack.c.h.b16 %v394
      %v1518 = vunpack.c.l.b16 %v395
      %v1519 = vunpack.c.h.b16 %v395
      %v1520 = vunpack.c.l.b16 %v396
      %v1521 = vunpack.c.h.b16 %v396
      %v1522 = vunpack.c.l.b16 %v397
      %v1523 = vunpack.c.h.b16 %v397
      %v1524 = vunpack.c.l.b16 %v398
      %v1525 = vunpack.c.h.b16 %v398
      %v1526 = vunpack.c.l.b16 %v399
      %v1527 = vunpack.c.h.b16 %v399
      %v1528 = vunpack.c.l.b16 %v400
      %v1529 = vunpack.c.h.b16 %v400
      %v1530 = vunpack.c.l.b16 %v401
      %v1531 = vunpack.c.h.b16 %v401
      %v1532 = vunpack.c.l.b16 %v402
      %v1533 = vunpack.c.h.b16 %v402
      %v1534 = vunpack.c.l.b16 %v403
      %v1535 = vunpack.c.h.b16 %v403
      %v1536 = vunpack.c.l.b16 %v404
      %v1537 = vunpack.c.h.b16 %v404
      %v1538 = vunpack.c.l.b16 %v405
      %v1539 = vunpack.c.h.b16 %v405
      %v1540 = vunpack.c.l.b16 %v406
      %v1541 = vunpack.c.h.b16 %v406
      %v1542 = vunpack.c.l.b16 %v407
      %v1543 = vunpack.c.h.b16 %v407
      %v1544 = vunpack.c.l.b16 %v408
      %v1545 = vunpack.c.h.b16 %v408
      %v1546 = vunpack.c.l.b16 %v409
      %v1547 = vunpack.c.h.b16 %v409
      %v1548 = vunpack.c.l.b16 %v410
      %v1549 = vunpack.c.h.b16 %v410
      %v1550 = vunpack.c.l.b16 %v411
      %v1551 = vunpack.c.h.b16 %v411
      %v1552 = vunpack.c.l.b16 %v412
      %v1553 = vunpack.c.h.b16 %v412
      %v1554 = vunpack.c.l.b16 %v413
      %v1555 = vunpack.c.h.b16 %v413
      %v1556 = vunpack.c.l.b16 %v414
      %v1557 = vunpack.c.h.b16 %v414
      %v1558 = vunpack.c.l.b16 %v415
      %v1559 = vunpack.c.h.b16 %v415
      %v1560 = vunpack.c.l.b16 %v416
      %v1561 = vunpack.c.h.b16 %v416
      %v1562 = vunpack.c.l.b16 %v417
      %v1563 = vunpack.c.h.b16 %v417
      %v1564 = vunpack.c.l.b16 %v418
      %v1565 = vunpack.c.h.b16 %v418
      %v1566 = vunpack.c.l.b16 %v419
      %v1567 = vunpack.c.h.b16 %v419
      %v1568 = vunpack.c.l.b16 %v420
      %v1569 = vunpack.c.h.b16 %v420
      %v1570 = vunpack.c.l.b16 %v421
      %v1571 = vunpack.c.h.b16 %v421
      %v1572 = vunpack.c.l.b16 %v422
      %v1573 = vunpack.c.h.b16 %v422
      %v1574 = vunpack.c.l.b16 %v423
      %v1575 = vunpack.c.h.b16 %v423
      %v1576 = vunpack.c.l.b16 %v424
      %v1577 = vunpack.c.h.b16 %v424
      %v1578 = vunpack.c.l.b16 %v425
      %v1579 = vunpack.c.h.b16 %v425
      %v1580 = vunpack.c.l.b16 %v426
      %v1581 = vunpack.c.h.b16 %v426
      %v1582 = vunpack.c.l.b16 %v427
      %v1583 = vunpack.c.h.b16 %v427
      %v1584 = vunpack.c.l.b16 %v428
      %v1585 = vunpack.c.h.b16 %v428
      %v1586 = vunpack.c.l.b16 %v429
      %v1587 = vunpack.c.h.b16 %v429
      %v1588 = vunpack.c.l.b16 %v430
      %v1589 = vunpack.c.h.b16 %v430
      %v1590 = vunpack.c.l.b16 %v431
      %v1591 = vunpack.c.h.b16 %v431
      %v1592 = vunpack.c.l.b16 %v432
      %v1593 = vunpack.c.h.b16 %v432
      %v1594 = vunpack.c.l.b16 %v433
      %v1595 = vunpack.c.h.b16 %v433
      %v1596 = vunpack.c.l.b16 %v434
      %v1597 = vunpack.c.h.b16 %v434
      %v1598 = vunpack.c.l.b16 %v435
      %v1599 = vunpack.c.h.b16 %v435
      %v1600 = vunpack.c.l.b16 %v436
      %v1601 = vunpack.c.h.b16 %v436
      %v1602 = vunpack.c.l.b16 %v437
      %v1603 = vunpack.c.h.b16 %v437
      %v1604 = vunpack.c.l.b16 %v438
      %v1605 = vunpack.c.h.b16 %v438
      %v1606 = vunpack.c.l.b16 %v439
      %v1607 = vunpack.c.h.b16 %v439
      %v1608 = vunpack.c.l.b16 %v440
      %v1609 = vunpack.c.h.b16 %v440
      %v1610 = vunpack.c.l.b16 %v441
      %v1611 = vunpack.c.h.b16 %v441
      %v1612 = vunpack.c.l.b16 %v442
      %v1613 = vunpack.c.h.b16 %v442
      %v1614 = vunpack.c.l.b16 %v443
      %v1615 = vunpack.c.h.b16 %v443
      %v1616 = vunpack.c.l.b16 %v444
      %v1617 = vunpack.c.h.b16 %v444
      %v1618 = vunpack.c.l.b16 %v445
      %v1619 = vunpack.c.h.b16 %v445
      %v1620 = vunpack.c.l.b16 %v446
      %v1621 = vunpack.c.h.b16 %v446
      %v1622 = vunpack.c.l.b16 %v447
      %v1623 = vunpack.c.h.b16 %v447
      %v1624 = vunpack.c.l.b16 %v448
      %v1625 = vunpack.c.h.b16 %v448
      %v1626 = vunpack.c.l.b16 %v449
      %v1627 = vunpack.c.h.b16 %v449
      %v1628 = vunpack.c.l.b16 %v450
      %v1629 = vunpack.c.h.b16 %v450
      %v1630 = vunpack.c.l.b16 %v451
      %v1631 = vunpack.c.h.b16 %v451
      %v1632 = vunpack.c.l.b16 %v452
      %v1633 = vunpack.c.h.b16 %v452
      %v1634 = vunpack.c.l.b16 %v453
      %v1635 = vunpack.c.h.b16 %v453
      %v1636 = vunpack.c.l.b16 %v454
      %v1637 = vunpack.c.h.b16 %v454
      %v1638 = vunpack.c.l.b16 %v455
      %v1639 = vunpack.c.h.b16 %v455
      %v1640 = vunpack.c.l.b16 %v456
      %v1641 = vunpack.c.h.b16 %v456
      %v1642 = vunpack.c.l.b16 %v457
      %v1643 = vunpack.c.h.b16 %v457
      %v1644 = vunpack.c.l.b16 %v458
      %v1645 = vunpack.c.h.b16 %v458
      %v1646 = vunpack.c.l.b16 %v459
      %v1647 = vunpack.c.h.b16 %v459
      %v1648 = vunpack.c.l.b16 %v460
      %v1649 = vunpack.c.h.b16 %v460
      %v1650 = vunpack.c.l.b16 %v461
      %v1651 = vunpack.c.h.b16 %v461
      %v1652 = vunpack.c.l.b16 %v462
      %v1653 = vunpack.c.h.b16 %v462
      %v1654 = vunpack.c.l.b16 %v463
      %v1655 = vunpack.c.h.b16 %v463
      %v1656 = vunpack.c.l.b16 %v464
      %v1657 = vunpack.c.h.b16 %v464
      %v1658 = vunpack.c.l.b16 %v465
      %v1659 = vunpack.c.h.b16 %v465
      %v1660 = vunpack.c.l.b16 %v466
      %v1661 = vunpack.c.h.b16 %v466
      %v1662 = vunpack.c.l.b16 %v467
      %v1663 = vunpack.c.h.b16 %v467
      %v1664 = vunpack.c.l.b16 %v468
      %v1665 = vunpack.c.h.b16 %v468
      %v1666 = vunpack.c.l.b16 %v469
      %v1667 = vunpack.c.h.b16 %v469
      %v1668 = vunpack.c.l.b16 %v470
      %v1669 = vunpack.c.h.b16 %v470
      %v1670 = vunpack.c.l.b16 %v471
      %v1671 = vunpack.c.h.b16 %v471
      %v1672 = vunpack.c.l.b16 %v472
      %v1673 = vunpack.c.h.b16 %v472
      %v1674 = vunpack.c.l.b16 %v473
      %v1675 = vunpack.c.h.b16 %v473
      %v1676 = vunpack.c.l.b16 %v474
      %v1677 = vunpack.c.h.b16 %v474
      %v1678 = vunpack.c.l.b16 %v475
      %v1679 = vunpack.c.h.b16 %v475
      %v1680 = vunpack.c.l.b16 %v476
      %v1681 = vunpack.c.h.b16 %v476
      %v1682 = vunpack.c.l.b16 %v477
      %v1683 = vunpack.c.h.b16 %v477
      %v1684 = vunpack.c.l.b16 %v478
      %v1685 = vunpack.c.h.b16 %v478
      %v1686 = vunpack.c.l.b16 %v479
      %v1687 = vunpack.c.h.b16 %v479
      %v1688 = vunpack.c.l.b16 %v480
      %v1689 = vunpack.c.h.b16 %v480
      %v1690 = vunpack.c.l.b16 %v481
      %v1691 = vunpack.c.h.b16 %v481
      %v1692 = vunpack.c.l.b16 %v482
      %v1693 = vunpack.c.h.b16 %v482
      %v1694 = vunpack.c.l.b16 %v483
      %v1695 = vunpack.c.h.b16 %v483
      %v1696 = vunpack.c.l.b16 %v484
      %v1697 = vunpack.c.h.b16 %v484
      %v1698 = vunpack.c.l.b16 %v485
      %v1699 = vunpack.c.h.b16 %v485
      %v1700 = vunpack.c.l.b16 %v486
      %v1701 = vunpack.c.h.b16 %v486
      %v1702 = vunpack.c.l.b16 %v487
      %v1703 = vunpack.c.h.b16 %v487
      %v1704 = vunpack.c.l.b16 %v488
      %v1705 = vunpack.c.h.b16 %v488
      %v1706 = vunpack.c.l.b16 %v489
      %v1707 = vunpack.c.h.b16 %v489
      %v1708 = vunpack.c.l.b16 %v490
      %v1709 = vunpack.c.h.b16 %v490
      %v1710 = vunpack.c.l.b16 %v491
      %v1711 = vunpack.c.h.b16 %v491
      %v1712 = vunpack.c.l.b16 %v492
      %v1713 = vunpack.c.h.b16 %v492
      %v1714 = vunpack.c.l.b16 %v493
      %v1715 = vunpack.c.h.b16 %v493
      %v1716 = vunpack.c.l.b16 %v494
      %v1717 = vunpack.c.h.b16 %v494
      %v1718 = vunpack.c.l.b16 %v495
      %v1719 = vunpack.c.h.b16 %v495
      %v1720 = vunpack.c.l.b16 %v496
      %v1721 = vunpack.c.h.b16 %v496
      %v1722 = vunpack.c.l.b16 %v497
      %v1723 = vunpack.c.h.b16 %v497
      %v1724 = vunpack.c.l.b16 %v498
      %v1725 = vunpack.c.h.b16 %v498
      %v1726 = vunpack.c.l.b16 %v499
      %v1727 = vunpack.c.h.b16 %v499
      %v1728 = vunpack.c.l.b16 %v500
      %v1729 = vunpack.c.h.b16 %v500
      %v1730 = vunpack.c.l.b16 %v501
      %v1731 = vunpack.c.h.b16 %v501
      %v1732 = vunpack.c.l.b16 %v502
      %v1733 = vunpack.c.h.b16 %v502
      %v1734 = vunpack.c.l.b16 %v503
      %v1735 = vunpack.c.h.b16 %v503
      %v1736 = vunpack.c.l.b16 %v504
      %v1737 = vunpack.c.h.b16 %v504
      %v1738 = vunpack.c.l.b16 %v505
      %v1739 = vunpack.c.h.b16 %v505
      %v1740 = vunpack.c.l.b16 %v506
      %v1741 = vunpack.c.h.b16 %v506
      %v1742 = vunpack.c.l.b16 %v507
      %v1743 = vunpack.c.h.b16 %v507
      %v1744 = vunpack.c.l.b16 %v508
      %v1745 = vunpack.c.h.b16 %v508
      %v1746 = vunpack.c.l.b16 %v509
      %v1747 = vunpack.c.h.b16 %v509
      %v1748 = vunpack.c.l.b16 %v510
      %v1749 = vunpack.c.h.b16 %v510
      %v1750 = vunpack.c.l.b16 %v511
      %v1751 = vunpack.c.h.b16 %v511
      %v1752 = vunpack.c.l.b16 %v512
      %v1753 = vunpack.c.h.b16 %v512
      %v1754 = vunpack.c.l.b16 %v513
      %v1755 = vunpack.c.h.b16 %v513
      %v1756 = vunpack.c.l.b16 %v514
      %v1757 = vunpack.c.h.b16 %v514
      %v1758 = vunpack.c.l.b16 %v515
      %v1759 = vunpack.c.h.b16 %v515
      %v1760 = vunpack.c.l.b16 %v516
      %v1761 = vunpack.c.h.b16 %v516
      %v1762 = vunpack.c.l.b16 %v517
      %v1763 = vunpack.c.h.b16 %v517
      %v1764 = vunpack.c.l.b16 %v518
      %v1765 = vunpack.c.h.b16 %v518
      %v1766 = vunpack.c.l.b16 %v519
      %v1767 = vunpack.c.h.b16 %v519
      %v1768 = vunpack.c.l.b16 %v520
      %v1769 = vunpack.c.h.b16 %v520
      %v1770 = vunpack.c.l.b16 %v521
      %v1771 = vunpack.c.h.b16 %v521
      %v1772 = vunpack.c.l.b16 %v522
      %v1773 = vunpack.c.h.b16 %v522
      %v1774 = vunpack.c.l.b16 %v523
      %v1775 = vunpack.c.h.b16 %v523
      %v1776 = vunpack.c.l.b16 %v524
      %v1777 = vunpack.c.h.b16 %v524
      %v1778 = vunpack.c.l.b16 %v525
      %v1779 = vunpack.c.h.b16 %v525
      %v1780 = vunpack.c.l.b16 %v526
      %v1781 = vunpack.c.h.b16 %v526
      %v1782 = vunpack.c.l.b16 %v527
      %v1783 = vunpack.c.h.b16 %v527
      %v1784 = vunpack.c.l.b16 %v528
      %v1785 = vunpack.c.h.b16 %v528
      %v1786 = vunpack.c.l.b16 %v529
      %v1787 = vunpack.c.h.b16 %v529
      %v1788 = vunpack.c.l.b16 %v530
      %v1789 = vunpack.c.h.b16 %v530
      %v1790 = vunpack.c.l.b16 %v531
      %v1791 = vunpack.c.h.b16 %v531
      %v1792 = vunpack.c.l.b16 %v532
      %v1793 = vunpack.c.h.b16 %v532
      %v1794 = vunpack.c.l.b16 %v533
      %v1795 = vunpack.c.h.b16 %v533
      %v1796 = vunpack.c.l.b16 %v534
      %v1797 = vunpack.c.h.b16 %v534
      %v1798 = vunpack.c.l.b16 %v535
      %v1799 = vunpack.c.h.b16 %v535
      %v1800 = vunpack.c.l.b16 %v536
      %v1801 = vunpack.c.h.b16 %v536
      %v1802 = vunpack.c.l.b16 %v537
      %v1803 = vunpack.c.h.b16 %v537
      %v1804 = vunpack.c.l.b16 %v538
      %v1805 = vunpack.c.h.b16 %v538
      %v1806 = vunpack.c.l.b16 %v539
      %v1807 = vunpack.c.h.b16 %v539
      %v1808 = vunpack.c.l.b16 %v540
      %v1809 = vunpack.c.h.b16 %v540
      %v1810 = vunpack.c.l.b16 %v541
      %v1811 = vunpack.c.h.b16 %v541
      %v1812 = vunpack.c.l.b16 %v542
      %v1813 = vunpack.c.h.b16 %v542
      %v1814 = vunpack.c.l.b16 %v543
      %v1815 = vunpack.c.h.b16 %v543
      %v1816 = vunpack.c.l.b16 %v544
      %v1817 = vunpack.c.h.b16 %v544
      %v1818 = vunpack.c.l.b16 %v545
      %v1819 = vunpack.c.h.b16 %v545
      %v1820 = vunpack.c.l.b16 %v546
      %v1821 = vunpack.c.h.b16 %v546
      %v1822 = vunpack.c.l.b16 %v547
      %v1823 = vunpack.c.h.b16 %v547
      %v1824 = vunpack.c.l.b16 %v548
      %v1825 = vunpack.c.h.b16 %v548
      %v1826 = vunpack.c.l.b16 %v549
      %v1827 = vunpack.c.h.b16 %v549
      %v1828 = vunpack.c.l.b16 %v550
      %v1829 = vunpack.c.h.b16 %v550
      %v1830 = vunpack.c.l.b16 %v551
      %v1831 = vunpack.c.h.b16 %v551
      %v1832 = vunpack.c.l.b16 %v552
      %v1833 = vunpack.c.h.b16 %v552
      %v1834 = vunpack.c.l.b16 %v553
      %v1835 = vunpack.c.h.b16 %v553
      %v1836 = vunpack.c.l.b16 %v554
      %v1837 = vunpack.c.h.b16 %v554
      %v1838 = vunpack.c.l.b16 %v555
      %v1839 = vunpack.c.h.b16 %v555
      %v1840 = vunpack.c.l.b16 %v556
      %v1841 = vunpack.c.h.b16 %v556
      %v1842 = vunpack.c.l.b16 %v557
      %v1843 = vunpack.c.h.b16 %v557
      %v1844 = vunpack.c.l.b16 %v558
      %v1845 = vunpack.c.h.b16 %v558
      %v1846 = vunpack.c.l.b16 %v559
      %v1847 = vunpack.c.h.b16 %v559
      %v1848 = vunpack.c.l.b16 %v560
      %v1849 = vunpack.c.h.b16 %v560
      %v1850 = vunpack.c.l.b16 %v561
      %v1851 = vunpack.c.h.b16 %v561
      %v1852 = vunpack.c.l.b16 %v562
      %v1853 = vunpack.c.h.b16 %v562
      %v1854 = vunpack.c.l.b16 %v563
      %v1855 = vunpack.c.h.b16 %v563
      %v1856 = vunpack.c.l.b16 %v564
      %v1857 = vunpack.c.h.b16 %v564
      %v1858 = vunpack.c.l.b16 %v565
      %v1859 = vunpack.c.h.b16 %v565
      %v1860 = vunpack.c.l.b16 %v566
      %v1861 = vunpack.c.h.b16 %v566
      %v1862 = vunpack.c.l.b16 %v567
      %v1863 = vunpack.c.h.b16 %v567
      %v1864 = vunpack.c.l.b16 %v568
      %v1865 = vunpack.c.h.b16 %v568
      %v1866 = vunpack.c.l.b16 %v569
      %v1867 = vunpack.c.h.b16 %v569
      %v1868 = vunpack.c.l.b16 %v570
      %v1869 = vunpack.c.h.b16 %v570
      %v1870 = vunpack.c.l.b16 %v571
      %v1871 = vunpack.c.h.b16 %v571
      %v1872 = vunpack.c.l.b16 %v572
      %v1873 = vunpack.c.h.b16 %v572
      %v1874 = vunpack.c.l.b16 %v573
      %v1875 = vunpack.c.h.b16 %v573
      %v1876 = vunpack.c.l.b16 %v574
      %v1877 = vunpack.c.h.b16 %v574
      %v1878 = vunpack.c.l.b16 %v575
      %v1879 = vunpack.c.h.b16 %v575
      %v1880 = vunpack.c.l.b16 %v576
      %v1881 = vunpack.c.h.b16 %v576
      %v1882 = vunpack.c.l.b16 %v577
      %v1883 = vunpack.c.h.b16 %v577
      %v1884 = vpack.c.b16 %v1052, %v1020
      %v1885 = vpack.c.b16 %v1053, %v1021
      %v1886 = vpack.c.b16 %v1054, %v1022
      %v1887 = vpack.c.b16 %v1055, %v1023
      %v1888 = vpack.c.b16 %v1056, %v1024
      %v1889 = vpack.c.b16 %v1057, %v1025
      %v1890 = vpack.c.b16 %v1058, %v1026
      %v1891 = vpack.c.b16 %v1059, %v1027
      %v1892 = vpack.c.b16 %v1060, %v1028
      %v1893 = vpack.c.b16 %v1061, %v1029
      %v1894 = vpack.c.b16 %v1062, %v1030
      %v1895 = vpack.c.b16 %v1063, %v1031
      %v1896 = vpack.c.b16 %v1064, %v1032
      %v1897 = vpack.c.b16 %v1065, %v1033
      %v1898 = vpack.c.b16 %v1066, %v1034
      %v1899 = vpack.c.b16 %v1067, %v1035
      %v1900 = vpack.c.b16 %v1068, %v1036
      %v1901 = vpack.c.b16 %v1069, %v1037
      %v1902 = vpack.c.b16 %v1070, %v1038
      %v1903 = vpack.c.b16 %v1071, %v1039
      %v1904 = vpack.c.b16 %v1072, %v1040
      %v1905 = vpack.c.b16 %v1073, %v1041
      %v1906 = vpack.c.b16 %v1074, %v1042
      %v1907 = vpack.c.b16 %v1075, %v1043
      %v1908 = vpack.c.b16 %v1076, %v1044
      %v1909 = vpack.c.b16 %v1077, %v1045
      %v1910 = vpack.c.b16 %v1078, %v1046
      %v1911 = vpack.c.b16 %v1079, %v1047
      %v1912 = vpack.c.b16 %v1080, %v1048
      %v1913 = vpack.c.b16 %v1081, %v1049
      %v1914 = vpack.c.b16 %v1082, %v1050
      %v1915 = vpack.c.b16 %v1083, %v1051
      %v1916 = vpack.c.b16 %v1116, %v1084
      %v1917 = vpack.c.b16 %v1117, %v1085
      %v1918 = vpack.c.b16 %v1118, %v1086
      %v1919 = vpack.c.b16 %v1119, %v1087
      %v1920 = vpack.c.b16 %v1120, %v1088
      %v1921 = vpack.c.b16 %v1121, %v1089
      %v1922 = vpack.c.b16 %v1122, %v1090
      %v1923 = vpack.c.b16 %v1123, %v1091
      %v1924 = vpack.c.b16 %v1124, %v1092
      %v1925 = vpack.c.b16 %v1125, %v1093
      %v1926 = vpack.c.b16 %v1126, %v1094
      %v1927 = vpack.c.b16 %v1127, %v1095
      %v1928 = vpack.c.b16 %v1128, %v1096
      %v1929 = vpack.c.b16 %v1129, %v1097
      %v1930 = vpack.c.b16 %v1130, %v1098
      %v1931 = vpack.c.b16 %v1131, %v1099
      %v1932 = vpack.c.b16 %v1132, %v1100
      %v1933 = vpack.c.b16 %v1133, %v1101
      %v1934 = vpack.c.b16 %v1134, %v1102
      %v1935 = vpack.c.b16 %v1135, %v1103
      %v1936 = vpack.c.b16 %v1136, %v1104
      %v1937 = vpack.c.b16 %v1137, %v1105
      %v1938 = vpack.c.b16 %v1138, %v1106
      %v1939 = vpack.c.b16 %v1139, %v1107
      %v1940 = vpack.c.b16 %v1140, %v1108
      %v1941 = vpack.c.b16 %v1141, %v1109
      %v1942 = vpack.c.b16 %v1142, %v1110
      %v1943 = vpack.c.b16 %v1143, %v1111
      %v1944 = vpack.c.b16 %v1144, %v1112
      %v1945 = vpack.c.b16 %v1145, %v1113
      %v1946 = vpack.c.b16 %v1146, %v1114
      %v1947 = vpack.c.b16 %v1147, %v1115
      %v1948 = vpack.c.b16 %v1180, %v1148
      %v1949 = vpack.c.b16 %v1181, %v1149
      %v1950 = vpack.c.b16 %v1182, %v1150
      %v1951 = vpack.c.b16 %v1183, %v1151
      %v1952 = vpack.c.b16 %v1184, %v1152
      %v1953 = vpack.c.b16 %v1185, %v1153
      %v1954 = vpack.c.b16 %v1186, %v1154
      %v1955 = vpack.c.b16 %v1187, %v1155
      %v1956 = vpack.c.b16 %v1188, %v1156
      %v1957 = vpack.c.b16 %v1189, %v1157
      %v1958 = vpack.c.b16 %v1190, %v1158
      %v1959 = vpack.c.b16 %v1191, %v1159
      %v1960 = vpack.c.b16 %v1192, %v1160
      %v1961 = vpack.c.b16 %v1193, %v1161
      %v1962 = vpack.c.b16 %v1194, %v1162
      %v1963 = vpack.c.b16 %v1195, %v1163
      %v1964 = vpack.c.b16 %v1196, %v1164
      %v1965 = vpack.c.b16 %v1197, %v1165
      %v1966 = vpack.c.b16 %v1198, %v1166
      %v1967 = vpack.c.b16 %v1199, %v1167
      %v1968 = vpack.c.b16 %v1200, %v1168
      %v1969 = vpack.c.b16 %v1201, %v1169
      %v1970 = vpack.c.b16 %v1202, %v1170
      %v1971 = vpack.c.b16 %v1203, %v1171
      %v1972 = vpack.c.b16 %v1204, %v1172
      %v1973 = vpack.c.b16 %v1205, %v1173
      %v1974 = vpack.c.b16 %v1206, %v1174
      %v1975 = vpack.c.b16 %v1207, %v1175
      %v1976 = vpack.c.b16 %v1208, %v1176
      %v1977 = vpack.c.b16 %v1209, %v1177
      %v1978 = vpack.c.b16 %v1210, %v1178
      %v1979 = vpack.c.b16 %v1211, %v1179
      %v1980 = vpack.c.b16 %v1244, %v1212
      %v1981 = vpack.c.b16 %v1245, %v1213
      %v1982 = vpack.c.b16 %v1246, %v1214
      %v1983 = vpack.c.b16 %v1247, %v1215
      %v1984 = vpack.c.b16 %v1248, %v1216
      %v1985 = vpack.c.b16 %v1249, %v1217
      %v1986 = vpack.c.b16 %v1250, %v1218
      %v1987 = vpack.c.b16 %v1251, %v1219
      %v1988 = vpack.c.b16 %v1252, %v1220
      %v1989 = vpack.c.b16 %v1253, %v1221
      %v1990 = vpack.c.b16 %v1254, %v1222
      %v1991 = vpack.c.b16 %v1255, %v1223
      %v1992 = vpack.c.b16 %v1256, %v1224
      %v1993 = vpack.c.b16 %v1257, %v1225
      %v1994 = vpack.c.b16 %v1258, %v1226
      %v1995 = vpack.c.b16 %v1259, %v1227
      %v1996 = vpack.c.b16 %v1260, %v1228
      %v1997 = vpack.c.b16 %v1261, %v1229
      %v1998 = vpack.c.b16 %v1262, %v1230
      %v1999 = vpack.c.b16 %v1263, %v1231
      %v2000 = vpack.c.b16 %v1264, %v1232
      %v2001 = vpack.c.b16 %v1265, %v1233
      %v2002 = vpack.c.b16 %v1266, %v1234
      %v2003 = vpack.c.b16 %v1267, %v1235
      %v2004 = vpack.c.b16 %v1268, %v1236
      %v2005 = vpack.c.b16 %v1269, %v1237
      %v2006 = vpack.c.b16 %v1270, %v1238
      %v2007 = vpack.c.b16 %v1271, %v1239
      %v2008 = vpack.c.b16 %v1272, %v1240
      %v2009 = vpack.c.b16 %v1273, %v1241
      %v2010 = vpack.c.b16 %v1274, %v1242
      %v2011 = vpack.c.b16 %v1275, %v1243
      %v2012 = vpack.c.b16 %v1308, %v1276
      %v2013 = vpack.c.b16 %v1309, %v1277
      %v2014 = vpack.c.b16 %v1310, %v1278
      %v2015 = vpack.c.b16 %v1311, %v1279
      %v2016 = vpack.c.b16 %v1312, %v1280
      %v2017 = vpack.c.b16 %v1313, %v1281
      %v2018 = vpack.c.b16 %v1314, %v1282
      %v2019 = vpack.c.b16 %v1315, %v1283
      %v2020 = vpack.c.b16 %v1316, %v1284
      %v2021 = vpack.c.b16 %v1317, %v1285
      %v2022 = vpack.c.b16 %v1318, %v1286
      %v2023 = vpack.c.b16 %v1319, %v1287
      %v2024 = vpack.c.b16 %v1320, %v1288
      %v2025 = vpack.c.b16 %v1321, %v1289
      %v2026 = vpack.c.b16 %v1322, %v1290
      %v2027 = vpack.c.b16 %v1323, %v1291
      %v2028 = vpack.c.b16 %v1324, %v1292
      %v2029 = vpack.c.b16 %v1325, %v1293
      %v2030 = vpack.c.b16 %v1326, %v1294
      %v2031 = vpack.c.b16 %v1327, %v1295
      %v2032 = vpack.c.b16 %v1328, %v1296
      %v2033 = vpack.c.b16 %v1329, %v1297
      %v2034 = vpack.c.b16 %v1330, %v1298
      %v2035 = vpack.c.b16 %v1331, %v1299
      %v2036 = vpack.c.b16 %v1332, %v1300
      %v2037 = vpack.c.b16 %v1333, %v1301
      %v2038 = vpack.c.b16 %v1334, %v1302
      %v2039 = vpack.c.b16 %v1335, %v1303
      %v2040 = vpack.c.b16 %v1336, %v1304
      %v2041 = vpack.c.b16 %v1337, %v1305
      %v2042 = vpack.c.b16 %v1338, %v1306
      %v2043 = vpack.c.b16 %v1339, %v1307
      %v2044 = vpack.c.b16 %v1372, %v1340
      %v2045 = vpack.c.b16 %v1373, %v1341
      %v2046 = vpack.c.b16 %v1374, %v1342
      %v2047 = vpack.c.b16 %v1375, %v1343
      %v2048 = vpack.c.b16 %v1376, %v1344
      %v2049 = vpack.c.b16 %v1377, %v1345
      %v2050 = vpack.c.b16 %v1378, %v1346
      %v2051 = vpack.c.b16 %v1379, %v1347
      %v2052 = vpack.c.b16 %v1380, %v1348
      %v2053 = vpack.c.b16 %v1381, %v1349
      %v2054 = vpack.c.b16 %v1382, %v1350
      %v2055 = vpack.c.b16 %v1383, %v1351
      %v2056 = vpack.c.b16 %v1384, %v1352
      %v2057 = vpack.c.b16 %v1385, %v1353
      %v2058 = vpack.c.b16 %v1386, %v1354
      %v2059 = vpack.c.b16 %v1387, %v1355
      %v2060 = vpack.c.b16 %v1388, %v1356
      %v2061 = vpack.c.b16 %v1389, %v1357
      %v2062 = vpack.c.b16 %v1390, %v1358
      %v2063 = vpack.c.b16 %v1391, %v1359
      %v2064 = vpack.c.b16 %v1392, %v1360
      %v2065 = vpack.c.b16 %v1393, %v1361
      %v2066 = vpack.c.b16 %v1394, %v1362
      %v2067 = vpack.c.b16 %v1395, %v1363
      %v2068 = vpack.c.b16 %v1396, %v1364
      %v2069 = vpack.c.b16 %v1397, %v1365
      %v2070 = vpack.c.b16 %v1398, %v1366
      %v2071 = vpack.c.b16 %v1399, %v1367
      %v2072 = vpack.c.b16 %v1400, %v1368
      %v2073 = vpack.c.b16 %v1401, %v1369
      %v2074 = vpack.c.b16 %v1402, %v1370
      %v2075 = vpack.c.b16 %v1403, %v1371
      %v2076 = vpack.c.b16 %v1436, %v1404
      %v2077 = vpack.c.b16 %v1437, %v1405
      %v2078 = vpack.c.b16 %v1438, %v1406
      %v2079 = vpack.c.b16 %v1439, %v1407
      %v2080 = vpack.c.b16 %v1440, %v1408
      %v2081 = vpack.c.b16 %v1441, %v1409
      %v2082 = vpack.c.b16 %v1442, %v1410
      %v2083 = vpack.c.b16 %v1443, %v1411
      %v2084 = vpack.c.b16 %v1444, %v1412
      %v2085 = vpack.c.b16 %v1445, %v1413
      %v2086 = vpack.c.b16 %v1446, %v1414
      %v2087 = vpack.c.b16 %v1447, %v1415
      %v2088 = vpack.c.b16 %v1448, %v1416
      %v2089 = vpack.c.b16 %v1449, %v1417
      %v2090 = vpack.c.b16 %v1450, %v1418
      %v2091 = vpack.c.b16 %v1451, %v1419
      %v2092 = vpack.c.b16 %v1452, %v1420
      %v2093 = vpack.c.b16 %v1453, %v1421
      %v2094 = vpack.c.b16 %v1454, %v1422
      %v2095 = vpack.c.b16 %v1455, %v1423
      %v2096 = vpack.c.b16 %v1456, %v1424
      %v2097 = vpack.c.b16 %v1457, %v1425
      %v2098 = vpack.c.b16 %v1458, %v1426
      %v2099 = vpack.c.b16 %v1459, %v1427
      %v2100 = vpack.c.b16 %v1460, %v1428
      %v2101 = vpack.c.b16 %v1461, %v1429
      %v2102 = vpack.c.b16 %v1462, %v1430
      %v2103 = vpack.c.b16 %v1463, %v1431
      %v2104 = vpack.c.b16 %v1464, %v1432
      %v2105 = vpack.c.b16 %v1465, %v1433
      %v2106 = vpack.c.b16 %v1466, %v1434
      %v2107 = vpack.c.b16 %v1467, %v1435
      %v2108 = vpack.c.b16 %v1500, %v1468
      %v2109 = vpack.c.b16 %v1501, %v1469
      %v2110 = vpack.c.b16 %v1502, %v1470
      %v2111 = vpack.c.b16 %v1503, %v1471
      %v2112 = vpack.c.b16 %v1504, %v1472
      %v2113 = vpack.c.b16 %v1505, %v1473
      %v2114 = vpack.c.b16 %v1506, %v1474
      %v2115 = vpack.c.b16 %v1507, %v1475
      %v2116 = vpack.c.b16 %v1508, %v1476
      %v2117 = vpack.c.b16 %v1509, %v1477
      %v2118 = vpack.c.b16 %v1510, %v1478
      %v2119 = vpack.c.b16 %v1511, %v1479
      %v2120 = vpack.c.b16 %v1512, %v1480
      %v2121 = vpack.c.b16 %v1513, %v1481
      %v2122 = vpack.c.b16 %v1514, %v1482
      %v2123 = vpack.c.b16 %v1515, %v1483
      %v2124 = vpack.c.b16 %v1516, %v1484
      %v2125 = vpack.c.b16 %v1517, %v1485
      %v2126 = vpack.c.b16 %v1518, %v1486
      %v2127 = vpack.c.b16 %v1519, %v1487
      %v2128 = vpack.c.b16 %v1520, %v1488
      %v2129 = vpack.c.b16 %v1521, %v1489
      %v2130 = vpack.c.b16 %v1522, %v1490
      %v2131 = vpack.c.b16 %v1523, %v1491
      %v2132 = vpack.c.b16 %v1524, %v1492
      %v2133 = vpack.c.b16 %v1525, %v1493
      %v2134 = vpack.c.b16 %v1526, %v1494
      %v2135 = vpack.c.b16 %v1527, %v1495
      %v2136 = vpack.c.b16 %v1528, %v1496
      %v2137 = vpack.c.b16 %v1529, %v1497
      %v2138 = vpack.c.b16 %v1530, %v1498
      %v2139 = vpack.c.b16 %v1531, %v1499
      %v2140 = vpack.c.b16 %v1564, %v1532
      %v2141 = vpack.c.b16 %v1565, %v1533
      %v2142 = vpack.c.b16 %v1566, %v1534
      %v2143 = vpack.c.b16 %v1567, %v1535
      %v2144 = vpack.c.b16 %v1568, %v1536
      %v2145 = vpack.c.b16 %v1569, %v1537
      %v2146 = vpack.c.b16 %v1570, %v1538
      %v2147 = vpack.c.b16 %v1571, %v1539
      %v2148 = vpack.c.b16 %v1572, %v1540
      %v2149 = vpack.c.b16 %v1573, %v1541
      %v2150 = vpack.c.b16 %v1574, %v1542
      %v2151 = vpack.c.b16 %v1575, %v1543
      %v2152 = vpack.c.b16 %v1576, %v1544
      %v2153 = vpack.c.b16 %v1577, %v1545
      %v2154 = vpack.c.b16 %v1578, %v1546
      %v2155 = vpack.c.b16 %v1579, %v1547
      %v2156 = vpack.c.b16 %v1580, %v1548
      %v2157 = vpack.c.b16 %v1581, %v1549
      %v2158 = vpack.c.b16 %v1582, %v1550
      %v2159 = vpack.c.b16 %v1583, %v1551
      %v2160 = vpack.c.b16 %v1584, %v1552
      %v2161 = vpack.c.b16 %v1585, %v1553
      %v2162 = vpack.c.b16 %v1586, %v1554
      %v2163 = vpack.c.b16 %v1587, %v1555
      %v2164 = vpack.c.b16 %v1588, %v1556
      %v2165 = vpack.c.b16 %v1589, %v1557
      %v2166 = vpack.c.b16 %v1590, %v1558
      %v2167 = vpack.c.b16 %v1591, %v1559
      %v2168 = vpack.c.b16 %v1592, %v1560
      %v2169 = vpack.c.b16 %v1593, %v1561
      %v2170 = vpack.c.b16 %v1594, %v1562
      %v2171 = vpack.c.b16 %v1595, %v1563
      %v2172 = vpack.c.b16 %v1628, %v1596
      %v2173 = vpack.c.b16 %v1629, %v1597
      %v2174 = vpack.c.b16 %v1630, %v1598
      %v2175 = vpack.c.b16 %v1631, %v1599
      %v2176 = vpack.c.b16 %v1632, %v1600
      %v2177 = vpack.c.b16 %v1633, %v1601
      %v2178 = vpack.c.b16 %v1634, %v1602
      %v2179 = vpack.c.b16 %v1635, %v1603
      %v2180 = vpack.c.b16 %v1636, %v1604
      %v2181 = vpack.c.b16 %v1637, %v1605
      %v2182 = vpack.c.b16 %v1638, %v1606
      %v2183 = vpack.c.b16 %v1639, %v1607
      %v2184 = vpack.c.b16 %v1640, %v1608
      %v2185 = vpack.c.b16 %v1641, %v1609
      %v2186 = vpack.c.b16 %v1642, %v1610
      %v2187 = vpack.c.b16 %v1643, %v1611
      %v2188 = vpack.c.b16 %v1644, %v1612
      %v2189 = vpack.c.b16 %v1645, %v1613
      %v2190 = vpack.c.b16 %v1646, %v1614
      %v2191 = vpack.c.b16 %v1647, %v1615
      %v2192 = vpack.c.b16 %v1648, %v1616
      %v2193 = vpack.c.b16 %v1649, %v1617
      %v2194 = vpack.c.b16 %v1650, %v1618
      %v2195 = vpack.c.b16 %v1651, %v1619
      %v2196 = vpack.c.b16 %v1652, %v1620
      %v2197 = vpack.c.b16 %v1653, %v1621
      %v2198 = vpack.c.b16 %v1654, %v1622
      %v2199 = vpack.c.b16 %v1655, %v1623
      %v2200 = vpack.c.b16 %v1656, %v1624
      %v2201 = vpack.c.b16 %v1657, %v1625
      %v2202 = vpack.c.b16 %v1658, %v1626
      %v2203 = vpack.c.b16 %v1659, %v1627
      %v2204 = vpack.c.b16 %v1692, %v1660
      %v2205 = vpack.c.b16 %v1693, %v1661
      %v2206 = vpack.c.b16 %v1694, %v1662
      %v2207 = vpack.c.b16 %v1695, %v1663
      %v2208 = vpack.c.b16 %v1696, %v1664
      %v2209 = vpack.c.b16 %v1697, %v1665
      %v2210 = vpack.c.b16 %v1698, %v1666
      %v2211 = vpack.c.b16 %v1699, %v1667
      %v2212 = vpack.c.b16 %v1700, %v1668
      %v2213 = vpack.c.b16 %v1701, %v1669
      %v2214 = vpack.c.b16 %v1702, %v1670
      %v2215 = vpack.c.b16 %v1703, %v1671
      %v2216 = vpack.c.b16 %v1704, %v1672
      %v2217 = vpack.c.b16 %v1705, %v1673
      %v2218 = vpack.c.b16 %v1706, %v1674
      %v2219 = vpack.c.b16 %v1707, %v1675
      %v2220 = vpack.c.b16 %v1708, %v1676
      %v2221 = vpack.c.b16 %v1709, %v1677
      %v2222 = vpack.c.b16 %v1710, %v1678
      %v2223 = vpack.c.b16 %v1711, %v1679
      %v2224 = vpack.c.b16 %v1712, %v1680
      %v2225 = vpack.c.b16 %v1713, %v1681
      %v2226 = vpack.c.b16 %v1714, %v1682
      %v2227 = vpack.c.b16 %v1715, %v1683
      %v2228 = vpack.c.b16 %v1716, %v1684
      %v2229 = vpack.c.b16 %v1717, %v1685
      %v2230 = vpack.c.b16 %v1718, %v1686
      %v2231 = vpack.c.b16 %v1719, %v1687
      %v2232 = vpack.c.b16 %v1720, %v1688
      %v2233 = vpack.c.b16 %v1721, %v1689
      %v2234 = vpack.c.b16 %v1722, %v1690
      %v2235 = vpack.c.b16 %v1723, %v1691
      %v2236 = vpack.c.b16 %v1756, %v1724
      %v2237 = vpack.c.b16 %v1757, %v1725
      %v2238 = vpack.c.b16 %v1758, %v1726
      %v2239 = vpack.c.b16 %v1759, %v1727
      %v2240 = vpack.c.b16 %v1760, %v1728
      %v2241 = vpack.c.b16 %v1761, %v1729
      %v2242 = vpack.c.b16 %v1762, %v1730
      %v2243 = vpack.c.b16 %v1763, %v1731
      %v2244 = vpack.c.b16 %v1764, %v1732
      %v2245 = vpack.c.b16 %v1765, %v1733
      %v2246 = vpack.c.b16 %v1766, %v1734
      %v2247 = vpack.c.b16 %v1767, %v1735
      %v2248 = vpack.c.b16 %v1768, %v1736
      %v2249 = vpack.c.b16 %v1769, %v1737
      %v2250 = vpack.c.b16 %v1770, %v1738
      %v2251 = vpack.c.b16 %v1771, %v1739
      %v2252 = vpack.c.b16 %v1772, %v1740
      %v2253 = vpack.c.b16 %v1773, %v1741
      %v2254 = vpack.c.b16 %v1774, %v1742
      %v2255 = vpack.c.b16 %v1775, %v1743
      %v2256 = vpack.c.b16 %v1776, %v1744
      %v2257 = vpack.c.b16 %v1777, %v1745
      %v2258 = vpack.c.b16 %v1778, %v1746
      %v2259 = vpack.c.b16 %v1779, %v1747
      %v2260 = vpack.c.b16 %v1780, %v1748
      %v2261 = vpack.c.b16 %v1781, %v1749
      %v2262 = vpack.c.b16 %v1782, %v1750
      %v2263 = vpack.c.b16 %v1783, %v1751
      %v2264 = vpack.c.b16 %v1784, %v1752
      %v2265 = vpack.c.b16 %v1785, %v1753
      %v2266 = vpack.c.b16 %v1786, %v1754
      %v2267 = vpack.c.b16 %v1787, %v1755
      %v2268 = vpack.c.b16 %v1820, %v1788
      %v2269 = vpack.c.b16 %v1821, %v1789
      %v2270 = vpack.c.b16 %v1822, %v1790
      %v2271 = vpack.c.b16 %v1823, %v1791
      %v2272 = vpack.c.b16 %v1824, %v1792
      %v2273 = vpack.c.b16 %v1825, %v1793
      %v2274 = vpack.c.b16 %v1826, %v1794
      %v2275 = vpack.c.b16 %v1827, %v1795
      %v2276 = vpack.c.b16 %v1828, %v1796
      %v2277 = vpack.c.b16 %v1829, %v1797
      %v2278 = vpack.c.b16 %v1830, %v1798
      %v2279 = vpack.c.b16 %v1831, %v1799
      %v2280 = vpack.c.b16 %v1832, %v1800
      %v2281 = vpack.c.b16 %v1833, %v1801
      %v2282 = vpack.c.b16 %v1834, %v1802
      %v2283 = vpack.c.b16 %v1835, %v1803
      %v2284 = vpack.c.b16 %v1836, %v1804
      %v2285 = vpack.c.b16 %v1837, %v1805
      %v2286 = vpack.c.b16 %v1838, %v1806
      %v2287 = vpack.c.b16 %v1839, %v1807
      %v2288 = vpack.c.b16 %v1840, %v1808
      %v2289 = vpack.c.b16 %v1841, %v1809
      %v2290 = vpack.c.b16 %v1842, %v1810
      %v2291 = vpack.c.b16 %v1843, %v1811
      %v2292 = vpack.c.b16 %v1844, %v1812
      %v2293 = vpack.c.b16 %v1845, %v1813
      %v2294 = vpack.c.b16 %v1846, %v1814
      %v2295 = vpack.c.b16 %v1847, %v1815
      %v2296 = vpack.c.b16 %v1848, %v1816
      %v2297 = vpack.c.b16 %v1849, %v1817
      %v2298 = vpack.c.b16 %v1850, %v1818
      %v2299 = vpack.c.b16 %v1851, %v1819
      %v2300 = vpack.c.b16 %v1852, %v1852
      %v2301 = vpack.c.b16 %v1853, %v1853
      %v2302 = vpack.c.b16 %v1854, %v1854
      %v2303 = vpack.c.b16 %v1855, %v1855
      %v2304 = vpack.c.b16 %v1856, %v1856
      %v2305 = vpack.c.b16 %v1857, %v1857
      %v2306 = vpack.c.b16 %v1858, %v1858
      %v2307 = vpack.c.b16 %v1859, %v1859
      %v2308 = vpack.c.b16 %v1860, %v1860
      %v2309 = vpack.c.b16 %v1861, %v1861
      %v2310 = vpack.c.b16 %v1862, %v1862
      %v2311 = vpack.c.b16 %v1863, %v1863
      %v2312 = vpack.c.b16 %v1864, %v1864
      %v2313 = vpack.c.b16 %v1865, %v1865
      %v2314 = vpack.c.b16 %v1866, %v1866
      %v2315 = vpack.c.b16 %v1867, %v1867
      %v2316 = vpack.c.b16 %v1868, %v1868
      %v2317 = vpack.c.b16 %v1869, %v1869
      %v2318 = vpack.c.b16 %v1870, %v1870
      %v2319 = vpack.c.b16 %v1871, %v1871
      %v2320 = vpack.c.b16 %v1872, %v1872
      %v2321 = vpack.c.b16 %v1873, %v1873
      %v2322 = vpack.c.b16 %v1874, %v1874
      %v2323 = vpack.c.b16 %v1875, %v1875
      %v2324 = vpack.c.b16 %v1876, %v1876
      %v2325 = vpack.c.b16 %v1877, %v1877
      %v2326 = vpack.c.b16 %v1878, %v1878
      %v2327 = vpack.c.b16 %v1879, %v1879
      %v2328 = vpack.c.b16 %v1880, %v1880
      %v2329 = vpack.c.b16 %v1881, %v1881
      %v2330 = vpack.c.b16 %v1882, %v1882
      %v2331 = vpack.c.b16 %v1883, %v1883
      %vm2748 = vcmask 719872
      %v2750 = vsel %vm2748, %v586, 0
      %vm2752 = vcmask 1043456
      %v2754 = vsel %vm2752, %v2300, 0
      %v2757 = vsel %vm2752, %v2301, 0
      %v2760 = vsel %vm2752, %v2302, 0
      %v2763 = vsel %vm2752, %v2303, 0
      %v2766 = vsel %vm2752, %v2304, 0
      %v2769 = vsel %vm2752, %v2305, 0
      %v2772 = vsel %vm2752, %v2306, 0
      %v2775 = vsel %vm2752, %v2307, 0
      %v2778 = vsel %vm2752, %v2308, 0
      %v2781 = vsel %vm2752, %v2309, 0
      %v2784 = vsel %vm2752, %v2310, 0
      %v2787 = vsel %vm2752, %v2311, 0
      %v2790 = vsel %vm2752, %v2312, 0
      %v2793 = vsel %vm2752, %v2313, 0
      %v2796 = vsel %vm2752, %v2314, 0
      %v2799 = vsel %vm2752, %v2315, 0
      %v2802 = vsel %vm2752, %v2316, 0
      %v2805 = vsel %vm2752, %v2317, 0
      %v2808 = vsel %vm2752, %v2318, 0
      %v2811 = vsel %vm2752, %v2319, 0
      %v2814 = vsel %vm2752, %v2320, 0
      %v2817 = vsel %vm2752, %v2321, 0
      %v2820 = vsel %vm2752, %v2322, 0
      %v2823 = vsel %vm2752, %v2323, 0
      %v2826 = vsel %vm2752, %v2324, 0
      %v2829 = vsel %vm2752, %v2325, 0
      %v2832 = vsel %vm2752, %v2326, 0
      %v2835 = vsel %vm2752, %v2327, 0
      %v2838 = vsel %vm2752, %v2328, 0
      %v2841 = vsel %vm2752, %v2329, 0
      %v2844 = vsel %vm2752, %v2330, 0
      %v2847 = vsel %vm2752, %v2331, 0
      %2849 = vmatprep.subr.bf16.mxu0 %v1885
      %2850 = vmatpush1.bf16.msra.mxu0 %v1884
      %2851 = vmatprep.subr.bf16.mxu0 %v1917
      %2852 = vmatpush1.bf16.msra.mxu0 %v1916
      %2853 = vmatprep.subr.bf16.mxu0 %v1949
      %2854 = vmatpush1.bf16.msra.mxu0 %v1948
      %2855 = vmatprep.subr.bf16.mxu0 %v1981
      %2856 = vmatpush1.bf16.msra.mxu0 %v1980
      %2857 = vmatprep.subr.bf16.mxu0 %v2013
      %2858 = vmatpush1.bf16.msra.mxu0 %v2012
      %2859 = vmatprep.subr.bf16.mxu0 %v2045
      %2860 = vmatpush1.bf16.msra.mxu0 %v2044
      %2861 = vmatprep.subr.bf16.mxu0 %v2077
      %2862 = vmatpush1.bf16.msra.mxu0 %v2076
      %2863 = vmatprep.subr.bf16.mxu0 %v2109
      %2864 = vmatpush1.bf16.msra.mxu0 %v2108
      %2865 = vmatprep.subr.bf16.mxu0 %v2141
      %2866 = vmatpush1.bf16.msra.mxu0 %v2140
      %2867 = vmatprep.subr.bf16.mxu0 %v2173
      %2868 = vmatpush1.bf16.msra.mxu0 %v2172
      %2869 = vmatprep.subr.bf16.mxu0 %v2205
      %2870 = vmatpush1.bf16.msra.mxu0 %v2204
      %2871 = vmatprep.subr.bf16.mxu0 %v2237
      %2872 = vmatpush1.bf16.msra.mxu0 %v2236
      %2873 = vmatprep.subr.bf16.mxu0 %v2269
      %2874 = vmatpush1.bf16.msra.mxu0 %v2268
      %2875 = vmatprep.subr.bf16.mxu0 %v2757
      %2876 = vmatpush1.bf16.msra.mxu0 %v2754
      %2877 = vmatprep.subr.bf16.mxu0 0
      %2878 = vmatpush1.bf16.msra.mxu0 0
      %2879 = vmatprep.subr.bf16.mxu0 0
      %2880 = vmatpush1.bf16.msra.mxu0 0
      %2881 = vmatprep.mubr.bf16.mxu0 %v2750
      %2882 = vmatmul.mubr.bf16.gmra.mrb[0].mxu0 %v585
      %v2883 = vpop.f32.mrb[0].mxu0
      %v2884 = vadd.f32 0.0, %v2883
      %v2885 = vpop.f32.mrb[0].mxu0
      %v2886 = vadd.f32 0.0, %v2885
      %v2887 = vpop.f32.mrb[0].mxu0
      %v2888 = vpop.f32.mrb[0].mxu0
      %2889 = vdwg.mxu0
      %2890 = vmatprep.subr.bf16.mxu0 %v1887
      %2891 = vmatpush1.bf16.msra.mxu0 %v1886
      %2892 = vmatprep.subr.bf16.mxu0 %v1919
      %2893 = vmatpush1.bf16.msra.mxu0 %v1918
      %2894 = vmatprep.subr.bf16.mxu0 %v1951
      %2895 = vmatpush1.bf16.msra.mxu0 %v1950
      %2896 = vmatprep.subr.bf16.mxu0 %v1983
      %2897 = vmatpush1.bf16.msra.mxu0 %v1982
      %2898 = vmatprep.subr.bf16.mxu0 %v2015
      %2899 = vmatpush1.bf16.msra.mxu0 %v2014
      %2900 = vmatprep.subr.bf16.mxu0 %v2047
      %2901 = vmatpush1.bf16.msra.mxu0 %v2046
      %2902 = vmatprep.subr.bf16.mxu0 %v2079
      %2903 = vmatpush1.bf16.msra.mxu0 %v2078
      %2904 = vmatprep.subr.bf16.mxu0 %v2111
      %2905 = vmatpush1.bf16.msra.mxu0 %v2110
      %2906 = vmatprep.subr.bf16.mxu0 %v2143
      %2907 = vmatpush1.bf16.msra.mxu0 %v2142
      %2908 = vmatprep.subr.bf16.mxu0 %v2175
      %2909 = vmatpush1.bf16.msra.mxu0 %v2174
      %2910 = vmatprep.subr.bf16.mxu0 %v2207
      %2911 = vmatpush1.bf16.msra.mxu0 %v2206
      %2912 = vmatprep.subr.bf16.mxu0 %v2239
      %2913 = vmatpush1.bf16.msra.mxu0 %v2238
      %2914 = vmatprep.subr.bf16.mxu0 %v2271
      %2915 = vmatpush1.bf16.msra.mxu0 %v2270
      %2916 = vmatprep.subr.bf16.mxu0 %v2763
      %2917 = vmatpush1.bf16.msra.mxu0 %v2760
      %2918 = vmatprep.subr.bf16.mxu0 0
      %2919 = vmatpush1.bf16.msra.mxu0 0
      %2920 = vmatprep.subr.bf16.mxu0 0
      %2921 = vmatpush1.bf16.msra.mxu0 0
      %2922 = vmatprep.mubr.bf16.mxu0 %v2750
      %2923 = vmatmul.mubr.bf16.gmra.mrb[0].mxu0 %v585
      %v2924 = vpop.f32.mrb[0].mxu0
      %v2925 = vadd.f32 0.0, %v2924
      %v2926 = vpop.f32.mrb[0].mxu0
      %v2927 = vadd.f32 0.0, %v2926
      %v2928 = vpop.f32.mrb[0].mxu0
      %v2929 = vpop.f32.mrb[0].mxu0
      %2930 = vdwg.mxu0
      %2931 = vmatprep.subr.bf16.mxu0 %v1889
      %2932 = vmatpush1.bf16.msra.mxu0 %v1888
      %2933 = vmatprep.subr.bf16.mxu0 %v1921
      %2934 = vmatpush1.bf16.msra.mxu0 %v1920
      %2935 = vmatprep.subr.bf16.mxu0 %v1953
      %2936 = vmatpush1.bf16.msra.mxu0 %v1952
      %2937 = vmatprep.subr.bf16.mxu0 %v1985
      %2938 = vmatpush1.bf16.msra.mxu0 %v1984
      %2939 = vmatprep.subr.bf16.mxu0 %v2017
      %2940 = vmatpush1.bf16.msra.mxu0 %v2016
      %2941 = vmatprep.subr.bf16.mxu0 %v2049
      %2942 = vmatpush1.bf16.msra.mxu0 %v2048
      %2943 = vmatprep.subr.bf16.mxu0 %v2081
      %2944 = vmatpush1.bf16.msra.mxu0 %v2080
      %2945 = vmatprep.subr.bf16.mxu0 %v2113
      %2946 = vmatpush1.bf16.msra.mxu0 %v2112
      %2947 = vmatprep.subr.bf16.mxu0 %v2145
      %2948 = vmatpush1.bf16.msra.mxu0 %v2144
      %2949 = vmatprep.subr.bf16.mxu0 %v2177
      %2950 = vmatpush1.bf16.msra.mxu0 %v2176
      %2951 = vmatprep.subr.bf16.mxu0 %v2209
      %2952 = vmatpush1.bf16.msra.mxu0 %v2208
      %2953 = vmatprep.subr.bf16.mxu0 %v2241
      %2954 = vmatpush1.bf16.msra.mxu0 %v2240
      %2955 = vmatprep.subr.bf16.mxu0 %v2273
      %2956 = vmatpush1.bf16.msra.mxu0 %v2272
      %2957 = vmatprep.subr.bf16.mxu0 %v2769
      %2958 = vmatpush1.bf16.msra.mxu0 %v2766
      %2959 = vmatprep.subr.bf16.mxu0 0
      %2960 = vmatpush1.bf16.msra.mxu0 0
      %2961 = vmatprep.subr.bf16.mxu0 0
      %2962 = vmatpush1.bf16.msra.mxu0 0
      %2963 = vmatprep.mubr.bf16.mxu0 %v2750
      %2964 = vmatmul.mubr.bf16.gmra.mrb[0].mxu0 %v585
      %v2965 = vpop.f32.mrb[0].mxu0
      %v2966 = vadd.f32 0.0, %v2965
      %v2967 = vpop.f32.mrb[0].mxu0
      %v2968 = vadd.f32 0.0, %v2967
      %v2969 = vpop.f32.mrb[0].mxu0
      %v2970 = vpop.f32.mrb[0].mxu0
      %2971 = vdwg.mxu0
      %2972 = vmatprep.subr.bf16.mxu0 %v1891
      %2973 = vmatpush1.bf16.msra.mxu0 %v1890
      %2974 = vmatprep.subr.bf16.mxu0 %v1923
      %2975 = vmatpush1.bf16.msra.mxu0 %v1922
      %2976 = vmatprep.subr.bf16.mxu0 %v1955
      %2977 = vmatpush1.bf16.msra.mxu0 %v1954
      %2978 = vmatprep.subr.bf16.mxu0 %v1987
      %2979 = vmatpush1.bf16.msra.mxu0 %v1986
      %2980 = vmatprep.subr.bf16.mxu0 %v2019
      %2981 = vmatpush1.bf16.msra.mxu0 %v2018
      %2982 = vmatprep.subr.bf16.mxu0 %v2051
      %2983 = vmatpush1.bf16.msra.mxu0 %v2050
      %2984 = vmatprep.subr.bf16.mxu0 %v2083
      %2985 = vmatpush1.bf16.msra.mxu0 %v2082
      %2986 = vmatprep.subr.bf16.mxu0 %v2115
      %2987 = vmatpush1.bf16.msra.mxu0 %v2114
      %2988 = vmatprep.subr.bf16.mxu0 %v2147
      %2989 = vmatpush1.bf16.msra.mxu0 %v2146
      %2990 = vmatprep.subr.bf16.mxu0 %v2179
      %2991 = vmatpush1.bf16.msra.mxu0 %v2178
      %2992 = vmatprep.subr.bf16.mxu0 %v2211
      %2993 = vmatpush1.bf16.msra.mxu0 %v2210
      %2994 = vmatprep.subr.bf16.mxu0 %v2243
      %2995 = vmatpush1.bf16.msra.mxu0 %v2242
      %2996 = vmatprep.subr.bf16.mxu0 %v2275
      %2997 = vmatpush1.bf16.msra.mxu0 %v2274
      %2998 = vmatprep.subr.bf16.mxu0 %v2775
      %2999 = vmatpush1.bf16.msra.mxu0 %v2772
      %3000 = vmatprep.subr.bf16.mxu0 0
      %3001 = vmatpush1.bf16.msra.mxu0 0
      %3002 = vmatprep.subr.bf16.mxu0 0
      %3003 = vmatpush1.bf16.msra.mxu0 0
      %3004 = vmatprep.mubr.bf16.mxu0 %v2750
      %3005 = vmatmul.mubr.bf16.gmra.mrb[0].mxu0 %v585
      %v3006 = vpop.f32.mrb[0].mxu0
      %v3007 = vadd.f32 0.0, %v3006
      %v3008 = vpop.f32.mrb[0].mxu0
      %v3009 = vadd.f32 0.0, %v3008
      %v3010 = vpop.f32.mrb[0].mxu0
      %v3011 = vpop.f32.mrb[0].mxu0
      %3012 = vdwg.mxu0
      %3013 = vmatprep.subr.bf16.mxu0 %v1893
      %3014 = vmatpush1.bf16.msra.mxu0 %v1892
      %3015 = vmatprep.subr.bf16.mxu0 %v1925
      %3016 = vmatpush1.bf16.msra.mxu0 %v1924
      %3017 = vmatprep.subr.bf16.mxu0 %v1957
      %3018 = vmatpush1.bf16.msra.mxu0 %v1956
      %3019 = vmatprep.subr.bf16.mxu0 %v1989
      %3020 = vmatpush1.bf16.msra.mxu0 %v1988
      %3021 = vmatprep.subr.bf16.mxu0 %v2021
      %3022 = vmatpush1.bf16.msra.mxu0 %v2020
      %3023 = vmatprep.subr.bf16.mxu0 %v2053
      %3024 = vmatpush1.bf16.msra.mxu0 %v2052
      %3025 = vmatprep.subr.bf16.mxu0 %v2085
      %3026 = vmatpush1.bf16.msra.mxu0 %v2084
      %3027 = vmatprep.subr.bf16.mxu0 %v2117
      %3028 = vmatpush1.bf16.msra.mxu0 %v2116
      %3029 = vmatprep.subr.bf16.mxu0 %v2149
      %3030 = vmatpush1.bf16.msra.mxu0 %v2148
      %3031 = vmatprep.subr.bf16.mxu0 %v2181
      %3032 = vmatpush1.bf16.msra.mxu0 %v2180
      %3033 = vmatprep.subr.bf16.mxu0 %v2213
      %3034 = vmatpush1.bf16.msra.mxu0 %v2212
      %3035 = vmatprep.subr.bf16.mxu0 %v2245
      %3036 = vmatpush1.bf16.msra.mxu0 %v2244
      %3037 = vmatprep.subr.bf16.mxu0 %v2277
      %3038 = vmatpush1.bf16.msra.mxu0 %v2276
      %3039 = vmatprep.subr.bf16.mxu0 %v2781
      %3040 = vmatpush1.bf16.msra.mxu0 %v2778
      %3041 = vmatprep.subr.bf16.mxu0 0
      %3042 = vmatpush1.bf16.msra.mxu0 0
      %3043 = vmatprep.subr.bf16.mxu0 0
      %3044 = vmatpush1.bf16.msra.mxu0 0
      %3045 = vmatprep.mubr.bf16.mxu0 %v2750
      %3046 = vmatmul.mubr.bf16.gmra.mrb[0].mxu0 %v585
      %v3047 = vpop.f32.mrb[0].mxu0
      %v3048 = vadd.f32 0.0, %v3047
      %v3049 = vpop.f32.mrb[0].mxu0
      %v3050 = vadd.f32 0.0, %v3049
      %v3051 = vpop.f32.mrb[0].mxu0
      %v3052 = vpop.f32.mrb[0].mxu0
      %3053 = vdwg.mxu0
      %3054 = vmatprep.subr.bf16.mxu0 %v1895
      %3055 = vmatpush1.bf16.msra.mxu0 %v1894
      %3056 = vmatprep.subr.bf16.mxu0 %v1927
      %3057 = vmatpush1.bf16.msra.mxu0 %v1926
      %3058 = vmatprep.subr.bf16.mxu0 %v1959
      %3059 = vmatpush1.bf16.msra.mxu0 %v1958
      %3060 = vmatprep.subr.bf16.mxu0 %v1991
      %3061 = vmatpush1.bf16.msra.mxu0 %v1990
      %3062 = vmatprep.subr.bf16.mxu0 %v2023
      %3063 = vmatpush1.bf16.msra.mxu0 %v2022
      %3064 = vmatprep.subr.bf16.mxu0 %v2055
      %3065 = vmatpush1.bf16.msra.mxu0 %v2054
      %3066 = vmatprep.subr.bf16.mxu0 %v2087
      %3067 = vmatpush1.bf16.msra.mxu0 %v2086
      %3068 = vmatprep.subr.bf16.mxu0 %v2119
      %3069 = vmatpush1.bf16.msra.mxu0 %v2118
      %3070 = vmatprep.subr.bf16.mxu0 %v2151
      %3071 = vmatpush1.bf16.msra.mxu0 %v2150
      %3072 = vmatprep.subr.bf16.mxu0 %v2183
      %3073 = vmatpush1.bf16.msra.mxu0 %v2182
      %3074 = vmatprep.subr.bf16.mxu0 %v2215
      %3075 = vmatpush1.bf16.msra.mxu0 %v2214
      %3076 = vmatprep.subr.bf16.mxu0 %v2247
      %3077 = vmatpush1.bf16.msra.mxu0 %v2246
      %3078 = vmatprep.subr.bf16.mxu0 %v2279
      %3079 = vmatpush1.bf16.msra.mxu0 %v2278
      %3080 = vmatprep.subr.bf16.mxu0 %v2787
      %3081 = vmatpush1.bf16.msra.mxu0 %v2784
      %3082 = vmatprep.subr.bf16.mxu0 0
      %3083 = vmatpush1.bf16.msra.mxu0 0
      %3084 = vmatprep.subr.bf16.mxu0 0
      %3085 = vmatpush1.bf16.msra.mxu0 0
      %3086 = vmatprep.mubr.bf16.mxu0 %v2750
      %3087 = vmatmul.mubr.bf16.gmra.mrb[0].mxu0 %v585
      %v3088 = vpop.f32.mrb[0].mxu0
      %v3089 = vadd.f32 0.0, %v3088
      %v3090 = vpop.f32.mrb[0].mxu0
      %v3091 = vadd.f32 0.0, %v3090
      %v3092 = vpop.f32.mrb[0].mxu0
      %v3093 = vpop.f32.mrb[0].mxu0
      %3094 = vdwg.mxu0
      %3095 = vmatprep.subr.bf16.mxu0 %v1897
      %3096 = vmatpush1.bf16.msra.mxu0 %v1896
      %3097 = vmatprep.subr.bf16.mxu0 %v1929
      %3098 = vmatpush1.bf16.msra.mxu0 %v1928
      %3099 = vmatprep.subr.bf16.mxu0 %v1961
      %3100 = vmatpush1.bf16.msra.mxu0 %v1960
      %3101 = vmatprep.subr.bf16.mxu0 %v1993
      %3102 = vmatpush1.bf16.msra.mxu0 %v1992
      %3103 = vmatprep.subr.bf16.mxu0 %v2025
      %3104 = vmatpush1.bf16.msra.mxu0 %v2024
      %3105 = vmatprep.subr.bf16.mxu0 %v2057
      %3106 = vmatpush1.bf16.msra.mxu0 %v2056
      %3107 = vmatprep.subr.bf16.mxu0 %v2089
      %3108 = vmatpush1.bf16.msra.mxu0 %v2088
      %3109 = vmatprep.subr.bf16.mxu0 %v2121
      %3110 = vmatpush1.bf16.msra.mxu0 %v2120
      %3111 = vmatprep.subr.bf16.mxu0 %v2153
      %3112 = vmatpush1.bf16.msra.mxu0 %v2152
      %3113 = vmatprep.subr.bf16.mxu0 %v2185
      %3114 = vmatpush1.bf16.msra.mxu0 %v2184
      %3115 = vmatprep.subr.bf16.mxu0 %v2217
      %3116 = vmatpush1.bf16.msra.mxu0 %v2216
      %3117 = vmatprep.subr.bf16.mxu0 %v2249
      %3118 = vmatpush1.bf16.msra.mxu0 %v2248
      %3119 = vmatprep.subr.bf16.mxu0 %v2281
      %3120 = vmatpush1.bf16.msra.mxu0 %v2280
      %3121 = vmatprep.subr.bf16.mxu0 %v2793
      %3122 = vmatpush1.bf16.msra.mxu0 %v2790
      %3123 = vmatprep.subr.bf16.mxu0 0
      %3124 = vmatpush1.bf16.msra.mxu0 0
      %3125 = vmatprep.subr.bf16.mxu0 0
      %3126 = vmatpush1.bf16.msra.mxu0 0
      %3127 = vmatprep.mubr.bf16.mxu0 %v2750
      %3128 = vmatmul.mubr.bf16.gmra.mrb[0].mxu0 %v585
      %v3129 = vpop.f32.mrb[0].mxu0
      %v3130 = vadd.f32 0.0, %v3129
      %v3131 = vpop.f32.mrb[0].mxu0
      %v3132 = vadd.f32 0.0, %v3131
      %v3133 = vpop.f32.mrb[0].mxu0
      %v3134 = vpop.f32.mrb[0].mxu0
      %3135 = vdwg.mxu0
      %3136 = vmatprep.subr.bf16.mxu0 %v1899
      %3137 = vmatpush1.bf16.msra.mxu0 %v1898
      %3138 = vmatprep.subr.bf16.mxu0 %v1931
      %3139 = vmatpush1.bf16.msra.mxu0 %v1930
      %3140 = vmatprep.subr.bf16.mxu0 %v1963
      %3141 = vmatpush1.bf16.msra.mxu0 %v1962
      %3142 = vmatprep.subr.bf16.mxu0 %v1995
      %3143 = vmatpush1.bf16.msra.mxu0 %v1994
      %3144 = vmatprep.subr.bf16.mxu0 %v2027
      %3145 = vmatpush1.bf16.msra.mxu0 %v2026
      %3146 = vmatprep.subr.bf16.mxu0 %v2059
      %3147 = vmatpush1.bf16.msra.mxu0 %v2058
      %3148 = vmatprep.subr.bf16.mxu0 %v2091
      %3149 = vmatpush1.bf16.msra.mxu0 %v2090
      %3150 = vmatprep.subr.bf16.mxu0 %v2123
      %3151 = vmatpush1.bf16.msra.mxu0 %v2122
      %3152 = vmatprep.subr.bf16.mxu0 %v2155
      %3153 = vmatpush1.bf16.msra.mxu0 %v2154
      %3154 = vmatprep.subr.bf16.mxu0 %v2187
      %3155 = vmatpush1.bf16.msra.mxu0 %v2186
      %3156 = vmatprep.subr.bf16.mxu0 %v2219
      %3157 = vmatpush1.bf16.msra.mxu0 %v2218
      %3158 = vmatprep.subr.bf16.mxu0 %v2251
      %3159 = vmatpush1.bf16.msra.mxu0 %v2250
      %3160 = vmatprep.subr.bf16.mxu0 %v2283
      %3161 = vmatpush1.bf16.msra.mxu0 %v2282
      %3162 = vmatprep.subr.bf16.mxu0 %v2799
      %3163 = vmatpush1.bf16.msra.mxu0 %v2796
      %3164 = vmatprep.subr.bf16.mxu0 0
      %3165 = vmatpush1.bf16.msra.mxu0 0
      %3166 = vmatprep.subr.bf16.mxu0 0
      %3167 = vmatpush1.bf16.msra.mxu0 0
      %3168 = vmatprep.mubr.bf16.mxu0 %v2750
      %3169 = vmatmul.mubr.bf16.gmra.mrb[0].mxu0 %v585
      %v3170 = vpop.f32.mrb[0].mxu0
      %v3171 = vadd.f32 0.0, %v3170
      %v3172 = vpop.f32.mrb[0].mxu0
      %v3173 = vadd.f32 0.0, %v3172
      %v3174 = vpop.f32.mrb[0].mxu0
      %v3175 = vpop.f32.mrb[0].mxu0
      %3176 = vdwg.mxu0
      %3177 = vmatprep.subr.bf16.mxu0 %v1901
      %3178 = vmatpush1.bf16.msra.mxu0 %v1900
      %3179 = vmatprep.subr.bf16.mxu0 %v1933
      %3180 = vmatpush1.bf16.msra.mxu0 %v1932
      %3181 = vmatprep.subr.bf16.mxu0 %v1965
      %3182 = vmatpush1.bf16.msra.mxu0 %v1964
      %3183 = vmatprep.subr.bf16.mxu0 %v1997
      %3184 = vmatpush1.bf16.msra.mxu0 %v1996
      %3185 = vmatprep.subr.bf16.mxu0 %v2029
      %3186 = vmatpush1.bf16.msra.mxu0 %v2028
      %3187 = vmatprep.subr.bf16.mxu0 %v2061
      %3188 = vmatpush1.bf16.msra.mxu0 %v2060
      %3189 = vmatprep.subr.bf16.mxu0 %v2093
      %3190 = vmatpush1.bf16.msra.mxu0 %v2092
      %3191 = vmatprep.subr.bf16.mxu0 %v2125
      %3192 = vmatpush1.bf16.msra.mxu0 %v2124
      %3193 = vmatprep.subr.bf16.mxu0 %v2157
      %3194 = vmatpush1.bf16.msra.mxu0 %v2156
      %3195 = vmatprep.subr.bf16.mxu0 %v2189
      %3196 = vmatpush1.bf16.msra.mxu0 %v2188
      %3197 = vmatprep.subr.bf16.mxu0 %v2221
      %3198 = vmatpush1.bf16.msra.mxu0 %v2220
      %3199 = vmatprep.subr.bf16.mxu0 %v2253
      %3200 = vmatpush1.bf16.msra.mxu0 %v2252
      %3201 = vmatprep.subr.bf16.mxu0 %v2285
      %3202 = vmatpush1.bf16.msra.mxu0 %v2284
      %3203 = vmatprep.subr.bf16.mxu0 %v2805
      %3204 = vmatpush1.bf16.msra.mxu0 %v2802
      %3205 = vmatprep.subr.bf16.mxu0 0
      %3206 = vmatpush1.bf16.msra.mxu0 0
      %3207 = vmatprep.subr.bf16.mxu0 0
      %3208 = vmatpush1.bf16.msra.mxu0 0
      %3209 = vmatprep.mubr.bf16.mxu0 %v2750
      %3210 = vmatmul.mubr.bf16.gmra.mrb[0].mxu0 %v585
      %v3211 = vpop.f32.mrb[0].mxu0
      %v3212 = vadd.f32 0.0, %v3211
      %v3213 = vpop.f32.mrb[0].mxu0
      %v3214 = vadd.f32 0.0, %v3213
      %v3215 = vpop.f32.mrb[0].mxu0
      %v3216 = vpop.f32.mrb[0].mxu0
      %3217 = vdwg.mxu0
      %3218 = vmatprep.subr.bf16.mxu0 %v1903
      %3219 = vmatpush1.bf16.msra.mxu0 %v1902
      %3220 = vmatprep.subr.bf16.mxu0 %v1935
      %3221 = vmatpush1.bf16.msra.mxu0 %v1934
      %3222 = vmatprep.subr.bf16.mxu0 %v1967
      %3223 = vmatpush1.bf16.msra.mxu0 %v1966
      %3224 = vmatprep.subr.bf16.mxu0 %v1999
      %3225 = vmatpush1.bf16.msra.mxu0 %v1998
      %3226 = vmatprep.subr.bf16.mxu0 %v2031
      %3227 = vmatpush1.bf16.msra.mxu0 %v2030
      %3228 = vmatprep.subr.bf16.mxu0 %v2063
      %3229 = vmatpush1.bf16.msra.mxu0 %v2062
      %3230 = vmatprep.subr.bf16.mxu0 %v2095
      %3231 = vmatpush1.bf16.msra.mxu0 %v2094
      %3232 = vmatprep.subr.bf16.mxu0 %v2127
      %3233 = vmatpush1.bf16.msra.mxu0 %v2126
      %3234 = vmatprep.subr.bf16.mxu0 %v2159
      %3235 = vmatpush1.bf16.msra.mxu0 %v2158
      %3236 = vmatprep.subr.bf16.mxu0 %v2191
      %3237 = vmatpush1.bf16.msra.mxu0 %v2190
      %3238 = vmatprep.subr.bf16.mxu0 %v2223
      %3239 = vmatpush1.bf16.msra.mxu0 %v2222
      %3240 = vmatprep.subr.bf16.mxu0 %v2255
      %3241 = vmatpush1.bf16.msra.mxu0 %v2254
      %3242 = vmatprep.subr.bf16.mxu0 %v2287
      %3243 = vmatpush1.bf16.msra.mxu0 %v2286
      %3244 = vmatprep.subr.bf16.mxu0 %v2811
      %3245 = vmatpush1.bf16.msra.mxu0 %v2808
      %3246 = vmatprep.subr.bf16.mxu0 0
      %3247 = vmatpush1.bf16.msra.mxu0 0
      %3248 = vmatprep.subr.bf16.mxu0 0
      %3249 = vmatpush1.bf16.msra.mxu0 0
      %3250 = vmatprep.mubr.bf16.mxu0 %v2750
      %3251 = vmatmul.mubr.bf16.gmra.mrb[0].mxu0 %v585
      %v3252 = vpop.f32.mrb[0].mxu0
      %v3253 = vadd.f32 0.0, %v3252
      %v3254 = vpop.f32.mrb[0].mxu0
      %v3255 = vadd.f32 0.0, %v3254
      %v3256 = vpop.f32.mrb[0].mxu0
      %v3257 = vpop.f32.mrb[0].mxu0
      %3258 = vdwg.mxu0
      %3259 = vmatprep.subr.bf16.mxu0 %v1905
      %3260 = vmatpush1.bf16.msra.mxu0 %v1904
      %3261 = vmatprep.subr.bf16.mxu0 %v1937
      %3262 = vmatpush1.bf16.msra.mxu0 %v1936
      %3263 = vmatprep.subr.bf16.mxu0 %v1969
      %3264 = vmatpush1.bf16.msra.mxu0 %v1968
      %3265 = vmatprep.subr.bf16.mxu0 %v2001
      %3266 = vmatpush1.bf16.msra.mxu0 %v2000
      %3267 = vmatprep.subr.bf16.mxu0 %v2033
      %3268 = vmatpush1.bf16.msra.mxu0 %v2032
      %3269 = vmatprep.subr.bf16.mxu0 %v2065
      %3270 = vmatpush1.bf16.msra.mxu0 %v2064
      %3271 = vmatprep.subr.bf16.mxu0 %v2097
      %3272 = vmatpush1.bf16.msra.mxu0 %v2096
      %3273 = vmatprep.subr.bf16.mxu0 %v2129
      %3274 = vmatpush1.bf16.msra.mxu0 %v2128
      %3275 = vmatprep.subr.bf16.mxu0 %v2161
      %3276 = vmatpush1.bf16.msra.mxu0 %v2160
      %3277 = vmatprep.subr.bf16.mxu0 %v2193
      %3278 = vmatpush1.bf16.msra.mxu0 %v2192
      %3279 = vmatprep.subr.bf16.mxu0 %v2225
      %3280 = vmatpush1.bf16.msra.mxu0 %v2224
      %3281 = vmatprep.subr.bf16.mxu0 %v2257
      %3282 = vmatpush1.bf16.msra.mxu0 %v2256
      %3283 = vmatprep.subr.bf16.mxu0 %v2289
      %3284 = vmatpush1.bf16.msra.mxu0 %v2288
      %3285 = vmatprep.subr.bf16.mxu0 %v2817
      %3286 = vmatpush1.bf16.msra.mxu0 %v2814
      %3287 = vmatprep.subr.bf16.mxu0 0
      %3288 = vmatpush1.bf16.msra.mxu0 0
      %3289 = vmatprep.subr.bf16.mxu0 0
      %3290 = vmatpush1.bf16.msra.mxu0 0
      %3291 = vmatprep.mubr.bf16.mxu0 %v2750
      %3292 = vmatmul.mubr.bf16.gmra.mrb[0].mxu0 %v585
      %v3293 = vpop.f32.mrb[0].mxu0
      %v3294 = vadd.f32 0.0, %v3293
      %v3295 = vpop.f32.mrb[0].mxu0
      %v3296 = vadd.f32 0.0, %v3295
      %v3297 = vpop.f32.mrb[0].mxu0
      %v3298 = vpop.f32.mrb[0].mxu0
      %3299 = vdwg.mxu0
      %3300 = vmatprep.subr.bf16.mxu0 %v1907
      %3301 = vmatpush1.bf16.msra.mxu0 %v1906
      %3302 = vmatprep.subr.bf16.mxu0 %v1939
      %3303 = vmatpush1.bf16.msra.mxu0 %v1938
      %3304 = vmatprep.subr.bf16.mxu0 %v1971
      %3305 = vmatpush1.bf16.msra.mxu0 %v1970
      %3306 = vmatprep.subr.bf16.mxu0 %v2003
      %3307 = vmatpush1.bf16.msra.mxu0 %v2002
      %3308 = vmatprep.subr.bf16.mxu0 %v2035
      %3309 = vmatpush1.bf16.msra.mxu0 %v2034
      %3310 = vmatprep.subr.bf16.mxu0 %v2067
      %3311 = vmatpush1.bf16.msra.mxu0 %v2066
      %3312 = vmatprep.subr.bf16.mxu0 %v2099
      %3313 = vmatpush1.bf16.msra.mxu0 %v2098
      %3314 = vmatprep.subr.bf16.mxu0 %v2131
      %3315 = vmatpush1.bf16.msra.mxu0 %v2130
      %3316 = vmatprep.subr.bf16.mxu0 %v2163
      %3317 = vmatpush1.bf16.msra.mxu0 %v2162
      %3318 = vmatprep.subr.bf16.mxu0 %v2195
      %3319 = vmatpush1.bf16.msra.mxu0 %v2194
      %3320 = vmatprep.subr.bf16.mxu0 %v2227
      %3321 = vmatpush1.bf16.msra.mxu0 %v2226
      %3322 = vmatprep.subr.bf16.mxu0 %v2259
      %3323 = vmatpush1.bf16.msra.mxu0 %v2258
      %3324 = vmatprep.subr.bf16.mxu0 %v2291
      %3325 = vmatpush1.bf16.msra.mxu0 %v2290
      %3326 = vmatprep.subr.bf16.mxu0 %v2823
      %3327 = vmatpush1.bf16.msra.mxu0 %v2820
      %3328 = vmatprep.subr.bf16.mxu0 0
      %3329 = vmatpush1.bf16.msra.mxu0 0
      %3330 = vmatprep.subr.bf16.mxu0 0
      %3331 = vmatpush1.bf16.msra.mxu0 0
      %3332 = vmatprep.mubr.bf16.mxu0 %v2750
      %3333 = vmatmul.mubr.bf16.gmra.mrb[0].mxu0 %v585
      %v3334 = vpop.f32.mrb[0].mxu0
      %v3335 = vadd.f32 0.0, %v3334
      %v3336 = vpop.f32.mrb[0].mxu0
      %v3337 = vadd.f32 0.0, %v3336
      %v3338 = vpop.f32.mrb[0].mxu0
      %v3339 = vpop.f32.mrb[0].mxu0
      %3340 = vdwg.mxu0
      %3341 = vmatprep.subr.bf16.mxu0 %v1909
      %3342 = vmatpush1.bf16.msra.mxu0 %v1908
      %3343 = vmatprep.subr.bf16.mxu0 %v1941
      %3344 = vmatpush1.bf16.msra.mxu0 %v1940
      %3345 = vmatprep.subr.bf16.mxu0 %v1973
      %3346 = vmatpush1.bf16.msra.mxu0 %v1972
      %3347 = vmatprep.subr.bf16.mxu0 %v2005
      %3348 = vmatpush1.bf16.msra.mxu0 %v2004
      %3349 = vmatprep.subr.bf16.mxu0 %v2037
      %3350 = vmatpush1.bf16.msra.mxu0 %v2036
      %3351 = vmatprep.subr.bf16.mxu0 %v2069
      %3352 = vmatpush1.bf16.msra.mxu0 %v2068
      %3353 = vmatprep.subr.bf16.mxu0 %v2101
      %3354 = vmatpush1.bf16.msra.mxu0 %v2100
      %3355 = vmatprep.subr.bf16.mxu0 %v2133
      %3356 = vmatpush1.bf16.msra.mxu0 %v2132
      %3357 = vmatprep.subr.bf16.mxu0 %v2165
      %3358 = vmatpush1.bf16.msra.mxu0 %v2164
      %3359 = vmatprep.subr.bf16.mxu0 %v2197
      %3360 = vmatpush1.bf16.msra.mxu0 %v2196
      %3361 = vmatprep.subr.bf16.mxu0 %v2229
      %3362 = vmatpush1.bf16.msra.mxu0 %v2228
      %3363 = vmatprep.subr.bf16.mxu0 %v2261
      %3364 = vmatpush1.bf16.msra.mxu0 %v2260
      %3365 = vmatprep.subr.bf16.mxu0 %v2293
      %3366 = vmatpush1.bf16.msra.mxu0 %v2292
      %3367 = vmatprep.subr.bf16.mxu0 %v2829
      %3368 = vmatpush1.bf16.msra.mxu0 %v2826
      %3369 = vmatprep.subr.bf16.mxu0 0
      %3370 = vmatpush1.bf16.msra.mxu0 0
      %3371 = vmatprep.subr.bf16.mxu0 0
      %3372 = vmatpush1.bf16.msra.mxu0 0
      %3373 = vmatprep.mubr.bf16.mxu0 %v2750
      %3374 = vmatmul.mubr.bf16.gmra.mrb[0].mxu0 %v585
      %v3375 = vpop.f32.mrb[0].mxu0
      %v3376 = vadd.f32 0.0, %v3375
      %v3377 = vpop.f32.mrb[0].mxu0
      %v3378 = vadd.f32 0.0, %v3377
      %v3379 = vpop.f32.mrb[0].mxu0
      %v3380 = vpop.f32.mrb[0].mxu0
      %3381 = vdwg.mxu0
      %3382 = vmatprep.subr.bf16.mxu0 %v1911
      %3383 = vmatpush1.bf16.msra.mxu0 %v1910
      %3384 = vmatprep.subr.bf16.mxu0 %v1943
      %3385 = vmatpush1.bf16.msra.mxu0 %v1942
      %3386 = vmatprep.subr.bf16.mxu0 %v1975
      %3387 = vmatpush1.bf16.msra.mxu0 %v1974
      %3388 = vmatprep.subr.bf16.mxu0 %v2007
      %3389 = vmatpush1.bf16.msra.mxu0 %v2006
      %3390 = vmatprep.subr.bf16.mxu0 %v2039
      %3391 = vmatpush1.bf16.msra.mxu0 %v2038
      %3392 = vmatprep.subr.bf16.mxu0 %v2071
      %3393 = vmatpush1.bf16.msra.mxu0 %v2070
      %3394 = vmatprep.subr.bf16.mxu0 %v2103
      %3395 = vmatpush1.bf16.msra.mxu0 %v2102
      %3396 = vmatprep.subr.bf16.mxu0 %v2135
      %3397 = vmatpush1.bf16.msra.mxu0 %v2134
      %3398 = vmatprep.subr.bf16.mxu0 %v2167
      %3399 = vmatpush1.bf16.msra.mxu0 %v2166
      %3400 = vmatprep.subr.bf16.mxu0 %v2199
      %3401 = vmatpush1.bf16.msra.mxu0 %v2198
      %3402 = vmatprep.subr.bf16.mxu0 %v2231
      %3403 = vmatpush1.bf16.msra.mxu0 %v2230
      %3404 = vmatprep.subr.bf16.mxu0 %v2263
      %3405 = vmatpush1.bf16.msra.mxu0 %v2262
      %3406 = vmatprep.subr.bf16.mxu0 %v2295
      %3407 = vmatpush1.bf16.msra.mxu0 %v2294
      %3408 = vmatprep.subr.bf16.mxu0 %v2835
      %3409 = vmatpush1.bf16.msra.mxu0 %v2832
      %3410 = vmatprep.subr.bf16.mxu0 0
      %3411 = vmatpush1.bf16.msra.mxu0 0
      %3412 = vmatprep.subr.bf16.mxu0 0
      %3413 = vmatpush1.bf16.msra.mxu0 0
      %3414 = vmatprep.mubr.bf16.mxu0 %v2750
      %3415 = vmatmul.mubr.bf16.gmra.mrb[0].mxu0 %v585
      %v3416 = vpop.f32.mrb[0].mxu0
      %v3417 = vadd.f32 0.0, %v3416
      %v3418 = vpop.f32.mrb[0].mxu0
      %v3419 = vadd.f32 0.0, %v3418
      %v3420 = vpop.f32.mrb[0].mxu0
      %v3421 = vpop.f32.mrb[0].mxu0
      %3422 = vdwg.mxu0
      %3423 = vmatprep.subr.bf16.mxu0 %v1913
      %3424 = vmatpush1.bf16.msra.mxu0 %v1912
      %3425 = vmatprep.subr.bf16.mxu0 %v1945
      %3426 = vmatpush1.bf16.msra.mxu0 %v1944
      %3427 = vmatprep.subr.bf16.mxu0 %v1977
      %3428 = vmatpush1.bf16.msra.mxu0 %v1976
      %3429 = vmatprep.subr.bf16.mxu0 %v2009
      %3430 = vmatpush1.bf16.msra.mxu0 %v2008
      %3431 = vmatprep.subr.bf16.mxu0 %v2041
      %3432 = vmatpush1.bf16.msra.mxu0 %v2040
      %3433 = vmatprep.subr.bf16.mxu0 %v2073
      %3434 = vmatpush1.bf16.msra.mxu0 %v2072
      %3435 = vmatprep.subr.bf16.mxu0 %v2105
      %3436 = vmatpush1.bf16.msra.mxu0 %v2104
      %3437 = vmatprep.subr.bf16.mxu0 %v2137
      %3438 = vmatpush1.bf16.msra.mxu0 %v2136
      %3439 = vmatprep.subr.bf16.mxu0 %v2169
      %3440 = vmatpush1.bf16.msra.mxu0 %v2168
      %3441 = vmatprep.subr.bf16.mxu0 %v2201
      %3442 = vmatpush1.bf16.msra.mxu0 %v2200
      %3443 = vmatprep.subr.bf16.mxu0 %v2233
      %3444 = vmatpush1.bf16.msra.mxu0 %v2232
      %3445 = vmatprep.subr.bf16.mxu0 %v2265
      %3446 = vmatpush1.bf16.msra.mxu0 %v2264
      %3447 = vmatprep.subr.bf16.mxu0 %v2297
      %3448 = vmatpush1.bf16.msra.mxu0 %v2296
      %3449 = vmatprep.subr.bf16.mxu0 %v2841
      %3450 = vmatpush1.bf16.msra.mxu0 %v2838
      %3451 = vmatprep.subr.bf16.mxu0 0
      %3452 = vmatpush1.bf16.msra.mxu0 0
      %3453 = vmatprep.subr.bf16.mxu0 0
      %3454 = vmatpush1.bf16.msra.mxu0 0
      %3455 = vmatprep.mubr.bf16.mxu0 %v2750
      %3456 = vmatmul.mubr.bf16.gmra.mrb[0].mxu0 %v585
      %v3457 = vpop.f32.mrb[0].mxu0
      %v3458 = vadd.f32 0.0, %v3457
      %v3459 = vpop.f32.mrb[0].mxu0
      %v3460 = vadd.f32 0.0, %v3459
      %v3461 = vpop.f32.mrb[0].mxu0
      %v3462 = vpop.f32.mrb[0].mxu0
      %3463 = vdwg.mxu0
      %3464 = vmatprep.subr.bf16.mxu0 %v1915
      %3465 = vmatpush1.bf16.msra.mxu0 %v1914
      %3466 = vmatprep.subr.bf16.mxu0 %v1947
      %3467 = vmatpush1.bf16.msra.mxu0 %v1946
      %3468 = vmatprep.subr.bf16.mxu0 %v1979
      %3469 = vmatpush1.bf16.msra.mxu0 %v1978
      %3470 = vmatprep.subr.bf16.mxu0 %v2011
      %3471 = vmatpush1.bf16.msra.mxu0 %v2010
      %3472 = vmatprep.subr.bf16.mxu0 %v2043
      %3473 = vmatpush1.bf16.msra.mxu0 %v2042
      %3474 = vmatprep.subr.bf16.mxu0 %v2075
      %3475 = vmatpush1.bf16.msra.mxu0 %v2074
      %3476 = vmatprep.subr.bf16.mxu0 %v2107
      %3477 = vmatpush1.bf16.msra.mxu0 %v2106
      %3478 = vmatprep.subr.bf16.mxu0 %v2139
      %3479 = vmatpush1.bf16.msra.mxu0 %v2138
      %3480 = vmatprep.subr.bf16.mxu0 %v2171
      %3481 = vmatpush1.bf16.msra.mxu0 %v2170
      %3482 = vmatprep.subr.bf16.mxu0 %v2203
      %3483 = vmatpush1.bf16.msra.mxu0 %v2202
      %3484 = vmatprep.subr.bf16.mxu0 %v2235
      %3485 = vmatpush1.bf16.msra.mxu0 %v2234
      %3486 = vmatprep.subr.bf16.mxu0 %v2267
      %3487 = vmatpush1.bf16.msra.mxu0 %v2266
      %3488 = vmatprep.subr.bf16.mxu0 %v2299
      %3489 = vmatpush1.bf16.msra.mxu0 %v2298
      %3490 = vmatprep.subr.bf16.mxu0 %v2847
      %3491 = vmatpush1.bf16.msra.mxu0 %v2844
      %3492 = vmatprep.subr.bf16.mxu0 0
      %3493 = vmatpush1.bf16.msra.mxu0 0
      %3494 = vmatprep.subr.bf16.mxu0 0
      %3495 = vmatpush1.bf16.msra.mxu0 0
      %3496 = vmatprep.mubr.bf16.mxu0 %v2750
      %3497 = vmatmul.mubr.bf16.gmra.mrb[0].mxu0 %v585
      %v3498 = vpop.f32.mrb[0].mxu0
      %v3499 = vadd.f32 0.0, %v3498
      %v3500 = vpop.f32.mrb[0].mxu0
      %v3501 = vadd.f32 0.0, %v3500
      %v3502 = vpop.f32.mrb[0].mxu0
      %v3503 = vpop.f32.mrb[0].mxu0
      %3504 = vdwg.mxu0
      %v3505 = vsel %vm2752, %v2884, 0.0
      %v3506 = vsel %vm2752, %v2886, 0.0
      %v3507 = vadd.f32 %v3505, %v3506
      %v3508 = vsel %vm2752, %v2925, 0.0
      %v3509 = vadd.f32 %v3507, %v3508
      %v3510 = vsel %vm2752, %v2927, 0.0
      %v3511 = vadd.f32 %v3509, %v3510
      %v3512 = vsel %vm2752, %v2966, 0.0
      %v3513 = vadd.f32 %v3511, %v3512
      %v3514 = vsel %vm2752, %v2968, 0.0
      %v3515 = vadd.f32 %v3513, %v3514
      %v3516 = vsel %vm2752, %v3007, 0.0
      %v3517 = vadd.f32 %v3515, %v3516
      %v3518 = vsel %vm2752, %v3009, 0.0
      %v3519 = vadd.f32 %v3517, %v3518
      %v3520 = vsel %vm2752, %v3048, 0.0
      %v3521 = vadd.f32 %v3519, %v3520
      %v3522 = vsel %vm2752, %v3050, 0.0
      %v3523 = vadd.f32 %v3521, %v3522
      %v3524 = vsel %vm2752, %v3089, 0.0
      %v3525 = vadd.f32 %v3523, %v3524
      %v3526 = vsel %vm2752, %v3091, 0.0
      %v3527 = vadd.f32 %v3525, %v3526
      %v3528 = vsel %vm2752, %v3130, 0.0
      %v3529 = vadd.f32 %v3527, %v3528
      %v3530 = vsel %vm2752, %v3132, 0.0
      %v3531 = vadd.f32 %v3529, %v3530
      %v3532 = vsel %vm2752, %v3171, 0.0
      %v3533 = vadd.f32 %v3531, %v3532
      %v3534 = vsel %vm2752, %v3173, 0.0
      %v3535 = vadd.f32 %v3533, %v3534
      %v3536 = vsel %vm2752, %v3212, 0.0
      %v3537 = vadd.f32 %v3535, %v3536
      %v3538 = vsel %vm2752, %v3214, 0.0
      %v3539 = vadd.f32 %v3537, %v3538
      %v3540 = vsel %vm2752, %v3253, 0.0
      %v3541 = vadd.f32 %v3539, %v3540
      %v3542 = vsel %vm2752, %v3255, 0.0
      %v3543 = vadd.f32 %v3541, %v3542
      %v3544 = vsel %vm2752, %v3294, 0.0
      %v3545 = vadd.f32 %v3543, %v3544
      %v3546 = vsel %vm2752, %v3296, 0.0
      %v3547 = vadd.f32 %v3545, %v3546
      %v3548 = vsel %vm2752, %v3335, 0.0
      %v3549 = vadd.f32 %v3547, %v3548
      %v3550 = vsel %vm2752, %v3337, 0.0
      %v3551 = vadd.f32 %v3549, %v3550
      %v3552 = vsel %vm2752, %v3376, 0.0
      %v3553 = vadd.f32 %v3551, %v3552
      %v3554 = vsel %vm2752, %v3378, 0.0
      %v3555 = vadd.f32 %v3553, %v3554
      %v3556 = vsel %vm2752, %v3417, 0.0
      %v3557 = vadd.f32 %v3555, %v3556
      %v3558 = vsel %vm2752, %v3419, 0.0
      %v3559 = vadd.f32 %v3557, %v3558
      %v3560 = vsel %vm2752, %v3458, 0.0
      %v3561 = vadd.f32 %v3559, %v3560
      %v3562 = vsel %vm2752, %v3460, 0.0
      %v3563 = vadd.f32 %v3561, %v3562
      %v3564 = vsel %vm2752, %v3499, 0.0
      %v3565 = vadd.f32 %v3563, %v3564
      %v3566 = vsel %vm2752, %v3501, 0.0
      %v3567 = vadd.f32 %v3565, %v3566
      %3568 = vadd.xlane.f32.xlu0 %v3567
      %v3569 = vpop.xlane.xlu0 %3568
      %v3570 = vrcp.pop 4096.0
      %v3571 = vmul.f32 %v3569, %v3570
      %v3572 = vsub.f32 %v2884, %v3571
      %v3573 = vsub.f32 %v2886, %v3571
      %v3574 = vsub.f32 %v2925, %v3571
      %v3575 = vsub.f32 %v2927, %v3571
      %v3576 = vsub.f32 %v2966, %v3571
      %v3577 = vsub.f32 %v2968, %v3571
      %v3578 = vsub.f32 %v3007, %v3571
      %v3579 = vsub.f32 %v3009, %v3571
      %v3580 = vsub.f32 %v3048, %v3571
      %v3581 = vsub.f32 %v3050, %v3571
      %v3582 = vsub.f32 %v3089, %v3571
      %v3583 = vsub.f32 %v3091, %v3571
      %v3584 = vsub.f32 %v3130, %v3571
      %v3585 = vsub.f32 %v3132, %v3571
      %v3586 = vsub.f32 %v3171, %v3571
      %v3587 = vsub.f32 %v3173, %v3571
      %v3588 = vsub.f32 %v3212, %v3571
      %v3589 = vsub.f32 %v3214, %v3571
      %v3590 = vsub.f32 %v3253, %v3571
      %v3591 = vsub.f32 %v3255, %v3571
      %v3592 = vsub.f32 %v3294, %v3571
      %v3593 = vsub.f32 %v3296, %v3571
      %v3594 = vsub.f32 %v3335, %v3571
      %v3595 = vsub.f32 %v3337, %v3571
      %v3596 = vsub.f32 %v3376, %v3571
      %v3597 = vsub.f32 %v3378, %v3571
      %v3598 = vsub.f32 %v3417, %v3571
      %v3599 = vsub.f32 %v3419, %v3571
      %v3600 = vsub.f32 %v3458, %v3571
      %v3601 = vsub.f32 %v3460, %v3571
      %v3602 = vsub.f32 %v3499, %v3571
      %v3603 = vsub.f32 %v3501, %v3571
      %v3604 = vmul.f32 %v3572, %v3572
      %v3605 = vmul.f32 %v3573, %v3573
      %v3606 = vmul.f32 %v3574, %v3574
      %v3607 = vmul.f32 %v3575, %v3575
      %v3608 = vmul.f32 %v3576, %v3576
      %v3609 = vmul.f32 %v3577, %v3577
      %v3610 = vmul.f32 %v3578, %v3578
      %v3611 = vmul.f32 %v3579, %v3579
      %v3612 = vmul.f32 %v3580, %v3580
      %v3613 = vmul.f32 %v3581, %v3581
      %v3614 = vmul.f32 %v3582, %v3582
      %v3615 = vmul.f32 %v3583, %v3583
      %v3616 = vmul.f32 %v3584, %v3584
      %v3617 = vmul.f32 %v3585, %v3585
      %v3618 = vmul.f32 %v3586, %v3586
      %v3619 = vmul.f32 %v3587, %v3587
      %v3620 = vmul.f32 %v3588, %v3588
      %v3621 = vmul.f32 %v3589, %v3589
      %v3622 = vmul.f32 %v3590, %v3590
      %v3623 = vmul.f32 %v3591, %v3591
      %v3624 = vmul.f32 %v3592, %v3592
      %v3625 = vmul.f32 %v3593, %v3593
      %v3626 = vmul.f32 %v3594, %v3594
      %v3627 = vmul.f32 %v3595, %v3595
      %v3628 = vmul.f32 %v3596, %v3596
      %v3629 = vmul.f32 %v3597, %v3597
      %v3630 = vmul.f32 %v3598, %v3598
      %v3631 = vmul.f32 %v3599, %v3599
      %v3632 = vmul.f32 %v3600, %v3600
      %v3633 = vmul.f32 %v3601, %v3601
      %v3634 = vmul.f32 %v3602, %v3602
      %v3635 = vmul.f32 %v3603, %v3603
      %v3636 = vsel %vm2752, %v3604, 0.0
      %v3637 = vsel %vm2752, %v3605, 0.0
      %v3638 = vadd.f32 %v3636, %v3637
      %v3639 = vsel %vm2752, %v3606, 0.0
      %v3640 = vadd.f32 %v3638, %v3639
      %v3641 = vsel %vm2752, %v3607, 0.0
      %v3642 = vadd.f32 %v3640, %v3641
      %v3643 = vsel %vm2752, %v3608, 0.0
      %v3644 = vadd.f32 %v3642, %v3643
      %v3645 = vsel %vm2752, %v3609, 0.0
      %v3646 = vadd.f32 %v3644, %v3645
      %v3647 = vsel %vm2752, %v3610, 0.0
      %v3648 = vadd.f32 %v3646, %v3647
      %v3649 = vsel %vm2752, %v3611, 0.0
      %v3650 = vadd.f32 %v3648, %v3649
      %v3651 = vsel %vm2752, %v3612, 0.0
      %v3652 = vadd.f32 %v3650, %v3651
      %v3653 = vsel %vm2752, %v3613, 0.0
      %v3654 = vadd.f32 %v3652, %v3653
      %v3655 = vsel %vm2752, %v3614, 0.0
      %v3656 = vadd.f32 %v3654, %v3655
      %v3657 = vsel %vm2752, %v3615, 0.0
      %v3658 = vadd.f32 %v3656, %v3657
      %v3659 = vsel %vm2752, %v3616, 0.0
      %v3660 = vadd.f32 %v3658, %v3659
      %v3661 = vsel %vm2752, %v3617, 0.0
      %v3662 = vadd.f32 %v3660, %v3661
      %v3663 = vsel %vm2752, %v3618, 0.0
      %v3664 = vadd.f32 %v3662, %v3663
      %v3665 = vsel %vm2752, %v3619, 0.0
      %v3666 = vadd.f32 %v3664, %v3665
      %v3667 = vsel %vm2752, %v3620, 0.0
      %v3668 = vadd.f32 %v3666, %v3667
      %v3669 = vsel %vm2752, %v3621, 0.0
      %v3670 = vadd.f32 %v3668, %v3669
      %v3671 = vsel %vm2752, %v3622, 0.0
      %v3672 = vadd.f32 %v3670, %v3671
      %v3673 = vsel %vm2752, %v3623, 0.0
      %v3674 = vadd.f32 %v3672, %v3673
      %v3675 = vsel %vm2752, %v3624, 0.0
      %v3676 = vadd.f32 %v3674, %v3675
      %v3677 = vsel %vm2752, %v3625, 0.0
      %v3678 = vadd.f32 %v3676, %v3677
      %v3679 = vsel %vm2752, %v3626, 0.0
      %v3680 = vadd.f32 %v3678, %v3679
      %v3681 = vsel %vm2752, %v3627, 0.0
      %v3682 = vadd.f32 %v3680, %v3681
      %v3683 = vsel %vm2752, %v3628, 0.0
      %v3684 = vadd.f32 %v3682, %v3683
      %v3685 = vsel %vm2752, %v3629, 0.0
      %v3686 = vadd.f32 %v3684, %v3685
      %v3687 = vsel %vm2752, %v3630, 0.0
      %v3688 = vadd.f32 %v3686, %v3687
      %v3689 = vsel %vm2752, %v3631, 0.0
      %v3690 = vadd.f32 %v3688, %v3689
      %v3691 = vsel %vm2752, %v3632, 0.0
      %v3692 = vadd.f32 %v3690, %v3691
      %v3693 = vsel %vm2752, %v3633, 0.0
      %v3694 = vadd.f32 %v3692, %v3693
      %v3695 = vsel %vm2752, %v3634, 0.0
      %v3696 = vadd.f32 %v3694, %v3695
      %v3697 = vsel %vm2752, %v3635, 0.0
      %v3698 = vadd.f32 %v3696, %v3697
      %3699 = vadd.xlane.f32.xlu0 %v3698
      %v3700 = vpop.xlane.xlu0 %3699
      %v3701 = vmul.f32 %v3700, %v3570
      %v3702 = vadd.f32 %v3701, 1e-05
      %v3703 = vrsqrt.pop %v3702
      %v3704 = vmul.f32 %v3572, %v3703
      %v3705 = vmul.f32 %v3573, %v3703
      %v3706 = vmul.f32 %v3574, %v3703
      %v3707 = vmul.f32 %v3575, %v3703
      %v3708 = vmul.f32 %v3576, %v3703
      %v3709 = vmul.f32 %v3577, %v3703
      %v3710 = vmul.f32 %v3578, %v3703
      %v3711 = vmul.f32 %v3579, %v3703
      %v3712 = vmul.f32 %v3580, %v3703
      %v3713 = vmul.f32 %v3581, %v3703
      %v3714 = vmul.f32 %v3582, %v3703
      %v3715 = vmul.f32 %v3583, %v3703
      %v3716 = vmul.f32 %v3584, %v3703
      %v3717 = vmul.f32 %v3585, %v3703
      %v3718 = vmul.f32 %v3586, %v3703
      %v3719 = vmul.f32 %v3587, %v3703
      %v3720 = vmul.f32 %v3588, %v3703
      %v3721 = vmul.f32 %v3589, %v3703
      %v3722 = vmul.f32 %v3590, %v3703
      %v3723 = vmul.f32 %v3591, %v3703
      %v3724 = vmul.f32 %v3592, %v3703
      %v3725 = vmul.f32 %v3593, %v3703
      %v3726 = vmul.f32 %v3594, %v3703
      %v3727 = vmul.f32 %v3595, %v3703
      %v3728 = vmul.f32 %v3596, %v3703
      %v3729 = vmul.f32 %v3597, %v3703
      %v3730 = vmul.f32 %v3598, %v3703
      %v3731 = vmul.f32 %v3599, %v3703
      %v3732 = vmul.f32 %v3600, %v3703
      %v3733 = vmul.f32 %v3601, %v3703
      %v3734 = vmul.f32 %v3602, %v3703
      %v3735 = vmul.f32 %v3603, %v3703
      %v3736 = vmax.f32 %v3704, 0.0
      %v3737 = vmax.f32 %v3705, 0.0
      %v3738 = vmax.f32 %v3706, 0.0
      %v3739 = vmax.f32 %v3707, 0.0
      %v3740 = vmax.f32 %v3708, 0.0
      %v3741 = vmax.f32 %v3709, 0.0
      %v3742 = vmax.f32 %v3710, 0.0
      %v3743 = vmax.f32 %v3711, 0.0
      %v3744 = vmax.f32 %v3712, 0.0
      %v3745 = vmax.f32 %v3713, 0.0
      %v3746 = vmax.f32 %v3714, 0.0
      %v3747 = vmax.f32 %v3715, 0.0
      %v3748 = vmax.f32 %v3716, 0.0
      %v3749 = vmax.f32 %v3717, 0.0
      %v3750 = vmax.f32 %v3718, 0.0
      %v3751 = vmax.f32 %v3719, 0.0
      %v3752 = vmax.f32 %v3720, 0.0
      %v3753 = vmax.f32 %v3721, 0.0
      %v3754 = vmax.f32 %v3722, 0.0
      %v3755 = vmax.f32 %v3723, 0.0
      %v3756 = vmax.f32 %v3724, 0.0
      %v3757 = vmax.f32 %v3725, 0.0
      %v3758 = vmax.f32 %v3726, 0.0
      %v3759 = vmax.f32 %v3727, 0.0
      %v3760 = vmax.f32 %v3728, 0.0
      %v3761 = vmax.f32 %v3729, 0.0
      %v3762 = vmax.f32 %v3730, 0.0
      %v3763 = vmax.f32 %v3731, 0.0
      %v3764 = vmax.f32 %v3732, 0.0
      %v3765 = vmax.f32 %v3733, 0.0
      %v3766 = vmax.f32 %v3734, 0.0
      %v3767 = vmax.f32 %v3735, 0.0
      %v3768 = vpack.c.bf16 %v3736, %v3736
      %v3769 = vpack.c.bf16 %v3737, %v3737
      %v3770 = vpack.c.bf16 %v3738, %v3738
      %v3771 = vpack.c.bf16 %v3739, %v3739
      %v3772 = vpack.c.bf16 %v3740, %v3740
      %v3773 = vpack.c.bf16 %v3741, %v3741
      %v3774 = vpack.c.bf16 %v3742, %v3742
      %v3775 = vpack.c.bf16 %v3743, %v3743
      %v3776 = vpack.c.bf16 %v3744, %v3744
      %v3777 = vpack.c.bf16 %v3745, %v3745
      %v3778 = vpack.c.bf16 %v3746, %v3746
      %v3779 = vpack.c.bf16 %v3747, %v3747
      %v3780 = vpack.c.bf16 %v3748, %v3748
      %v3781 = vpack.c.bf16 %v3749, %v3749
      %v3782 = vpack.c.bf16 %v3750, %v3750
      %v3783 = vpack.c.bf16 %v3751, %v3751
      %v3784 = vpack.c.bf16 %v3752, %v3752
      %v3785 = vpack.c.bf16 %v3753, %v3753
      %v3786 = vpack.c.bf16 %v3754, %v3754
      %v3787 = vpack.c.bf16 %v3755, %v3755
      %v3788 = vpack.c.bf16 %v3756, %v3756
      %v3789 = vpack.c.bf16 %v3757, %v3757
      %v3790 = vpack.c.bf16 %v3758, %v3758
      %v3791 = vpack.c.bf16 %v3759, %v3759
      %v3792 = vpack.c.bf16 %v3760, %v3760
      %v3793 = vpack.c.bf16 %v3761, %v3761
      %v3794 = vpack.c.bf16 %v3762, %v3762
      %v3795 = vpack.c.bf16 %v3763, %v3763
      %v3796 = vpack.c.bf16 %v3764, %v3764
      %v3797 = vpack.c.bf16 %v3765, %v3765
      %v3798 = vpack.c.bf16 %v3766, %v3766
      %v3799 = vpack.c.bf16 %v3767, %v3767
      %v3832 = vcombine.low %v3768, %v3769
      %v3833 = vcombine.low %v3770, %v3771
      %v3835 = vunpack.c.l.s4 1983009808
      %v3836 = vunpack.c.0.s8 %v3835
      %v3837 = vlaneseq
      %v3838 = vshrl.u32 %v3837, 7
      %v3839 = vsub.s32 %v3836, %v3838
      %v3840 = vrot.slane %v3832, %v3839
      %v3842 = vunpack.c.l.s4 1983009808
      %v3843 = vunpack.c.0.s8 %v3842
      %v3844 = vlaneseq
      %v3845 = vshrl.u32 %v3844, 7
      %v3846 = vsub.s32 %v3843, %v3845
      %v3847 = vrot.slane %v3833, %v3846
      %v3848 = vcombine.low %v3840, %v3847
      %v3849 = vcombine.low %v3772, %v3773
      %v3850 = vcombine.low %v3774, %v3775
      %v3852 = vunpack.c.l.s4 1983009808
      %v3853 = vunpack.c.0.s8 %v3852
      %v3854 = vlaneseq
      %v3855 = vshrl.u32 %v3854, 7
      %v3856 = vsub.s32 %v3853, %v3855
      %v3857 = vrot.slane %v3849, %v3856
      %v3859 = vunpack.c.l.s4 1983009808
      %v3860 = vunpack.c.0.s8 %v3859
      %v3861 = vlaneseq
      %v3862 = vshrl.u32 %v3861, 7
      %v3863 = vsub.s32 %v3860, %v3862
      %v3864 = vrot.slane %v3850, %v3863
      %v3865 = vcombine.low %v3857, %v3864
      %v3866 = vcombine.low %v3776, %v3777
      %v3867 = vcombine.low %v3778, %v3779
      %v3869 = vunpack.c.l.s4 1983009808
      %v3870 = vunpack.c.0.s8 %v3869
      %v3871 = vlaneseq
      %v3872 = vshrl.u32 %v3871, 7
      %v3873 = vsub.s32 %v3870, %v3872
      %v3874 = vrot.slane %v3866, %v3873
      %v3876 = vunpack.c.l.s4 1983009808
      %v3877 = vunpack.c.0.s8 %v3876
      %v3878 = vlaneseq
      %v3879 = vshrl.u32 %v3878, 7
      %v3880 = vsub.s32 %v3877, %v3879
      %v3881 = vrot.slane %v3867, %v3880
      %v3882 = vcombine.low %v3874, %v3881
      %v3883 = vcombine.low %v3780, %v3781
      %v3884 = vcombine.low %v3782, %v3783
      %v3886 = vunpack.c.l.s4 1983009808
      %v3887 = vunpack.c.0.s8 %v3886
      %v3888 = vlaneseq
      %v3889 = vshrl.u32 %v3888, 7
      %v3890 = vsub.s32 %v3887, %v3889
      %v3891 = vrot.slane %v3883, %v3890
      %v3893 = vunpack.c.l.s4 1983009808
      %v3894 = vunpack.c.0.s8 %v3893
      %v3895 = vlaneseq
      %v3896 = vshrl.u32 %v3895, 7
      %v3897 = vsub.s32 %v3894, %v3896
      %v3898 = vrot.slane %v3884, %v3897
      %v3899 = vcombine.low %v3891, %v3898
      %v3900 = vcombine.low %v3784, %v3785
      %v3901 = vcombine.low %v3786, %v3787
      %v3903 = vunpack.c.l.s4 1983009808
      %v3904 = vunpack.c.0.s8 %v3903
      %v3905 = vlaneseq
      %v3906 = vshrl.u32 %v3905, 7
      %v3907 = vsub.s32 %v3904, %v3906
      %v3908 = vrot.slane %v3900, %v3907
      %v3910 = vunpack.c.l.s4 1983009808
      %v3911 = vunpack.c.0.s8 %v3910
      %v3912 = vlaneseq
      %v3913 = vshrl.u32 %v3912, 7
      %v3914 = vsub.s32 %v3911, %v3913
      %v3915 = vrot.slane %v3901, %v3914
      %v3916 = vcombine.low %v3908, %v3915
      %v3917 = vcombine.low %v3788, %v3789
      %v3918 = vcombine.low %v3790, %v3791
      %v3920 = vunpack.c.l.s4 1983009808
      %v3921 = vunpack.c.0.s8 %v3920
      %v3922 = vlaneseq
      %v3923 = vshrl.u32 %v3922, 7
      %v3924 = vsub.s32 %v3921, %v3923
      %v3925 = vrot.slane %v3917, %v3924
      %v3927 = vunpack.c.l.s4 1983009808
      %v3928 = vunpack.c.0.s8 %v3927
      %v3929 = vlaneseq
      %v3930 = vshrl.u32 %v3929, 7
      %v3931 = vsub.s32 %v3928, %v3930
      %v3932 = vrot.slane %v3918, %v3931
      %v3933 = vcombine.low %v3925, %v3932
      %v3934 = vcombine.low %v3792, %v3793
      %v3935 = vcombine.low %v3794, %v3795
      %v3937 = vunpack.c.l.s4 1983009808
      %v3938 = vunpack.c.0.s8 %v3937
      %v3939 = vlaneseq
      %v3940 = vshrl.u32 %v3939, 7
      %v3941 = vsub.s32 %v3938, %v3940
      %v3942 = vrot.slane %v3934, %v3941
      %v3944 = vunpack.c.l.s4 1983009808
      %v3945 = vunpack.c.0.s8 %v3944
      %v3946 = vlaneseq
      %v3947 = vshrl.u32 %v3946, 7
      %v3948 = vsub.s32 %v3945, %v3947
      %v3949 = vrot.slane %v3935, %v3948
      %v3950 = vcombine.low %v3942, %v3949
      %v3951 = vcombine.low %v3796, %v3797
      %v3952 = vcombine.low %v3798, %v3799
      %v3954 = vunpack.c.l.s4 1983009808
      %v3955 = vunpack.c.0.s8 %v3954
      %v3956 = vlaneseq
      %v3957 = vshrl.u32 %v3956, 7
      %v3958 = vsub.s32 %v3955, %v3957
      %v3959 = vrot.slane %v3951, %v3958
      %v3961 = vunpack.c.l.s4 1983009808
      %v3962 = vunpack.c.0.s8 %v3961
      %v3963 = vlaneseq
      %v3964 = vshrl.u32 %v3963, 7
      %v3965 = vsub.s32 %v3962, %v3964
      %v3966 = vrot.slane %v3952, %v3965
      %v3967 = vcombine.low %v3959, %v3966
      %3976 = vst [vmem:[%s143] sm:$0xff] %v3848
      %3977 = vst [vmem:[%s143 + $0x8] sm:$0xff] %v3865
      %3978 = vst [vmem:[%s143 + $0x10] sm:$0xff] %v3882
      %3979 = vst [vmem:[%s143 + $0x18] sm:$0xff] %v3899
      %3980 = vst [vmem:[%s143 + $0x20] sm:$0xff] %v3916
      %3981 = vst [vmem:[%s143 + $0x28] sm:$0xff] %v3933
      %3982 = vst [vmem:[%s143 + $0x30] sm:$0xff] %v3950
      %3983 = vst [vmem:[%s143 + $0x38] sm:$0xff] %v3967
      %p3984 = scmp.lt.s32.totalorder %s13, 1
      %s3985 = scalar_select %p3984, %s13, 1
      %s3986 = smul.addr %s3985, 32
      %s3987 = smul.addr %s3986, 2
      %s3988 = scalar_lea.vmem %s2, %s3987
      // Predicated region
      $region29: #{decoder_forward.10} parent=27 // pred_check
        %p3989 = pneg %p78
      $region30: #{decoder_forward.10} parent=27 // pred_check_branch
        %3991 = sbr.rel (%p3989) target = $region32
      $region31: #{decoder_forward.10} parent=27 // pred_region
        _
      $region32: #{decoder_forward.10} parent=27 // pred_fallthru
        _
    $region28: #{decoder_forward.10} parent=5 // pred_fallthru
      _
    %p3992 = scmp.le.s32.totalorder 2, %s8
    // Predicated region
    $region33: #{decoder_forward.10} parent=5 // pred_check
      %p3993 = pneg %p3992
    $region34: #{decoder_forward.10} parent=5 // pred_check_branch
      %3995 = sbr.rel (%p3993) target = $region36
    $region35: #{decoder_forward.10} parent=5 // pred_region
      %s3996 = ssub.s32 %s8, 2
      // Predicated region
      $region37: #{decoder_forward.10} parent=35 // pred_check
        %p3997 = pneg %p84
      $region38: #{decoder_forward.10} parent=35 // pred_check_branch
        %3999 = sbr.rel (%p3997) target = $region40
      $region39: #{decoder_forward.10} parent=35 // pred_region
        %p4000 = scmp.lt.s32.totalorder %s14, 1
        %s4001 = scalar_select %p4000, %s14, 1
        %s4002 = smul.addr %s4001, 32
        %s4003 = smul.addr %s4002, 2
        %s4004 = scalar_lea.vmem %s2, %s4003
      $region40: #{decoder_forward.10} parent=35 // pred_fallthru
        _
    $region36: #{decoder_forward.10} parent=5 // pred_fallthru
      _
  $region6: #{decoder_forward.10} parent=0 // loop_footer
    %s12 = sadd.s32 1, %s8
  $region7: #{decoder_forward.10} parent=0 // loop_footer_branch
    %7 = sbr.rel target = $region3
  $region8: #{decoder_forward.10} parent=0 // loop_exit
    _

// kernel: decoder_forward.11
$region0: #{decoder_forward.11}
  #allocation0 [shape = 'u32[]', space=smem, size = 0x4, offset = 0x4, fixed_abs, tag = 'smem constant byte address 0x4 - core index']
  #allocation1 [shape = 'u32[144,128]{1,0:T(1,128)}', space=vmem, size = 0x12000, scoped, tag = 'internal scratch']
  %s0 = inlined_call_operand.vmem [shape: bf16[2,108,4096], index: 0, kind: input, shape index: {}]
  %s1 = inlined_call_operand.vmem [shape: bf16[4,108], index: 1, kind: input, shape index: {}]
  %s2 = inlined_call_operand.vmem [shape: f32[2,4], index: 2, kind: input, shape index: {}]
  %s3 = inlined_call_operand.vmem [shape: f32[2,2,4096], index: 3, kind: output, shape index: {}]
  %s4 = sld [smem:[#allocation0]]
  $region45: #{decoder_forward.11} parent=0
    _
  %s6 = ssub.s32 1, %s4
  %s7 = scalar_select 0, %s6, %s4
  loop: start=0, step=1, limit=4
  $region2: #{decoder_forward.11} parent=0 // loop_pre_header
    _
  $region3: #{decoder_forward.11} parent=0 // loop_header
    %s9 = sphi 0, %s13
    %p10 = scmp.ge.s32.totalorder %s9, 4
    %s19 = sphi 0, %s21
    %s22 = sphi 0, %s19
    %s23 = sphi 0, %s22
    %s39 = sphi 0, %s23
    %s43 = sphi 0, %s43
    %s45 = sphi 0, %s43
    %s46 = sphi 0, %s45
    %s60 = sphi 0, %s46
    %s64 = sphi 0, %s64
    %s66 = sphi 0, %s64
    %s67 = sphi 0, %s66
    %s81 = sphi 0, %s67
    %s87 = sphi 0, %s89
    %s90 = sphi 0, %s87
    %s91 = sphi 0, %s90
    %s107 = sphi 0, %s91
  $region4: #{decoder_forward.11} parent=0 // loop_header_branch
    %12 = sbr.rel (%p10) target = $region8
  $region5: #{decoder_forward.11} parent=0 // loop_body
    %s14 = ssub.s32 %s9, 1
    %s15 = ssub.s32 %s9, 2
    %s16 = sadd.s32 %s9, 1
    %s17 = ssub.s32 %s9, %s16
    %p18 = scmp.eq.s32.totalorder %s17, 0
    %s20 = sadd.s32 %s19, 1
    %s21 = scalar_select %p18, %s19, %s20
    %p24 = pneg %p18
    %p25 = scmp.eq.s32.totalorder %s9, 1
    %p26 = por %p24, %p25
    %p27 = scmp.ne.s32.totalorder %s19, %s22
    %p28 = scmp.eq.s32.totalorder %s9, 0
    %p29 = por %p27, %p28
    %p30 = scmp.ne.s32.totalorder %s19, %s22
    %p31 = scmp.eq.s32.totalorder %s14, 1
    %p32 = por %p30, %p31
    %p33 = scmp.ne.s32.totalorder %s22, %s23
    %p34 = scmp.eq.s32.totalorder %s14, 0
    %p35 = por %p33, %p34
    %p36 = scmp.ne.s32.totalorder %s22, %s23
    %p37 = scmp.eq.s32.totalorder %s15, 1
    %p38 = por %p36, %p37
    %p40 = scmp.ne.s32.totalorder %s23, %s39
    %p41 = scmp.eq.s32.totalorder %s15, 0
    %p42 = por %p40, %p41
    %s44 = sadd.s32 %s43, 1
    %p47 = scmp.eq.s32.totalorder %s9, 1
    %p48 = scmp.ne.s32.totalorder %s43, %s45
    %p49 = scmp.eq.s32.totalorder %s9, 0
    %p50 = por %p48, %p49
    %p51 = scmp.ne.s32.totalorder %s43, %s45
    %p52 = scmp.eq.s32.totalorder %s14, 1
    %p53 = por %p51, %p52
    %p54 = scmp.ne.s32.totalorder %s45, %s46
    %p55 = scmp.eq.s32.totalorder %s14, 0
    %p56 = por %p54, %p55
    %p57 = scmp.ne.s32.totalorder %s45, %s46
    %p58 = scmp.eq.s32.totalorder %s15, 1
    %p59 = por %p57, %p58
    %p61 = scmp.ne.s32.totalorder %s46, %s60
    %p62 = scmp.eq.s32.totalorder %s15, 0
    %p63 = por %p61, %p62
    %s65 = sadd.s32 %s64, 1
    %p68 = scmp.eq.s32.totalorder %s9, 1
    %p69 = scmp.ne.s32.totalorder %s64, %s66
    %p70 = scmp.eq.s32.totalorder %s9, 0
    %p71 = por %p69, %p70
    %p72 = scmp.ne.s32.totalorder %s64, %s66
    %p73 = scmp.eq.s32.totalorder %s14, 1
    %p74 = por %p72, %p73
    %p75 = scmp.ne.s32.totalorder %s66, %s67
    %p76 = scmp.eq.s32.totalorder %s14, 0
    %p77 = por %p75, %p76
    %p78 = scmp.ne.s32.totalorder %s66, %s67
    %p79 = scmp.eq.s32.totalorder %s15, 1
    %p80 = por %p78, %p79
    %p82 = scmp.ne.s32.totalorder %s67, %s81
    %p83 = scmp.eq.s32.totalorder %s15, 0
    %p84 = por %p82, %p83
    %s85 = ssub.s32 %s9, %s16
    %p86 = scmp.eq.s32.totalorder %s85, 0
    %s88 = sadd.s32 %s87, 1
    %s89 = scalar_select %p86, %s87, %s88
    %p92 = pneg %p86
    %p93 = scmp.eq.s32.totalorder %s9, 1
    %p94 = por %p92, %p93
    %p95 = scmp.ne.s32.totalorder %s87, %s90
    %p96 = scmp.eq.s32.totalorder %s9, 0
    %p97 = por %p95, %p96
    %p98 = scmp.ne.s32.totalorder %s87, %s90
    %p99 = scmp.eq.s32.totalorder %s14, 1
    %p100 = por %p98, %p99
    %p101 = scmp.ne.s32.totalorder %s90, %s91
    %p102 = scmp.eq.s32.totalorder %s14, 0
    %p103 = por %p101, %p102
    %p104 = scmp.ne.s32.totalorder %s90, %s91
    %p105 = scmp.eq.s32.totalorder %s15, 1
    %p106 = por %p104, %p105
    %p108 = scmp.ne.s32.totalorder %s91, %s107
    %p109 = scmp.eq.s32.totalorder %s15, 0
    %p110 = por %p108, %p109
    %p111 = scmp.le.s32.totalorder 1, %s9
    %p112 = scmp.lt.s32.totalorder %s9, 3
    %p113 = pnand %p111, %p112
    %p114 = pneg %p113
    // Predicated region
    $region9: #{decoder_forward.11} parent=5 // pred_check
      _
    $region10: #{decoder_forward.11} parent=5 // pred_check_branch
      %116 = sbr.rel (%p113) target = $region12
    $region11: #{decoder_forward.11} parent=5 // pred_region
      %s117 = ssub.s32 %s9, 1
      // Predicated region
      $region13: #{decoder_forward.11} parent=11 // pred_check
        %p118 = pneg %p56
      $region14: #{decoder_forward.11} parent=11 // pred_check_branch
        %120 = sbr.rel (%p118) target = $region16
      $region15: #{decoder_forward.11} parent=11 // pred_region
        _
      $region16: #{decoder_forward.11} parent=11 // pred_fallthru
        _
      // Predicated region
      $region17: #{decoder_forward.11} parent=11 // pred_check
        %p121 = pneg %p77
      $region18: #{decoder_forward.11} parent=11 // pred_check_branch
        %123 = sbr.rel (%p121) target = $region20
      $region19: #{decoder_forward.11} parent=11 // pred_region
        _
      $region20: #{decoder_forward.11} parent=11 // pred_fallthru
        _
    $region12: #{decoder_forward.11} parent=5 // pred_fallthru
      _
    %p124 = scmp.lt.s32.totalorder %s9, 2
    // Predicated region
    $region21: #{decoder_forward.11} parent=5 // pred_check
      %p125 = pneg %p124
    $region22: #{decoder_forward.11} parent=5 // pred_check_branch
      %127 = sbr.rel (%p125) target = $region24
    $region23: #{decoder_forward.11} parent=5 // pred_region
      // Predicated region
      $region25: #{decoder_forward.11} parent=23 // pred_check
        %p128 = pneg %p29
      $region26: #{decoder_forward.11} parent=23 // pred_check_branch
        %130 = sbr.rel (%p128) target = $region28
      $region27: #{decoder_forward.11} parent=23 // pred_region
        %p131 = scmp.lt.s32.totalorder %s9, 1
        %s132 = scalar_select %p131, %s9, 1
        %s133 = smul.addr %s132, 448
        %s134 = smul.addr %s133, 4
        %s135 = scalar_lea.vmem %s0, %s134
      $region28: #{decoder_forward.11} parent=23 // pred_fallthru
        _
    $region24: #{decoder_forward.11} parent=5 // pred_fallthru
      _
    %p136 = scmp.le.s32.totalorder 1, %s9
    %p137 = scmp.lt.s32.totalorder %s9, 3
    %p138 = pnand %p136, %p137
    %p139 = pneg %p138
    // Predicated region
    $region29: #{decoder_forward.11} parent=5 // pred_check
      _
    $region30: #{decoder_forward.11} parent=5 // pred_check_branch
      %141 = sbr.rel (%p138) target = $region32
    $region31: #{decoder_forward.11} parent=5 // pred_region
      %s142 = ssub.s32 %s9, 1
      %p143 = scmp.lt.s32.totalorder %s14, 1
      %s144 = scalar_select %p143, %s14, 1
      %s145 = smul.addr %s144, 448
      %s146 = smul.addr %s145, 4
      %s147 = scalar_lea.vmem %s0, %s146
      %p148 = pneg %p35
      %p149 = pneg %p32
      %p150 = pneg %p56
      %p151 = pneg %p53
      %p152 = pneg %p77
      %p153 = pneg %p74
      %p154 = pneg %p103
      %p155 = pneg %p100
      %p156 = scmp.lt.s32.totalorder %s14, 1
      %s157 = scalar_select %p156, %s14, 1
      %s158 = smul.addr %s157, 32
      %s159 = smul.addr %s158, 2
      %s160 = scalar_lea.vmem %s3, %s159
      %p161 = scmp.lt.s32.totalorder %s14, 1
      %s162 = scalar_select %p161, %s14, 1
      %s163 = smul.addr %s162, 448
      %s164 = smul.addr %s163, 4
      %s165 = scalar_lea.vmem %s0, %s164
      %p166 = scmp.lt.s32.totalorder %s14, 1
      %s167 = scalar_select %p166, %s14, 1
      %s168 = smul.addr %s167, 32
      %s169 = smul.addr %s168, 2
      %s170 = scalar_lea.vmem %s3, %s169
      %v172 = vld [vmem:[%s1] sm:$0x3]
      %v173 = vld [vmem:[%s165] sm:$0xff]
      %v174 = vld [vmem:[%s165 + $0x8] sm:$0xff]
      %v175 = vld [vmem:[%s165 + $0x10] sm:$0xff]
      %v176 = vld [vmem:[%s165 + $0x18] sm:$0xff]
      %v177 = vld [vmem:[%s165 + $0x20] sm:$0xff]
      %v178 = vld [vmem:[%s165 + $0x28] sm:$0xff]
      %v179 = vld [vmem:[%s165 + $0x30] sm:$0xff]
      %v180 = vld [vmem:[%s165 + $0x38] sm:$0xff]
      %v181 = vld [vmem:[%s165 + $0x40] sm:$0xff]
      %v182 = vld [vmem:[%s165 + $0x48] sm:$0xff]
      %v183 = vld [vmem:[%s165 + $0x50] sm:$0xff]
      %v184 = vld [vmem:[%s165 + $0x58] sm:$0xff]
      %v185 = vld [vmem:[%s165 + $0x60] sm:$0xff]
      %v186 = vld [vmem:[%s165 + $0x68] sm:$0xff]
      %v187 = vld [vmem:[%s165 + $0x70] sm:$0xff]
      %v188 = vld [vmem:[%s165 + $0x78] sm:$0xff]
      %v189 = vld [vmem:[%s165 + $0x80] sm:$0xff]
      %v190 = vld [vmem:[%s165 + $0x88] sm:$0xff]
      %v191 = vld [vmem:[%s165 + $0x90] sm:$0xff]
      %v192 = vld [vmem:[%s165 + $0x98] sm:$0xff]
      %v193 = vld [vmem:[%s165 + $0xa0] sm:$0xff]
      %v194 = vld [vmem:[%s165 + $0xa8] sm:$0xff]
      %v195 = vld [vmem:[%s165 + $0xb0] sm:$0xff]
      %v196 = vld [vmem:[%s165 + $0xb8] sm:$0xff]
      %v197 = vld [vmem:[%s165 + $0xc0] sm:$0xff]
      %v198 = vld [vmem:[%s165 + $0xc8] sm:$0xff]
      %v199 = vld [vmem:[%s165 + $0xd0] sm:$0xff]
      %v200 = vld [vmem:[%s165 + $0xd8] sm:$0xff]
      %v201 = vld [vmem:[%s165 + $0xe0] sm:$0xff]
      %v202 = vld [vmem:[%s165 + $0xe8] sm:$0xff]
      %v203 = vld [vmem:[%s165 + $0xf0] sm:$0xff]
      %v204 = vld [vmem:[%s165 + $0xf8] sm:$0xff]
      %v205 = vld [vmem:[%s165 + $0x100] sm:$0xff]
      %v206 = vld [vmem:[%s165 + $0x108] sm:$0xff]
      %v207 = vld [vmem:[%s165 + $0x110] sm:$0xff]
      %v208 = vld [vmem:[%s165 + $0x118] sm:$0xff]
      %v209 = vld [vmem:[%s165 + $0x120] sm:$0xff]
      %v210 = vld [vmem:[%s165 + $0x128] sm:$0xff]
      %v211 = vld [vmem:[%s165 + $0x130] sm:$0xff]
      %v212 = vld [vmem:[%s165 + $0x138] sm:$0xff]
      %v213 = vld [vmem:[%s165 + $0x140] sm:$0xff]
      %v214 = vld [vmem:[%s165 + $0x148] sm:$0xff]
      %v215 = vld [vmem:[%s165 + $0x150] sm:$0xff]
      %v216 = vld [vmem:[%s165 + $0x158] sm:$0xff]
      %v217 = vld [vmem:[%s165 + $0x160] sm:$0xff]
      %v218 = vld [vmem:[%s165 + $0x168] sm:$0xff]
      %v219 = vld [vmem:[%s165 + $0x170] sm:$0xff]
      %v220 = vld [vmem:[%s165 + $0x178] sm:$0xff]
      %v221 = vld [vmem:[%s165 + $0x180] sm:$0xff]
      %v222 = vld [vmem:[%s165 + $0x188] sm:$0xff]
      %v223 = vld [vmem:[%s165 + $0x190] sm:$0xff]
      %v224 = vld [vmem:[%s165 + $0x198] sm:$0xff]
      %v225 = vld [vmem:[%s165 + $0x1a0] sm:$0xff]
      %v226 = vld [vmem:[%s165 + $0x1a8] sm:$0xff]
      %v227 = vld [vmem:[%s165 + $0x1b0] sm:$0xff]
      %v228 = vld [vmem:[%s165 + $0x1b8] sm:$0xff]
      %v229 = vld [vmem:[%s165 + $0x1c0] sm:$0xff]
      %v230 = vld [vmem:[%s165 + $0x1c8] sm:$0xff]
      %v231 = vld [vmem:[%s165 + $0x1d0] sm:$0xff]
      %v232 = vld [vmem:[%s165 + $0x1d8] sm:$0xff]
      %v233 = vld [vmem:[%s165 + $0x1e0] sm:$0xff]
      %v234 = vld [vmem:[%s165 + $0x1e8] sm:$0xff]
      %v235 = vld [vmem:[%s165 + $0x1f0] sm:$0xff]
      %v236 = vld [vmem:[%s165 + $0x1f8] sm:$0xff]
      %v237 = vld [vmem:[%s165 + $0x200] sm:$0xff]
      %v238 = vld [vmem:[%s165 + $0x208] sm:$0xff]
      %v239 = vld [vmem:[%s165 + $0x210] sm:$0xff]
      %v240 = vld [vmem:[%s165 + $0x218] sm:$0xff]
      %v241 = vld [vmem:[%s165 + $0x220] sm:$0xff]
      %v242 = vld [vmem:[%s165 + $0x228] sm:$0xff]
      %v243 = vld [vmem:[%s165 + $0x230] sm:$0xff]
      %v244 = vld [vmem:[%s165 + $0x238] sm:$0xff]
      %v245 = vld [vmem:[%s165 + $0x240] sm:$0xff]
      %v246 = vld [vmem:[%s165 + $0x248] sm:$0xff]
      %v247 = vld [vmem:[%s165 + $0x250] sm:$0xff]
      %v248 = vld [vmem:[%s165 + $0x258] sm:$0xff]
      %v249 = vld [vmem:[%s165 + $0x260] sm:$0xff]
      %v250 = vld [vmem:[%s165 + $0x268] sm:$0xff]
      %v251 = vld [vmem:[%s165 + $0x270] sm:$0xff]
      %v252 = vld [vmem:[%s165 + $0x278] sm:$0xff]
      %v253 = vld [vmem:[%s165 + $0x280] sm:$0xff]
      %v254 = vld [vmem:[%s165 + $0x288] sm:$0xff]
      %v255 = vld [vmem:[%s165 + $0x290] sm:$0xff]
      %v256 = vld [vmem:[%s165 + $0x298] sm:$0xff]
      %v257 = vld [vmem:[%s165 + $0x2a0] sm:$0xff]
      %v258 = vld [vmem:[%s165 + $0x2a8] sm:$0xff]
      %v259 = vld [vmem:[%s165 + $0x2b0] sm:$0xff]
      %v260 = vld [vmem:[%s165 + $0x2b8] sm:$0xff]
      %v261 = vld [vmem:[%s165 + $0x2c0] sm:$0xff]
      %v262 = vld [vmem:[%s165 + $0x2c8] sm:$0xff]
      %v263 = vld [vmem:[%s165 + $0x2d0] sm:$0xff]
      %v264 = vld [vmem:[%s165 + $0x2d8] sm:$0xff]
      %v265 = vld [vmem:[%s165 + $0x2e0] sm:$0xff]
      %v266 = vld [vmem:[%s165 + $0x2e8] sm:$0xff]
      %v267 = vld [vmem:[%s165 + $0x2f0] sm:$0xff]
      %v268 = vld [vmem:[%s165 + $0x2f8] sm:$0xff]
      %v269 = vld [vmem:[%s165 + $0x300] sm:$0xff]
      %v270 = vld [vmem:[%s165 + $0x308] sm:$0xff]
      %v271 = vld [vmem:[%s165 + $0x310] sm:$0xff]
      %v272 = vld [vmem:[%s165 + $0x318] sm:$0xff]
      %v273 = vld [vmem:[%s165 + $0x320] sm:$0xff]
      %v274 = vld [vmem:[%s165 + $0x328] sm:$0xff]
      %v275 = vld [vmem:[%s165 + $0x330] sm:$0xff]
      %v276 = vld [vmem:[%s165 + $0x338] sm:$0xff]
      %v277 = vld [vmem:[%s165 + $0x340] sm:$0xff]
      %v278 = vld [vmem:[%s165 + $0x348] sm:$0xff]
      %v279 = vld [vmem:[%s165 + $0x350] sm:$0xff]
      %v280 = vld [vmem:[%s165 + $0x358] sm:$0xff]
      %v281 = vld [vmem:[%s165 + $0x360] sm:$0xff]
      %v282 = vld [vmem:[%s165 + $0x368] sm:$0xff]
      %v283 = vld [vmem:[%s165 + $0x370] sm:$0xff]
      %v284 = vld [vmem:[%s165 + $0x378] sm:$0xff]
      %v285 = vld [vmem:[%s165 + $0x380] sm:$0xff]
      %v286 = vld [vmem:[%s165 + $0x388] sm:$0xff]
      %v287 = vld [vmem:[%s165 + $0x390] sm:$0xff]
      %v288 = vld [vmem:[%s165 + $0x398] sm:$0xff]
      %v289 = vld [vmem:[%s165 + $0x3a0] sm:$0xff]
      %v290 = vld [vmem:[%s165 + $0x3a8] sm:$0xff]
      %v291 = vld [vmem:[%s165 + $0x3b0] sm:$0xff]
      %v292 = vld [vmem:[%s165 + $0x3b8] sm:$0xff]
      %v293 = vld [vmem:[%s165 + $0x3c0] sm:$0xff]
      %v294 = vld [vmem:[%s165 + $0x3c8] sm:$0xff]
      %v295 = vld [vmem:[%s165 + $0x3d0] sm:$0xff]
      %v296 = vld [vmem:[%s165 + $0x3d8] sm:$0xff]
      %v297 = vld [vmem:[%s165 + $0x3e0] sm:$0xff]
      %v298 = vld [vmem:[%s165 + $0x3e8] sm:$0xff]
      %v299 = vld [vmem:[%s165 + $0x3f0] sm:$0xff]
      %v300 = vld [vmem:[%s165 + $0x3f8] sm:$0xff]
      %v301 = vld [vmem:[%s165 + $0x400] sm:$0xff]
      %v302 = vld [vmem:[%s165 + $0x408] sm:$0xff]
      %v303 = vld [vmem:[%s165 + $0x410] sm:$0xff]
      %v304 = vld [vmem:[%s165 + $0x418] sm:$0xff]
      %v305 = vld [vmem:[%s165 + $0x420] sm:$0xff]
      %v306 = vld [vmem:[%s165 + $0x428] sm:$0xff]
      %v307 = vld [vmem:[%s165 + $0x430] sm:$0xff]
      %v308 = vld [vmem:[%s165 + $0x438] sm:$0xff]
      %v309 = vld [vmem:[%s165 + $0x440] sm:$0xff]
      %v310 = vld [vmem:[%s165 + $0x448] sm:$0xff]
      %v311 = vld [vmem:[%s165 + $0x450] sm:$0xff]
      %v312 = vld [vmem:[%s165 + $0x458] sm:$0xff]
      %v313 = vld [vmem:[%s165 + $0x460] sm:$0xff]
      %v314 = vld [vmem:[%s165 + $0x468] sm:$0xff]
      %v315 = vld [vmem:[%s165 + $0x470] sm:$0xff]
      %v316 = vld [vmem:[%s165 + $0x478] sm:$0xff]
      %v317 = vld [vmem:[%s165 + $0x480] sm:$0xff]
      %v318 = vld [vmem:[%s165 + $0x488] sm:$0xff]
      %v319 = vld [vmem:[%s165 + $0x490] sm:$0xff]
      %v320 = vld [vmem:[%s165 + $0x498] sm:$0xff]
      %v321 = vld [vmem:[%s165 + $0x4a0] sm:$0xff]
      %v322 = vld [vmem:[%s165 + $0x4a8] sm:$0xff]
      %v323 = vld [vmem:[%s165 + $0x4b0] sm:$0xff]
      %v324 = vld [vmem:[%s165 + $0x4b8] sm:$0xff]
      %v325 = vld [vmem:[%s165 + $0x4c0] sm:$0xff]
      %v326 = vld [vmem:[%s165 + $0x4c8] sm:$0xff]
      %v327 = vld [vmem:[%s165 + $0x4d0] sm:$0xff]
      %v328 = vld [vmem:[%s165 + $0x4d8] sm:$0xff]
      %v329 = vld [vmem:[%s165 + $0x4e0] sm:$0xff]
      %v330 = vld [vmem:[%s165 + $0x4e8] sm:$0xff]
      %v331 = vld [vmem:[%s165 + $0x4f0] sm:$0xff]
      %v332 = vld [vmem:[%s165 + $0x4f8] sm:$0xff]
      %v333 = vld [vmem:[%s165 + $0x500] sm:$0xff]
      %v334 = vld [vmem:[%s165 + $0x508] sm:$0xff]
      %v335 = vld [vmem:[%s165 + $0x510] sm:$0xff]
      %v336 = vld [vmem:[%s165 + $0x518] sm:$0xff]
      %v337 = vld [vmem:[%s165 + $0x520] sm:$0xff]
      %v338 = vld [vmem:[%s165 + $0x528] sm:$0xff]
      %v339 = vld [vmem:[%s165 + $0x530] sm:$0xff]
      %v340 = vld [vmem:[%s165 + $0x538] sm:$0xff]
      %v341 = vld [vmem:[%s165 + $0x540] sm:$0xff]
      %v342 = vld [vmem:[%s165 + $0x548] sm:$0xff]
      %v343 = vld [vmem:[%s165 + $0x550] sm:$0xff]
      %v344 = vld [vmem:[%s165 + $0x558] sm:$0xff]
      %v345 = vld [vmem:[%s165 + $0x560] sm:$0xff]
      %v346 = vld [vmem:[%s165 + $0x568] sm:$0xff]
      %v347 = vld [vmem:[%s165 + $0x570] sm:$0xff]
      %v348 = vld [vmem:[%s165 + $0x578] sm:$0xff]
      %v349 = vld [vmem:[%s165 + $0x580] sm:$0xff]
      %v350 = vld [vmem:[%s165 + $0x588] sm:$0xff]
      %v351 = vld [vmem:[%s165 + $0x590] sm:$0xff]
      %v352 = vld [vmem:[%s165 + $0x598] sm:$0xff]
      %v353 = vld [vmem:[%s165 + $0x5a0] sm:$0xff]
      %v354 = vld [vmem:[%s165 + $0x5a8] sm:$0xff]
      %v355 = vld [vmem:[%s165 + $0x5b0] sm:$0xff]
      %v356 = vld [vmem:[%s165 + $0x5b8] sm:$0xff]
      %v357 = vld [vmem:[%s165 + $0x5c0] sm:$0xff]
      %v358 = vld [vmem:[%s165 + $0x5c8] sm:$0xff]
      %v359 = vld [vmem:[%s165 + $0x5d0] sm:$0xff]
      %v360 = vld [vmem:[%s165 + $0x5d8] sm:$0xff]
      %v361 = vld [vmem:[%s165 + $0x5e0] sm:$0xff]
      %v362 = vld [vmem:[%s165 + $0x5e8] sm:$0xff]
      %v363 = vld [vmem:[%s165 + $0x5f0] sm:$0xff]
      %v364 = vld [vmem:[%s165 + $0x5f8] sm:$0xff]
      %v365 = vld [vmem:[%s165 + $0x600] sm:$0xff]
      %v366 = vld [vmem:[%s165 + $0x608] sm:$0xff]
      %v367 = vld [vmem:[%s165 + $0x610] sm:$0xff]
      %v368 = vld [vmem:[%s165 + $0x618] sm:$0xff]
      %v369 = vld [vmem:[%s165 + $0x620] sm:$0xff]
      %v370 = vld [vmem:[%s165 + $0x628] sm:$0xff]
      %v371 = vld [vmem:[%s165 + $0x630] sm:$0xff]
      %v372 = vld [vmem:[%s165 + $0x638] sm:$0xff]
      %v373 = vld [vmem:[%s165 + $0x640] sm:$0xff]
      %v374 = vld [vmem:[%s165 + $0x648] sm:$0xff]
      %v375 = vld [vmem:[%s165 + $0x650] sm:$0xff]
      %v376 = vld [vmem:[%s165 + $0x658] sm:$0xff]
      %v377 = vld [vmem:[%s165 + $0x660] sm:$0xff]
      %v378 = vld [vmem:[%s165 + $0x668] sm:$0xff]
      %v379 = vld [vmem:[%s165 + $0x670] sm:$0xff]
      %v380 = vld [vmem:[%s165 + $0x678] sm:$0xff]
      %v381 = vld [vmem:[%s165 + $0x680] sm:$0x33]
      %v382 = vld [vmem:[%s165 + $0x688] sm:$0x33]
      %v383 = vld [vmem:[%s165 + $0x690] sm:$0x33]
      %v384 = vld [vmem:[%s165 + $0x698] sm:$0x33]
      %v385 = vld [vmem:[%s165 + $0x6a0] sm:$0x33]
      %v386 = vld [vmem:[%s165 + $0x6a8] sm:$0x33]
      %v387 = vld [vmem:[%s165 + $0x6b0] sm:$0x33]
      %v388 = vld [vmem:[%s165 + $0x6b8] sm:$0x33]
      %v389 = vld [vmem:[%s165 + $0x6c0] sm:$0x33]
      %v390 = vld [vmem:[%s165 + $0x6c8] sm:$0x33]
      %v391 = vld [vmem:[%s165 + $0x6d0] sm:$0x33]
      %v392 = vld [vmem:[%s165 + $0x6d8] sm:$0x33]
      %v393 = vld [vmem:[%s165 + $0x6e0] sm:$0x33]
      %v394 = vld [vmem:[%s165 + $0x6e8] sm:$0x33]
      %v395 = vld [vmem:[%s165 + $0x6f0] sm:$0x33]
      %v396 = vld [vmem:[%s165 + $0x6f8] sm:$0x33]
      %v621 = vunpack.c.l.b16 %v173
      %v622 = vunpack.c.h.b16 %v173
      %v623 = vunpack.c.l.b16 %v174
      %v624 = vunpack.c.h.b16 %v174
      %v625 = vunpack.c.l.b16 %v175
      %v626 = vunpack.c.h.b16 %v175
      %v627 = vunpack.c.l.b16 %v176
      %v628 = vunpack.c.h.b16 %v176
      %v629 = vunpack.c.l.b16 %v177
      %v630 = vunpack.c.h.b16 %v177
      %v631 = vunpack.c.l.b16 %v178
      %v632 = vunpack.c.h.b16 %v178
      %v633 = vunpack.c.l.b16 %v179
      %v634 = vunpack.c.h.b16 %v179
      %v635 = vunpack.c.l.b16 %v180
      %v636 = vunpack.c.h.b16 %v180
      %v637 = vunpack.c.l.b16 %v181
      %v638 = vunpack.c.h.b16 %v181
      %v639 = vunpack.c.l.b16 %v182
      %v640 = vunpack.c.h.b16 %v182
      %v641 = vunpack.c.l.b16 %v183
      %v642 = vunpack.c.h.b16 %v183
      %v643 = vunpack.c.l.b16 %v184
      %v644 = vunpack.c.h.b16 %v184
      %v645 = vunpack.c.l.b16 %v185
      %v646 = vunpack.c.h.b16 %v185
      %v647 = vunpack.c.l.b16 %v186
      %v648 = vunpack.c.h.b16 %v186
      %v649 = vunpack.c.l.b16 %v187
      %v650 = vunpack.c.h.b16 %v187
      %v651 = vunpack.c.l.b16 %v188
      %v652 = vunpack.c.h.b16 %v188
      %v653 = vunpack.c.l.b16 %v189
      %v654 = vunpack.c.h.b16 %v189
      %v655 = vunpack.c.l.b16 %v190
      %v656 = vunpack.c.h.b16 %v190
      %v657 = vunpack.c.l.b16 %v191
      %v658 = vunpack.c.h.b16 %v191
      %v659 = vunpack.c.l.b16 %v192
      %v660 = vunpack.c.h.b16 %v192
      %v661 = vunpack.c.l.b16 %v193
      %v662 = vunpack.c.h.b16 %v193
      %v663 = vunpack.c.l.b16 %v194
      %v664 = vunpack.c.h.b16 %v194
      %v665 = vunpack.c.l.b16 %v195
      %v666 = vunpack.c.h.b16 %v195
      %v667 = vunpack.c.l.b16 %v196
      %v668 = vunpack.c.h.b16 %v196
      %v669 = vunpack.c.l.b16 %v197
      %v670 = vunpack.c.h.b16 %v197
      %v671 = vunpack.c.l.b16 %v198
      %v672 = vunpack.c.h.b16 %v198
      %v673 = vunpack.c.l.b16 %v199
      %v674 = vunpack.c.h.b16 %v199
      %v675 = vunpack.c.l.b16 %v200
      %v676 = vunpack.c.h.b16 %v200
      %v677 = vunpack.c.l.b16 %v201
      %v678 = vunpack.c.h.b16 %v201
      %v679 = vunpack.c.l.b16 %v202
      %v680 = vunpack.c.h.b16 %v202
      %v681 = vunpack.c.l.b16 %v203
      %v682 = vunpack.c.h.b16 %v203
      %v683 = vunpack.c.l.b16 %v204
      %v684 = vunpack.c.h.b16 %v204
      %v685 = vunpack.c.l.b16 %v205
      %v686 = vunpack.c.h.b16 %v205
      %v687 = vunpack.c.l.b16 %v206
      %v688 = vunpack.c.h.b16 %v206
      %v689 = vunpack.c.l.b16 %v207
      %v690 = vunpack.c.h.b16 %v207
      %v691 = vunpack.c.l.b16 %v208
      %v692 = vunpack.c.h.b16 %v208
      %v693 = vunpack.c.l.b16 %v209
      %v694 = vunpack.c.h.b16 %v209
      %v695 = vunpack.c.l.b16 %v210
      %v696 = vunpack.c.h.b16 %v210
      %v697 = vunpack.c.l.b16 %v211
      %v698 = vunpack.c.h.b16 %v211
      %v699 = vunpack.c.l.b16 %v212
      %v700 = vunpack.c.h.b16 %v212
      %v701 = vunpack.c.l.b16 %v213
      %v702 = vunpack.c.h.b16 %v213
      %v703 = vunpack.c.l.b16 %v214
      %v704 = vunpack.c.h.b16 %v214
      %v705 = vunpack.c.l.b16 %v215
      %v706 = vunpack.c.h.b16 %v215
      %v707 = vunpack.c.l.b16 %v216
      %v708 = vunpack.c.h.b16 %v216
      %v709 = vunpack.c.l.b16 %v217
      %v710 = vunpack.c.h.b16 %v217
      %v711 = vunpack.c.l.b16 %v218
      %v712 = vunpack.c.h.b16 %v218
      %v713 = vunpack.c.l.b16 %v219
      %v714 = vunpack.c.h.b16 %v219
      %v715 = vunpack.c.l.b16 %v220
      %v716 = vunpack.c.h.b16 %v220
      %v717 = vunpack.c.l.b16 %v221
      %v718 = vunpack.c.h.b16 %v221
      %v719 = vunpack.c.l.b16 %v222
      %v720 = vunpack.c.h.b16 %v222
      %v721 = vunpack.c.l.b16 %v223
      %v722 = vunpack.c.h.b16 %v223
      %v723 = vunpack.c.l.b16 %v224
      %v724 = vunpack.c.h.b16 %v224
      %v725 = vunpack.c.l.b16 %v225
      %v726 = vunpack.c.h.b16 %v225
      %v727 = vunpack.c.l.b16 %v226
      %v728 = vunpack.c.h.b16 %v226
      %v729 = vunpack.c.l.b16 %v227
      %v730 = vunpack.c.h.b16 %v227
      %v731 = vunpack.c.l.b16 %v228
      %v732 = vunpack.c.h.b16 %v228
      %v733 = vunpack.c.l.b16 %v229
      %v734 = vunpack.c.h.b16 %v229
      %v735 = vunpack.c.l.b16 %v230
      %v736 = vunpack.c.h.b16 %v230
      %v737 = vunpack.c.l.b16 %v231
      %v738 = vunpack.c.h.b16 %v231
      %v739 = vunpack.c.l.b16 %v232
      %v740 = vunpack.c.h.b16 %v232
      %v741 = vunpack.c.l.b16 %v233
      %v742 = vunpack.c.h.b16 %v233
      %v743 = vunpack.c.l.b16 %v234
      %v744 = vunpack.c.h.b16 %v234
      %v745 = vunpack.c.l.b16 %v235
      %v746 = vunpack.c.h.b16 %v235
      %v747 = vunpack.c.l.b16 %v236
      %v748 = vunpack.c.h.b16 %v236
      %v749 = vunpack.c.l.b16 %v237
      %v750 = vunpack.c.h.b16 %v237
      %v751 = vunpack.c.l.b16 %v238
      %v752 = vunpack.c.h.b16 %v238
      %v753 = vunpack.c.l.b16 %v239
      %v754 = vunpack.c.h.b16 %v239
      %v755 = vunpack.c.l.b16 %v240
      %v756 = vunpack.c.h.b16 %v240
      %v757 = vunpack.c.l.b16 %v241
      %v758 = vunpack.c.h.b16 %v241
      %v759 = vunpack.c.l.b16 %v242
      %v760 = vunpack.c.h.b16 %v242
      %v761 = vunpack.c.l.b16 %v243
      %v762 = vunpack.c.h.b16 %v243
      %v763 = vunpack.c.l.b16 %v244
      %v764 = vunpack.c.h.b16 %v244
      %v765 = vunpack.c.l.b16 %v245
      %v766 = vunpack.c.h.b16 %v245
      %v767 = vunpack.c.l.b16 %v246
      %v768 = vunpack.c.h.b16 %v246
      %v769 = vunpack.c.l.b16 %v247
      %v770 = vunpack.c.h.b16 %v247
      %v771 = vunpack.c.l.b16 %v248
      %v772 = vunpack.c.h.b16 %v248
      %v773 = vunpack.c.l.b16 %v249
      %v774 = vunpack.c.h.b16 %v249
      %v775 = vunpack.c.l.b16 %v250
      %v776 = vunpack.c.h.b16 %v250
      %v777 = vunpack.c.l.b16 %v251
      %v778 = vunpack.c.h.b16 %v251
      %v779 = vunpack.c.l.b16 %v252
      %v780 = vunpack.c.h.b16 %v252
      %v781 = vunpack.c.l.b16 %v253
      %v782 = vunpack.c.h.b16 %v253
      %v783 = vunpack.c.l.b16 %v254
      %v784 = vunpack.c.h.b16 %v254
      %v785 = vunpack.c.l.b16 %v255
      %v786 = vunpack.c.h.b16 %v255
      %v787 = vunpack.c.l.b16 %v256
      %v788 = vunpack.c.h.b16 %v256
      %v789 = vunpack.c.l.b16 %v257
      %v790 = vunpack.c.h.b16 %v257
      %v791 = vunpack.c.l.b16 %v258
      %v792 = vunpack.c.h.b16 %v258
      %v793 = vunpack.c.l.b16 %v259
      %v794 = vunpack.c.h.b16 %v259
      %v795 = vunpack.c.l.b16 %v260
      %v796 = vunpack.c.h.b16 %v260
      %v797 = vunpack.c.l.b16 %v261
      %v798 = vunpack.c.h.b16 %v261
      %v799 = vunpack.c.l.b16 %v262
      %v800 = vunpack.c.h.b16 %v262
      %v801 = vunpack.c.l.b16 %v263
      %v802 = vunpack.c.h.b16 %v263
      %v803 = vunpack.c.l.b16 %v264
      %v804 = vunpack.c.h.b16 %v264
      %v805 = vunpack.c.l.b16 %v265
      %v806 = vunpack.c.h.b16 %v265
      %v807 = vunpack.c.l.b16 %v266
      %v808 = vunpack.c.h.b16 %v266
      %v809 = vunpack.c.l.b16 %v267
      %v810 = vunpack.c.h.b16 %v267
      %v811 = vunpack.c.l.b16 %v268
      %v812 = vunpack.c.h.b16 %v268
      %v813 = vunpack.c.l.b16 %v269
      %v814 = vunpack.c.h.b16 %v269
      %v815 = vunpack.c.l.b16 %v270
      %v816 = vunpack.c.h.b16 %v270
      %v817 = vunpack.c.l.b16 %v271
      %v818 = vunpack.c.h.b16 %v271
      %v819 = vunpack.c.l.b16 %v272
      %v820 = vunpack.c.h.b16 %v272
      %v821 = vunpack.c.l.b16 %v273
      %v822 = vunpack.c.h.b16 %v273
      %v823 = vunpack.c.l.b16 %v274
      %v824 = vunpack.c.h.b16 %v274
      %v825 = vunpack.c.l.b16 %v275
      %v826 = vunpack.c.h.b16 %v275
      %v827 = vunpack.c.l.b16 %v276
      %v828 = vunpack.c.h.b16 %v276
      %v829 = vunpack.c.l.b16 %v277
      %v830 = vunpack.c.h.b16 %v277
      %v831 = vunpack.c.l.b16 %v278
      %v832 = vunpack.c.h.b16 %v278
      %v833 = vunpack.c.l.b16 %v279
      %v834 = vunpack.c.h.b16 %v279
      %v835 = vunpack.c.l.b16 %v280
      %v836 = vunpack.c.h.b16 %v280
      %v837 = vunpack.c.l.b16 %v281
      %v838 = vunpack.c.h.b16 %v281
      %v839 = vunpack.c.l.b16 %v282
      %v840 = vunpack.c.h.b16 %v282
      %v841 = vunpack.c.l.b16 %v283
      %v842 = vunpack.c.h.b16 %v283
      %v843 = vunpack.c.l.b16 %v284
      %v844 = vunpack.c.h.b16 %v284
      %v845 = vunpack.c.l.b16 %v285
      %v846 = vunpack.c.h.b16 %v285
      %v847 = vunpack.c.l.b16 %v286
      %v848 = vunpack.c.h.b16 %v286
      %v849 = vunpack.c.l.b16 %v287
      %v850 = vunpack.c.h.b16 %v287
      %v851 = vunpack.c.l.b16 %v288
      %v852 = vunpack.c.h.b16 %v288
      %v853 = vunpack.c.l.b16 %v289
      %v854 = vunpack.c.h.b16 %v289
      %v855 = vunpack.c.l.b16 %v290
      %v856 = vunpack.c.h.b16 %v290
      %v857 = vunpack.c.l.b16 %v291
      %v858 = vunpack.c.h.b16 %v291
      %v859 = vunpack.c.l.b16 %v292
      %v860 = vunpack.c.h.b16 %v292
      %v861 = vunpack.c.l.b16 %v293
      %v862 = vunpack.c.h.b16 %v293
      %v863 = vunpack.c.l.b16 %v294
      %v864 = vunpack.c.h.b16 %v294
      %v865 = vunpack.c.l.b16 %v295
      %v866 = vunpack.c.h.b16 %v295
      %v867 = vunpack.c.l.b16 %v296
      %v868 = vunpack.c.h.b16 %v296
      %v869 = vunpack.c.l.b16 %v297
      %v870 = vunpack.c.h.b16 %v297
      %v871 = vunpack.c.l.b16 %v298
      %v872 = vunpack.c.h.b16 %v298
      %v873 = vunpack.c.l.b16 %v299
      %v874 = vunpack.c.h.b16 %v299
      %v875 = vunpack.c.l.b16 %v300
      %v876 = vunpack.c.h.b16 %v300
      %v877 = vunpack.c.l.b16 %v301
      %v878 = vunpack.c.h.b16 %v301
      %v879 = vunpack.c.l.b16 %v302
      %v880 = vunpack.c.h.b16 %v302
      %v881 = vunpack.c.l.b16 %v303
      %v882 = vunpack.c.h.b16 %v303
      %v883 = vunpack.c.l.b16 %v304
      %v884 = vunpack.c.h.b16 %v304
      %v885 = vunpack.c.l.b16 %v305
      %v886 = vunpack.c.h.b16 %v305
      %v887 = vunpack.c.l.b16 %v306
      %v888 = vunpack.c.h.b16 %v306
      %v889 = vunpack.c.l.b16 %v307
      %v890 = vunpack.c.h.b16 %v307
      %v891 = vunpack.c.l.b16 %v308
      %v892 = vunpack.c.h.b16 %v308
      %v893 = vunpack.c.l.b16 %v309
      %v894 = vunpack.c.h.b16 %v309
      %v895 = vunpack.c.l.b16 %v310
      %v896 = vunpack.c.h.b16 %v310
      %v897 = vunpack.c.l.b16 %v311
      %v898 = vunpack.c.h.b16 %v311
      %v899 = vunpack.c.l.b16 %v312
      %v900 = vunpack.c.h.b16 %v312
      %v901 = vunpack.c.l.b16 %v313
      %v902 = vunpack.c.h.b16 %v313
      %v903 = vunpack.c.l.b16 %v314
      %v904 = vunpack.c.h.b16 %v314
      %v905 = vunpack.c.l.b16 %v315
      %v906 = vunpack.c.h.b16 %v315
      %v907 = vunpack.c.l.b16 %v316
      %v908 = vunpack.c.h.b16 %v316
      %v909 = vunpack.c.l.b16 %v317
      %v910 = vunpack.c.h.b16 %v317
      %v911 = vunpack.c.l.b16 %v318
      %v912 = vunpack.c.h.b16 %v318
      %v913 = vunpack.c.l.b16 %v319
      %v914 = vunpack.c.h.b16 %v319
      %v915 = vunpack.c.l.b16 %v320
      %v916 = vunpack.c.h.b16 %v320
      %v917 = vunpack.c.l.b16 %v321
      %v918 = vunpack.c.h.b16 %v321
      %v919 = vunpack.c.l.b16 %v322
      %v920 = vunpack.c.h.b16 %v322
      %v921 = vunpack.c.l.b16 %v323
      %v922 = vunpack.c.h.b16 %v323
      %v923 = vunpack.c.l.b16 %v324
      %v924 = vunpack.c.h.b16 %v324
      %v925 = vunpack.c.l.b16 %v325
      %v926 = vunpack.c.h.b16 %v325
      %v927 = vunpack.c.l.b16 %v326
      %v928 = vunpack.c.h.b16 %v326
      %v929 = vunpack.c.l.b16 %v327
      %v930 = vunpack.c.h.b16 %v327
      %v931 = vunpack.c.l.b16 %v328
      %v932 = vunpack.c.h.b16 %v328
      %v933 = vunpack.c.l.b16 %v329
      %v934 = vunpack.c.h.b16 %v329
      %v935 = vunpack.c.l.b16 %v330
      %v936 = vunpack.c.h.b16 %v330
      %v937 = vunpack.c.l.b16 %v331
      %v938 = vunpack.c.h.b16 %v331
      %v939 = vunpack.c.l.b16 %v332
      %v940 = vunpack.c.h.b16 %v332
      %v941 = vunpack.c.l.b16 %v333
      %v942 = vunpack.c.h.b16 %v333
      %v943 = vunpack.c.l.b16 %v334
      %v944 = vunpack.c.h.b16 %v334
      %v945 = vunpack.c.l.b16 %v335
      %v946 = vunpack.c.h.b16 %v335
      %v947 = vunpack.c.l.b16 %v336
      %v948 = vunpack.c.h.b16 %v336
      %v949 = vunpack.c.l.b16 %v337
      %v950 = vunpack.c.h.b16 %v337
      %v951 = vunpack.c.l.b16 %v338
      %v952 = vunpack.c.h.b16 %v338
      %v953 = vunpack.c.l.b16 %v339
      %v954 = vunpack.c.h.b16 %v339
      %v955 = vunpack.c.l.b16 %v340
      %v956 = vunpack.c.h.b16 %v340
      %v957 = vunpack.c.l.b16 %v341
      %v958 = vunpack.c.h.b16 %v341
      %v959 = vunpack.c.l.b16 %v342
      %v960 = vunpack.c.h.b16 %v342
      %v961 = vunpack.c.l.b16 %v343
      %v962 = vunpack.c.h.b16 %v343
      %v963 = vunpack.c.l.b16 %v344
      %v964 = vunpack.c.h.b16 %v344
      %v965 = vunpack.c.l.b16 %v345
      %v966 = vunpack.c.h.b16 %v345
      %v967 = vunpack.c.l.b16 %v346
      %v968 = vunpack.c.h.b16 %v346
      %v969 = vunpack.c.l.b16 %v347
      %v970 = vunpack.c.h.b16 %v347
      %v971 = vunpack.c.l.b16 %v348
      %v972 = vunpack.c.h.b16 %v348
      %v973 = vunpack.c.l.b16 %v349
      %v974 = vunpack.c.h.b16 %v349
      %v975 = vunpack.c.l.b16 %v350
      %v976 = vunpack.c.h.b16 %v350
      %v977 = vunpack.c.l.b16 %v351
      %v978 = vunpack.c.h.b16 %v351
      %v979 = vunpack.c.l.b16 %v352
      %v980 = vunpack.c.h.b16 %v352
      %v981 = vunpack.c.l.b16 %v353
      %v982 = vunpack.c.h.b16 %v353
      %v983 = vunpack.c.l.b16 %v354
      %v984 = vunpack.c.h.b16 %v354
      %v985 = vunpack.c.l.b16 %v355
      %v986 = vunpack.c.h.b16 %v355
      %v987 = vunpack.c.l.b16 %v356
      %v988 = vunpack.c.h.b16 %v356
      %v989 = vunpack.c.l.b16 %v357
      %v990 = vunpack.c.h.b16 %v357
      %v991 = vunpack.c.l.b16 %v358
      %v992 = vunpack.c.h.b16 %v358
      %v993 = vunpack.c.l.b16 %v359
      %v994 = vunpack.c.h.b16 %v359
      %v995 = vunpack.c.l.b16 %v360
      %v996 = vunpack.c.h.b16 %v360
      %v997 = vunpack.c.l.b16 %v361
      %v998 = vunpack.c.h.b16 %v361
      %v999 = vunpack.c.l.b16 %v362
      %v1000 = vunpack.c.h.b16 %v362
      %v1001 = vunpack.c.l.b16 %v363
      %v1002 = vunpack.c.h.b16 %v363
      %v1003 = vunpack.c.l.b16 %v364
      %v1004 = vunpack.c.h.b16 %v364
      %v1005 = vunpack.c.l.b16 %v365
      %v1006 = vunpack.c.h.b16 %v365
      %v1007 = vunpack.c.l.b16 %v366
      %v1008 = vunpack.c.h.b16 %v366
      %v1009 = vunpack.c.l.b16 %v367
      %v1010 = vunpack.c.h.b16 %v367
      %v1011 = vunpack.c.l.b16 %v368
      %v1012 = vunpack.c.h.b16 %v368
      %v1013 = vunpack.c.l.b16 %v369
      %v1014 = vunpack.c.h.b16 %v369
      %v1015 = vunpack.c.l.b16 %v370
      %v1016 = vunpack.c.h.b16 %v370
      %v1017 = vunpack.c.l.b16 %v371
      %v1018 = vunpack.c.h.b16 %v371
      %v1019 = vunpack.c.l.b16 %v372
      %v1020 = vunpack.c.h.b16 %v372
      %v1021 = vunpack.c.l.b16 %v373
      %v1022 = vunpack.c.h.b16 %v373
      %v1023 = vunpack.c.l.b16 %v374
      %v1024 = vunpack.c.h.b16 %v374
      %v1025 = vunpack.c.l.b16 %v375
      %v1026 = vunpack.c.h.b16 %v375
      %v1027 = vunpack.c.l.b16 %v376
      %v1028 = vunpack.c.h.b16 %v376
      %v1029 = vunpack.c.l.b16 %v377
      %v1030 = vunpack.c.h.b16 %v377
      %v1031 = vunpack.c.l.b16 %v378
      %v1032 = vunpack.c.h.b16 %v378
      %v1033 = vunpack.c.l.b16 %v379
      %v1034 = vunpack.c.h.b16 %v379
      %v1035 = vunpack.c.l.b16 %v380
      %v1036 = vunpack.c.h.b16 %v380
      %v1037 = vunpack.c.l.b16 %v381
      %v1038 = vunpack.c.h.b16 %v381
      %v1039 = vunpack.c.l.b16 %v382
      %v1040 = vunpack.c.h.b16 %v382
      %v1041 = vunpack.c.l.b16 %v383
      %v1042 = vunpack.c.h.b16 %v383
      %v1043 = vunpack.c.l.b16 %v384
      %v1044 = vunpack.c.h.b16 %v384
      %v1045 = vunpack.c.l.b16 %v385
      %v1046 = vunpack.c.h.b16 %v385
      %v1047 = vunpack.c.l.b16 %v386
      %v1048 = vunpack.c.h.b16 %v386
      %v1049 = vunpack.c.l.b16 %v387
      %v1050 = vunpack.c.h.b16 %v387
      %v1051 = vunpack.c.l.b16 %v388
      %v1052 = vunpack.c.h.b16 %v388
      %v1053 = vunpack.c.l.b16 %v389
      %v1054 = vunpack.c.h.b16 %v389
      %v1055 = vunpack.c.l.b16 %v390
      %v1056 = vunpack.c.h.b16 %v390
      %v1057 = vunpack.c.l.b16 %v391
      %v1058 = vunpack.c.h.b16 %v391
      %v1059 = vunpack.c.l.b16 %v392
      %v1060 = vunpack.c.h.b16 %v392
      %v1061 = vunpack.c.l.b16 %v393
      %v1062 = vunpack.c.h.b16 %v393
      %v1063 = vunpack.c.l.b16 %v394
      %v1064 = vunpack.c.h.b16 %v394
      %v1065 = vunpack.c.l.b16 %v395
      %v1066 = vunpack.c.h.b16 %v395
      %v1067 = vunpack.c.l.b16 %v396
      %v1068 = vunpack.c.h.b16 %v396
      %v1069 = vpack.c.b16 %v653, %v621
      %v1070 = vpack.c.b16 %v654, %v622
      %v1071 = vpack.c.b16 %v655, %v623
      %v1072 = vpack.c.b16 %v656, %v624
      %v1073 = vpack.c.b16 %v657, %v625
      %v1074 = vpack.c.b16 %v658, %v626
      %v1075 = vpack.c.b16 %v659, %v627
      %v1076 = vpack.c.b16 %v660, %v628
      %v1077 = vpack.c.b16 %v661, %v629
      %v1078 = vpack.c.b16 %v662, %v630
      %v1079 = vpack.c.b16 %v663, %v631
      %v1080 = vpack.c.b16 %v664, %v632
      %v1081 = vpack.c.b16 %v665, %v633
      %v1082 = vpack.c.b16 %v666, %v634
      %v1083 = vpack.c.b16 %v667, %v635
      %v1084 = vpack.c.b16 %v668, %v636
      %v1085 = vpack.c.b16 %v669, %v637
      %v1086 = vpack.c.b16 %v670, %v638
      %v1087 = vpack.c.b16 %v671, %v639
      %v1088 = vpack.c.b16 %v672, %v640
      %v1089 = vpack.c.b16 %v673, %v641
      %v1090 = vpack.c.b16 %v674, %v642
      %v1091 = vpack.c.b16 %v675, %v643
      %v1092 = vpack.c.b16 %v676, %v644
      %v1093 = vpack.c.b16 %v677, %v645
      %v1094 = vpack.c.b16 %v678, %v646
      %v1095 = vpack.c.b16 %v679, %v647
      %v1096 = vpack.c.b16 %v680, %v648
      %v1097 = vpack.c.b16 %v681, %v649
      %v1098 = vpack.c.b16 %v682, %v650
      %v1099 = vpack.c.b16 %v683, %v651
      %v1100 = vpack.c.b16 %v684, %v652
      %v1101 = vpack.c.b16 %v717, %v685
      %v1102 = vpack.c.b16 %v718, %v686
      %v1103 = vpack.c.b16 %v719, %v687
      %v1104 = vpack.c.b16 %v720, %v688
      %v1105 = vpack.c.b16 %v721, %v689
      %v1106 = vpack.c.b16 %v722, %v690
      %v1107 = vpack.c.b16 %v723, %v691
      %v1108 = vpack.c.b16 %v724, %v692
      %v1109 = vpack.c.b16 %v725, %v693
      %v1110 = vpack.c.b16 %v726, %v694
      %v1111 = vpack.c.b16 %v727, %v695
      %v1112 = vpack.c.b16 %v728, %v696
      %v1113 = vpack.c.b16 %v729, %v697
      %v1114 = vpack.c.b16 %v730, %v698
      %v1115 = vpack.c.b16 %v731, %v699
      %v1116 = vpack.c.b16 %v732, %v700
      %v1117 = vpack.c.b16 %v733, %v701
      %v1118 = vpack.c.b16 %v734, %v702
      %v1119 = vpack.c.b16 %v735, %v703
      %v1120 = vpack.c.b16 %v736, %v704
      %v1121 = vpack.c.b16 %v737, %v705
      %v1122 = vpack.c.b16 %v738, %v706
      %v1123 = vpack.c.b16 %v739, %v707
      %v1124 = vpack.c.b16 %v740, %v708
      %v1125 = vpack.c.b16 %v741, %v709
      %v1126 = vpack.c.b16 %v742, %v710
      %v1127 = vpack.c.b16 %v743, %v711
      %v1128 = vpack.c.b16 %v744, %v712
      %v1129 = vpack.c.b16 %v745, %v713
      %v1130 = vpack.c.b16 %v746, %v714
      %v1131 = vpack.c.b16 %v747, %v715
      %v1132 = vpack.c.b16 %v748, %v716
      %v1133 = vpack.c.b16 %v781, %v749
      %v1134 = vpack.c.b16 %v782, %v750
      %v1135 = vpack.c.b16 %v783, %v751
      %v1136 = vpack.c.b16 %v784, %v752
      %v1137 = vpack.c.b16 %v785, %v753
      %v1138 = vpack.c.b16 %v786, %v754
      %v1139 = vpack.c.b16 %v787, %v755
      %v1140 = vpack.c.b16 %v788, %v756
      %v1141 = vpack.c.b16 %v789, %v757
      %v1142 = vpack.c.b16 %v790, %v758
      %v1143 = vpack.c.b16 %v791, %v759
      %v1144 = vpack.c.b16 %v792, %v760
      %v1145 = vpack.c.b16 %v793, %v761
      %v1146 = vpack.c.b16 %v794, %v762
      %v1147 = vpack.c.b16 %v795, %v763
      %v1148 = vpack.c.b16 %v796, %v764
      %v1149 = vpack.c.b16 %v797, %v765
      %v1150 = vpack.c.b16 %v798, %v766
      %v1151 = vpack.c.b16 %v799, %v767
      %v1152 = vpack.c.b16 %v800, %v768
      %v1153 = vpack.c.b16 %v801, %v769
      %v1154 = vpack.c.b16 %v802, %v770
      %v1155 = vpack.c.b16 %v803, %v771
      %v1156 = vpack.c.b16 %v804, %v772
      %v1157 = vpack.c.b16 %v805, %v773
      %v1158 = vpack.c.b16 %v806, %v774
      %v1159 = vpack.c.b16 %v807, %v775
      %v1160 = vpack.c.b16 %v808, %v776
      %v1161 = vpack.c.b16 %v809, %v777
      %v1162 = vpack.c.b16 %v810, %v778
      %v1163 = vpack.c.b16 %v811, %v779
      %v1164 = vpack.c.b16 %v812, %v780
      %v1165 = vpack.c.b16 %v845, %v813
      %v1166 = vpack.c.b16 %v846, %v814
      %v1167 = vpack.c.b16 %v847, %v815
      %v1168 = vpack.c.b16 %v848, %v816
      %v1169 = vpack.c.b16 %v849, %v817
      %v1170 = vpack.c.b16 %v850, %v818
      %v1171 = vpack.c.b16 %v851, %v819
      %v1172 = vpack.c.b16 %v852, %v820
      %v1173 = vpack.c.b16 %v853, %v821
      %v1174 = vpack.c.b16 %v854, %v822
      %v1175 = vpack.c.b16 %v855, %v823
      %v1176 = vpack.c.b16 %v856, %v824
      %v1177 = vpack.c.b16 %v857, %v825
      %v1178 = vpack.c.b16 %v858, %v826
      %v1179 = vpack.c.b16 %v859, %v827
      %v1180 = vpack.c.b16 %v860, %v828
      %v1181 = vpack.c.b16 %v861, %v829
      %v1182 = vpack.c.b16 %v862, %v830
      %v1183 = vpack.c.b16 %v863, %v831
      %v1184 = vpack.c.b16 %v864, %v832
      %v1185 = vpack.c.b16 %v865, %v833
      %v1186 = vpack.c.b16 %v866, %v834
      %v1187 = vpack.c.b16 %v867, %v835
      %v1188 = vpack.c.b16 %v868, %v836
      %v1189 = vpack.c.b16 %v869, %v837
      %v1190 = vpack.c.b16 %v870, %v838
      %v1191 = vpack.c.b16 %v871, %v839
      %v1192 = vpack.c.b16 %v872, %v840
      %v1193 = vpack.c.b16 %v873, %v841
      %v1194 = vpack.c.b16 %v874, %v842
      %v1195 = vpack.c.b16 %v875, %v843
      %v1196 = vpack.c.b16 %v876, %v844
      %v1197 = vpack.c.b16 %v909, %v877
      %v1198 = vpack.c.b16 %v910, %v878
      %v1199 = vpack.c.b16 %v911, %v879
      %v1200 = vpack.c.b16 %v912, %v880
      %v1201 = vpack.c.b16 %v913, %v881
      %v1202 = vpack.c.b16 %v914, %v882
      %v1203 = vpack.c.b16 %v915, %v883
      %v1204 = vpack.c.b16 %v916, %v884
      %v1205 = vpack.c.b16 %v917, %v885
      %v1206 = vpack.c.b16 %v918, %v886
      %v1207 = vpack.c.b16 %v919, %v887
      %v1208 = vpack.c.b16 %v920, %v888
      %v1209 = vpack.c.b16 %v921, %v889
      %v1210 = vpack.c.b16 %v922, %v890
      %v1211 = vpack.c.b16 %v923, %v891
      %v1212 = vpack.c.b16 %v924, %v892
      %v1213 = vpack.c.b16 %v925, %v893
      %v1214 = vpack.c.b16 %v926, %v894
      %v1215 = vpack.c.b16 %v927, %v895
      %v1216 = vpack.c.b16 %v928, %v896
      %v1217 = vpack.c.b16 %v929, %v897
      %v1218 = vpack.c.b16 %v930, %v898
      %v1219 = vpack.c.b16 %v931, %v899
      %v1220 = vpack.c.b16 %v932, %v900
      %v1221 = vpack.c.b16 %v933, %v901
      %v1222 = vpack.c.b16 %v934, %v902
      %v1223 = vpack.c.b16 %v935, %v903
      %v1224 = vpack.c.b16 %v936, %v904
      %v1225 = vpack.c.b16 %v937, %v905
      %v1226 = vpack.c.b16 %v938, %v906
      %v1227 = vpack.c.b16 %v939, %v907
      %v1228 = vpack.c.b16 %v940, %v908
      %v1229 = vpack.c.b16 %v973, %v941
      %v1230 = vpack.c.b16 %v974, %v942
      %v1231 = vpack.c.b16 %v975, %v943
      %v1232 = vpack.c.b16 %v976, %v944
      %v1233 = vpack.c.b16 %v977, %v945
      %v1234 = vpack.c.b16 %v978, %v946
      %v1235 = vpack.c.b16 %v979, %v947
      %v1236 = vpack.c.b16 %v980, %v948
      %v1237 = vpack.c.b16 %v981, %v949
      %v1238 = vpack.c.b16 %v982, %v950
      %v1239 = vpack.c.b16 %v983, %v951
      %v1240 = vpack.c.b16 %v984, %v952
      %v1241 = vpack.c.b16 %v985, %v953
      %v1242 = vpack.c.b16 %v986, %v954
      %v1243 = vpack.c.b16 %v987, %v955
      %v1244 = vpack.c.b16 %v988, %v956
      %v1245 = vpack.c.b16 %v989, %v957
      %v1246 = vpack.c.b16 %v990, %v958
      %v1247 = vpack.c.b16 %v991, %v959
      %v1248 = vpack.c.b16 %v992, %v960
      %v1249 = vpack.c.b16 %v993, %v961
      %v1250 = vpack.c.b16 %v994, %v962
      %v1251 = vpack.c.b16 %v995, %v963
      %v1252 = vpack.c.b16 %v996, %v964
      %v1253 = vpack.c.b16 %v997, %v965
      %v1254 = vpack.c.b16 %v998, %v966
      %v1255 = vpack.c.b16 %v999, %v967
      %v1256 = vpack.c.b16 %v1000, %v968
      %v1257 = vpack.c.b16 %v1001, %v969
      %v1258 = vpack.c.b16 %v1002, %v970
      %v1259 = vpack.c.b16 %v1003, %v971
      %v1260 = vpack.c.b16 %v1004, %v972
      %v1261 = vpack.c.b16 %v1037, %v1005
      %v1262 = vpack.c.b16 %v1038, %v1006
      %v1263 = vpack.c.b16 %v1039, %v1007
      %v1264 = vpack.c.b16 %v1040, %v1008
      %v1265 = vpack.c.b16 %v1041, %v1009
      %v1266 = vpack.c.b16 %v1042, %v1010
      %v1267 = vpack.c.b16 %v1043, %v1011
      %v1268 = vpack.c.b16 %v1044, %v1012
      %v1269 = vpack.c.b16 %v1045, %v1013
      %v1270 = vpack.c.b16 %v1046, %v1014
      %v1271 = vpack.c.b16 %v1047, %v1015
      %v1272 = vpack.c.b16 %v1048, %v1016
      %v1273 = vpack.c.b16 %v1049, %v1017
      %v1274 = vpack.c.b16 %v1050, %v1018
      %v1275 = vpack.c.b16 %v1051, %v1019
      %v1276 = vpack.c.b16 %v1052, %v1020
      %v1277 = vpack.c.b16 %v1053, %v1021
      %v1278 = vpack.c.b16 %v1054, %v1022
      %v1279 = vpack.c.b16 %v1055, %v1023
      %v1280 = vpack.c.b16 %v1056, %v1024
      %v1281 = vpack.c.b16 %v1057, %v1025
      %v1282 = vpack.c.b16 %v1058, %v1026
      %v1283 = vpack.c.b16 %v1059, %v1027
      %v1284 = vpack.c.b16 %v1060, %v1028
      %v1285 = vpack.c.b16 %v1061, %v1029
      %v1286 = vpack.c.b16 %v1062, %v1030
      %v1287 = vpack.c.b16 %v1063, %v1031
      %v1288 = vpack.c.b16 %v1064, %v1032
      %v1289 = vpack.c.b16 %v1065, %v1033
      %v1290 = vpack.c.b16 %v1066, %v1034
      %v1291 = vpack.c.b16 %v1067, %v1035
      %v1292 = vpack.c.b16 %v1068, %v1036
      %vm1485 = vcmask 883712
      %v1487 = vsel %vm1485, %v172, 0
      %vm1489 = vcmask 1045504
      %v1491 = vsel %vm1489, %v1261, 0
      %v1494 = vsel %vm1489, %v1262, 0
      %v1497 = vsel %vm1489, %v1263, 0
      %v1500 = vsel %vm1489, %v1264, 0
      %v1503 = vsel %vm1489, %v1265, 0
      %v1506 = vsel %vm1489, %v1266, 0
      %v1509 = vsel %vm1489, %v1267, 0
      %v1512 = vsel %vm1489, %v1268, 0
      %v1515 = vsel %vm1489, %v1269, 0
      %v1518 = vsel %vm1489, %v1270, 0
      %v1521 = vsel %vm1489, %v1271, 0
      %v1524 = vsel %vm1489, %v1272, 0
      %v1527 = vsel %vm1489, %v1273, 0
      %v1530 = vsel %vm1489, %v1274, 0
      %v1533 = vsel %vm1489, %v1275, 0
      %v1536 = vsel %vm1489, %v1276, 0
      %v1539 = vsel %vm1489, %v1277, 0
      %v1542 = vsel %vm1489, %v1278, 0
      %v1545 = vsel %vm1489, %v1279, 0
      %v1548 = vsel %vm1489, %v1280, 0
      %v1551 = vsel %vm1489, %v1281, 0
      %v1554 = vsel %vm1489, %v1282, 0
      %v1557 = vsel %vm1489, %v1283, 0
      %v1560 = vsel %vm1489, %v1284, 0
      %v1563 = vsel %vm1489, %v1285, 0
      %v1566 = vsel %vm1489, %v1286, 0
      %v1569 = vsel %vm1489, %v1287, 0
      %v1572 = vsel %vm1489, %v1288, 0
      %v1575 = vsel %vm1489, %v1289, 0
      %v1578 = vsel %vm1489, %v1290, 0
      %v1581 = vsel %vm1489, %v1291, 0
      %v1584 = vsel %vm1489, %v1292, 0
      %1586 = vmatprep.subr.bf16.mxu0 %v1070
      %1587 = vmatpush1.bf16.msra.mxu0 %v1069
      %1588 = vmatprep.subr.bf16.mxu0 %v1102
      %1589 = vmatpush1.bf16.msra.mxu0 %v1101
      %1590 = vmatprep.subr.bf16.mxu0 %v1134
      %1591 = vmatpush1.bf16.msra.mxu0 %v1133
      %1592 = vmatprep.subr.bf16.mxu0 %v1166
      %1593 = vmatpush1.bf16.msra.mxu0 %v1165
      %1594 = vmatprep.subr.bf16.mxu0 %v1198
      %1595 = vmatpush1.bf16.msra.mxu0 %v1197
      %1596 = vmatprep.subr.bf16.mxu0 %v1230
      %1597 = vmatpush1.bf16.msra.mxu0 %v1229
      %1598 = vmatprep.subr.bf16.mxu0 %v1494
      %1599 = vmatpush1.bf16.msra.mxu0 %v1491
      %1600 = vmatprep.subr.bf16.mxu0 0
      %1601 = vmatpush1.bf16.msra.mxu0 0
      %1602 = vmatprep.subr.bf16.mxu0 0
      %1603 = vmatpush1.bf16.msra.mxu0 0
      %1604 = vmatprep.subr.bf16.mxu0 0
      %1605 = vmatpush1.bf16.msra.mxu0 0
      %1606 = vmatprep.subr.bf16.mxu0 0
      %1607 = vmatpush1.bf16.msra.mxu0 0
      %1608 = vmatprep.subr.bf16.mxu0 0
      %1609 = vmatpush1.bf16.msra.mxu0 0
      %1610 = vmatprep.subr.bf16.mxu0 0
      %1611 = vmatpush1.bf16.msra.mxu0 0
      %1612 = vmatprep.subr.bf16.mxu0 0
      %1613 = vmatpush1.bf16.msra.mxu0 0
      %1614 = vmatprep.subr.bf16.mxu0 0
      %1615 = vmatpush1.bf16.msra.mxu0 0
      %1616 = vmatprep.subr.bf16.mxu0 0
      %1617 = vmatpush1.bf16.msra.mxu0 0
      %1618 = vmatprep.mubr.bf16.mxu0 0
      %1619 = vmatmul.mubr.bf16.gmra.mrb[0].mxu0 %v1487
      %v1620 = vpop.f32.mrb[0].mxu0
      %v1621 = vadd.f32 0.0, %v1620
      %v1622 = vpop.f32.mrb[0].mxu0
      %v1623 = vadd.f32 0.0, %v1622
      %v1624 = vpop.f32.mrb[0].mxu0
      %v1625 = vpop.f32.mrb[0].mxu0
      %1626 = vdwg.mxu0
      %1627 = vmatprep.subr.bf16.mxu0 %v1072
      %1628 = vmatpush1.bf16.msra.mxu0 %v1071
      %1629 = vmatprep.subr.bf16.mxu0 %v1104
      %1630 = vmatpush1.bf16.msra.mxu0 %v1103
      %1631 = vmatprep.subr.bf16.mxu0 %v1136
      %1632 = vmatpush1.bf16.msra.mxu0 %v1135
      %1633 = vmatprep.subr.bf16.mxu0 %v1168
      %1634 = vmatpush1.bf16.msra.mxu0 %v1167
      %1635 = vmatprep.subr.bf16.mxu0 %v1200
      %1636 = vmatpush1.bf16.msra.mxu0 %v1199
      %1637 = vmatprep.subr.bf16.mxu0 %v1232
      %1638 = vmatpush1.bf16.msra.mxu0 %v1231
      %1639 = vmatprep.subr.bf16.mxu0 %v1500
      %1640 = vmatpush1.bf16.msra.mxu0 %v1497
      %1641 = vmatprep.subr.bf16.mxu0 0
      %1642 = vmatpush1.bf16.msra.mxu0 0
      %1643 = vmatprep.subr.bf16.mxu0 0
      %1644 = vmatpush1.bf16.msra.mxu0 0
      %1645 = vmatprep.subr.bf16.mxu0 0
      %1646 = vmatpush1.bf16.msra.mxu0 0
      %1647 = vmatprep.subr.bf16.mxu0 0
      %1648 = vmatpush1.bf16.msra.mxu0 0
      %1649 = vmatprep.subr.bf16.mxu0 0
      %1650 = vmatpush1.bf16.msra.mxu0 0
      %1651 = vmatprep.subr.bf16.mxu0 0
      %1652 = vmatpush1.bf16.msra.mxu0 0
      %1653 = vmatprep.subr.bf16.mxu0 0
      %1654 = vmatpush1.bf16.msra.mxu0 0
      %1655 = vmatprep.subr.bf16.mxu0 0
      %1656 = vmatpush1.bf16.msra.mxu0 0
      %1657 = vmatprep.subr.bf16.mxu0 0
      %1658 = vmatpush1.bf16.msra.mxu0 0
      %1659 = vmatprep.mubr.bf16.mxu0 0
      %1660 = vmatmul.mubr.bf16.gmra.mrb[0].mxu0 %v1487
      %v1661 = vpop.f32.mrb[0].mxu0
      %v1662 = vadd.f32 0.0, %v1661
      %v1663 = vpop.f32.mrb[0].mxu0
      %v1664 = vadd.f32 0.0, %v1663
      %v1665 = vpop.f32.mrb[0].mxu0
      %v1666 = vpop.f32.mrb[0].mxu0
      %1667 = vdwg.mxu0
      %1668 = vmatprep.subr.bf16.mxu0 %v1074
      %1669 = vmatpush1.bf16.msra.mxu0 %v1073
      %1670 = vmatprep.subr.bf16.mxu0 %v1106
      %1671 = vmatpush1.bf16.msra.mxu0 %v1105
      %1672 = vmatprep.subr.bf16.mxu0 %v1138
      %1673 = vmatpush1.bf16.msra.mxu0 %v1137
      %1674 = vmatprep.subr.bf16.mxu0 %v1170
      %1675 = vmatpush1.bf16.msra.mxu0 %v1169
      %1676 = vmatprep.subr.bf16.mxu0 %v1202
      %1677 = vmatpush1.bf16.msra.mxu0 %v1201
      %1678 = vmatprep.subr.bf16.mxu0 %v1234
      %1679 = vmatpush1.bf16.msra.mxu0 %v1233
      %1680 = vmatprep.subr.bf16.mxu0 %v1506
      %1681 = vmatpush1.bf16.msra.mxu0 %v1503
      %1682 = vmatprep.subr.bf16.mxu0 0
      %1683 = vmatpush1.bf16.msra.mxu0 0
      %1684 = vmatprep.subr.bf16.mxu0 0
      %1685 = vmatpush1.bf16.msra.mxu0 0
      %1686 = vmatprep.subr.bf16.mxu0 0
      %1687 = vmatpush1.bf16.msra.mxu0 0
      %1688 = vmatprep.subr.bf16.mxu0 0
      %1689 = vmatpush1.bf16.msra.mxu0 0
      %1690 = vmatprep.subr.bf16.mxu0 0
      %1691 = vmatpush1.bf16.msra.mxu0 0
      %1692 = vmatprep.subr.bf16.mxu0 0
      %1693 = vmatpush1.bf16.msra.mxu0 0
      %1694 = vmatprep.subr.bf16.mxu0 0
      %1695 = vmatpush1.bf16.msra.mxu0 0
      %1696 = vmatprep.subr.bf16.mxu0 0
      %1697 = vmatpush1.bf16.msra.mxu0 0
      %1698 = vmatprep.subr.bf16.mxu0 0
      %1699 = vmatpush1.bf16.msra.mxu0 0
      %1700 = vmatprep.mubr.bf16.mxu0 0
      %1701 = vmatmul.mubr.bf16.gmra.mrb[0].mxu0 %v1487
      %v1702 = vpop.f32.mrb[0].mxu0
      %v1703 = vadd.f32 0.0, %v1702
      %v1704 = vpop.f32.mrb[0].mxu0
      %v1705 = vadd.f32 0.0, %v1704
      %v1706 = vpop.f32.mrb[0].mxu0
      %v1707 = vpop.f32.mrb[0].mxu0
      %1708 = vdwg.mxu0
      %1709 = vmatprep.subr.bf16.mxu0 %v1076
      %1710 = vmatpush1.bf16.msra.mxu0 %v1075
      %1711 = vmatprep.subr.bf16.mxu0 %v1108
      %1712 = vmatpush1.bf16.msra.mxu0 %v1107
      %1713 = vmatprep.subr.bf16.mxu0 %v1140
      %1714 = vmatpush1.bf16.msra.mxu0 %v1139
      %1715 = vmatprep.subr.bf16.mxu0 %v1172
      %1716 = vmatpush1.bf16.msra.mxu0 %v1171
      %1717 = vmatprep.subr.bf16.mxu0 %v1204
      %1718 = vmatpush1.bf16.msra.mxu0 %v1203
      %1719 = vmatprep.subr.bf16.mxu0 %v1236
      %1720 = vmatpush1.bf16.msra.mxu0 %v1235
      %1721 = vmatprep.subr.bf16.mxu0 %v1512
      %1722 = vmatpush1.bf16.msra.mxu0 %v1509
      %1723 = vmatprep.subr.bf16.mxu0 0
      %1724 = vmatpush1.bf16.msra.mxu0 0
      %1725 = vmatprep.subr.bf16.mxu0 0
      %1726 = vmatpush1.bf16.msra.mxu0 0
      %1727 = vmatprep.subr.bf16.mxu0 0
      %1728 = vmatpush1.bf16.msra.mxu0 0
      %1729 = vmatprep.subr.bf16.mxu0 0
      %1730 = vmatpush1.bf16.msra.mxu0 0
      %1731 = vmatprep.subr.bf16.mxu0 0
      %1732 = vmatpush1.bf16.msra.mxu0 0
      %1733 = vmatprep.subr.bf16.mxu0 0
      %1734 = vmatpush1.bf16.msra.mxu0 0
      %1735 = vmatprep.subr.bf16.mxu0 0
      %1736 = vmatpush1.bf16.msra.mxu0 0
      %1737 = vmatprep.subr.bf16.mxu0 0
      %1738 = vmatpush1.bf16.msra.mxu0 0
      %1739 = vmatprep.subr.bf16.mxu0 0
      %1740 = vmatpush1.bf16.msra.mxu0 0
      %1741 = vmatprep.mubr.bf16.mxu0 0
      %1742 = vmatmul.mubr.bf16.gmra.mrb[0].mxu0 %v1487
      %v1743 = vpop.f32.mrb[0].mxu0
      %v1744 = vadd.f32 0.0, %v1743
      %v1745 = vpop.f32.mrb[0].mxu0
      %v1746 = vadd.f32 0.0, %v1745
      %v1747 = vpop.f32.mrb[0].mxu0
      %v1748 = vpop.f32.mrb[0].mxu0
      %1749 = vdwg.mxu0
      %1750 = vmatprep.subr.bf16.mxu0 %v1078
      %1751 = vmatpush1.bf16.msra.mxu0 %v1077
      %1752 = vmatprep.subr.bf16.mxu0 %v1110
      %1753 = vmatpush1.bf16.msra.mxu0 %v1109
      %1754 = vmatprep.subr.bf16.mxu0 %v1142
      %1755 = vmatpush1.bf16.msra.mxu0 %v1141
      %1756 = vmatprep.subr.bf16.mxu0 %v1174
      %1757 = vmatpush1.bf16.msra.mxu0 %v1173
      %1758 = vmatprep.subr.bf16.mxu0 %v1206
      %1759 = vmatpush1.bf16.msra.mxu0 %v1205
      %1760 = vmatprep.subr.bf16.mxu0 %v1238
      %1761 = vmatpush1.bf16.msra.mxu0 %v1237
      %1762 = vmatprep.subr.bf16.mxu0 %v1518
      %1763 = vmatpush1.bf16.msra.mxu0 %v1515
      %1764 = vmatprep.subr.bf16.mxu0 0
      %1765 = vmatpush1.bf16.msra.mxu0 0
      %1766 = vmatprep.subr.bf16.mxu0 0
      %1767 = vmatpush1.bf16.msra.mxu0 0
      %1768 = vmatprep.subr.bf16.mxu0 0
      %1769 = vmatpush1.bf16.msra.mxu0 0
      %1770 = vmatprep.subr.bf16.mxu0 0
      %1771 = vmatpush1.bf16.msra.mxu0 0
      %1772 = vmatprep.subr.bf16.mxu0 0
      %1773 = vmatpush1.bf16.msra.mxu0 0
      %1774 = vmatprep.subr.bf16.mxu0 0
      %1775 = vmatpush1.bf16.msra.mxu0 0
      %1776 = vmatprep.subr.bf16.mxu0 0
      %1777 = vmatpush1.bf16.msra.mxu0 0
      %1778 = vmatprep.subr.bf16.mxu0 0
      %1779 = vmatpush1.bf16.msra.mxu0 0
      %1780 = vmatprep.subr.bf16.mxu0 0
      %1781 = vmatpush1.bf16.msra.mxu0 0
      %1782 = vmatprep.mubr.bf16.mxu0 0
      %1783 = vmatmul.mubr.bf16.gmra.mrb[0].mxu0 %v1487
      %v1784 = vpop.f32.mrb[0].mxu0
      %v1785 = vadd.f32 0.0, %v1784
      %v1786 = vpop.f32.mrb[0].mxu0
      %v1787 = vadd.f32 0.0, %v1786
      %v1788 = vpop.f32.mrb[0].mxu0
      %v1789 = vpop.f32.mrb[0].mxu0
      %1790 = vdwg.mxu0
      %1791 = vmatprep.subr.bf16.mxu0 %v1080
      %1792 = vmatpush1.bf16.msra.mxu0 %v1079
      %1793 = vmatprep.subr.bf16.mxu0 %v1112
      %1794 = vmatpush1.bf16.msra.mxu0 %v1111
      %1795 = vmatprep.subr.bf16.mxu0 %v1144
      %1796 = vmatpush1.bf16.msra.mxu0 %v1143
      %1797 = vmatprep.subr.bf16.mxu0 %v1176
      %1798 = vmatpush1.bf16.msra.mxu0 %v1175
      %1799 = vmatprep.subr.bf16.mxu0 %v1208
      %1800 = vmatpush1.bf16.msra.mxu0 %v1207
      %1801 = vmatprep.subr.bf16.mxu0 %v1240
      %1802 = vmatpush1.bf16.msra.mxu0 %v1239
      %1803 = vmatprep.subr.bf16.mxu0 %v1524
      %1804 = vmatpush1.bf16.msra.mxu0 %v1521
      %1805 = vmatprep.subr.bf16.mxu0 0
      %1806 = vmatpush1.bf16.msra.mxu0 0
      %1807 = vmatprep.subr.bf16.mxu0 0
      %1808 = vmatpush1.bf16.msra.mxu0 0
      %1809 = vmatprep.subr.bf16.mxu0 0
      %1810 = vmatpush1.bf16.msra.mxu0 0
      %1811 = vmatprep.subr.bf16.mxu0 0
      %1812 = vmatpush1.bf16.msra.mxu0 0
      %1813 = vmatprep.subr.bf16.mxu0 0
      %1814 = vmatpush1.bf16.msra.mxu0 0
      %1815 = vmatprep.subr.bf16.mxu0 0
      %1816 = vmatpush1.bf16.msra.mxu0 0
      %1817 = vmatprep.subr.bf16.mxu0 0
      %1818 = vmatpush1.bf16.msra.mxu0 0
      %1819 = vmatprep.subr.bf16.mxu0 0
      %1820 = vmatpush1.bf16.msra.mxu0 0
      %1821 = vmatprep.subr.bf16.mxu0 0
      %1822 = vmatpush1.bf16.msra.mxu0 0
      %1823 = vmatprep.mubr.bf16.mxu0 0
      %1824 = vmatmul.mubr.bf16.gmra.mrb[0].mxu0 %v1487
      %v1825 = vpop.f32.mrb[0].mxu0
      %v1826 = vadd.f32 0.0, %v1825
      %v1827 = vpop.f32.mrb[0].mxu0
      %v1828 = vadd.f32 0.0, %v1827
      %v1829 = vpop.f32.mrb[0].mxu0
      %v1830 = vpop.f32.mrb[0].mxu0
      %1831 = vdwg.mxu0
      %1832 = vmatprep.subr.bf16.mxu0 %v1082
      %1833 = vmatpush1.bf16.msra.mxu0 %v1081
      %1834 = vmatprep.subr.bf16.mxu0 %v1114
      %1835 = vmatpush1.bf16.msra.mxu0 %v1113
      %1836 = vmatprep.subr.bf16.mxu0 %v1146
      %1837 = vmatpush1.bf16.msra.mxu0 %v1145
      %1838 = vmatprep.subr.bf16.mxu0 %v1178
      %1839 = vmatpush1.bf16.msra.mxu0 %v1177
      %1840 = vmatprep.subr.bf16.mxu0 %v1210
      %1841 = vmatpush1.bf16.msra.mxu0 %v1209
      %1842 = vmatprep.subr.bf16.mxu0 %v1242
      %1843 = vmatpush1.bf16.msra.mxu0 %v1241
      %1844 = vmatprep.subr.bf16.mxu0 %v1530
      %1845 = vmatpush1.bf16.msra.mxu0 %v1527
      %1846 = vmatprep.subr.bf16.mxu0 0
      %1847 = vmatpush1.bf16.msra.mxu0 0
      %1848 = vmatprep.subr.bf16.mxu0 0
      %1849 = vmatpush1.bf16.msra.mxu0 0
      %1850 = vmatprep.subr.bf16.mxu0 0
      %1851 = vmatpush1.bf16.msra.mxu0 0
      %1852 = vmatprep.subr.bf16.mxu0 0
      %1853 = vmatpush1.bf16.msra.mxu0 0
      %1854 = vmatprep.subr.bf16.mxu0 0
      %1855 = vmatpush1.bf16.msra.mxu0 0
      %1856 = vmatprep.subr.bf16.mxu0 0
      %1857 = vmatpush1.bf16.msra.mxu0 0
      %1858 = vmatprep.subr.bf16.mxu0 0
      %1859 = vmatpush1.bf16.msra.mxu0 0
      %1860 = vmatprep.subr.bf16.mxu0 0
      %1861 = vmatpush1.bf16.msra.mxu0 0
      %1862 = vmatprep.subr.bf16.mxu0 0
      %1863 = vmatpush1.bf16.msra.mxu0 0
      %1864 = vmatprep.mubr.bf16.mxu0 0
      %1865 = vmatmul.mubr.bf16.gmra.mrb[0].mxu0 %v1487
      %v1866 = vpop.f32.mrb[0].mxu0
      %v1867 = vadd.f32 0.0, %v1866
      %v1868 = vpop.f32.mrb[0].mxu0
      %v1869 = vadd.f32 0.0, %v1868
      %v1870 = vpop.f32.mrb[0].mxu0
      %v1871 = vpop.f32.mrb[0].mxu0
      %1872 = vdwg.mxu0
      %1873 = vmatprep.subr.bf16.mxu0 %v1084
      %1874 = vmatpush1.bf16.msra.mxu0 %v1083
      %1875 = vmatprep.subr.bf16.mxu0 %v1116
      %1876 = vmatpush1.bf16.msra.mxu0 %v1115
      %1877 = vmatprep.subr.bf16.mxu0 %v1148
      %1878 = vmatpush1.bf16.msra.mxu0 %v1147
      %1879 = vmatprep.subr.bf16.mxu0 %v1180
      %1880 = vmatpush1.bf16.msra.mxu0 %v1179
      %1881 = vmatprep.subr.bf16.mxu0 %v1212
      %1882 = vmatpush1.bf16.msra.mxu0 %v1211
      %1883 = vmatprep.subr.bf16.mxu0 %v1244
      %1884 = vmatpush1.bf16.msra.mxu0 %v1243
      %1885 = vmatprep.subr.bf16.mxu0 %v1536
      %1886 = vmatpush1.bf16.msra.mxu0 %v1533
      %1887 = vmatprep.subr.bf16.mxu0 0
      %1888 = vmatpush1.bf16.msra.mxu0 0
      %1889 = vmatprep.subr.bf16.mxu0 0
      %1890 = vmatpush1.bf16.msra.mxu0 0
      %1891 = vmatprep.subr.bf16.mxu0 0
      %1892 = vmatpush1.bf16.msra.mxu0 0
      %1893 = vmatprep.subr.bf16.mxu0 0
      %1894 = vmatpush1.bf16.msra.mxu0 0
      %1895 = vmatprep.subr.bf16.mxu0 0
      %1896 = vmatpush1.bf16.msra.mxu0 0
      %1897 = vmatprep.subr.bf16.mxu0 0
      %1898 = vmatpush1.bf16.msra.mxu0 0
      %1899 = vmatprep.subr.bf16.mxu0 0
      %1900 = vmatpush1.bf16.msra.mxu0 0
      %1901 = vmatprep.subr.bf16.mxu0 0
      %1902 = vmatpush1.bf16.msra.mxu0 0
      %1903 = vmatprep.subr.bf16.mxu0 0
      %1904 = vmatpush1.bf16.msra.mxu0 0
      %1905 = vmatprep.mubr.bf16.mxu0 0
      %1906 = vmatmul.mubr.bf16.gmra.mrb[0].mxu0 %v1487
      %v1907 = vpop.f32.mrb[0].mxu0
      %v1908 = vadd.f32 0.0, %v1907
      %v1909 = vpop.f32.mrb[0].mxu0
      %v1910 = vadd.f32 0.0, %v1909
      %v1911 = vpop.f32.mrb[0].mxu0
      %v1912 = vpop.f32.mrb[0].mxu0
      %1913 = vdwg.mxu0
      %1914 = vmatprep.subr.bf16.mxu0 %v1086
      %1915 = vmatpush1.bf16.msra.mxu0 %v1085
      %1916 = vmatprep.subr.bf16.mxu0 %v1118
      %1917 = vmatpush1.bf16.msra.mxu0 %v1117
      %1918 = vmatprep.subr.bf16.mxu0 %v1150
      %1919 = vmatpush1.bf16.msra.mxu0 %v1149
      %1920 = vmatprep.subr.bf16.mxu0 %v1182
      %1921 = vmatpush1.bf16.msra.mxu0 %v1181
      %1922 = vmatprep.subr.bf16.mxu0 %v1214
      %1923 = vmatpush1.bf16.msra.mxu0 %v1213
      %1924 = vmatprep.subr.bf16.mxu0 %v1246
      %1925 = vmatpush1.bf16.msra.mxu0 %v1245
      %1926 = vmatprep.subr.bf16.mxu0 %v1542
      %1927 = vmatpush1.bf16.msra.mxu0 %v1539
      %1928 = vmatprep.subr.bf16.mxu0 0
      %1929 = vmatpush1.bf16.msra.mxu0 0
      %1930 = vmatprep.subr.bf16.mxu0 0
      %1931 = vmatpush1.bf16.msra.mxu0 0
      %1932 = vmatprep.subr.bf16.mxu0 0
      %1933 = vmatpush1.bf16.msra.mxu0 0
      %1934 = vmatprep.subr.bf16.mxu0 0
      %1935 = vmatpush1.bf16.msra.mxu0 0
      %1936 = vmatprep.subr.bf16.mxu0 0
      %1937 = vmatpush1.bf16.msra.mxu0 0
      %1938 = vmatprep.subr.bf16.mxu0 0
      %1939 = vmatpush1.bf16.msra.mxu0 0
      %1940 = vmatprep.subr.bf16.mxu0 0
      %1941 = vmatpush1.bf16.msra.mxu0 0
      %1942 = vmatprep.subr.bf16.mxu0 0
      %1943 = vmatpush1.bf16.msra.mxu0 0
      %1944 = vmatprep.subr.bf16.mxu0 0
      %1945 = vmatpush1.bf16.msra.mxu0 0
      %1946 = vmatprep.mubr.bf16.mxu0 0
      %1947 = vmatmul.mubr.bf16.gmra.mrb[0].mxu0 %v1487
      %v1948 = vpop.f32.mrb[0].mxu0
      %v1949 = vadd.f32 0.0, %v1948
      %v1950 = vpop.f32.mrb[0].mxu0
      %v1951 = vadd.f32 0.0, %v1950
      %v1952 = vpop.f32.mrb[0].mxu0
      %v1953 = vpop.f32.mrb[0].mxu0
      %1954 = vdwg.mxu0
      %1955 = vmatprep.subr.bf16.mxu0 %v1088
      %1956 = vmatpush1.bf16.msra.mxu0 %v1087
      %1957 = vmatprep.subr.bf16.mxu0 %v1120
      %1958 = vmatpush1.bf16.msra.mxu0 %v1119
      %1959 = vmatprep.subr.bf16.mxu0 %v1152
      %1960 = vmatpush1.bf16.msra.mxu0 %v1151
      %1961 = vmatprep.subr.bf16.mxu0 %v1184
      %1962 = vmatpush1.bf16.msra.mxu0 %v1183
      %1963 = vmatprep.subr.bf16.mxu0 %v1216
      %1964 = vmatpush1.bf16.msra.mxu0 %v1215
      %1965 = vmatprep.subr.bf16.mxu0 %v1248
      %1966 = vmatpush1.bf16.msra.mxu0 %v1247
      %1967 = vmatprep.subr.bf16.mxu0 %v1548
      %1968 = vmatpush1.bf16.msra.mxu0 %v1545
      %1969 = vmatprep.subr.bf16.mxu0 0
      %1970 = vmatpush1.bf16.msra.mxu0 0
      %1971 = vmatprep.subr.bf16.mxu0 0
      %1972 = vmatpush1.bf16.msra.mxu0 0
      %1973 = vmatprep.subr.bf16.mxu0 0
      %1974 = vmatpush1.bf16.msra.mxu0 0
      %1975 = vmatprep.subr.bf16.mxu0 0
      %1976 = vmatpush1.bf16.msra.mxu0 0
      %1977 = vmatprep.subr.bf16.mxu0 0
      %1978 = vmatpush1.bf16.msra.mxu0 0
      %1979 = vmatprep.subr.bf16.mxu0 0
      %1980 = vmatpush1.bf16.msra.mxu0 0
      %1981 = vmatprep.subr.bf16.mxu0 0
      %1982 = vmatpush1.bf16.msra.mxu0 0
      %1983 = vmatprep.subr.bf16.mxu0 0
      %1984 = vmatpush1.bf16.msra.mxu0 0
      %1985 = vmatprep.subr.bf16.mxu0 0
      %1986 = vmatpush1.bf16.msra.mxu0 0
      %1987 = vmatprep.mubr.bf16.mxu0 0
      %1988 = vmatmul.mubr.bf16.gmra.mrb[0].mxu0 %v1487
      %v1989 = vpop.f32.mrb[0].mxu0
      %v1990 = vadd.f32 0.0, %v1989
      %v1991 = vpop.f32.mrb[0].mxu0
      %v1992 = vadd.f32 0.0, %v1991
      %v1993 = vpop.f32.mrb[0].mxu0
      %v1994 = vpop.f32.mrb[0].mxu0
      %1995 = vdwg.mxu0
      %1996 = vmatprep.subr.bf16.mxu0 %v1090
      %1997 = vmatpush1.bf16.msra.mxu0 %v1089
      %1998 = vmatprep.subr.bf16.mxu0 %v1122
      %1999 = vmatpush1.bf16.msra.mxu0 %v1121
      %2000 = vmatprep.subr.bf16.mxu0 %v1154
      %2001 = vmatpush1.bf16.msra.mxu0 %v1153
      %2002 = vmatprep.subr.bf16.mxu0 %v1186
      %2003 = vmatpush1.bf16.msra.mxu0 %v1185
      %2004 = vmatprep.subr.bf16.mxu0 %v1218
      %2005 = vmatpush1.bf16.msra.mxu0 %v1217
      %2006 = vmatprep.subr.bf16.mxu0 %v1250
      %2007 = vmatpush1.bf16.msra.mxu0 %v1249
      %2008 = vmatprep.subr.bf16.mxu0 %v1554
      %2009 = vmatpush1.bf16.msra.mxu0 %v1551
      %2010 = vmatprep.subr.bf16.mxu0 0
      %2011 = vmatpush1.bf16.msra.mxu0 0
      %2012 = vmatprep.subr.bf16.mxu0 0
      %2013 = vmatpush1.bf16.msra.mxu0 0
      %2014 = vmatprep.subr.bf16.mxu0 0
      %2015 = vmatpush1.bf16.msra.mxu0 0
      %2016 = vmatprep.subr.bf16.mxu0 0
      %2017 = vmatpush1.bf16.msra.mxu0 0
      %2018 = vmatprep.subr.bf16.mxu0 0
      %2019 = vmatpush1.bf16.msra.mxu0 0
      %2020 = vmatprep.subr.bf16.mxu0 0
      %2021 = vmatpush1.bf16.msra.mxu0 0
      %2022 = vmatprep.subr.bf16.mxu0 0
      %2023 = vmatpush1.bf16.msra.mxu0 0
      %2024 = vmatprep.subr.bf16.mxu0 0
      %2025 = vmatpush1.bf16.msra.mxu0 0
      %2026 = vmatprep.subr.bf16.mxu0 0
      %2027 = vmatpush1.bf16.msra.mxu0 0
      %2028 = vmatprep.mubr.bf16.mxu0 0
      %2029 = vmatmul.mubr.bf16.gmra.mrb[0].mxu0 %v1487
      %v2030 = vpop.f32.mrb[0].mxu0
      %v2031 = vadd.f32 0.0, %v2030
      %v2032 = vpop.f32.mrb[0].mxu0
      %v2033 = vadd.f32 0.0, %v2032
      %v2034 = vpop.f32.mrb[0].mxu0
      %v2035 = vpop.f32.mrb[0].mxu0
      %2036 = vdwg.mxu0
      %2037 = vmatprep.subr.bf16.mxu0 %v1092
      %2038 = vmatpush1.bf16.msra.mxu0 %v1091
      %2039 = vmatprep.subr.bf16.mxu0 %v1124
      %2040 = vmatpush1.bf16.msra.mxu0 %v1123
      %2041 = vmatprep.subr.bf16.mxu0 %v1156
      %2042 = vmatpush1.bf16.msra.mxu0 %v1155
      %2043 = vmatprep.subr.bf16.mxu0 %v1188
      %2044 = vmatpush1.bf16.msra.mxu0 %v1187
      %2045 = vmatprep.subr.bf16.mxu0 %v1220
      %2046 = vmatpush1.bf16.msra.mxu0 %v1219
      %2047 = vmatprep.subr.bf16.mxu0 %v1252
      %2048 = vmatpush1.bf16.msra.mxu0 %v1251
      %2049 = vmatprep.subr.bf16.mxu0 %v1560
      %2050 = vmatpush1.bf16.msra.mxu0 %v1557
      %2051 = vmatprep.subr.bf16.mxu0 0
      %2052 = vmatpush1.bf16.msra.mxu0 0
      %2053 = vmatprep.subr.bf16.mxu0 0
      %2054 = vmatpush1.bf16.msra.mxu0 0
      %2055 = vmatprep.subr.bf16.mxu0 0
      %2056 = vmatpush1.bf16.msra.mxu0 0
      %2057 = vmatprep.subr.bf16.mxu0 0
      %2058 = vmatpush1.bf16.msra.mxu0 0
      %2059 = vmatprep.subr.bf16.mxu0 0
      %2060 = vmatpush1.bf16.msra.mxu0 0
      %2061 = vmatprep.subr.bf16.mxu0 0
      %2062 = vmatpush1.bf16.msra.mxu0 0
      %2063 = vmatprep.subr.bf16.mxu0 0
      %2064 = vmatpush1.bf16.msra.mxu0 0
      %2065 = vmatprep.subr.bf16.mxu0 0
      %2066 = vmatpush1.bf16.msra.mxu0 0
      %2067 = vmatprep.subr.bf16.mxu0 0
      %2068 = vmatpush1.bf16.msra.mxu0 0
      %2069 = vmatprep.mubr.bf16.mxu0 0
      %2070 = vmatmul.mubr.bf16.gmra.mrb[0].mxu0 %v1487
      %v2071 = vpop.f32.mrb[0].mxu0
      %v2072 = vadd.f32 0.0, %v2071
      %v2073 = vpop.f32.mrb[0].mxu0
      %v2074 = vadd.f32 0.0, %v2073
      %v2075 = vpop.f32.mrb[0].mxu0
      %v2076 = vpop.f32.mrb[0].mxu0
      %2077 = vdwg.mxu0
      %2078 = vmatprep.subr.bf16.mxu0 %v1094
      %2079 = vmatpush1.bf16.msra.mxu0 %v1093
      %2080 = vmatprep.subr.bf16.mxu0 %v1126
      %2081 = vmatpush1.bf16.msra.mxu0 %v1125
      %2082 = vmatprep.subr.bf16.mxu0 %v1158
      %2083 = vmatpush1.bf16.msra.mxu0 %v1157
      %2084 = vmatprep.subr.bf16.mxu0 %v1190
      %2085 = vmatpush1.bf16.msra.mxu0 %v1189
      %2086 = vmatprep.subr.bf16.mxu0 %v1222
      %2087 = vmatpush1.bf16.msra.mxu0 %v1221
      %2088 = vmatprep.subr.bf16.mxu0 %v1254
      %2089 = vmatpush1.bf16.msra.mxu0 %v1253
      %2090 = vmatprep.subr.bf16.mxu0 %v1566
      %2091 = vmatpush1.bf16.msra.mxu0 %v1563
      %2092 = vmatprep.subr.bf16.mxu0 0
      %2093 = vmatpush1.bf16.msra.mxu0 0
      %2094 = vmatprep.subr.bf16.mxu0 0
      %2095 = vmatpush1.bf16.msra.mxu0 0
      %2096 = vmatprep.subr.bf16.mxu0 0
      %2097 = vmatpush1.bf16.msra.mxu0 0
      %2098 = vmatprep.subr.bf16.mxu0 0
      %2099 = vmatpush1.bf16.msra.mxu0 0
      %2100 = vmatprep.subr.bf16.mxu0 0
      %2101 = vmatpush1.bf16.msra.mxu0 0
      %2102 = vmatprep.subr.bf16.mxu0 0
      %2103 = vmatpush1.bf16.msra.mxu0 0
      %2104 = vmatprep.subr.bf16.mxu0 0
      %2105 = vmatpush1.bf16.msra.mxu0 0
      %2106 = vmatprep.subr.bf16.mxu0 0
      %2107 = vmatpush1.bf16.msra.mxu0 0
      %2108 = vmatprep.subr.bf16.mxu0 0
      %2109 = vmatpush1.bf16.msra.mxu0 0
      %2110 = vmatprep.mubr.bf16.mxu0 0
      %2111 = vmatmul.mubr.bf16.gmra.mrb[0].mxu0 %v1487
      %v2112 = vpop.f32.mrb[0].mxu0
      %v2113 = vadd.f32 0.0, %v2112
      %v2114 = vpop.f32.mrb[0].mxu0
      %v2115 = vadd.f32 0.0, %v2114
      %v2116 = vpop.f32.mrb[0].mxu0
      %v2117 = vpop.f32.mrb[0].mxu0
      %2118 = vdwg.mxu0
      %2119 = vmatprep.subr.bf16.mxu0 %v1096
      %2120 = vmatpush1.bf16.msra.mxu0 %v1095
      %2121 = vmatprep.subr.bf16.mxu0 %v1128
      %2122 = vmatpush1.bf16.msra.mxu0 %v1127
      %2123 = vmatprep.subr.bf16.mxu0 %v1160
      %2124 = vmatpush1.bf16.msra.mxu0 %v1159
      %2125 = vmatprep.subr.bf16.mxu0 %v1192
      %2126 = vmatpush1.bf16.msra.mxu0 %v1191
      %2127 = vmatprep.subr.bf16.mxu0 %v1224
      %2128 = vmatpush1.bf16.msra.mxu0 %v1223
      %2129 = vmatprep.subr.bf16.mxu0 %v1256
      %2130 = vmatpush1.bf16.msra.mxu0 %v1255
      %2131 = vmatprep.subr.bf16.mxu0 %v1572
      %2132 = vmatpush1.bf16.msra.mxu0 %v1569
      %2133 = vmatprep.subr.bf16.mxu0 0
      %2134 = vmatpush1.bf16.msra.mxu0 0
      %2135 = vmatprep.subr.bf16.mxu0 0
      %2136 = vmatpush1.bf16.msra.mxu0 0
      %2137 = vmatprep.subr.bf16.mxu0 0
      %2138 = vmatpush1.bf16.msra.mxu0 0
      %2139 = vmatprep.subr.bf16.mxu0 0
      %2140 = vmatpush1.bf16.msra.mxu0 0
      %2141 = vmatprep.subr.bf16.mxu0 0
      %2142 = vmatpush1.bf16.msra.mxu0 0
      %2143 = vmatprep.subr.bf16.mxu0 0
      %2144 = vmatpush1.bf16.msra.mxu0 0
      %2145 = vmatprep.subr.bf16.mxu0 0
      %2146 = vmatpush1.bf16.msra.mxu0 0
      %2147 = vmatprep.subr.bf16.mxu0 0
      %2148 = vmatpush1.bf16.msra.mxu0 0
      %2149 = vmatprep.subr.bf16.mxu0 0
      %2150 = vmatpush1.bf16.msra.mxu0 0
      %2151 = vmatprep.mubr.bf16.mxu0 0
      %2152 = vmatmul.mubr.bf16.gmra.mrb[0].mxu0 %v1487
      %v2153 = vpop.f32.mrb[0].mxu0
      %v2154 = vadd.f32 0.0, %v2153
      %v2155 = vpop.f32.mrb[0].mxu0
      %v2156 = vadd.f32 0.0, %v2155
      %v2157 = vpop.f32.mrb[0].mxu0
      %v2158 = vpop.f32.mrb[0].mxu0
      %2159 = vdwg.mxu0
      %2160 = vmatprep.subr.bf16.mxu0 %v1098
      %2161 = vmatpush1.bf16.msra.mxu0 %v1097
      %2162 = vmatprep.subr.bf16.mxu0 %v1130
      %2163 = vmatpush1.bf16.msra.mxu0 %v1129
      %2164 = vmatprep.subr.bf16.mxu0 %v1162
      %2165 = vmatpush1.bf16.msra.mxu0 %v1161
      %2166 = vmatprep.subr.bf16.mxu0 %v1194
      %2167 = vmatpush1.bf16.msra.mxu0 %v1193
      %2168 = vmatprep.subr.bf16.mxu0 %v1226
      %2169 = vmatpush1.bf16.msra.mxu0 %v1225
      %2170 = vmatprep.subr.bf16.mxu0 %v1258
      %2171 = vmatpush1.bf16.msra.mxu0 %v1257
      %2172 = vmatprep.subr.bf16.mxu0 %v1578
      %2173 = vmatpush1.bf16.msra.mxu0 %v1575
      %2174 = vmatprep.subr.bf16.mxu0 0
      %2175 = vmatpush1.bf16.msra.mxu0 0
      %2176 = vmatprep.subr.bf16.mxu0 0
      %2177 = vmatpush1.bf16.msra.mxu0 0
      %2178 = vmatprep.subr.bf16.mxu0 0
      %2179 = vmatpush1.bf16.msra.mxu0 0
      %2180 = vmatprep.subr.bf16.mxu0 0
      %2181 = vmatpush1.bf16.msra.mxu0 0
      %2182 = vmatprep.subr.bf16.mxu0 0
      %2183 = vmatpush1.bf16.msra.mxu0 0
      %2184 = vmatprep.subr.bf16.mxu0 0
      %2185 = vmatpush1.bf16.msra.mxu0 0
      %2186 = vmatprep.subr.bf16.mxu0 0
      %2187 = vmatpush1.bf16.msra.mxu0 0
      %2188 = vmatprep.subr.bf16.mxu0 0
      %2189 = vmatpush1.bf16.msra.mxu0 0
      %2190 = vmatprep.subr.bf16.mxu0 0
      %2191 = vmatpush1.bf16.msra.mxu0 0
      %2192 = vmatprep.mubr.bf16.mxu0 0
      %2193 = vmatmul.mubr.bf16.gmra.mrb[0].mxu0 %v1487
      %v2194 = vpop.f32.mrb[0].mxu0
      %v2195 = vadd.f32 0.0, %v2194
      %v2196 = vpop.f32.mrb[0].mxu0
      %v2197 = vadd.f32 0.0, %v2196
      %v2198 = vpop.f32.mrb[0].mxu0
      %v2199 = vpop.f32.mrb[0].mxu0
      %2200 = vdwg.mxu0
      %2201 = vmatprep.subr.bf16.mxu0 %v1100
      %2202 = vmatpush1.bf16.msra.mxu0 %v1099
      %2203 = vmatprep.subr.bf16.mxu0 %v1132
      %2204 = vmatpush1.bf16.msra.mxu0 %v1131
      %2205 = vmatprep.subr.bf16.mxu0 %v1164
      %2206 = vmatpush1.bf16.msra.mxu0 %v1163
      %2207 = vmatprep.subr.bf16.mxu0 %v1196
      %2208 = vmatpush1.bf16.msra.mxu0 %v1195
      %2209 = vmatprep.subr.bf16.mxu0 %v1228
      %2210 = vmatpush1.bf16.msra.mxu0 %v1227
      %2211 = vmatprep.subr.bf16.mxu0 %v1260
      %2212 = vmatpush1.bf16.msra.mxu0 %v1259
      %2213 = vmatprep.subr.bf16.mxu0 %v1584
      %2214 = vmatpush1.bf16.msra.mxu0 %v1581
      %2215 = vmatprep.subr.bf16.mxu0 0
      %2216 = vmatpush1.bf16.msra.mxu0 0
      %2217 = vmatprep.subr.bf16.mxu0 0
      %2218 = vmatpush1.bf16.msra.mxu0 0
      %2219 = vmatprep.subr.bf16.mxu0 0
      %2220 = vmatpush1.bf16.msra.mxu0 0
      %2221 = vmatprep.subr.bf16.mxu0 0
      %2222 = vmatpush1.bf16.msra.mxu0 0
      %2223 = vmatprep.subr.bf16.mxu0 0
      %2224 = vmatpush1.bf16.msra.mxu0 0
      %2225 = vmatprep.subr.bf16.mxu0 0
      %2226 = vmatpush1.bf16.msra.mxu0 0
      %2227 = vmatprep.subr.bf16.mxu0 0
      %2228 = vmatpush1.bf16.msra.mxu0 0
      %2229 = vmatprep.subr.bf16.mxu0 0
      %2230 = vmatpush1.bf16.msra.mxu0 0
      %2231 = vmatprep.subr.bf16.mxu0 0
      %2232 = vmatpush1.bf16.msra.mxu0 0
      %2233 = vmatprep.mubr.bf16.mxu0 0
      %2234 = vmatmul.mubr.bf16.gmra.mrb[0].mxu0 %v1487
      %v2235 = vpop.f32.mrb[0].mxu0
      %v2236 = vadd.f32 0.0, %v2235
      %v2237 = vpop.f32.mrb[0].mxu0
      %v2238 = vadd.f32 0.0, %v2237
      %v2239 = vpop.f32.mrb[0].mxu0
      %v2240 = vpop.f32.mrb[0].mxu0
      %2241 = vdwg.mxu0
      %vm2242 = vcmask 1043456
      %v2243 = vsel %vm2242, %v1621, 0.0
      %v2244 = vsel %vm2242, %v1623, 0.0
      %v2245 = vadd.f32 %v2243, %v2244
      %v2246 = vsel %vm2242, %v1662, 0.0
      %v2247 = vadd.f32 %v2245, %v2246
      %v2248 = vsel %vm2242, %v1664, 0.0
      %v2249 = vadd.f32 %v2247, %v2248
      %v2250 = vsel %vm2242, %v1703, 0.0
      %v2251 = vadd.f32 %v2249, %v2250
      %v2252 = vsel %vm2242, %v1705, 0.0
      %v2253 = vadd.f32 %v2251, %v2252
      %v2254 = vsel %vm2242, %v1744, 0.0
      %v2255 = vadd.f32 %v2253, %v2254
      %v2256 = vsel %vm2242, %v1746, 0.0
      %v2257 = vadd.f32 %v2255, %v2256
      %v2258 = vsel %vm2242, %v1785, 0.0
      %v2259 = vadd.f32 %v2257, %v2258
      %v2260 = vsel %vm2242, %v1787, 0.0
      %v2261 = vadd.f32 %v2259, %v2260
      %v2262 = vsel %vm2242, %v1826, 0.0
      %v2263 = vadd.f32 %v2261, %v2262
      %v2264 = vsel %vm2242, %v1828, 0.0
      %v2265 = vadd.f32 %v2263, %v2264
      %v2266 = vsel %vm2242, %v1867, 0.0
      %v2267 = vadd.f32 %v2265, %v2266
      %v2268 = vsel %vm2242, %v1869, 0.0
      %v2269 = vadd.f32 %v2267, %v2268
      %v2270 = vsel %vm2242, %v1908, 0.0
      %v2271 = vadd.f32 %v2269, %v2270
      %v2272 = vsel %vm2242, %v1910, 0.0
      %v2273 = vadd.f32 %v2271, %v2272
      %v2274 = vsel %vm2242, %v1949, 0.0
      %v2275 = vadd.f32 %v2273, %v2274
      %v2276 = vsel %vm2242, %v1951, 0.0
      %v2277 = vadd.f32 %v2275, %v2276
      %v2278 = vsel %vm2242, %v1990, 0.0
      %v2279 = vadd.f32 %v2277, %v2278
      %v2280 = vsel %vm2242, %v1992, 0.0
      %v2281 = vadd.f32 %v2279, %v2280
      %v2282 = vsel %vm2242, %v2031, 0.0
      %v2283 = vadd.f32 %v2281, %v2282
      %v2284 = vsel %vm2242, %v2033, 0.0
      %v2285 = vadd.f32 %v2283, %v2284
      %v2286 = vsel %vm2242, %v2072, 0.0
      %v2287 = vadd.f32 %v2285, %v2286
      %v2288 = vsel %vm2242, %v2074, 0.0
      %v2289 = vadd.f32 %v2287, %v2288
      %v2290 = vsel %vm2242, %v2113, 0.0
      %v2291 = vadd.f32 %v2289, %v2290
      %v2292 = vsel %vm2242, %v2115, 0.0
      %v2293 = vadd.f32 %v2291, %v2292
      %v2294 = vsel %vm2242, %v2154, 0.0
      %v2295 = vadd.f32 %v2293, %v2294
      %v2296 = vsel %vm2242, %v2156, 0.0
      %v2297 = vadd.f32 %v2295, %v2296
      %v2298 = vsel %vm2242, %v2195, 0.0
      %v2299 = vadd.f32 %v2297, %v2298
      %v2300 = vsel %vm2242, %v2197, 0.0
      %v2301 = vadd.f32 %v2299, %v2300
      %v2302 = vsel %vm2242, %v2236, 0.0
      %v2303 = vadd.f32 %v2301, %v2302
      %v2304 = vsel %vm2242, %v2238, 0.0
      %v2305 = vadd.f32 %v2303, %v2304
      %2306 = vadd.xlane.f32.xlu0 %v2305
      %v2307 = vpop.xlane.xlu0 %2306
      %v2308 = vrcp.pop 4096.0
      %v2309 = vmul.f32 %v2307, %v2308
      %v2310 = vsub.f32 %v1621, %v2309
      %v2311 = vsub.f32 %v1623, %v2309
      %v2312 = vsub.f32 %v1662, %v2309
      %v2313 = vsub.f32 %v1664, %v2309
      %v2314 = vsub.f32 %v1703, %v2309
      %v2315 = vsub.f32 %v1705, %v2309
      %v2316 = vsub.f32 %v1744, %v2309
      %v2317 = vsub.f32 %v1746, %v2309
      %v2318 = vsub.f32 %v1785, %v2309
      %v2319 = vsub.f32 %v1787, %v2309
      %v2320 = vsub.f32 %v1826, %v2309
      %v2321 = vsub.f32 %v1828, %v2309
      %v2322 = vsub.f32 %v1867, %v2309
      %v2323 = vsub.f32 %v1869, %v2309
      %v2324 = vsub.f32 %v1908, %v2309
      %v2325 = vsub.f32 %v1910, %v2309
      %v2326 = vsub.f32 %v1949, %v2309
      %v2327 = vsub.f32 %v1951, %v2309
      %v2328 = vsub.f32 %v1990, %v2309
      %v2329 = vsub.f32 %v1992, %v2309
      %v2330 = vsub.f32 %v2031, %v2309
      %v2331 = vsub.f32 %v2033, %v2309
      %v2332 = vsub.f32 %v2072, %v2309
      %v2333 = vsub.f32 %v2074, %v2309
      %v2334 = vsub.f32 %v2113, %v2309
      %v2335 = vsub.f32 %v2115, %v2309
      %v2336 = vsub.f32 %v2154, %v2309
      %v2337 = vsub.f32 %v2156, %v2309
      %v2338 = vsub.f32 %v2195, %v2309
      %v2339 = vsub.f32 %v2197, %v2309
      %v2340 = vsub.f32 %v2236, %v2309
      %v2341 = vsub.f32 %v2238, %v2309
      %v2342 = vmul.f32 %v2310, %v2310
      %v2343 = vmul.f32 %v2311, %v2311
      %v2344 = vmul.f32 %v2312, %v2312
      %v2345 = vmul.f32 %v2313, %v2313
      %v2346 = vmul.f32 %v2314, %v2314
      %v2347 = vmul.f32 %v2315, %v2315
      %v2348 = vmul.f32 %v2316, %v2316
      %v2349 = vmul.f32 %v2317, %v2317
      %v2350 = vmul.f32 %v2318, %v2318
      %v2351 = vmul.f32 %v2319, %v2319
      %v2352 = vmul.f32 %v2320, %v2320
      %v2353 = vmul.f32 %v2321, %v2321
      %v2354 = vmul.f32 %v2322, %v2322
      %v2355 = vmul.f32 %v2323, %v2323
      %v2356 = vmul.f32 %v2324, %v2324
      %v2357 = vmul.f32 %v2325, %v2325
      %v2358 = vmul.f32 %v2326, %v2326
      %v2359 = vmul.f32 %v2327, %v2327
      %v2360 = vmul.f32 %v2328, %v2328
      %v2361 = vmul.f32 %v2329, %v2329
      %v2362 = vmul.f32 %v2330, %v2330
      %v2363 = vmul.f32 %v2331, %v2331
      %v2364 = vmul.f32 %v2332, %v2332
      %v2365 = vmul.f32 %v2333, %v2333
      %v2366 = vmul.f32 %v2334, %v2334
      %v2367 = vmul.f32 %v2335, %v2335
      %v2368 = vmul.f32 %v2336, %v2336
      %v2369 = vmul.f32 %v2337, %v2337
      %v2370 = vmul.f32 %v2338, %v2338
      %v2371 = vmul.f32 %v2339, %v2339
      %v2372 = vmul.f32 %v2340, %v2340
      %v2373 = vmul.f32 %v2341, %v2341
      %v2374 = vsel %vm2242, %v2342, 0.0
      %v2375 = vsel %vm2242, %v2343, 0.0
      %v2376 = vadd.f32 %v2374, %v2375
      %v2377 = vsel %vm2242, %v2344, 0.0
      %v2378 = vadd.f32 %v2376, %v2377
      %v2379 = vsel %vm2242, %v2345, 0.0
      %v2380 = vadd.f32 %v2378, %v2379
      %v2381 = vsel %vm2242, %v2346, 0.0
      %v2382 = vadd.f32 %v2380, %v2381
      %v2383 = vsel %vm2242, %v2347, 0.0
      %v2384 = vadd.f32 %v2382, %v2383
      %v2385 = vsel %vm2242, %v2348, 0.0
      %v2386 = vadd.f32 %v2384, %v2385
      %v2387 = vsel %vm2242, %v2349, 0.0
      %v2388 = vadd.f32 %v2386, %v2387
      %v2389 = vsel %vm2242, %v2350, 0.0
      %v2390 = vadd.f32 %v2388, %v2389
      %v2391 = vsel %vm2242, %v2351, 0.0
      %v2392 = vadd.f32 %v2390, %v2391
      %v2393 = vsel %vm2242, %v2352, 0.0
      %v2394 = vadd.f32 %v2392, %v2393
      %v2395 = vsel %vm2242, %v2353, 0.0
      %v2396 = vadd.f32 %v2394, %v2395
      %v2397 = vsel %vm2242, %v2354, 0.0
      %v2398 = vadd.f32 %v2396, %v2397
      %v2399 = vsel %vm2242, %v2355, 0.0
      %v2400 = vadd.f32 %v2398, %v2399
      %v2401 = vsel %vm2242, %v2356, 0.0
      %v2402 = vadd.f32 %v2400, %v2401
      %v2403 = vsel %vm2242, %v2357, 0.0
      %v2404 = vadd.f32 %v2402, %v2403
      %v2405 = vsel %vm2242, %v2358, 0.0
      %v2406 = vadd.f32 %v2404, %v2405
      %v2407 = vsel %vm2242, %v2359, 0.0
      %v2408 = vadd.f32 %v2406, %v2407
      %v2409 = vsel %vm2242, %v2360, 0.0
      %v2410 = vadd.f32 %v2408, %v2409
      %v2411 = vsel %vm2242, %v2361, 0.0
      %v2412 = vadd.f32 %v2410, %v2411
      %v2413 = vsel %vm2242, %v2362, 0.0
      %v2414 = vadd.f32 %v2412, %v2413
      %v2415 = vsel %vm2242, %v2363, 0.0
      %v2416 = vadd.f32 %v2414, %v2415
      %v2417 = vsel %vm2242, %v2364, 0.0
      %v2418 = vadd.f32 %v2416, %v2417
      %v2419 = vsel %vm2242, %v2365, 0.0
      %v2420 = vadd.f32 %v2418, %v2419
      %v2421 = vsel %vm2242, %v2366, 0.0
      %v2422 = vadd.f32 %v2420, %v2421
      %v2423 = vsel %vm2242, %v2367, 0.0
      %v2424 = vadd.f32 %v2422, %v2423
      %v2425 = vsel %vm2242, %v2368, 0.0
      %v2426 = vadd.f32 %v2424, %v2425
      %v2427 = vsel %vm2242, %v2369, 0.0
      %v2428 = vadd.f32 %v2426, %v2427
      %v2429 = vsel %vm2242, %v2370, 0.0
      %v2430 = vadd.f32 %v2428, %v2429
      %v2431 = vsel %vm2242, %v2371, 0.0
      %v2432 = vadd.f32 %v2430, %v2431
      %v2433 = vsel %vm2242, %v2372, 0.0
      %v2434 = vadd.f32 %v2432, %v2433
      %v2435 = vsel %vm2242, %v2373, 0.0
      %v2436 = vadd.f32 %v2434, %v2435
      %2437 = vadd.xlane.f32.xlu0 %v2436
      %v2438 = vpop.xlane.xlu0 %2437
      %v2439 = vmul.f32 %v2438, %v2308
      %v2440 = vadd.f32 %v2439, 1e-05
      %v2441 = vrsqrt.pop %v2440
      %v2442 = vmul.f32 %v2310, %v2441
      %v2443 = vmul.f32 %v2311, %v2441
      %v2444 = vmul.f32 %v2312, %v2441
      %v2445 = vmul.f32 %v2313, %v2441
      %v2446 = vmul.f32 %v2314, %v2441
      %v2447 = vmul.f32 %v2315, %v2441
      %v2448 = vmul.f32 %v2316, %v2441
      %v2449 = vmul.f32 %v2317, %v2441
      %v2450 = vmul.f32 %v2318, %v2441
      %v2451 = vmul.f32 %v2319, %v2441
      %v2452 = vmul.f32 %v2320, %v2441
      %v2453 = vmul.f32 %v2321, %v2441
      %v2454 = vmul.f32 %v2322, %v2441
      %v2455 = vmul.f32 %v2323, %v2441
      %v2456 = vmul.f32 %v2324, %v2441
      %v2457 = vmul.f32 %v2325, %v2441
      %v2458 = vmul.f32 %v2326, %v2441
      %v2459 = vmul.f32 %v2327, %v2441
      %v2460 = vmul.f32 %v2328, %v2441
      %v2461 = vmul.f32 %v2329, %v2441
      %v2462 = vmul.f32 %v2330, %v2441
      %v2463 = vmul.f32 %v2331, %v2441
      %v2464 = vmul.f32 %v2332, %v2441
      %v2465 = vmul.f32 %v2333, %v2441
      %v2466 = vmul.f32 %v2334, %v2441
      %v2467 = vmul.f32 %v2335, %v2441
      %v2468 = vmul.f32 %v2336, %v2441
      %v2469 = vmul.f32 %v2337, %v2441
      %v2470 = vmul.f32 %v2338, %v2441
      %v2471 = vmul.f32 %v2339, %v2441
      %v2472 = vmul.f32 %v2340, %v2441
      %v2473 = vmul.f32 %v2341, %v2441
      %v2474 = vmax.f32 %v2442, 0.0
      %v2475 = vmax.f32 %v2443, 0.0
      %v2476 = vmax.f32 %v2444, 0.0
      %v2477 = vmax.f32 %v2445, 0.0
      %v2478 = vmax.f32 %v2446, 0.0
      %v2479 = vmax.f32 %v2447, 0.0
      %v2480 = vmax.f32 %v2448, 0.0
      %v2481 = vmax.f32 %v2449, 0.0
      %v2482 = vmax.f32 %v2450, 0.0
      %v2483 = vmax.f32 %v2451, 0.0
      %v2484 = vmax.f32 %v2452, 0.0
      %v2485 = vmax.f32 %v2453, 0.0
      %v2486 = vmax.f32 %v2454, 0.0
      %v2487 = vmax.f32 %v2455, 0.0
      %v2488 = vmax.f32 %v2456, 0.0
      %v2489 = vmax.f32 %v2457, 0.0
      %v2490 = vmax.f32 %v2458, 0.0
      %v2491 = vmax.f32 %v2459, 0.0
      %v2492 = vmax.f32 %v2460, 0.0
      %v2493 = vmax.f32 %v2461, 0.0
      %v2494 = vmax.f32 %v2462, 0.0
      %v2495 = vmax.f32 %v2463, 0.0
      %v2496 = vmax.f32 %v2464, 0.0
      %v2497 = vmax.f32 %v2465, 0.0
      %v2498 = vmax.f32 %v2466, 0.0
      %v2499 = vmax.f32 %v2467, 0.0
      %v2500 = vmax.f32 %v2468, 0.0
      %v2501 = vmax.f32 %v2469, 0.0
      %v2502 = vmax.f32 %v2470, 0.0
      %v2503 = vmax.f32 %v2471, 0.0
      %v2504 = vmax.f32 %v2472, 0.0
      %v2505 = vmax.f32 %v2473, 0.0
      %v2506 = vld [vmem:[%s2] sm:$0x3]
      %vm2507 = vcmask 31744
      %v2509 = vsel %vm2507, %v2506, 0
      %v2512 = vsel %vm2242, %v2474, 0
      %v2515 = vsel %vm2242, %v2475, 0
      %v2518 = vsel %vm2242, %v2476, 0
      %v2521 = vsel %vm2242, %v2477, 0
      %v2524 = vsel %vm2242, %v2478, 0
      %v2527 = vsel %vm2242, %v2479, 0
      %v2530 = vsel %vm2242, %v2480, 0
      %v2533 = vsel %vm2242, %v2481, 0
      %v2536 = vsel %vm2242, %v2482, 0
      %v2539 = vsel %vm2242, %v2483, 0
      %v2542 = vsel %vm2242, %v2484, 0
      %v2545 = vsel %vm2242, %v2485, 0
      %v2548 = vsel %vm2242, %v2486, 0
      %v2551 = vsel %vm2242, %v2487, 0
      %v2554 = vsel %vm2242, %v2488, 0
      %v2557 = vsel %vm2242, %v2489, 0
      %v2560 = vsel %vm2242, %v2490, 0
      %v2563 = vsel %vm2242, %v2491, 0
      %v2566 = vsel %vm2242, %v2492, 0
      %v2569 = vsel %vm2242, %v2493, 0
      %v2572 = vsel %vm2242, %v2494, 0
      %v2575 = vsel %vm2242, %v2495, 0
      %v2578 = vsel %vm2242, %v2496, 0
      %v2581 = vsel %vm2242, %v2497, 0
      %v2584 = vsel %vm2242, %v2498, 0
      %v2587 = vsel %vm2242, %v2499, 0
      %v2590 = vsel %vm2242, %v2500, 0
      %v2593 = vsel %vm2242, %v2501, 0
      %v2596 = vsel %vm2242, %v2502, 0
      %v2599 = vsel %vm2242, %v2503, 0
      %v2602 = vsel %vm2242, %v2504, 0
      %v2605 = vsel %vm2242, %v2505, 0
      %2607 = vmatprep.subr.mxu0 %v2515
      %2608 = vmatpush1.msra.mxu0 %v2512
      %2609 = vmatprep.subr.mxu0 0.0
      %2610 = vmatpush1.msra.mxu0 0.0
      %2611 = vmatprep.subr.mxu0 0.0
      %2612 = vmatpush1.msra.mxu0 0.0
      %2613 = vmatprep.subr.mxu0 0.0
      %2614 = vmatpush1.msra.mxu0 0.0
      %2615 = vmatprep.subr.mxu0 0.0
      %2616 = vmatpush1.msra.mxu0 0.0
      %2617 = vmatprep.subr.mxu0 0.0
      %2618 = vmatpush1.msra.mxu0 0.0
      %2619 = vmatprep.subr.mxu0 0.0
      %2620 = vmatpush1.msra.mxu0 0.0
      %2621 = vmatprep.subr.mxu0 0.0
      %2622 = vmatpush1.msra.mxu0 0.0
      %2623 = vmatprep.subr.mxu0 0.0
      %2624 = vmatpush1.msra.mxu0 0.0
      %2625 = vmatprep.subr.mxu0 0.0
      %2626 = vmatpush1.msra.mxu0 0.0
      %2627 = vmatprep.subr.mxu0 0.0
      %2628 = vmatpush1.msra.mxu0 0.0
      %2629 = vmatprep.subr.mxu0 0.0
      %2630 = vmatpush1.msra.mxu0 0.0
      %2631 = vmatprep.subr.mxu0 0.0
      %2632 = vmatpush1.msra.mxu0 0.0
      %2633 = vmatprep.subr.mxu0 0.0
      %2634 = vmatpush1.msra.mxu0 0.0
      %2635 = vmatprep.subr.mxu0 0.0
      %2636 = vmatpush1.msra.mxu0 0.0
      %2637 = vmatprep.subr.mxu0 0.0
      %2638 = vmatpush1.msra.mxu0 0.0
      %2639 = vmatprep.subr.mxu0 0.0
      %2640 = vmatpush1.msra.mxu0 0.0
      %2641 = vmatprep.subr.mxu0 0.0
      %2642 = vmatpush1.msra.mxu0 0.0
      %2643 = vmatprep.subr.mxu0 0.0
      %2644 = vmatpush1.msra.mxu0 0.0
      %2645 = vmatprep.subr.mxu0 0.0
      %2646 = vmatpush1.msra.mxu0 0.0
      %2647 = vmatprep.subr.mxu0 0.0
      %2648 = vmatpush1.msra.mxu0 0.0
      %2649 = vmatprep.subr.mxu0 0.0
      %2650 = vmatpush1.msra.mxu0 0.0
      %2651 = vmatprep.subr.mxu0 0.0
      %2652 = vmatpush1.msra.mxu0 0.0
      %2653 = vmatprep.subr.mxu0 0.0
      %2654 = vmatpush1.msra.mxu0 0.0
      %2655 = vmatprep.subr.mxu0 0.0
      %2656 = vmatpush1.msra.mxu0 0.0
      %2657 = vmatprep.subr.mxu0 0.0
      %2658 = vmatpush1.msra.mxu0 0.0
      %2659 = vmatprep.subr.mxu0 0.0
      %2660 = vmatpush1.msra.mxu0 0.0
      %2661 = vmatprep.subr.mxu0 0.0
      %2662 = vmatpush1.msra.mxu0 0.0
      %2663 = vmatprep.subr.mxu0 0.0
      %2664 = vmatpush1.msra.mxu0 0.0
      %2665 = vmatprep.subr.mxu0 0.0
      %2666 = vmatpush1.msra.mxu0 0.0
      %2667 = vmatprep.subr.mxu0 0.0
      %2668 = vmatpush1.msra.mxu0 0.0
      %2669 = vmatprep.subr.mxu0 0.0
      %2670 = vmatpush1.msra.mxu0 0.0
      %2671 = vmatprep.mubr.f32.mxu0 0.0
      %2672 = vmatmul.mubr.f32.gmra.mrb[0].mxu0 %v2509
      %v2673 = vpop.f32.mrb[0].mxu0
      %v2674 = vadd.f32 0.0, %v2673
      %v2675 = vpop.f32.mrb[0].mxu0
      %v2676 = vadd.f32 0.0, %v2675
      %2677 = vdwg.mxu0
      %2678 = vmatprep.subr.mxu0 %v2521
      %2679 = vmatpush1.msra.mxu0 %v2518
      %2680 = vmatprep.subr.mxu0 0.0
      %2681 = vmatpush1.msra.mxu0 0.0
      %2682 = vmatprep.subr.mxu0 0.0
      %2683 = vmatpush1.msra.mxu0 0.0
      %2684 = vmatprep.subr.mxu0 0.0
      %2685 = vmatpush1.msra.mxu0 0.0
      %2686 = vmatprep.subr.mxu0 0.0
      %2687 = vmatpush1.msra.mxu0 0.0
      %2688 = vmatprep.subr.mxu0 0.0
      %2689 = vmatpush1.msra.mxu0 0.0
      %2690 = vmatprep.subr.mxu0 0.0
      %2691 = vmatpush1.msra.mxu0 0.0
      %2692 = vmatprep.subr.mxu0 0.0
      %2693 = vmatpush1.msra.mxu0 0.0
      %2694 = vmatprep.subr.mxu0 0.0
      %2695 = vmatpush1.msra.mxu0 0.0
      %2696 = vmatprep.subr.mxu0 0.0
      %2697 = vmatpush1.msra.mxu0 0.0
      %2698 = vmatprep.subr.mxu0 0.0
      %2699 = vmatpush1.msra.mxu0 0.0
      %2700 = vmatprep.subr.mxu0 0.0
      %2701 = vmatpush1.msra.mxu0 0.0
      %2702 = vmatprep.subr.mxu0 0.0
      %2703 = vmatpush1.msra.mxu0 0.0
      %2704 = vmatprep.subr.mxu0 0.0
      %2705 = vmatpush1.msra.mxu0 0.0
      %2706 = vmatprep.subr.mxu0 0.0
      %2707 = vmatpush1.msra.mxu0 0.0
      %2708 = vmatprep.subr.mxu0 0.0
      %2709 = vmatpush1.msra.mxu0 0.0
      %2710 = vmatprep.subr.mxu0 0.0
      %2711 = vmatpush1.msra.mxu0 0.0
      %2712 = vmatprep.subr.mxu0 0.0
      %2713 = vmatpush1.msra.mxu0 0.0
      %2714 = vmatprep.subr.mxu0 0.0
      %2715 = vmatpush1.msra.mxu0 0.0
      %2716 = vmatprep.subr.mxu0 0.0
      %2717 = vmatpush1.msra.mxu0 0.0
      %2718 = vmatprep.subr.mxu0 0.0
      %2719 = vmatpush1.msra.mxu0 0.0
      %2720 = vmatprep.subr.mxu0 0.0
      %2721 = vmatpush1.msra.mxu0 0.0
      %2722 = vmatprep.subr.mxu0 0.0
      %2723 = vmatpush1.msra.mxu0 0.0
      %2724 = vmatprep.subr.mxu0 0.0
      %2725 = vmatpush1.msra.mxu0 0.0
      %2726 = vmatprep.subr.mxu0 0.0
      %2727 = vmatpush1.msra.mxu0 0.0
      %2728 = vmatprep.subr.mxu0 0.0
      %2729 = vmatpush1.msra.mxu0 0.0
      %2730 = vmatprep.subr.mxu0 0.0
      %2731 = vmatpush1.msra.mxu0 0.0
      %2732 = vmatprep.subr.mxu0 0.0
      %2733 = vmatpush1.msra.mxu0 0.0
      %2734 = vmatprep.subr.mxu0 0.0
      %2735 = vmatpush1.msra.mxu0 0.0
      %2736 = vmatprep.subr.mxu0 0.0
      %2737 = vmatpush1.msra.mxu0 0.0
      %2738 = vmatprep.subr.mxu0 0.0
      %2739 = vmatpush1.msra.mxu0 0.0
      %2740 = vmatprep.subr.mxu0 0.0
      %2741 = vmatpush1.msra.mxu0 0.0
      %2742 = vmatprep.mubr.f32.mxu0 0.0
      %2743 = vmatmul.mubr.f32.gmra.mrb[0].mxu0 %v2509
      %v2744 = vpop.f32.mrb[0].mxu0
      %v2745 = vadd.f32 0.0, %v2744
      %v2746 = vpop.f32.mrb[0].mxu0
      %v2747 = vadd.f32 0.0, %v2746
      %2748 = vdwg.mxu0
      %2749 = vmatprep.subr.mxu0 %v2527
      %2750 = vmatpush1.msra.mxu0 %v2524
      %2751 = vmatprep.subr.mxu0 0.0
      %2752 = vmatpush1.msra.mxu0 0.0
      %2753 = vmatprep.subr.mxu0 0.0
      %2754 = vmatpush1.msra.mxu0 0.0
      %2755 = vmatprep.subr.mxu0 0.0
      %2756 = vmatpush1.msra.mxu0 0.0
      %2757 = vmatprep.subr.mxu0 0.0
      %2758 = vmatpush1.msra.mxu0 0.0
      %2759 = vmatprep.subr.mxu0 0.0
      %2760 = vmatpush1.msra.mxu0 0.0
      %2761 = vmatprep.subr.mxu0 0.0
      %2762 = vmatpush1.msra.mxu0 0.0
      %2763 = vmatprep.subr.mxu0 0.0
      %2764 = vmatpush1.msra.mxu0 0.0
      %2765 = vmatprep.subr.mxu0 0.0
      %2766 = vmatpush1.msra.mxu0 0.0
      %2767 = vmatprep.subr.mxu0 0.0
      %2768 = vmatpush1.msra.mxu0 0.0
      %2769 = vmatprep.subr.mxu0 0.0
      %2770 = vmatpush1.msra.mxu0 0.0
      %2771 = vmatprep.subr.mxu0 0.0
      %2772 = vmatpush1.msra.mxu0 0.0
      %2773 = vmatprep.subr.mxu0 0.0
      %2774 = vmatpush1.msra.mxu0 0.0
      %2775 = vmatprep.subr.mxu0 0.0
      %2776 = vmatpush1.msra.mxu0 0.0
      %2777 = vmatprep.subr.mxu0 0.0
      %2778 = vmatpush1.msra.mxu0 0.0
      %2779 = vmatprep.subr.mxu0 0.0
      %2780 = vmatpush1.msra.mxu0 0.0
      %2781 = vmatprep.subr.mxu0 0.0
      %2782 = vmatpush1.msra.mxu0 0.0
      %2783 = vmatprep.subr.mxu0 0.0
      %2784 = vmatpush1.msra.mxu0 0.0
      %2785 = vmatprep.subr.mxu0 0.0
      %2786 = vmatpush1.msra.mxu0 0.0
      %2787 = vmatprep.subr.mxu0 0.0
      %2788 = vmatpush1.msra.mxu0 0.0
      %2789 = vmatprep.subr.mxu0 0.0
      %2790 = vmatpush1.msra.mxu0 0.0
      %2791 = vmatprep.subr.mxu0 0.0
      %2792 = vmatpush1.msra.mxu0 0.0
      %2793 = vmatprep.subr.mxu0 0.0
      %2794 = vmatpush1.msra.mxu0 0.0
      %2795 = vmatprep.subr.mxu0 0.0
      %2796 = vmatpush1.msra.mxu0 0.0
      %2797 = vmatprep.subr.mxu0 0.0
      %2798 = vmatpush1.msra.mxu0 0.0
      %2799 = vmatprep.subr.mxu0 0.0
      %2800 = vmatpush1.msra.mxu0 0.0
      %2801 = vmatprep.subr.mxu0 0.0
      %2802 = vmatpush1.msra.mxu0 0.0
      %2803 = vmatprep.subr.mxu0 0.0
      %2804 = vmatpush1.msra.mxu0 0.0
      %2805 = vmatprep.subr.mxu0 0.0
      %2806 = vmatpush1.msra.mxu0 0.0
      %2807 = vmatprep.subr.mxu0 0.0
      %2808 = vmatpush1.msra.mxu0 0.0
      %2809 = vmatprep.subr.mxu0 0.0
      %2810 = vmatpush1.msra.mxu0 0.0
      %2811 = vmatprep.subr.mxu0 0.0
      %2812 = vmatpush1.msra.mxu0 0.0
      %2813 = vmatprep.mubr.f32.mxu0 0.0
      %2814 = vmatmul.mubr.f32.gmra.mrb[0].mxu0 %v2509
      %v2815 = vpop.f32.mrb[0].mxu0
      %v2816 = vadd.f32 0.0, %v2815
      %v2817 = vpop.f32.mrb[0].mxu0
      %v2818 = vadd.f32 0.0, %v2817
      %2819 = vdwg.mxu0
      %2820 = vmatprep.subr.mxu0 %v2533
      %2821 = vmatpush1.msra.mxu0 %v2530
      %2822 = vmatprep.subr.mxu0 0.0
      %2823 = vmatpush1.msra.mxu0 0.0
      %2824 = vmatprep.subr.mxu0 0.0
      %2825 = vmatpush1.msra.mxu0 0.0
      %2826 = vmatprep.subr.mxu0 0.0
      %2827 = vmatpush1.msra.mxu0 0.0
      %2828 = vmatprep.subr.mxu0 0.0
      %2829 = vmatpush1.msra.mxu0 0.0
      %2830 = vmatprep.subr.mxu0 0.0
      %2831 = vmatpush1.msra.mxu0 0.0
      %2832 = vmatprep.subr.mxu0 0.0
      %2833 = vmatpush1.msra.mxu0 0.0
      %2834 = vmatprep.subr.mxu0 0.0
      %2835 = vmatpush1.msra.mxu0 0.0
      %2836 = vmatprep.subr.mxu0 0.0
      %2837 = vmatpush1.msra.mxu0 0.0
      %2838 = vmatprep.subr.mxu0 0.0
      %2839 = vmatpush1.msra.mxu0 0.0
      %2840 = vmatprep.subr.mxu0 0.0
      %2841 = vmatpush1.msra.mxu0 0.0
      %2842 = vmatprep.subr.mxu0 0.0
      %2843 = vmatpush1.msra.mxu0 0.0
      %2844 = vmatprep.subr.mxu0 0.0
      %2845 = vmatpush1.msra.mxu0 0.0
      %2846 = vmatprep.subr.mxu0 0.0
      %2847 = vmatpush1.msra.mxu0 0.0
      %2848 = vmatprep.subr.mxu0 0.0
      %2849 = vmatpush1.msra.mxu0 0.0
      %2850 = vmatprep.subr.mxu0 0.0
      %2851 = vmatpush1.msra.mxu0 0.0
      %2852 = vmatprep.subr.mxu0 0.0
      %2853 = vmatpush1.msra.mxu0 0.0
      %2854 = vmatprep.subr.mxu0 0.0
      %2855 = vmatpush1.msra.mxu0 0.0
      %2856 = vmatprep.subr.mxu0 0.0
      %2857 = vmatpush1.msra.mxu0 0.0
      %2858 = vmatprep.subr.mxu0 0.0
      %2859 = vmatpush1.msra.mxu0 0.0
      %2860 = vmatprep.subr.mxu0 0.0
      %2861 = vmatpush1.msra.mxu0 0.0
      %2862 = vmatprep.subr.mxu0 0.0
      %2863 = vmatpush1.msra.mxu0 0.0
      %2864 = vmatprep.subr.mxu0 0.0
      %2865 = vmatpush1.msra.mxu0 0.0
      %2866 = vmatprep.subr.mxu0 0.0
      %2867 = vmatpush1.msra.mxu0 0.0
      %2868 = vmatprep.subr.mxu0 0.0
      %2869 = vmatpush1.msra.mxu0 0.0
      %2870 = vmatprep.subr.mxu0 0.0
      %2871 = vmatpush1.msra.mxu0 0.0
      %2872 = vmatprep.subr.mxu0 0.0
      %2873 = vmatpush1.msra.mxu0 0.0
      %2874 = vmatprep.subr.mxu0 0.0
      %2875 = vmatpush1.msra.mxu0 0.0
      %2876 = vmatprep.subr.mxu0 0.0
      %2877 = vmatpush1.msra.mxu0 0.0
      %2878 = vmatprep.subr.mxu0 0.0
      %2879 = vmatpush1.msra.mxu0 0.0
      %2880 = vmatprep.subr.mxu0 0.0
      %2881 = vmatpush1.msra.mxu0 0.0
      %2882 = vmatprep.subr.mxu0 0.0
      %2883 = vmatpush1.msra.mxu0 0.0
      %2884 = vmatprep.mubr.f32.mxu0 0.0
      %2885 = vmatmul.mubr.f32.gmra.mrb[0].mxu0 %v2509
      %v2886 = vpop.f32.mrb[0].mxu0
      %v2887 = vadd.f32 0.0, %v2886
      %v2888 = vpop.f32.mrb[0].mxu0
      %v2889 = vadd.f32 0.0, %v2888
      %2890 = vdwg.mxu0
      %2891 = vmatprep.subr.mxu0 %v2539
      %2892 = vmatpush1.msra.mxu0 %v2536
      %2893 = vmatprep.subr.mxu0 0.0
      %2894 = vmatpush1.msra.mxu0 0.0
      %2895 = vmatprep.subr.mxu0 0.0
      %2896 = vmatpush1.msra.mxu0 0.0
      %2897 = vmatprep.subr.mxu0 0.0
      %2898 = vmatpush1.msra.mxu0 0.0
      %2899 = vmatprep.subr.mxu0 0.0
      %2900 = vmatpush1.msra.mxu0 0.0
      %2901 = vmatprep.subr.mxu0 0.0
      %2902 = vmatpush1.msra.mxu0 0.0
      %2903 = vmatprep.subr.mxu0 0.0
      %2904 = vmatpush1.msra.mxu0 0.0
      %2905 = vmatprep.subr.mxu0 0.0
      %2906 = vmatpush1.msra.mxu0 0.0
      %2907 = vmatprep.subr.mxu0 0.0
      %2908 = vmatpush1.msra.mxu0 0.0
      %2909 = vmatprep.subr.mxu0 0.0
      %2910 = vmatpush1.msra.mxu0 0.0
      %2911 = vmatprep.subr.mxu0 0.0
      %2912 = vmatpush1.msra.mxu0 0.0
      %2913 = vmatprep.subr.mxu0 0.0
      %2914 = vmatpush1.msra.mxu0 0.0
      %2915 = vmatprep.subr.mxu0 0.0
      %2916 = vmatpush1.msra.mxu0 0.0
      %2917 = vmatprep.subr.mxu0 0.0
      %2918 = vmatpush1.msra.mxu0 0.0
      %2919 = vmatprep.subr.mxu0 0.0
      %2920 = vmatpush1.msra.mxu0 0.0
      %2921 = vmatprep.subr.mxu0 0.0
      %2922 = vmatpush1.msra.mxu0 0.0
      %2923 = vmatprep.subr.mxu0 0.0
      %2924 = vmatpush1.msra.mxu0 0.0
      %2925 = vmatprep.subr.mxu0 0.0
      %2926 = vmatpush1.msra.mxu0 0.0
      %2927 = vmatprep.subr.mxu0 0.0
      %2928 = vmatpush1.msra.mxu0 0.0
      %2929 = vmatprep.subr.mxu0 0.0
      %2930 = vmatpush1.msra.mxu0 0.0
      %2931 = vmatprep.subr.mxu0 0.0
      %2932 = vmatpush1.msra.mxu0 0.0
      %2933 = vmatprep.subr.mxu0 0.0
      %2934 = vmatpush1.msra.mxu0 0.0
      %2935 = vmatprep.subr.mxu0 0.0
      %2936 = vmatpush1.msra.mxu0 0.0
      %2937 = vmatprep.subr.mxu0 0.0
      %2938 = vmatpush1.msra.mxu0 0.0
      %2939 = vmatprep.subr.mxu0 0.0
      %2940 = vmatpush1.msra.mxu0 0.0
      %2941 = vmatprep.subr.mxu0 0.0
      %2942 = vmatpush1.msra.mxu0 0.0
      %2943 = vmatprep.subr.mxu0 0.0
      %2944 = vmatpush1.msra.mxu0 0.0
      %2945 = vmatprep.subr.mxu0 0.0
      %2946 = vmatpush1.msra.mxu0 0.0
      %2947 = vmatprep.subr.mxu0 0.0
      %2948 = vmatpush1.msra.mxu0 0.0
      %2949 = vmatprep.subr.mxu0 0.0
      %2950 = vmatpush1.msra.mxu0 0.0
      %2951 = vmatprep.subr.mxu0 0.0
      %2952 = vmatpush1.msra.mxu0 0.0
      %2953 = vmatprep.subr.mxu0 0.0
      %2954 = vmatpush1.msra.mxu0 0.0
      %2955 = vmatprep.mubr.f32.mxu0 0.0
      %2956 = vmatmul.mubr.f32.gmra.mrb[0].mxu0 %v2509
      %v2957 = vpop.f32.mrb[0].mxu0
      %v2958 = vadd.f32 0.0, %v2957
      %v2959 = vpop.f32.mrb[0].mxu0
      %v2960 = vadd.f32 0.0, %v2959
      %2961 = vdwg.mxu0
      %2962 = vmatprep.subr.mxu0 %v2545
      %2963 = vmatpush1.msra.mxu0 %v2542
      %2964 = vmatprep.subr.mxu0 0.0
      %2965 = vmatpush1.msra.mxu0 0.0
      %2966 = vmatprep.subr.mxu0 0.0
      %2967 = vmatpush1.msra.mxu0 0.0
      %2968 = vmatprep.subr.mxu0 0.0
      %2969 = vmatpush1.msra.mxu0 0.0
      %2970 = vmatprep.subr.mxu0 0.0
      %2971 = vmatpush1.msra.mxu0 0.0
      %2972 = vmatprep.subr.mxu0 0.0
      %2973 = vmatpush1.msra.mxu0 0.0
      %2974 = vmatprep.subr.mxu0 0.0
      %2975 = vmatpush1.msra.mxu0 0.0
      %2976 = vmatprep.subr.mxu0 0.0
      %2977 = vmatpush1.msra.mxu0 0.0
      %2978 = vmatprep.subr.mxu0 0.0
      %2979 = vmatpush1.msra.mxu0 0.0
      %2980 = vmatprep.subr.mxu0 0.0
      %2981 = vmatpush1.msra.mxu0 0.0
      %2982 = vmatprep.subr.mxu0 0.0
      %2983 = vmatpush1.msra.mxu0 0.0
      %2984 = vmatprep.subr.mxu0 0.0
      %2985 = vmatpush1.msra.mxu0 0.0
      %2986 = vmatprep.subr.mxu0 0.0
      %2987 = vmatpush1.msra.mxu0 0.0
      %2988 = vmatprep.subr.mxu0 0.0
      %2989 = vmatpush1.msra.mxu0 0.0
      %2990 = vmatprep.subr.mxu0 0.0
      %2991 = vmatpush1.msra.mxu0 0.0
      %2992 = vmatprep.subr.mxu0 0.0
      %2993 = vmatpush1.msra.mxu0 0.0
      %2994 = vmatprep.subr.mxu0 0.0
      %2995 = vmatpush1.msra.mxu0 0.0
      %2996 = vmatprep.subr.mxu0 0.0
      %2997 = vmatpush1.msra.mxu0 0.0
      %2998 = vmatprep.subr.mxu0 0.0
      %2999 = vmatpush1.msra.mxu0 0.0
      %3000 = vmatprep.subr.mxu0 0.0
      %3001 = vmatpush1.msra.mxu0 0.0
      %3002 = vmatprep.subr.mxu0 0.0
      %3003 = vmatpush1.msra.mxu0 0.0
      %3004 = vmatprep.subr.mxu0 0.0
      %3005 = vmatpush1.msra.mxu0 0.0
      %3006 = vmatprep.subr.mxu0 0.0
      %3007 = vmatpush1.msra.mxu0 0.0
      %3008 = vmatprep.subr.mxu0 0.0
      %3009 = vmatpush1.msra.mxu0 0.0
      %3010 = vmatprep.subr.mxu0 0.0
      %3011 = vmatpush1.msra.mxu0 0.0
      %3012 = vmatprep.subr.mxu0 0.0
      %3013 = vmatpush1.msra.mxu0 0.0
      %3014 = vmatprep.subr.mxu0 0.0
      %3015 = vmatpush1.msra.mxu0 0.0
      %3016 = vmatprep.subr.mxu0 0.0
      %3017 = vmatpush1.msra.mxu0 0.0
      %3018 = vmatprep.subr.mxu0 0.0
      %3019 = vmatpush1.msra.mxu0 0.0
      %3020 = vmatprep.subr.mxu0 0.0
      %3021 = vmatpush1.msra.mxu0 0.0
      %3022 = vmatprep.subr.mxu0 0.0
      %3023 = vmatpush1.msra.mxu0 0.0
      %3024 = vmatprep.subr.mxu0 0.0
      %3025 = vmatpush1.msra.mxu0 0.0
      %3026 = vmatprep.mubr.f32.mxu0 0.0
      %3027 = vmatmul.mubr.f32.gmra.mrb[0].mxu0 %v2509
      %v3028 = vpop.f32.mrb[0].mxu0
      %v3029 = vadd.f32 0.0, %v3028
      %v3030 = vpop.f32.mrb[0].mxu0
      %v3031 = vadd.f32 0.0, %v3030
      %3032 = vdwg.mxu0
      %3033 = vmatprep.subr.mxu0 %v2551
      %3034 = vmatpush1.msra.mxu0 %v2548
      %3035 = vmatprep.subr.mxu0 0.0
      %3036 = vmatpush1.msra.mxu0 0.0
      %3037 = vmatprep.subr.mxu0 0.0
      %3038 = vmatpush1.msra.mxu0 0.0
      %3039 = vmatprep.subr.mxu0 0.0
      %3040 = vmatpush1.msra.mxu0 0.0
      %3041 = vmatprep.subr.mxu0 0.0
      %3042 = vmatpush1.msra.mxu0 0.0
      %3043 = vmatprep.subr.mxu0 0.0
      %3044 = vmatpush1.msra.mxu0 0.0
      %3045 = vmatprep.subr.mxu0 0.0
      %3046 = vmatpush1.msra.mxu0 0.0
      %3047 = vmatprep.subr.mxu0 0.0
      %3048 = vmatpush1.msra.mxu0 0.0
      %3049 = vmatprep.subr.mxu0 0.0
      %3050 = vmatpush1.msra.mxu0 0.0
      %3051 = vmatprep.subr.mxu0 0.0
      %3052 = vmatpush1.msra.mxu0 0.0
      %3053 = vmatprep.subr.mxu0 0.0
      %3054 = vmatpush1.msra.mxu0 0.0
      %3055 = vmatprep.subr.mxu0 0.0
      %3056 = vmatpush1.msra.mxu0 0.0
      %3057 = vmatprep.subr.mxu0 0.0
      %3058 = vmatpush1.msra.mxu0 0.0
      %3059 = vmatprep.subr.mxu0 0.0
      %3060 = vmatpush1.msra.mxu0 0.0
      %3061 = vmatprep.subr.mxu0 0.0
      %3062 = vmatpush1.msra.mxu0 0.0
      %3063 = vmatprep.subr.mxu0 0.0
      %3064 = vmatpush1.msra.mxu0 0.0
      %3065 = vmatprep.subr.mxu0 0.0
      %3066 = vmatpush1.msra.mxu0 0.0
      %3067 = vmatprep.subr.mxu0 0.0
      %3068 = vmatpush1.msra.mxu0 0.0
      %3069 = vmatprep.subr.mxu0 0.0
      %3070 = vmatpush1.msra.mxu0 0.0
      %3071 = vmatprep.subr.mxu0 0.0
      %3072 = vmatpush1.msra.mxu0 0.0
      %3073 = vmatprep.subr.mxu0 0.0
      %3074 = vmatpush1.msra.mxu0 0.0
      %3075 = vmatprep.subr.mxu0 0.0
      %3076 = vmatpush1.msra.mxu0 0.0
      %3077 = vmatprep.subr.mxu0 0.0
      %3078 = vmatpush1.msra.mxu0 0.0
      %3079 = vmatprep.subr.mxu0 0.0
      %3080 = vmatpush1.msra.mxu0 0.0
      %3081 = vmatprep.subr.mxu0 0.0
      %3082 = vmatpush1.msra.mxu0 0.0
      %3083 = vmatprep.subr.mxu0 0.0
      %3084 = vmatpush1.msra.mxu0 0.0
      %3085 = vmatprep.subr.mxu0 0.0
      %3086 = vmatpush1.msra.mxu0 0.0
      %3087 = vmatprep.subr.mxu0 0.0
      %3088 = vmatpush1.msra.mxu0 0.0
      %3089 = vmatprep.subr.mxu0 0.0
      %3090 = vmatpush1.msra.mxu0 0.0
      %3091 = vmatprep.subr.mxu0 0.0
      %3092 = vmatpush1.msra.mxu0 0.0
      %3093 = vmatprep.subr.mxu0 0.0
      %3094 = vmatpush1.msra.mxu0 0.0
      %3095 = vmatprep.subr.mxu0 0.0
      %3096 = vmatpush1.msra.mxu0 0.0
      %3097 = vmatprep.mubr.f32.mxu0 0.0
      %3098 = vmatmul.mubr.f32.gmra.mrb[0].mxu0 %v2509
      %v3099 = vpop.f32.mrb[0].mxu0
      %v3100 = vadd.f32 0.0, %v3099
      %v3101 = vpop.f32.mrb[0].mxu0
      %v3102 = vadd.f32 0.0, %v3101
      %3103 = vdwg.mxu0
      %3104 = vmatprep.subr.mxu0 %v2557
      %3105 = vmatpush1.msra.mxu0 %v2554
      %3106 = vmatprep.subr.mxu0 0.0
      %3107 = vmatpush1.msra.mxu0 0.0
      %3108 = vmatprep.subr.mxu0 0.0
      %3109 = vmatpush1.msra.mxu0 0.0
      %3110 = vmatprep.subr.mxu0 0.0
      %3111 = vmatpush1.msra.mxu0 0.0
      %3112 = vmatprep.subr.mxu0 0.0
      %3113 = vmatpush1.msra.mxu0 0.0
      %3114 = vmatprep.subr.mxu0 0.0
      %3115 = vmatpush1.msra.mxu0 0.0
      %3116 = vmatprep.subr.mxu0 0.0
      %3117 = vmatpush1.msra.mxu0 0.0
      %3118 = vmatprep.subr.mxu0 0.0
      %3119 = vmatpush1.msra.mxu0 0.0
      %3120 = vmatprep.subr.mxu0 0.0
      %3121 = vmatpush1.msra.mxu0 0.0
      %3122 = vmatprep.subr.mxu0 0.0
      %3123 = vmatpush1.msra.mxu0 0.0
      %3124 = vmatprep.subr.mxu0 0.0
      %3125 = vmatpush1.msra.mxu0 0.0
      %3126 = vmatprep.subr.mxu0 0.0
      %3127 = vmatpush1.msra.mxu0 0.0
      %3128 = vmatprep.subr.mxu0 0.0
      %3129 = vmatpush1.msra.mxu0 0.0
      %3130 = vmatprep.subr.mxu0 0.0
      %3131 = vmatpush1.msra.mxu0 0.0
      %3132 = vmatprep.subr.mxu0 0.0
      %3133 = vmatpush1.msra.mxu0 0.0
      %3134 = vmatprep.subr.mxu0 0.0
      %3135 = vmatpush1.msra.mxu0 0.0
      %3136 = vmatprep.subr.mxu0 0.0
      %3137 = vmatpush1.msra.mxu0 0.0
      %3138 = vmatprep.subr.mxu0 0.0
      %3139 = vmatpush1.msra.mxu0 0.0
      %3140 = vmatprep.subr.mxu0 0.0
      %3141 = vmatpush1.msra.mxu0 0.0
      %3142 = vmatprep.subr.mxu0 0.0
      %3143 = vmatpush1.msra.mxu0 0.0
      %3144 = vmatprep.subr.mxu0 0.0
      %3145 = vmatpush1.msra.mxu0 0.0
      %3146 = vmatprep.subr.mxu0 0.0
      %3147 = vmatpush1.msra.mxu0 0.0
      %3148 = vmatprep.subr.mxu0 0.0
      %3149 = vmatpush1.msra.mxu0 0.0
      %3150 = vmatprep.subr.mxu0 0.0
      %3151 = vmatpush1.msra.mxu0 0.0
      %3152 = vmatprep.subr.mxu0 0.0
      %3153 = vmatpush1.msra.mxu0 0.0
      %3154 = vmatprep.subr.mxu0 0.0
      %3155 = vmatpush1.msra.mxu0 0.0
      %3156 = vmatprep.subr.mxu0 0.0
      %3157 = vmatpush1.msra.mxu0 0.0
      %3158 = vmatprep.subr.mxu0 0.0
      %3159 = vmatpush1.msra.mxu0 0.0
      %3160 = vmatprep.subr.mxu0 0.0
      %3161 = vmatpush1.msra.mxu0 0.0
      %3162 = vmatprep.subr.mxu0 0.0
      %3163 = vmatpush1.msra.mxu0 0.0
      %3164 = vmatprep.subr.mxu0 0.0
      %3165 = vmatpush1.msra.mxu0 0.0
      %3166 = vmatprep.subr.mxu0 0.0
      %3167 = vmatpush1.msra.mxu0 0.0
      %3168 = vmatprep.mubr.f32.mxu0 0.0
      %3169 = vmatmul.mubr.f32.gmra.mrb[0].mxu0 %v2509
      %v3170 = vpop.f32.mrb[0].mxu0
      %v3171 = vadd.f32 0.0, %v3170
      %v3172 = vpop.f32.mrb[0].mxu0
      %v3173 = vadd.f32 0.0, %v3172
      %3174 = vdwg.mxu0
      %3175 = vmatprep.subr.mxu0 %v2563
      %3176 = vmatpush1.msra.mxu0 %v2560
      %3177 = vmatprep.subr.mxu0 0.0
      %3178 = vmatpush1.msra.mxu0 0.0
      %3179 = vmatprep.subr.mxu0 0.0
      %3180 = vmatpush1.msra.mxu0 0.0
      %3181 = vmatprep.subr.mxu0 0.0
      %3182 = vmatpush1.msra.mxu0 0.0
      %3183 = vmatprep.subr.mxu0 0.0
      %3184 = vmatpush1.msra.mxu0 0.0
      %3185 = vmatprep.subr.mxu0 0.0
      %3186 = vmatpush1.msra.mxu0 0.0
      %3187 = vmatprep.subr.mxu0 0.0
      %3188 = vmatpush1.msra.mxu0 0.0
      %3189 = vmatprep.subr.mxu0 0.0
      %3190 = vmatpush1.msra.mxu0 0.0
      %3191 = vmatprep.subr.mxu0 0.0
      %3192 = vmatpush1.msra.mxu0 0.0
      %3193 = vmatprep.subr.mxu0 0.0
      %3194 = vmatpush1.msra.mxu0 0.0
      %3195 = vmatprep.subr.mxu0 0.0
      %3196 = vmatpush1.msra.mxu0 0.0
      %3197 = vmatprep.subr.mxu0 0.0
      %3198 = vmatpush1.msra.mxu0 0.0
      %3199 = vmatprep.subr.mxu0 0.0
      %3200 = vmatpush1.msra.mxu0 0.0
      %3201 = vmatprep.subr.mxu0 0.0
      %3202 = vmatpush1.msra.mxu0 0.0
      %3203 = vmatprep.subr.mxu0 0.0
      %3204 = vmatpush1.msra.mxu0 0.0
      %3205 = vmatprep.subr.mxu0 0.0
      %3206 = vmatpush1.msra.mxu0 0.0
      %3207 = vmatprep.subr.mxu0 0.0
      %3208 = vmatpush1.msra.mxu0 0.0
      %3209 = vmatprep.subr.mxu0 0.0
      %3210 = vmatpush1.msra.mxu0 0.0
      %3211 = vmatprep.subr.mxu0 0.0
      %3212 = vmatpush1.msra.mxu0 0.0
      %3213 = vmatprep.subr.mxu0 0.0
      %3214 = vmatpush1.msra.mxu0 0.0
      %3215 = vmatprep.subr.mxu0 0.0
      %3216 = vmatpush1.msra.mxu0 0.0
      %3217 = vmatprep.subr.mxu0 0.0
      %3218 = vmatpush1.msra.mxu0 0.0
      %3219 = vmatprep.subr.mxu0 0.0
      %3220 = vmatpush1.msra.mxu0 0.0
      %3221 = vmatprep.subr.mxu0 0.0
      %3222 = vmatpush1.msra.mxu0 0.0
      %3223 = vmatprep.subr.mxu0 0.0
      %3224 = vmatpush1.msra.mxu0 0.0
      %3225 = vmatprep.subr.mxu0 0.0
      %3226 = vmatpush1.msra.mxu0 0.0
      %3227 = vmatprep.subr.mxu0 0.0
      %3228 = vmatpush1.msra.mxu0 0.0
      %3229 = vmatprep.subr.mxu0 0.0
      %3230 = vmatpush1.msra.mxu0 0.0
      %3231 = vmatprep.subr.mxu0 0.0
      %3232 = vmatpush1.msra.mxu0 0.0
      %3233 = vmatprep.subr.mxu0 0.0
      %3234 = vmatpush1.msra.mxu0 0.0
      %3235 = vmatprep.subr.mxu0 0.0
      %3236 = vmatpush1.msra.mxu0 0.0
      %3237 = vmatprep.subr.mxu0 0.0
      %3238 = vmatpush1.msra.mxu0 0.0
      %3239 = vmatprep.mubr.f32.mxu0 0.0
      %3240 = vmatmul.mubr.f32.gmra.mrb[0].mxu0 %v2509
      %v3241 = vpop.f32.mrb[0].mxu0
      %v3242 = vadd.f32 0.0, %v3241
      %v3243 = vpop.f32.mrb[0].mxu0
      %v3244 = vadd.f32 0.0, %v3243
      %3245 = vdwg.mxu0
      %3246 = vmatprep.subr.mxu0 %v2569
      %3247 = vmatpush1.msra.mxu0 %v2566
      %3248 = vmatprep.subr.mxu0 0.0
      %3249 = vmatpush1.msra.mxu0 0.0
      %3250 = vmatprep.subr.mxu0 0.0
      %3251 = vmatpush1.msra.mxu0 0.0
      %3252 = vmatprep.subr.mxu0 0.0
      %3253 = vmatpush1.msra.mxu0 0.0
      %3254 = vmatprep.subr.mxu0 0.0
      %3255 = vmatpush1.msra.mxu0 0.0
      %3256 = vmatprep.subr.mxu0 0.0
      %3257 = vmatpush1.msra.mxu0 0.0
      %3258 = vmatprep.subr.mxu0 0.0
      %3259 = vmatpush1.msra.mxu0 0.0
      %3260 = vmatprep.subr.mxu0 0.0
      %3261 = vmatpush1.msra.mxu0 0.0
      %3262 = vmatprep.subr.mxu0 0.0
      %3263 = vmatpush1.msra.mxu0 0.0
      %3264 = vmatprep.subr.mxu0 0.0
      %3265 = vmatpush1.msra.mxu0 0.0
      %3266 = vmatprep.subr.mxu0 0.0
      %3267 = vmatpush1.msra.mxu0 0.0
      %3268 = vmatprep.subr.mxu0 0.0
      %3269 = vmatpush1.msra.mxu0 0.0
      %3270 = vmatprep.subr.mxu0 0.0
      %3271 = vmatpush1.msra.mxu0 0.0
      %3272 = vmatprep.subr.mxu0 0.0
      %3273 = vmatpush1.msra.mxu0 0.0
      %3274 = vmatprep.subr.mxu0 0.0
      %3275 = vmatpush1.msra.mxu0 0.0
      %3276 = vmatprep.subr.mxu0 0.0
      %3277 = vmatpush1.msra.mxu0 0.0
      %3278 = vmatprep.subr.mxu0 0.0
      %3279 = vmatpush1.msra.mxu0 0.0
      %3280 = vmatprep.subr.mxu0 0.0
      %3281 = vmatpush1.msra.mxu0 0.0
      %3282 = vmatprep.subr.mxu0 0.0
      %3283 = vmatpush1.msra.mxu0 0.0
      %3284 = vmatprep.subr.mxu0 0.0
      %3285 = vmatpush1.msra.mxu0 0.0
      %3286 = vmatprep.subr.mxu0 0.0
      %3287 = vmatpush1.msra.mxu0 0.0
      %3288 = vmatprep.subr.mxu0 0.0
      %3289 = vmatpush1.msra.mxu0 0.0
      %3290 = vmatprep.subr.mxu0 0.0
      %3291 = vmatpush1.msra.mxu0 0.0
      %3292 = vmatprep.subr.mxu0 0.0
      %3293 = vmatpush1.msra.mxu0 0.0
      %3294 = vmatprep.subr.mxu0 0.0
      %3295 = vmatpush1.msra.mxu0 0.0
      %3296 = vmatprep.subr.mxu0 0.0
      %3297 = vmatpush1.msra.mxu0 0.0
      %3298 = vmatprep.subr.mxu0 0.0
      %3299 = vmatpush1.msra.mxu0 0.0
      %3300 = vmatprep.subr.mxu0 0.0
      %3301 = vmatpush1.msra.mxu0 0.0
      %3302 = vmatprep.subr.mxu0 0.0
      %3303 = vmatpush1.msra.mxu0 0.0
      %3304 = vmatprep.subr.mxu0 0.0
      %3305 = vmatpush1.msra.mxu0 0.0
      %3306 = vmatprep.subr.mxu0 0.0
      %3307 = vmatpush1.msra.mxu0 0.0
      %3308 = vmatprep.subr.mxu0 0.0
      %3309 = vmatpush1.msra.mxu0 0.0
      %3310 = vmatprep.mubr.f32.mxu0 0.0
      %3311 = vmatmul.mubr.f32.gmra.mrb[0].mxu0 %v2509
      %v3312 = vpop.f32.mrb[0].mxu0
      %v3313 = vadd.f32 0.0, %v3312
      %v3314 = vpop.f32.mrb[0].mxu0
      %v3315 = vadd.f32 0.0, %v3314
      %3316 = vdwg.mxu0
      %3317 = vmatprep.subr.mxu0 %v2575
      %3318 = vmatpush1.msra.mxu0 %v2572
      %3319 = vmatprep.subr.mxu0 0.0
      %3320 = vmatpush1.msra.mxu0 0.0
      %3321 = vmatprep.subr.mxu0 0.0
      %3322 = vmatpush1.msra.mxu0 0.0
      %3323 = vmatprep.subr.mxu0 0.0
      %3324 = vmatpush1.msra.mxu0 0.0
      %3325 = vmatprep.subr.mxu0 0.0
      %3326 = vmatpush1.msra.mxu0 0.0
      %3327 = vmatprep.subr.mxu0 0.0
      %3328 = vmatpush1.msra.mxu0 0.0
      %3329 = vmatprep.subr.mxu0 0.0
      %3330 = vmatpush1.msra.mxu0 0.0
      %3331 = vmatprep.subr.mxu0 0.0
      %3332 = vmatpush1.msra.mxu0 0.0
      %3333 = vmatprep.subr.mxu0 0.0
      %3334 = vmatpush1.msra.mxu0 0.0
      %3335 = vmatprep.subr.mxu0 0.0
      %3336 = vmatpush1.msra.mxu0 0.0
      %3337 = vmatprep.subr.mxu0 0.0
      %3338 = vmatpush1.msra.mxu0 0.0
      %3339 = vmatprep.subr.mxu0 0.0
      %3340 = vmatpush1.msra.mxu0 0.0
      %3341 = vmatprep.subr.mxu0 0.0
      %3342 = vmatpush1.msra.mxu0 0.0
      %3343 = vmatprep.subr.mxu0 0.0
      %3344 = vmatpush1.msra.mxu0 0.0
      %3345 = vmatprep.subr.mxu0 0.0
      %3346 = vmatpush1.msra.mxu0 0.0
      %3347 = vmatprep.subr.mxu0 0.0
      %3348 = vmatpush1.msra.mxu0 0.0
      %3349 = vmatprep.subr.mxu0 0.0
      %3350 = vmatpush1.msra.mxu0 0.0
      %3351 = vmatprep.subr.mxu0 0.0
      %3352 = vmatpush1.msra.mxu0 0.0
      %3353 = vmatprep.subr.mxu0 0.0
      %3354 = vmatpush1.msra.mxu0 0.0
      %3355 = vmatprep.subr.mxu0 0.0
      %3356 = vmatpush1.msra.mxu0 0.0
      %3357 = vmatprep.subr.mxu0 0.0
      %3358 = vmatpush1.msra.mxu0 0.0
      %3359 = vmatprep.subr.mxu0 0.0
      %3360 = vmatpush1.msra.mxu0 0.0
      %3361 = vmatprep.subr.mxu0 0.0
      %3362 = vmatpush1.msra.mxu0 0.0
      %3363 = vmatprep.subr.mxu0 0.0
      %3364 = vmatpush1.msra.mxu0 0.0
      %3365 = vmatprep.subr.mxu0 0.0
      %3366 = vmatpush1.msra.mxu0 0.0
      %3367 = vmatprep.subr.mxu0 0.0
      %3368 = vmatpush1.msra.mxu0 0.0
      %3369 = vmatprep.subr.mxu0 0.0
      %3370 = vmatpush1.msra.mxu0 0.0
      %3371 = vmatprep.subr.mxu0 0.0
      %3372 = vmatpush1.msra.mxu0 0.0
      %3373 = vmatprep.subr.mxu0 0.0
      %3374 = vmatpush1.msra.mxu0 0.0
      %3375 = vmatprep.subr.mxu0 0.0
      %3376 = vmatpush1.msra.mxu0 0.0
      %3377 = vmatprep.subr.mxu0 0.0
      %3378 = vmatpush1.msra.mxu0 0.0
      %3379 = vmatprep.subr.mxu0 0.0
      %3380 = vmatpush1.msra.mxu0 0.0
      %3381 = vmatprep.mubr.f32.mxu0 0.0
      %3382 = vmatmul.mubr.f32.gmra.mrb[0].mxu0 %v2509
      %v3383 = vpop.f32.mrb[0].mxu0
      %v3384 = vadd.f32 0.0, %v3383
      %v3385 = vpop.f32.mrb[0].mxu0
      %v3386 = vadd.f32 0.0, %v3385
      %3387 = vdwg.mxu0
      %3388 = vmatprep.subr.mxu0 %v2581
      %3389 = vmatpush1.msra.mxu0 %v2578
      %3390 = vmatprep.subr.mxu0 0.0
      %3391 = vmatpush1.msra.mxu0 0.0
      %3392 = vmatprep.subr.mxu0 0.0
      %3393 = vmatpush1.msra.mxu0 0.0
      %3394 = vmatprep.subr.mxu0 0.0
      %3395 = vmatpush1.msra.mxu0 0.0
      %3396 = vmatprep.subr.mxu0 0.0
      %3397 = vmatpush1.msra.mxu0 0.0
      %3398 = vmatprep.subr.mxu0 0.0
      %3399 = vmatpush1.msra.mxu0 0.0
      %3400 = vmatprep.subr.mxu0 0.0
      %3401 = vmatpush1.msra.mxu0 0.0
      %3402 = vmatprep.subr.mxu0 0.0
      %3403 = vmatpush1.msra.mxu0 0.0
      %3404 = vmatprep.subr.mxu0 0.0
      %3405 = vmatpush1.msra.mxu0 0.0
      %3406 = vmatprep.subr.mxu0 0.0
      %3407 = vmatpush1.msra.mxu0 0.0
      %3408 = vmatprep.subr.mxu0 0.0
      %3409 = vmatpush1.msra.mxu0 0.0
      %3410 = vmatprep.subr.mxu0 0.0
      %3411 = vmatpush1.msra.mxu0 0.0
      %3412 = vmatprep.subr.mxu0 0.0
      %3413 = vmatpush1.msra.mxu0 0.0
      %3414 = vmatprep.subr.mxu0 0.0
      %3415 = vmatpush1.msra.mxu0 0.0
      %3416 = vmatprep.subr.mxu0 0.0
      %3417 = vmatpush1.msra.mxu0 0.0
      %3418 = vmatprep.subr.mxu0 0.0
      %3419 = vmatpush1.msra.mxu0 0.0
      %3420 = vmatprep.subr.mxu0 0.0
      %3421 = vmatpush1.msra.mxu0 0.0
      %3422 = vmatprep.subr.mxu0 0.0
      %3423 = vmatpush1.msra.mxu0 0.0
      %3424 = vmatprep.subr.mxu0 0.0
      %3425 = vmatpush1.msra.mxu0 0.0
      %3426 = vmatprep.subr.mxu0 0.0
      %3427 = vmatpush1.msra.mxu0 0.0
      %3428 = vmatprep.subr.mxu0 0.0
      %3429 = vmatpush1.msra.mxu0 0.0
      %3430 = vmatprep.subr.mxu0 0.0
      %3431 = vmatpush1.msra.mxu0 0.0
      %3432 = vmatprep.subr.mxu0 0.0
      %3433 = vmatpush1.msra.mxu0 0.0
      %3434 = vmatprep.subr.mxu0 0.0
      %3435 = vmatpush1.msra.mxu0 0.0
      %3436 = vmatprep.subr.mxu0 0.0
      %3437 = vmatpush1.msra.mxu0 0.0
      %3438 = vmatprep.subr.mxu0 0.0
      %3439 = vmatpush1.msra.mxu0 0.0
      %3440 = vmatprep.subr.mxu0 0.0
      %3441 = vmatpush1.msra.mxu0 0.0
      %3442 = vmatprep.subr.mxu0 0.0
      %3443 = vmatpush1.msra.mxu0 0.0
      %3444 = vmatprep.subr.mxu0 0.0
      %3445 = vmatpush1.msra.mxu0 0.0
      %3446 = vmatprep.subr.mxu0 0.0
      %3447 = vmatpush1.msra.mxu0 0.0
      %3448 = vmatprep.subr.mxu0 0.0
      %3449 = vmatpush1.msra.mxu0 0.0
      %3450 = vmatprep.subr.mxu0 0.0
      %3451 = vmatpush1.msra.mxu0 0.0
      %3452 = vmatprep.mubr.f32.mxu0 0.0
      %3453 = vmatmul.mubr.f32.gmra.mrb[0].mxu0 %v2509
      %v3454 = vpop.f32.mrb[0].mxu0
      %v3455 = vadd.f32 0.0, %v3454
      %v3456 = vpop.f32.mrb[0].mxu0
      %v3457 = vadd.f32 0.0, %v3456
      %3458 = vdwg.mxu0
      %3459 = vmatprep.subr.mxu0 %v2587
      %3460 = vmatpush1.msra.mxu0 %v2584
      %3461 = vmatprep.subr.mxu0 0.0
      %3462 = vmatpush1.msra.mxu0 0.0
      %3463 = vmatprep.subr.mxu0 0.0
      %3464 = vmatpush1.msra.mxu0 0.0
      %3465 = vmatprep.subr.mxu0 0.0
      %3466 = vmatpush1.msra.mxu0 0.0
      %3467 = vmatprep.subr.mxu0 0.0
      %3468 = vmatpush1.msra.mxu0 0.0
      %3469 = vmatprep.subr.mxu0 0.0
      %3470 = vmatpush1.msra.mxu0 0.0
      %3471 = vmatprep.subr.mxu0 0.0
      %3472 = vmatpush1.msra.mxu0 0.0
      %3473 = vmatprep.subr.mxu0 0.0
      %3474 = vmatpush1.msra.mxu0 0.0
      %3475 = vmatprep.subr.mxu0 0.0
      %3476 = vmatpush1.msra.mxu0 0.0
      %3477 = vmatprep.subr.mxu0 0.0
      %3478 = vmatpush1.msra.mxu0 0.0
      %3479 = vmatprep.subr.mxu0 0.0
      %3480 = vmatpush1.msra.mxu0 0.0
      %3481 = vmatprep.subr.mxu0 0.0
      %3482 = vmatpush1.msra.mxu0 0.0
      %3483 = vmatprep.subr.mxu0 0.0
      %3484 = vmatpush1.msra.mxu0 0.0
      %3485 = vmatprep.subr.mxu0 0.0
      %3486 = vmatpush1.msra.mxu0 0.0
      %3487 = vmatprep.subr.mxu0 0.0
      %3488 = vmatpush1.msra.mxu0 0.0
      %3489 = vmatprep.subr.mxu0 0.0
      %3490 = vmatpush1.msra.mxu0 0.0
      %3491 = vmatprep.subr.mxu0 0.0
      %3492 = vmatpush1.msra.mxu0 0.0
      %3493 = vmatprep.subr.mxu0 0.0
      %3494 = vmatpush1.msra.mxu0 0.0
      %3495 = vmatprep.subr.mxu0 0.0
      %3496 = vmatpush1.msra.mxu0 0.0
      %3497 = vmatprep.subr.mxu0 0.0
      %3498 = vmatpush1.msra.mxu0 0.0
      %3499 = vmatprep.subr.mxu0 0.0
      %3500 = vmatpush1.msra.mxu0 0.0
      %3501 = vmatprep.subr.mxu0 0.0
      %3502 = vmatpush1.msra.mxu0 0.0
      %3503 = vmatprep.subr.mxu0 0.0
      %3504 = vmatpush1.msra.mxu0 0.0
      %3505 = vmatprep.subr.mxu0 0.0
      %3506 = vmatpush1.msra.mxu0 0.0
      %3507 = vmatprep.subr.mxu0 0.0
      %3508 = vmatpush1.msra.mxu0 0.0
      %3509 = vmatprep.subr.mxu0 0.0
      %3510 = vmatpush1.msra.mxu0 0.0
      %3511 = vmatprep.subr.mxu0 0.0
      %3512 = vmatpush1.msra.mxu0 0.0
      %3513 = vmatprep.subr.mxu0 0.0
      %3514 = vmatpush1.msra.mxu0 0.0
      %3515 = vmatprep.subr.mxu0 0.0
      %3516 = vmatpush1.msra.mxu0 0.0
      %3517 = vmatprep.subr.mxu0 0.0
      %3518 = vmatpush1.msra.mxu0 0.0
      %3519 = vmatprep.subr.mxu0 0.0
      %3520 = vmatpush1.msra.mxu0 0.0
      %3521 = vmatprep.subr.mxu0 0.0
      %3522 = vmatpush1.msra.mxu0 0.0
      %3523 = vmatprep.mubr.f32.mxu0 0.0
      %3524 = vmatmul.mubr.f32.gmra.mrb[0].mxu0 %v2509
      %v3525 = vpop.f32.mrb[0].mxu0
      %v3526 = vadd.f32 0.0, %v3525
      %v3527 = vpop.f32.mrb[0].mxu0
      %v3528 = vadd.f32 0.0, %v3527
      %3529 = vdwg.mxu0
      %3530 = vmatprep.subr.mxu0 %v2593
      %3531 = vmatpush1.msra.mxu0 %v2590
      %3532 = vmatprep.subr.mxu0 0.0
      %3533 = vmatpush1.msra.mxu0 0.0
      %3534 = vmatprep.subr.mxu0 0.0
      %3535 = vmatpush1.msra.mxu0 0.0
      %3536 = vmatprep.subr.mxu0 0.0
      %3537 = vmatpush1.msra.mxu0 0.0
      %3538 = vmatprep.subr.mxu0 0.0
      %3539 = vmatpush1.msra.mxu0 0.0
      %3540 = vmatprep.subr.mxu0 0.0
      %3541 = vmatpush1.msra.mxu0 0.0
      %3542 = vmatprep.subr.mxu0 0.0
      %3543 = vmatpush1.msra.mxu0 0.0
      %3544 = vmatprep.subr.mxu0 0.0
      %3545 = vmatpush1.msra.mxu0 0.0
      %3546 = vmatprep.subr.mxu0 0.0
      %3547 = vmatpush1.msra.mxu0 0.0
      %3548 = vmatprep.subr.mxu0 0.0
      %3549 = vmatpush1.msra.mxu0 0.0
      %3550 = vmatprep.subr.mxu0 0.0
      %3551 = vmatpush1.msra.mxu0 0.0
      %3552 = vmatprep.subr.mxu0 0.0
      %3553 = vmatpush1.msra.mxu0 0.0
      %3554 = vmatprep.subr.mxu0 0.0
      %3555 = vmatpush1.msra.mxu0 0.0
      %3556 = vmatprep.subr.mxu0 0.0
      %3557 = vmatpush1.msra.mxu0 0.0
      %3558 = vmatprep.subr.mxu0 0.0
      %3559 = vmatpush1.msra.mxu0 0.0
      %3560 = vmatprep.subr.mxu0 0.0
      %3561 = vmatpush1.msra.mxu0 0.0
      %3562 = vmatprep.subr.mxu0 0.0
      %3563 = vmatpush1.msra.mxu0 0.0
      %3564 = vmatprep.subr.mxu0 0.0
      %3565 = vmatpush1.msra.mxu0 0.0
      %3566 = vmatprep.subr.mxu0 0.0
      %3567 = vmatpush1.msra.mxu0 0.0
      %3568 = vmatprep.subr.mxu0 0.0
      %3569 = vmatpush1.msra.mxu0 0.0
      %3570 = vmatprep.subr.mxu0 0.0
      %3571 = vmatpush1.msra.mxu0 0.0
      %3572 = vmatprep.subr.mxu0 0.0
      %3573 = vmatpush1.msra.mxu0 0.0
      %3574 = vmatprep.subr.mxu0 0.0
      %3575 = vmatpush1.msra.mxu0 0.0
      %3576 = vmatprep.subr.mxu0 0.0
      %3577 = vmatpush1.msra.mxu0 0.0
      %3578 = vmatprep.subr.mxu0 0.0
      %3579 = vmatpush1.msra.mxu0 0.0
      %3580 = vmatprep.subr.mxu0 0.0
      %3581 = vmatpush1.msra.mxu0 0.0
      %3582 = vmatprep.subr.mxu0 0.0
      %3583 = vmatpush1.msra.mxu0 0.0
      %3584 = vmatprep.subr.mxu0 0.0
      %3585 = vmatpush1.msra.mxu0 0.0
      %3586 = vmatprep.subr.mxu0 0.0
      %3587 = vmatpush1.msra.mxu0 0.0
      %3588 = vmatprep.subr.mxu0 0.0
      %3589 = vmatpush1.msra.mxu0 0.0
      %3590 = vmatprep.subr.mxu0 0.0
      %3591 = vmatpush1.msra.mxu0 0.0
      %3592 = vmatprep.subr.mxu0 0.0
      %3593 = vmatpush1.msra.mxu0 0.0
      %3594 = vmatprep.mubr.f32.mxu0 0.0
      %3595 = vmatmul.mubr.f32.gmra.mrb[0].mxu0 %v2509
      %v3596 = vpop.f32.mrb[0].mxu0
      %v3597 = vadd.f32 0.0, %v3596
      %v3598 = vpop.f32.mrb[0].mxu0
      %v3599 = vadd.f32 0.0, %v3598
      %3600 = vdwg.mxu0
      %3601 = vmatprep.subr.mxu0 %v2599
      %3602 = vmatpush1.msra.mxu0 %v2596
      %3603 = vmatprep.subr.mxu0 0.0
      %3604 = vmatpush1.msra.mxu0 0.0
      %3605 = vmatprep.subr.mxu0 0.0
      %3606 = vmatpush1.msra.mxu0 0.0
      %3607 = vmatprep.subr.mxu0 0.0
      %3608 = vmatpush1.msra.mxu0 0.0
      %3609 = vmatprep.subr.mxu0 0.0
      %3610 = vmatpush1.msra.mxu0 0.0
      %3611 = vmatprep.subr.mxu0 0.0
      %3612 = vmatpush1.msra.mxu0 0.0
      %3613 = vmatprep.subr.mxu0 0.0
      %3614 = vmatpush1.msra.mxu0 0.0
      %3615 = vmatprep.subr.mxu0 0.0
      %3616 = vmatpush1.msra.mxu0 0.0
      %3617 = vmatprep.subr.mxu0 0.0
      %3618 = vmatpush1.msra.mxu0 0.0
      %3619 = vmatprep.subr.mxu0 0.0
      %3620 = vmatpush1.msra.mxu0 0.0
      %3621 = vmatprep.subr.mxu0 0.0
      %3622 = vmatpush1.msra.mxu0 0.0
      %3623 = vmatprep.subr.mxu0 0.0
      %3624 = vmatpush1.msra.mxu0 0.0
      %3625 = vmatprep.subr.mxu0 0.0
      %3626 = vmatpush1.msra.mxu0 0.0
      %3627 = vmatprep.subr.mxu0 0.0
      %3628 = vmatpush1.msra.mxu0 0.0
      %3629 = vmatprep.subr.mxu0 0.0
      %3630 = vmatpush1.msra.mxu0 0.0
      %3631 = vmatprep.subr.mxu0 0.0
      %3632 = vmatpush1.msra.mxu0 0.0
      %3633 = vmatprep.subr.mxu0 0.0
      %3634 = vmatpush1.msra.mxu0 0.0
      %3635 = vmatprep.subr.mxu0 0.0
      %3636 = vmatpush1.msra.mxu0 0.0
      %3637 = vmatprep.subr.mxu0 0.0
      %3638 = vmatpush1.msra.mxu0 0.0
      %3639 = vmatprep.subr.mxu0 0.0
      %3640 = vmatpush1.msra.mxu0 0.0
      %3641 = vmatprep.subr.mxu0 0.0
      %3642 = vmatpush1.msra.mxu0 0.0
      %3643 = vmatprep.subr.mxu0 0.0
      %3644 = vmatpush1.msra.mxu0 0.0
      %3645 = vmatprep.subr.mxu0 0.0
      %3646 = vmatpush1.msra.mxu0 0.0
      %3647 = vmatprep.subr.mxu0 0.0
      %3648 = vmatpush1.msra.mxu0 0.0
      %3649 = vmatprep.subr.mxu0 0.0
      %3650 = vmatpush1.msra.mxu0 0.0
      %3651 = vmatprep.subr.mxu0 0.0
      %3652 = vmatpush1.msra.mxu0 0.0
      %3653 = vmatprep.subr.mxu0 0.0
      %3654 = vmatpush1.msra.mxu0 0.0
      %3655 = vmatprep.subr.mxu0 0.0
      %3656 = vmatpush1.msra.mxu0 0.0
      %3657 = vmatprep.subr.mxu0 0.0
      %3658 = vmatpush1.msra.mxu0 0.0
      %3659 = vmatprep.subr.mxu0 0.0
      %3660 = vmatpush1.msra.mxu0 0.0
      %3661 = vmatprep.subr.mxu0 0.0
      %3662 = vmatpush1.msra.mxu0 0.0
      %3663 = vmatprep.subr.mxu0 0.0
      %3664 = vmatpush1.msra.mxu0 0.0
      %3665 = vmatprep.mubr.f32.mxu0 0.0
      %3666 = vmatmul.mubr.f32.gmra.mrb[0].mxu0 %v2509
      %v3667 = vpop.f32.mrb[0].mxu0
      %v3668 = vadd.f32 0.0, %v3667
      %v3669 = vpop.f32.mrb[0].mxu0
      %v3670 = vadd.f32 0.0, %v3669
      %3671 = vdwg.mxu0
      %3672 = vmatprep.subr.mxu0 %v2605
      %3673 = vmatpush1.msra.mxu0 %v2602
      %3674 = vmatprep.subr.mxu0 0.0
      %3675 = vmatpush1.msra.mxu0 0.0
      %3676 = vmatprep.subr.mxu0 0.0
      %3677 = vmatpush1.msra.mxu0 0.0
      %3678 = vmatprep.subr.mxu0 0.0
      %3679 = vmatpush1.msra.mxu0 0.0
      %3680 = vmatprep.subr.mxu0 0.0
      %3681 = vmatpush1.msra.mxu0 0.0
      %3682 = vmatprep.subr.mxu0 0.0
      %3683 = vmatpush1.msra.mxu0 0.0
      %3684 = vmatprep.subr.mxu0 0.0
      %3685 = vmatpush1.msra.mxu0 0.0
      %3686 = vmatprep.subr.mxu0 0.0
      %3687 = vmatpush1.msra.mxu0 0.0
      %3688 = vmatprep.subr.mxu0 0.0
      %3689 = vmatpush1.msra.mxu0 0.0
      %3690 = vmatprep.subr.mxu0 0.0
      %3691 = vmatpush1.msra.mxu0 0.0
      %3692 = vmatprep.subr.mxu0 0.0
      %3693 = vmatpush1.msra.mxu0 0.0
      %3694 = vmatprep.subr.mxu0 0.0
      %3695 = vmatpush1.msra.mxu0 0.0
      %3696 = vmatprep.subr.mxu0 0.0
      %3697 = vmatpush1.msra.mxu0 0.0
      %3698 = vmatprep.subr.mxu0 0.0
      %3699 = vmatpush1.msra.mxu0 0.0
      %3700 = vmatprep.subr.mxu0 0.0
      %3701 = vmatpush1.msra.mxu0 0.0
      %3702 = vmatprep.subr.mxu0 0.0
      %3703 = vmatpush1.msra.mxu0 0.0
      %3704 = vmatprep.subr.mxu0 0.0
      %3705 = vmatpush1.msra.mxu0 0.0
      %3706 = vmatprep.subr.mxu0 0.0
      %3707 = vmatpush1.msra.mxu0 0.0
      %3708 = vmatprep.subr.mxu0 0.0
      %3709 = vmatpush1.msra.mxu0 0.0
      %3710 = vmatprep.subr.mxu0 0.0
      %3711 = vmatpush1.msra.mxu0 0.0
      %3712 = vmatprep.subr.mxu0 0.0
      %3713 = vmatpush1.msra.mxu0 0.0
      %3714 = vmatprep.subr.mxu0 0.0
      %3715 = vmatpush1.msra.mxu0 0.0
      %3716 = vmatprep.subr.mxu0 0.0
      %3717 = vmatpush1.msra.mxu0 0.0
      %3718 = vmatprep.subr.mxu0 0.0
      %3719 = vmatpush1.msra.mxu0 0.0
      %3720 = vmatprep.subr.mxu0 0.0
      %3721 = vmatpush1.msra.mxu0 0.0
      %3722 = vmatprep.subr.mxu0 0.0
      %3723 = vmatpush1.msra.mxu0 0.0
      %3724 = vmatprep.subr.mxu0 0.0
      %3725 = vmatpush1.msra.mxu0 0.0
      %3726 = vmatprep.subr.mxu0 0.0
      %3727 = vmatpush1.msra.mxu0 0.0
      %3728 = vmatprep.subr.mxu0 0.0
      %3729 = vmatpush1.msra.mxu0 0.0
      %3730 = vmatprep.subr.mxu0 0.0
      %3731 = vmatpush1.msra.mxu0 0.0
      %3732 = vmatprep.subr.mxu0 0.0
      %3733 = vmatpush1.msra.mxu0 0.0
      %3734 = vmatprep.subr.mxu0 0.0
      %3735 = vmatpush1.msra.mxu0 0.0
      %3736 = vmatprep.mubr.f32.mxu0 0.0
      %3737 = vmatmul.mubr.f32.gmra.mrb[0].mxu0 %v2509
      %v3738 = vpop.f32.mrb[0].mxu0
      %v3739 = vadd.f32 0.0, %v3738
      %v3740 = vpop.f32.mrb[0].mxu0
      %v3741 = vadd.f32 0.0, %v3740
      %3742 = vdwg.mxu0
      %v3743 = vxor.u32 %v2674, 2147483648
      %v3744 = vxor.u32 %v2676, 2147483648
      %v3745 = vxor.u32 %v2745, 2147483648
      %v3746 = vxor.u32 %v2747, 2147483648
      %v3747 = vxor.u32 %v2816, 2147483648
      %v3748 = vxor.u32 %v2818, 2147483648
      %v3749 = vxor.u32 %v2887, 2147483648
      %v3750 = vxor.u32 %v2889, 2147483648
      %v3751 = vxor.u32 %v2958, 2147483648
      %v3752 = vxor.u32 %v2960, 2147483648
      %v3753 = vxor.u32 %v3029, 2147483648
      %v3754 = vxor.u32 %v3031, 2147483648
      %v3755 = vxor.u32 %v3100, 2147483648
      %v3756 = vxor.u32 %v3102, 2147483648
      %v3757 = vxor.u32 %v3171, 2147483648
      %v3758 = vxor.u32 %v3173, 2147483648
      %v3759 = vxor.u32 %v3242, 2147483648
      %v3760 = vxor.u32 %v3244, 2147483648
      %v3761 = vxor.u32 %v3313, 2147483648
      %v3762 = vxor.u32 %v3315, 2147483648
      %v3763 = vxor.u32 %v3384, 2147483648
      %v3764 = vxor.u32 %v3386, 2147483648
      %v3765 = vxor.u32 %v3455, 2147483648
      %v3766 = vxor.u32 %v3457, 2147483648
      %v3767 = vxor.u32 %v3526, 2147483648
      %v3768 = vxor.u32 %v3528, 2147483648
      %v3769 = vxor.u32 %v3597, 2147483648
      %v3770 = vxor.u32 %v3599, 2147483648
      %v3771 = vxor.u32 %v3668, 2147483648
      %v3772 = vxor.u32 %v3670, 2147483648
      %v3773 = vxor.u32 %v3739, 2147483648
      %v3774 = vxor.u32 %v3741, 2147483648
      %v3775 = vmul.f32 %v3743, 1.442695
      %v3776 = vpow.pop %v3775
      %v3777 = vmul.f32 %v3744, 1.442695
      %v3778 = vpow.pop %v3777
      %v3779 = vmul.f32 %v3745, 1.442695
      %v3780 = vpow.pop %v3779
      %v3781 = vmul.f32 %v3746, 1.442695
      %v3782 = vpow.pop %v3781
      %v3783 = vmul.f32 %v3747, 1.442695
      %v3784 = vpow.pop %v3783
      %v3785 = vmul.f32 %v3748, 1.442695
      %v3786 = vpow.pop %v3785
      %v3787 = vmul.f32 %v3749, 1.442695
      %v3788 = vpow.pop %v3787
      %v3789 = vmul.f32 %v3750, 1.442695
      %v3790 = vpow.pop %v3789
      %v3791 = vmul.f32 %v3751, 1.442695
      %v3792 = vpow.pop %v3791
      %v3793 = vmul.f32 %v3752, 1.442695
      %v3794 = vpow.pop %v3793
      %v3795 = vmul.f32 %v3753, 1.442695
      %v3796 = vpow.pop %v3795
      %v3797 = vmul.f32 %v3754, 1.442695
      %v3798 = vpow.pop %v3797
      %v3799 = vmul.f32 %v3755, 1.442695
      %v3800 = vpow.pop %v3799
      %v3801 = vmul.f32 %v3756, 1.442695
      %v3802 = vpow.pop %v3801
      %v3803 = vmul.f32 %v3757, 1.442695
      %v3804 = vpow.pop %v3803
      %v3805 = vmul.f32 %v3758, 1.442695
      %v3806 = vpow.pop %v3805
      %v3807 = vmul.f32 %v3759, 1.442695
      %v3808 = vpow.pop %v3807
      %v3809 = vmul.f32 %v3760, 1.442695
      %v3810 = vpow.pop %v3809
      %v3811 = vmul.f32 %v3761, 1.442695
      %v3812 = vpow.pop %v3811
      %v3813 = vmul.f32 %v3762, 1.442695
      %v3814 = vpow.pop %v3813
      %v3815 = vmul.f32 %v3763, 1.442695
      %v3816 = vpow.pop %v3815
      %v3817 = vmul.f32 %v3764, 1.442695
      %v3818 = vpow.pop %v3817
      %v3819 = vmul.f32 %v3765, 1.442695
      %v3820 = vpow.pop %v3819
      %v3821 = vmul.f32 %v3766, 1.442695
      %v3822 = vpow.pop %v3821
      %v3823 = vmul.f32 %v3767, 1.442695
      %v3824 = vpow.pop %v3823
      %v3825 = vmul.f32 %v3768, 1.442695
      %v3826 = vpow.pop %v3825
      %v3827 = vmul.f32 %v3769, 1.442695
      %v3828 = vpow.pop %v3827
      %v3829 = vmul.f32 %v3770, 1.442695
      %v3830 = vpow.pop %v3829
      %v3831 = vmul.f32 %v3771, 1.442695
      %v3832 = vpow.pop %v3831
      %v3833 = vmul.f32 %v3772, 1.442695
      %v3834 = vpow.pop %v3833
      %v3835 = vmul.f32 %v3773, 1.442695
      %v3836 = vpow.pop %v3835
      %v3837 = vmul.f32 %v3774, 1.442695
      %v3838 = vpow.pop %v3837
      %v3839 = vadd.f32 %v3776, 1.0
      %v3840 = vadd.f32 %v3778, 1.0
      %v3841 = vadd.f32 %v3780, 1.0
      %v3842 = vadd.f32 %v3782, 1.0
      %v3843 = vadd.f32 %v3784, 1.0
      %v3844 = vadd.f32 %v3786, 1.0
      %v3845 = vadd.f32 %v3788, 1.0
      %v3846 = vadd.f32 %v3790, 1.0
      %v3847 = vadd.f32 %v3792, 1.0
      %v3848 = vadd.f32 %v3794, 1.0
      %v3849 = vadd.f32 %v3796, 1.0
      %v3850 = vadd.f32 %v3798, 1.0
      %v3851 = vadd.f32 %v3800, 1.0
      %v3852 = vadd.f32 %v3802, 1.0
      %v3853 = vadd.f32 %v3804, 1.0
      %v3854 = vadd.f32 %v3806, 1.0
      %v3855 = vadd.f32 %v3808, 1.0
      %v3856 = vadd.f32 %v3810, 1.0
      %v3857 = vadd.f32 %v3812, 1.0
      %v3858 = vadd.f32 %v3814, 1.0
      %v3859 = vadd.f32 %v3816, 1.0
      %v3860 = vadd.f32 %v3818, 1.0
      %v3861 = vadd.f32 %v3820, 1.0
      %v3862 = vadd.f32 %v3822, 1.0
      %v3863 = vadd.f32 %v3824, 1.0
      %v3864 = vadd.f32 %v3826, 1.0
      %v3865 = vadd.f32 %v3828, 1.0
      %v3866 = vadd.f32 %v3830, 1.0
      %v3867 = vadd.f32 %v3832, 1.0
      %v3868 = vadd.f32 %v3834, 1.0
      %v3869 = vadd.f32 %v3836, 1.0
      %v3870 = vadd.f32 %v3838, 1.0
      %v3871 = vrcp.pop %v3839
      %v3872 = vmul.f32 1.0, %v3871
      %v3873 = vrcp.pop %v3840
      %v3874 = vmul.f32 1.0, %v3873
      %v3875 = vrcp.pop %v3841
      %v3876 = vmul.f32 1.0, %v3875
      %v3877 = vrcp.pop %v3842
      %v3878 = vmul.f32 1.0, %v3877
      %v3879 = vrcp.pop %v3843
      %v3880 = vmul.f32 1.0, %v3879
      %v3881 = vrcp.pop %v3844
      %v3882 = vmul.f32 1.0, %v3881
      %v3883 = vrcp.pop %v3845
      %v3884 = vmul.f32 1.0, %v3883
      %v3885 = vrcp.pop %v3846
      %v3886 = vmul.f32 1.0, %v3885
      %v3887 = vrcp.pop %v3847
      %v3888 = vmul.f32 1.0, %v3887
      %v3889 = vrcp.pop %v3848
      %v3890 = vmul.f32 1.0, %v3889
      %v3891 = vrcp.pop %v3849
      %v3892 = vmul.f32 1.0, %v3891
      %v3893 = vrcp.pop %v3850
      %v3894 = vmul.f32 1.0, %v3893
      %v3895 = vrcp.pop %v3851
      %v3896 = vmul.f32 1.0, %v3895
      %v3897 = vrcp.pop %v3852
      %v3898 = vmul.f32 1.0, %v3897
      %v3899 = vrcp.pop %v3853
      %v3900 = vmul.f32 1.0, %v3899
      %v3901 = vrcp.pop %v3854
      %v3902 = vmul.f32 1.0, %v3901
      %v3903 = vrcp.pop %v3855
      %v3904 = vmul.f32 1.0, %v3903
      %v3905 = vrcp.pop %v3856
      %v3906 = vmul.f32 1.0, %v3905
      %v3907 = vrcp.pop %v3857
      %v3908 = vmul.f32 1.0, %v3907
      %v3909 = vrcp.pop %v3858
      %v3910 = vmul.f32 1.0, %v3909
      %v3911 = vrcp.pop %v3859
      %v3912 = vmul.f32 1.0, %v3911
      %v3913 = vrcp.pop %v3860
      %v3914 = vmul.f32 1.0, %v3913
      %v3915 = vrcp.pop %v3861
      %v3916 = vmul.f32 1.0, %v3915
      %v3917 = vrcp.pop %v3862
      %v3918 = vmul.f32 1.0, %v3917
      %v3919 = vrcp.pop %v3863
      %v3920 = vmul.f32 1.0, %v3919
      %v3921 = vrcp.pop %v3864
      %v3922 = vmul.f32 1.0, %v3921
      %v3923 = vrcp.pop %v3865
      %v3924 = vmul.f32 1.0, %v3923
      %v3925 = vrcp.pop %v3866
      %v3926 = vmul.f32 1.0, %v3925
      %v3927 = vrcp.pop %v3867
      %v3928 = vmul.f32 1.0, %v3927
      %v3929 = vrcp.pop %v3868
      %v3930 = vmul.f32 1.0, %v3929
      %v3931 = vrcp.pop %v3869
      %v3932 = vmul.f32 1.0, %v3931
      %v3933 = vrcp.pop %v3870
      %v3934 = vmul.f32 1.0, %v3933
      %v3967 = vcombine.low %v3872, %v3874
      %v3968 = vcombine.low %v3876, %v3878
      %v3970 = vunpack.c.l.s4 1983009808
      %v3971 = vunpack.c.0.s8 %v3970
      %v3972 = vlaneseq
      %v3973 = vshrl.u32 %v3972, 7
      %v3974 = vsub.s32 %v3971, %v3973
      %v3975 = vrot.slane %v3967, %v3974
      %v3977 = vunpack.c.l.s4 1983009808
      %v3978 = vunpack.c.0.s8 %v3977
      %v3979 = vlaneseq
      %v3980 = vshrl.u32 %v3979, 7
      %v3981 = vsub.s32 %v3978, %v3980
      %v3982 = vrot.slane %v3968, %v3981
      %v3983 = vcombine.low %v3975, %v3982
      %v3984 = vcombine.low %v3880, %v3882
      %v3985 = vcombine.low %v3884, %v3886
      %v3987 = vunpack.c.l.s4 1983009808
      %v3988 = vunpack.c.0.s8 %v3987
      %v3989 = vlaneseq
      %v3990 = vshrl.u32 %v3989, 7
      %v3991 = vsub.s32 %v3988, %v3990
      %v3992 = vrot.slane %v3984, %v3991
      %v3994 = vunpack.c.l.s4 1983009808
      %v3995 = vunpack.c.0.s8 %v3994
      %v3996 = vlaneseq
      %v3997 = vshrl.u32 %v3996, 7
      %v3998 = vsub.s32 %v3995, %v3997
      %v3999 = vrot.slane %v3985, %v3998
      %v4000 = vcombine.low %v3992, %v3999
      %v4001 = vcombine.low %v3888, %v3890
      %v4002 = vcombine.low %v3892, %v3894
      %v4004 = vunpack.c.l.s4 1983009808
      %v4005 = vunpack.c.0.s8 %v4004
      %v4006 = vlaneseq
      %v4007 = vshrl.u32 %v4006, 7
      %v4008 = vsub.s32 %v4005, %v4007
      %v4009 = vrot.slane %v4001, %v4008
      %v4011 = vunpack.c.l.s4 1983009808
      %v4012 = vunpack.c.0.s8 %v4011
      %v4013 = vlaneseq
      %v4014 = vshrl.u32 %v4013, 7
      %v4015 = vsub.s32 %v4012, %v4014
      %v4016 = vrot.slane %v4002, %v4015
      %v4017 = vcombine.low %v4009, %v4016
      %v4018 = vcombine.low %v3896, %v3898
      %v4019 = vcombine.low %v3900, %v3902
      %v4021 = vunpack.c.l.s4 1983009808
      %v4022 = vunpack.c.0.s8 %v4021
      %v4023 = vlaneseq
      %v4024 = vshrl.u32 %v4023, 7
      %v4025 = vsub.s32 %v4022, %v4024
      %v4026 = vrot.slane %v4018, %v4025
      %v4028 = vunpack.c.l.s4 1983009808
      %v4029 = vunpack.c.0.s8 %v4028
      %v4030 = vlaneseq
      %v4031 = vshrl.u32 %v4030, 7
      %v4032 = vsub.s32 %v4029, %v4031
      %v4033 = vrot.slane %v4019, %v4032
      %v4034 = vcombine.low %v4026, %v4033
      %v4035 = vcombine.low %v3904, %v3906
      %v4036 = vcombine.low %v3908, %v3910
      %v4038 = vunpack.c.l.s4 1983009808
      %v4039 = vunpack.c.0.s8 %v4038
      %v4040 = vlaneseq
      %v4041 = vshrl.u32 %v4040, 7
      %v4042 = vsub.s32 %v4039, %v4041
      %v4043 = vrot.slane %v4035, %v4042
      %v4045 = vunpack.c.l.s4 1983009808
      %v4046 = vunpack.c.0.s8 %v4045
      %v4047 = vlaneseq
      %v4048 = vshrl.u32 %v4047, 7
      %v4049 = vsub.s32 %v4046, %v4048
      %v4050 = vrot.slane %v4036, %v4049
      %v4051 = vcombine.low %v4043, %v4050
      %v4052 = vcombine.low %v3912, %v3914
      %v4053 = vcombine.low %v3916, %v3918
      %v4055 = vunpack.c.l.s4 1983009808
      %v4056 = vunpack.c.0.s8 %v4055
      %v4057 = vlaneseq
      %v4058 = vshrl.u32 %v4057, 7
      %v4059 = vsub.s32 %v4056, %v4058
      %v4060 = vrot.slane %v4052, %v4059
      %v4062 = vunpack.c.l.s4 1983009808
      %v4063 = vunpack.c.0.s8 %v4062
      %v4064 = vlaneseq
      %v4065 = vshrl.u32 %v4064, 7
      %v4066 = vsub.s32 %v4063, %v4065
      %v4067 = vrot.slane %v4053, %v4066
      %v4068 = vcombine.low %v4060, %v4067
      %v4069 = vcombine.low %v3920, %v3922
      %v4070 = vcombine.low %v3924, %v3926
      %v4072 = vunpack.c.l.s4 1983009808
      %v4073 = vunpack.c.0.s8 %v4072
      %v4074 = vlaneseq
      %v4075 = vshrl.u32 %v4074, 7
      %v4076 = vsub.s32 %v4073, %v4075
      %v4077 = vrot.slane %v4069, %v4076
      %v4079 = vunpack.c.l.s4 1983009808
      %v4080 = vunpack.c.0.s8 %v4079
      %v4081 = vlaneseq
      %v4082 = vshrl.u32 %v4081, 7
      %v4083 = vsub.s32 %v4080, %v4082
      %v4084 = vrot.slane %v4070, %v4083
      %v4085 = vcombine.low %v4077, %v4084
      %v4086 = vcombine.low %v3928, %v3930
      %v4087 = vcombine.low %v3932, %v3934
      %v4089 = vunpack.c.l.s4 1983009808
      %v4090 = vunpack.c.0.s8 %v4089
      %v4091 = vlaneseq
      %v4092 = vshrl.u32 %v4091, 7
      %v4093 = vsub.s32 %v4090, %v4092
      %v4094 = vrot.slane %v4086, %v4093
      %v4096 = vunpack.c.l.s4 1983009808
      %v4097 = vunpack.c.0.s8 %v4096
      %v4098 = vlaneseq
      %v4099 = vshrl.u32 %v4098, 7
      %v4100 = vsub.s32 %v4097, %v4099
      %v4101 = vrot.slane %v4087, %v4100
      %v4102 = vcombine.low %v4094, %v4101
      %4111 = vst [vmem:[%s170] sm:$0xff] %v3983
      %4112 = vst [vmem:[%s170 + $0x8] sm:$0xff] %v4000
      %4113 = vst [vmem:[%s170 + $0x10] sm:$0xff] %v4017
      %4114 = vst [vmem:[%s170 + $0x18] sm:$0xff] %v4034
      %4115 = vst [vmem:[%s170 + $0x20] sm:$0xff] %v4051
      %4116 = vst [vmem:[%s170 + $0x28] sm:$0xff] %v4068
      %4117 = vst [vmem:[%s170 + $0x30] sm:$0xff] %v4085
      %4118 = vst [vmem:[%s170 + $0x38] sm:$0xff] %v4102
      %p4119 = scmp.lt.s32.totalorder %s14, 1
      %s4120 = scalar_select %p4119, %s14, 1
      %s4121 = smul.addr %s4120, 32
      %s4122 = smul.addr %s4121, 2
      %s4123 = scalar_lea.vmem %s3, %s4122
      // Predicated region
      $region33: #{decoder_forward.11} parent=31 // pred_check
        %p4124 = pneg %p100
      $region34: #{decoder_forward.11} parent=31 // pred_check_branch
        %4126 = sbr.rel (%p4124) target = $region36
      $region35: #{decoder_forward.11} parent=31 // pred_region
        _
      $region36: #{decoder_forward.11} parent=31 // pred_fallthru
        _
    $region32: #{decoder_forward.11} parent=5 // pred_fallthru
      _
    %p4127 = scmp.le.s32.totalorder 2, %s9
    // Predicated region
    $region37: #{decoder_forward.11} parent=5 // pred_check
      %p4128 = pneg %p4127
    $region38: #{decoder_forward.11} parent=5 // pred_check_branch
      %4130 = sbr.rel (%p4128) target = $region40
    $region39: #{decoder_forward.11} parent=5 // pred_region
      %s4131 = ssub.s32 %s9, 2
      // Predicated region
      $region41: #{decoder_forward.11} parent=39 // pred_check
        %p4132 = pneg %p106
      $region42: #{decoder_forward.11} parent=39 // pred_check_branch
        %4134 = sbr.rel (%p4132) target = $region44
      $region43: #{decoder_forward.11} parent=39 // pred_region
        %p4135 = scmp.lt.s32.totalorder %s15, 1
        %s4136 = scalar_select %p4135, %s15, 1
        %s4137 = smul.addr %s4136, 32
        %s4138 = smul.addr %s4137, 2
        %s4139 = scalar_lea.vmem %s3, %s4138
      $region44: #{decoder_forward.11} parent=39 // pred_fallthru
        _
    $region40: #{decoder_forward.11} parent=5 // pred_fallthru
      _
  $region6: #{decoder_forward.11} parent=0 // loop_footer
    %s13 = sadd.s32 1, %s9
  $region7: #{decoder_forward.11} parent=0 // loop_footer_branch
    %8 = sbr.rel target = $region3
  $region8: #{decoder_forward.11} parent=0 // loop_exit
    _

</llo_original>
